<compile_context>
chip_gen: v6e
topology: v6e:2x2x1
jax: 0.10.0
libtpu: 0.0.40
codegen_flags: <defaults>
</compile_context>

<pallas_src>
import functools

import jax
import jax.numpy as jnp
from jax.experimental import pallas as pl
from jax.experimental.pallas import tpu as pltpu

_SQRT_2_OVER_PI = 0.7978845608028654


def _gelu(x):
    # tanh-approximate GELU, f32.
    return 0.5 * x * (1.0 + jnp.tanh(_SQRT_2_OVER_PI * (x + 0.044715 * x * x * x)))


# ---------------------------------------------------------------------------
# Pallas kernels
# ---------------------------------------------------------------------------
def _linear_kernel(x_ref, w_ref, b_ref, o_ref):
    # x_ref: (TM, K) f32/bf16, w_ref: (K, N) bf16, b_ref: (1, N) f32, o_ref: (TM, N)
    x = x_ref[...].astype(jnp.bfloat16)                  # no-op if already bf16
    acc = jnp.dot(x, w_ref[...], preferred_element_type=jnp.float32)
    o_ref[...] = (acc + b_ref[...]).astype(o_ref.dtype)


def _dwconv_bn_gelu_kernel(x_ref, w_ref, s_ref, o_ref, xpad_ref, *, Hl, Wl, TR, PAD_L):
    # x_ref:    (1, Hl, Wl, Cb)  bf16 unpadded NHWC tile
    # w_ref:    (5, 5, Cb)       f32 combined (3x3|5x5) taps with BN scale folded in
    # s_ref:    (1, 1, Cb)       f32 folded conv-bias + BN shift
    # o_ref:    (1, Hl, Wl, Cb)  bf16
    # xpad_ref: (Hl+4, Wp, Cb)   f32 VMEM scratch for the halo-padded tile
    #
    # Build halo-padded f32 tile in VMEM: single upcast, zero halo, interior at
    # sublane-aligned column PAD_L. No HBM pad pass.
    xpad_ref[...] = jnp.zeros_like(xpad_ref)
    xpad_ref[2:2 + Hl, PAD_L:PAD_L + Wl, :] = x_ref[0].astype(jnp.float32)

    w = w_ref[...]
    shift = s_ref[0, 0, :]

    # Row-strip accumulation: (tr, Wl, Cb) f32 accumulator stays in vregs.
    for r0 in range(0, Hl, TR):
        tr = min(TR, Hl - r0)
        c00 = PAD_L - 2
        acc = w[0, 0, :] * xpad_ref[r0:r0 + tr, c00:c00 + Wl, :]
        for ky in range(5):
            for kx in range(5):
                if ky == 0 and kx == 0:
                    continue
                c0 = PAD_L - 2 + kx
                acc = acc + w[ky, kx, :] * xpad_ref[r0 + ky:r0 + ky + tr, c0:c0 + Wl, :]
        y = acc + shift
        # MultiDWConv's GELU(BN(.)) followed by MRFP.act (GELU), fused.
        y = _gelu(_gelu(y))
        o_ref[0, r0:r0 + tr, :, :] = y.astype(o_ref.dtype)


# ---------------------------------------------------------------------------
# Wrappers
# ---------------------------------------------------------------------------
def linear(x2d, w_bf16, b_f32, *, out_dtype, tm=128):
    """out = x2d @ w + b.  Weights pre-cast bf16; activation cast done in-kernel."""
    M, K = x2d.shape
    N = w_bf16.shape[1]
    tm = min(tm, max(8, ((M + 7) // 8) * 8))
    return pl.pallas_call(
        _linear_kernel,
        out_shape=jax.ShapeDtypeStruct((M, N), out_dtype),
        grid=(pl.cdiv(M, tm),),
        in_specs=[
            pl.BlockSpec((tm, K), lambda i: (i, 0)),
            pl.BlockSpec((K, N), lambda i: (0, 0)),
            pl.BlockSpec((1, N), lambda i: (0, 0)),
        ],
        out_specs=pl.BlockSpec((tm, N), lambda i: (i, 0)),
        compiler_params=pltpu.CompilerParams(
            dimension_semantics=("parallel",),
            vmem_limit_bytes=32 * 1024 * 1024,
        ),
    )(x2d, w_bf16, b_f32)


def dwconv_bn_gelu_level(x_nhwc, w_comb, shift):
    """Fused (dw3x3 | dw5x5) + BN + GELU + GELU for one resolution level (NHWC)."""
    B, Hl, Wl, C = x_nhwc.shape
    cb = 128 if C % 128 == 0 else C               # channel block (lane-dense)
    PAD_L = 8                                     # aligned interior column offset (>=2)
    Wp = PAD_L + ((Wl + 2 + 7) // 8) * 8          # width of the halo scratch
    # Row strip sized so the f32 accumulator stays within ~64 KiB of vregs.
    TR = max(1, min(Hl, (64 * 1024) // max(1, Wl * cb * 4)))

    kern = functools.partial(_dwconv_bn_gelu_kernel, Hl=Hl, Wl=Wl, TR=TR, PAD_L=PAD_L)
    return pl.pallas_call(
        kern,
        out_shape=jax.ShapeDtypeStruct((B, Hl, Wl, C), jnp.bfloat16),
        grid=(B, C // cb),
        in_specs=[
            pl.BlockSpec((1, Hl, Wl, cb), lambda b, c: (b, 0, 0, c)),
            pl.BlockSpec((5, 5, cb), lambda b, c: (0, 0, c)),
            pl.BlockSpec((1, 1, cb), lambda b, c: (0, 0, c)),
        ],
        out_specs=pl.BlockSpec((1, Hl, Wl, cb), lambda b, c: (b, 0, 0, c)),
        scratch_shapes=[pltpu.VMEM((Hl + 4, Wp, cb), jnp.float32)],
        compiler_params=pltpu.CompilerParams(
            dimension_semantics=("parallel", "parallel"),
            vmem_limit_bytes=32 * 1024 * 1024,
        ),
    )(x_nhwc, w_comb, shift)


# ---------------------------------------------------------------------------
# Parameter folding / construction (deterministic, synthetic)
# ---------------------------------------------------------------------------
def fold_level_params(w3, b3, w5, b5, gamma, beta, mean, var, eps=1e-5):
    """Fold BN + conv biases into a combined (5,5,C) f32 tap tensor and (1,1,C) shift.

    Channels [:C/2] use the 3x3 weights (placed at taps [1:4,1:4]); channels [C/2:]
    use the 5x5 weights — matching torch.cat([dw3x3(x[:, :C/2]), dw5x5(x[:, C/2:])],1)
    -> BN -> GELU.
    """
    Ch = w3.shape[-1]
    C = 2 * Ch
    scale = gamma / jnp.sqrt(var + eps)
    shift_bn = beta - mean * scale
    wc = jnp.zeros((5, 5, C), jnp.float32)
    wc = wc.at[1:4, 1:4, :Ch].set(w3)
    wc = wc.at[:, :, Ch:].set(w5)
    wc = wc * scale[None, None, :]
    bias = jnp.concatenate([b3, b5], axis=0)
    shift = (scale * bias + shift_bn).reshape(1, 1, C)
    return wc.astype(jnp.float32), shift.astype(jnp.float32)


def init_params(key, in_features, hidden_features, out_features):
    Ch = hidden_features // 2
    keys = jax.random.split(key, 16)

    def make_bn(k, c):
        k1, k2, k3, k4 = jax.random.split(k, 4)
        gamma = 1.0 + 0.1 * jax.random.normal(k1, (c,), jnp.float32)
        beta = 0.05 * jax.random.normal(k2, (c,), jnp.float32)
        mean = 0.01 * jax.random.normal(k3, (c,), jnp.float32)
        var = 1.0 + 0.1 * jax.random.uniform(k4, (c,), jnp.float32)
        return gamma, beta, mean, var

    # Pre-cast linear weights/biases to their kernel dtypes once (no per-call casts).
    p = {
        "fc1_w": (0.05 * jax.random.normal(keys[0], (in_features, hidden_features),
                                           jnp.float32)).astype(jnp.bfloat16),
        "fc1_b": (0.01 * jax.random.normal(keys[1], (hidden_features,), jnp.float32)
                  ).reshape(1, hidden_features),
        "fc2_w": (0.05 * jax.random.normal(keys[2], (hidden_features, out_features),
                                           jnp.float32)).astype(jnp.bfloat16),
        "fc2_b": (0.01 * jax.random.normal(keys[3], (out_features,), jnp.float32)
                  ).reshape(1, out_features),
    }
    for li, base in zip((1, 2, 3), (4, 8, 12)):
        w3 = 0.1 * jax.random.normal(keys[base + 0], (3, 3, Ch), jnp.float32)
        b3 = 0.01 * jax.random.normal(keys[base + 1], (Ch,), jnp.float32)
        w5 = 0.1 * jax.random.normal(keys[base + 2], (5, 5, Ch), jnp.float32)
        b5 = 0.01 * jax.random.normal(keys[base + 3], (Ch,), jnp.float32)
        gamma, beta, mean, var = make_bn(jax.random.fold_in(key, 100 + li), hidden_features)
        p[f"dw{li}"] = fold_level_params(w3, b3, w5, b5, gamma, beta, mean, var)
    return p


# ---------------------------------------------------------------------------
# Forward pass (matches MRFP.forward semantics)
# ---------------------------------------------------------------------------
def mrfp_forward(params, x, H, W):
    B, N, Cin = x.shape
    n = N // 21
    hidden = params["fc1_w"].shape[1]
    out_features = params["fc2_w"].shape[1]

    # fc1 (single f32 HBM read of x; bf16 MXU; bf16 activations out)
    h = linear(x.reshape(B * N, Cin), params["fc1_w"], params["fc1_b"],
               out_dtype=jnp.bfloat16)
    h = h.reshape(B, N, hidden)

    # Token split -> three NHWC maps (pure reshapes of contiguous token chunks,
    # equivalent to transpose(1,2).view(B,C,h,w) followed by our NHWC layout).
    x1 = h[:, : 16 * n, :].reshape(B, 2 * H, 2 * W, hidden)
    x2 = h[:, 16 * n: 20 * n, :].reshape(B, H, W, hidden)
    x3 = h[:, 20 * n:, :].reshape(B, H // 2, W // 2, hidden)

    # Per level: fused dwconv+BN+GELU+GELU, then fc2 (no hidden-wide concat copy).
    outs = []
    for xi, name in ((x1, "dw1"), (x2, "dw2"), (x3, "dw3")):
        yi = dwconv_bn_gelu_level(xi, *params[name])
        Bi, Hi, Wi, _ = yi.shape
        oi = linear(yi.reshape(Bi * Hi * Wi, hidden), params["fc2_w"], params["fc2_b"],
                    out_dtype=jnp.float32)
        outs.append(oi.reshape(Bi, Hi * Wi, out_features))

    # Dropout p=0.0 is identity.
    return jnp.concatenate(outs, axis=1)


# ---------------------------------------------------------------------------
if __name__ == "__main__":
    # Small config: hidden must be even; N = 21 * (H*W/4).
    B, H, W = 2, 8, 8
    in_features, hidden_features, out_features = 64, 128, 64
    n = (H * W) // 4
    N = 21 * n                                           # 336 tokens

    key = jax.random.PRNGKey(0)
    kp, kx = jax.random.split(key)
    params = init_params(kp, in_features, hidden_features, out_features)
    x = jax.random.normal(kx, (B, N, in_features), jnp.float32)

    fwd = jax.jit(functools.partial(mrfp_forward, H=H, W=W))
    out = fwd(params, x)
    jax.block_until_ready(out)

    assert out.shape == (B, N, out_features), out.shape
    assert bool(jnp.all(jnp.isfinite(out)))
    print("KERNEL_OK")
</pallas_src>

<mosaic_0001>
module attributes {stable_mosaic.version = 11 : i64} {
  func.func @_linear_kernel(%arg0: i32, %arg1: memref<128x64xf32, #tpu.memory_space<vmem>>, %arg2: memref<64x128xbf16, #tpu.memory_space<vmem>>, %arg3: memref<1x128xf32, #tpu.memory_space<vmem>>, %arg4: memref<128x128xbf16, #tpu.memory_space<vmem>>) attributes {dimension_semantics = [#tpu.dimension_semantics<parallel>], iteration_bounds = array<i64: 6>, scalar_prefetch = 0 : i64, scratch_operands = 0 : i64, tpu.core_type = #tpu.core_type<tc>, window_params = [{transform_indices = @transform_0, window_bounds = array<i64: 128, 64>}, {pipeline_mode = #tpu.pipeline_mode<synchronous>, transform_indices = @transform_1, window_bounds = array<i64: 64, 128>}, {pipeline_mode = #tpu.pipeline_mode<synchronous>, transform_indices = @transform_2, window_bounds = array<i64: 1, 128>}, {transform_indices = @transform_3, window_bounds = array<i64: 128, 128>}]} {
    %c0 = arith.constant 0 : index
    %c0_0 = arith.constant 0 : index
    %0 = vector.load %arg1[%c0, %c0_0] : memref<128x64xf32, #tpu.memory_space<vmem>>, vector<128x64xf32>
    %1 = arith.truncf %0 : vector<128x64xf32> to vector<128x64xbf16>
    %c0_1 = arith.constant 0 : index
    %c0_2 = arith.constant 0 : index
    %2 = vector.load %arg2[%c0_1, %c0_2] : memref<64x128xbf16, #tpu.memory_space<vmem>>, vector<64x128xbf16>
    %cst = arith.constant dense<0.000000e+00> : vector<128x128xf32>
    %3 = tpu.matmul %1, %2, %cst {dimension_numbers = #tpu.dot_dimension_numbers<[1], [0], [0], [1], [0, 0, 1, 1], [], []>} : vector<128x64xbf16>, vector<64x128xbf16>, vector<128x128xf32> -> vector<128x128xf32>
    %c0_3 = arith.constant 0 : index
    %c0_4 = arith.constant 0 : index
    %4 = vector.load %arg3[%c0_3, %c0_4] : memref<1x128xf32, #tpu.memory_space<vmem>>, vector<1x128xf32>
    %5 = vector.broadcast %4 : vector<1x128xf32> to vector<128x128xf32>
    %6 = arith.addf %3, %5 : vector<128x128xf32>
    %7 = arith.truncf %6 : vector<128x128xf32> to vector<128x128xbf16>
    %c0_5 = arith.constant 0 : index
    %c0_6 = arith.constant 0 : index
    %8 = vector.load %arg4[%c0_5, %c0_6] : memref<128x128xbf16, #tpu.memory_space<vmem>>, vector<128x128xbf16>
    tpu.vector_store %arg4[%c0_5, %c0_6], %7 {strides = array<i32>} : memref<128x128xbf16, #tpu.memory_space<vmem>>, vector<128x128xbf16>,
    return
  }
  func.func @transform_0(%arg0: i32) -> (i32, i32) {
    %c0_i32 = arith.constant 0 : i32
    %c0_i32_0 = arith.constant 0 : i32
    return %arg0, %c0_i32 : i32, i32
  }
  func.func @transform_1(%arg0: i32) -> (i32, i32) {
    %c0_i32 = arith.constant 0 : i32
    %c0_i32_0 = arith.constant 0 : i32
    %c0_i32_1 = arith.constant 0 : i32
    return %c0_i32, %c0_i32_0 : i32, i32
  }
  func.func @transform_2(%arg0: i32) -> (i32, i32) {
    %c0_i32 = arith.constant 0 : i32
    %c0_i32_0 = arith.constant 0 : i32
    %c0_i32_1 = arith.constant 0 : i32
    return %c0_i32, %c0_i32_0 : i32, i32
  }
  func.func @transform_3(%arg0: i32) -> (i32, i32) {
    %c0_i32 = arith.constant 0 : i32
    %c0_i32_0 = arith.constant 0 : i32
    return %arg0, %c0_i32 : i32, i32
  }
}

module attributes {stable_mosaic.version = 11 : i64} {
  func.func @_dwconv_bn_gelu_kernel(%arg0: i32, %arg1: i32, %arg2: memref<1x4x4x128xbf16, #tpu.memory_space<vmem>>, %arg3: memref<5x5x128xf32, #tpu.memory_space<vmem>>, %arg4: memref<1x1x128xf32, #tpu.memory_space<vmem>>, %arg5: memref<1x4x4x128xbf16, #tpu.memory_space<vmem>>, %arg6: memref<8x16x128xf32, #tpu.memory_space<vmem>>) attributes {dimension_semantics = [#tpu.dimension_semantics<parallel>, #tpu.dimension_semantics<parallel>], iteration_bounds = array<i64: 2, 1>, scalar_prefetch = 0 : i64, scratch_operands = 1 : i64, tpu.core_type = #tpu.core_type<tc>, window_params = [{transform_indices = @transform_0, window_bounds = array<i64: 1, 4, 4, 128>}, {transform_indices = @transform_1, window_bounds = array<i64: 5, 5, 128>}, {transform_indices = @transform_2, window_bounds = array<i64: 1, 1, 128>}, {transform_indices = @transform_3, window_bounds = array<i64: 1, 4, 4, 128>}]} {
    %cst = arith.constant 0.000000e+00 : f32
    %0 = vector.broadcast %cst : f32 to vector<8x16x128xf32>
    %c0 = arith.constant 0 : index
    %c0_0 = arith.constant 0 : index
    %c0_1 = arith.constant 0 : index
    %1 = vector.load %arg6[%c0, %c0_0, %c0_1] : memref<8x16x128xf32, #tpu.memory_space<vmem>>, vector<8x16x128xf32>
    tpu.vector_store %arg6[%c0, %c0_0, %c0_1], %0 {strides = array<i32>} : memref<8x16x128xf32, #tpu.memory_space<vmem>>, vector<8x16x128xf32>,
    %c0_2 = arith.constant 0 : index
    %c0_3 = arith.constant 0 : index
    %c0_4 = arith.constant 0 : index
    %c0_5 = arith.constant 0 : index
    %2 = vector.load %arg2[%c0_2, %c0_3, %c0_4, %c0_5] : memref<1x4x4x128xbf16, #tpu.memory_space<vmem>>, vector<1x4x4x128xbf16>
    %3 = vector.shape_cast %2 : vector<1x4x4x128xbf16> to vector<4x4x128xbf16>
    %4 = arith.extf %3 : vector<4x4x128xbf16> to vector<4x4x128xf32>
    %c2 = arith.constant 2 : index
    %c8 = arith.constant 8 : index
    %c0_6 = arith.constant 0 : index
    %5 = vector.load %arg6[%c2, %c8, %c0_6] : memref<8x16x128xf32, #tpu.memory_space<vmem>>, vector<4x4x128xf32>
    tpu.vector_store %arg6[%c2, %c8, %c0_6], %4 {strides = array<i32>} : memref<8x16x128xf32, #tpu.memory_space<vmem>>, vector<4x4x128xf32>,
    %c0_7 = arith.constant 0 : index
    %c0_8 = arith.constant 0 : index
    %c0_9 = arith.constant 0 : index
    %6 = vector.load %arg3[%c0_7, %c0_8, %c0_9] : memref<5x5x128xf32, #tpu.memory_space<vmem>>, vector<5x5x128xf32>
    %c0_10 = arith.constant 0 : index
    %c0_11 = arith.constant 0 : index
    %c0_12 = arith.constant 0 : index
    %7 = vector.load %arg4[%c0_10, %c0_11, %c0_12] : memref<1x1x128xf32, #tpu.memory_space<vmem>>, vector<1x1x128xf32>
    %8 = vector.shape_cast %7 : vector<1x1x128xf32> to vector<128xf32>
    %9 = vector.extract_strided_slice %6 {offsets = [0, 0, 0], sizes = [1, 1, 128], strides = [1, 1, 1]} : vector<5x5x128xf32> to vector<1x1x128xf32>
    %10 = vector.shape_cast %9 : vector<1x1x128xf32> to vector<128xf32>
    %c0_13 = arith.constant 0 : index
    %c6 = arith.constant 6 : index
    %c0_14 = arith.constant 0 : index
    %11 = vector.load %arg6[%c0_13, %c6, %c0_14] : memref<8x16x128xf32, #tpu.memory_space<vmem>>, vector<4x4x128xf32>
    %12 = vector.shape_cast %10 : vector<128xf32> to vector<1x1x128xf32>
    %13 = vector.broadcast %12 : vector<1x1x128xf32> to vector<4x4x128xf32>
    %14 = arith.mulf %13, %11 : vector<4x4x128xf32>
    %15 = vector.extract_strided_slice %6 {offsets = [0, 1, 0], sizes = [1, 1, 128], strides = [1, 1, 1]} : vector<5x5x128xf32> to vector<1x1x128xf32>
    %16 = vector.shape_cast %15 : vector<1x1x128xf32> to vector<128xf32>
    %c0_15 = arith.constant 0 : index
    %c7 = arith.constant 7 : index
    %c0_16 = arith.constant 0 : index
    %17 = vector.load %arg6[%c0_15, %c7, %c0_16] : memref<8x16x128xf32, #tpu.memory_space<vmem>>, vector<4x4x128xf32>
    %18 = vector.shape_cast %16 : vector<128xf32> to vector<1x1x128xf32>
    %19 = vector.broadcast %18 : vector<1x1x128xf32> to vector<4x4x128xf32>
    %20 = arith.mulf %19, %17 : vector<4x4x128xf32>
    %21 = arith.addf %14, %20 : vector<4x4x128xf32>
    %22 = vector.extract_strided_slice %6 {offsets = [0, 2, 0], sizes = [1, 1, 128], strides = [1, 1, 1]} : vector<5x5x128xf32> to vector<1x1x128xf32>
    %23 = vector.shape_cast %22 : vector<1x1x128xf32> to vector<128xf32>
    %c0_17 = arith.constant 0 : index
    %c8_18 = arith.constant 8 : index
    %c0_19 = arith.constant 0 : index
    %24 = vector.load %arg6[%c0_17, %c8_18, %c0_19] : memref<8x16x128xf32, #tpu.memory_space<vmem>>, vector<4x4x128xf32>
    %25 = vector.shape_cast %23 : vector<128xf32> to vector<1x1x128xf32>
    %26 = vector.broadcast %25 : vector<1x1x128xf32> to vector<4x4x128xf32>
    %27 = arith.mulf %26, %24 : vector<4x4x128xf32>
    %28 = arith.addf %21, %27 : vector<4x4x128xf32>
    %29 = vector.extract_strided_slice %6 {offsets = [0, 3, 0], sizes = [1, 1, 128], strides = [1, 1, 1]} : vector<5x5x128xf32> to vector<1x1x128xf32>
    %30 = vector.shape_cast %29 : vector<1x1x128xf32> to vector<128xf32>
    %c0_20 = arith.constant 0 : index
    %c9 = arith.constant 9 : index
    %c0_21 = arith.constant 0 : index
    %31 = vector.load %arg6[%c0_20, %c9, %c0_21] : memref<8x16x128xf32, #tpu.memory_space<vmem>>, vector<4x4x128xf32>
    %32 = vector.shape_cast %30 : vector<128xf32> to vector<1x1x128xf32>
    %33 = vector.broadcast %32 : vector<1x1x128xf32> to vector<4x4x128xf32>
    %34 = arith.mulf %33, %31 : vector<4x4x128xf32>
    %35 = arith.addf %28, %34 : vector<4x4x128xf32>
    %36 = vector.extract_strided_slice %6 {offsets = [0, 4, 0], sizes = [1, 1, 128], strides = [1, 1, 1]} : vector<5x5x128xf32> to vector<1x1x128xf32>
    %37 = vector.shape_cast %36 : vector<1x1x128xf32> to vector<128xf32>
    %c0_22 = arith.constant 0 : index
    %c10 = arith.constant 10 : index
    %c0_23 = arith.constant 0 : index
    %38 = vector.load %arg6[%c0_22, %c10, %c0_23] : memref<8x16x128xf32, #tpu.memory_space<vmem>>, vector<4x4x128xf32>
    %39 = vector.shape_cast %37 : vector<128xf32> to vector<1x1x128xf32>
    %40 = vector.broadcast %39 : vector<1x1x128xf32> to vector<4x4x128xf32>
    %41 = arith.mulf %40, %38 : vector<4x4x128xf32>
    %42 = arith.addf %35, %41 : vector<4x4x128xf32>
    %43 = vector.extract_strided_slice %6 {offsets = [1, 0, 0], sizes = [1, 1, 128], strides = [1, 1, 1]} : vector<5x5x128xf32> to vector<1x1x128xf32>
    %44 = vector.shape_cast %43 : vector<1x1x128xf32> to vector<128xf32>
    %c1 = arith.constant 1 : index
    %c6_24 = arith.constant 6 : index
    %c0_25 = arith.constant 0 : index
    %45 = vector.load %arg6[%c1, %c6_24, %c0_25] : memref<8x16x128xf32, #tpu.memory_space<vmem>>, vector<4x4x128xf32>
    %46 = vector.shape_cast %44 : vector<128xf32> to vector<1x1x128xf32>
    %47 = vector.broadcast %46 : vector<1x1x128xf32> to vector<4x4x128xf32>
    %48 = arith.mulf %47, %45 : vector<4x4x128xf32>
    %49 = arith.addf %42, %48 : vector<4x4x128xf32>
    %50 = vector.extract_strided_slice %6 {offsets = [1, 1, 0], sizes = [1, 1, 128], strides = [1, 1, 1]} : vector<5x5x128xf32> to vector<1x1x128xf32>
    %51 = vector.shape_cast %50 : vector<1x1x128xf32> to vector<128xf32>
    %c1_26 = arith.constant 1 : index
    %c7_27 = arith.constant 7 : index
    %c0_28 = arith.constant 0 : index
    %52 = vector.load %arg6[%c1_26, %c7_27, %c0_28] : memref<8x16x128xf32, #tpu.memory_space<vmem>>, vector<4x4x128xf32>
    %53 = vector.shape_cast %51 : vector<128xf32> to vector<1x1x128xf32>
    %54 = vector.broadcast %53 : vector<1x1x128xf32> to vector<4x4x128xf32>
    %55 = arith.mulf %54, %52 : vector<4x4x128xf32>
    %56 = arith.addf %49, %55 : vector<4x4x128xf32>
    %57 = vector.extract_strided_slice %6 {offsets = [1, 2, 0], sizes = [1, 1, 128], strides = [1, 1, 1]} : vector<5x5x128xf32> to vector<1x1x128xf32>
    %58 = vector.shape_cast %57 : vector<1x1x128xf32> to vector<128xf32>
    %c1_29 = arith.constant 1 : index
    %c8_30 = arith.constant 8 : index
    %c0_31 = arith.constant 0 : index
    %59 = vector.load %arg6[%c1_29, %c8_30, %c0_31] : memref<8x16x128xf32, #tpu.memory_space<vmem>>, vector<4x4x128xf32>
    %60 = vector.shape_cast %58 : vector<128xf32> to vector<1x1x128xf32>
    %61 = vector.broadcast %60 : vector<1x1x128xf32> to vector<4x4x128xf32>
    %62 = arith.mulf %61, %59 : vector<4x4x128xf32>
    %63 = arith.addf %56, %62 : vector<4x4x128xf32>
    %64 = vector.extract_strided_slice %6 {offsets = [1, 3, 0], sizes = [1, 1, 128], strides = [1, 1, 1]} : vector<5x5x128xf32> to vector<1x1x128xf32>
    %65 = vector.shape_cast %64 : vector<1x1x128xf32> to vector<128xf32>
    %c1_32 = arith.constant 1 : index
    %c9_33 = arith.constant 9 : index
    %c0_34 = arith.constant 0 : index
    %66 = vector.load %arg6[%c1_32, %c9_33, %c0_34] : memref<8x16x128xf32, #tpu.memory_space<vmem>>, vector<4x4x128xf32>
    %67 = vector.shape_cast %65 : vector<128xf32> to vector<1x1x128xf32>
    %68 = vector.broadcast %67 : vector<1x1x128xf32> to vector<4x4x128xf32>
    %69 = arith.mulf %68, %66 : vector<4x4x128xf32>
    %70 = arith.addf %63, %69 : vector<4x4x128xf32>
    %71 = vector.extract_strided_slice %6 {offsets = [1, 4, 0], sizes = [1, 1, 128], strides = [1, 1, 1]} : vector<5x5x128xf32> to vector<1x1x128xf32>
    %72 = vector.shape_cast %71 : vector<1x1x128xf32> to vector<128xf32>
    %c1_35 = arith.constant 1 : index
    %c10_36 = arith.constant 10 : index
    %c0_37 = arith.constant 0 : index
    %73 = vector.load %arg6[%c1_35, %c10_36, %c0_37] : memref<8x16x128xf32, #tpu.memory_space<vmem>>, vector<4x4x128xf32>
    %74 = vector.shape_cast %72 : vector<128xf32> to vector<1x1x128xf32>
    %75 = vector.broadcast %74 : vector<1x1x128xf32> to vector<4x4x128xf32>
    %76 = arith.mulf %75, %73 : vector<4x4x128xf32>
    %77 = arith.addf %70, %76 : vector<4x4x128xf32>
    %78 = vector.extract_strided_slice %6 {offsets = [2, 0, 0], sizes = [1, 1, 128], strides = [1, 1, 1]} : vector<5x5x128xf32> to vector<1x1x128xf32>
    %79 = vector.shape_cast %78 : vector<1x1x128xf32> to vector<128xf32>
    %c2_38 = arith.constant 2 : index
    %c6_39 = arith.constant 6 : index
    %c0_40 = arith.constant 0 : index
    %80 = vector.load %arg6[%c2_38, %c6_39, %c0_40] : memref<8x16x128xf32, #tpu.memory_space<vmem>>, vector<4x4x128xf32>
    %81 = vector.shape_cast %79 : vector<128xf32> to vector<1x1x128xf32>
    %82 = vector.broadcast %81 : vector<1x1x128xf32> to vector<4x4x128xf32>
    %83 = arith.mulf %82, %80 : vector<4x4x128xf32>
    %84 = arith.addf %77, %83 : vector<4x4x128xf32>
    %85 = vector.extract_strided_slice %6 {offsets = [2, 1, 0], sizes = [1, 1, 128], strides = [1, 1, 1]} : vector<5x5x128xf32> to vector<1x1x128xf32>
    %86 = vector.shape_cast %85 : vector<1x1x128xf32> to vector<128xf32>
    %c2_41 = arith.constant 2 : index
    %c7_42 = arith.constant 7 : index
    %c0_43 = arith.constant 0 : index
    %87 = vector.load %arg6[%c2_41, %c7_42, %c0_43] : memref<8x16x128xf32, #tpu.memory_space<vmem>>, vector<4x4x128xf32>
    %88 = vector.shape_cast %86 : vector<128xf32> to vector<1x1x128xf32>
    %89 = vector.broadcast %88 : vector<1x1x128xf32> to vector<4x4x128xf32>
    %90 = arith.mulf %89, %87 : vector<4x4x128xf32>
    %91 = arith.addf %84, %90 : vector<4x4x128xf32>
    %92 = vector.extract_strided_slice %6 {offsets = [2, 2, 0], sizes = [1, 1, 128], strides = [1, 1, 1]} : vector<5x5x128xf32> to vector<1x1x128xf32>
    %93 = vector.shape_cast %92 : vector<1x1x128xf32> to vector<128xf32>
    %c2_44 = arith.constant 2 : index
    %c8_45 = arith.constant 8 : index
    %c0_46 = arith.constant 0 : index
    %94 = vector.load %arg6[%c2_44, %c8_45, %c0_46] : memref<8x16x128xf32, #tpu.memory_space<vmem>>, vector<4x4x128xf32>
    %95 = vector.shape_cast %93 : vector<128xf32> to vector<1x1x128xf32>
    %96 = vector.broadcast %95 : vector<1x1x128xf32> to vector<4x4x128xf32>
    %97 = arith.mulf %96, %94 : vector<4x4x128xf32>
    %98 = arith.addf %91, %97 : vector<4x4x128xf32>
    %99 = vector.extract_strided_slice %6 {offsets = [2, 3, 0], sizes = [1, 1, 128], strides = [1, 1, 1]} : vector<5x5x128xf32> to vector<1x1x128xf32>
    %100 = vector.shape_cast %99 : vector<1x1x128xf32> to vector<128xf32>
    %c2_47 = arith.constant 2 : index
    %c9_48 = arith.constant 9 : index
    %c0_49 = arith.constant 0 : index
    %101 = vector.load %arg6[%c2_47, %c9_48, %c0_49] : memref<8x16x128xf32, #tpu.memory_space<vmem>>, vector<4x4x128xf32>
    %102 = vector.shape_cast %100 : vector<128xf32> to vector<1x1x128xf32>
    %103 = vector.broadcast %102 : vector<1x1x128xf32> to vector<4x4x128xf32>
    %104 = arith.mulf %103, %101 : vector<4x4x128xf32>
    %105 = arith.addf %98, %104 : vector<4x4x128xf32>
    %106 = vector.extract_strided_slice %6 {offsets = [2, 4, 0], sizes = [1, 1, 128], strides = [1, 1, 1]} : vector<5x5x128xf32> to vector<1x1x128xf32>
    %107 = vector.shape_cast %106 : vector<1x1x128xf32> to vector<128xf32>
    %c2_50 = arith.constant 2 : index
    %c10_51 = arith.constant 10 : index
    %c0_52 = arith.constant 0 : index
    %108 = vector.load %arg6[%c2_50, %c10_51, %c0_52] : memref<8x16x128xf32, #tpu.memory_space<vmem>>, vector<4x4x128xf32>
    %109 = vector.shape_cast %107 : vector<128xf32> to vector<1x1x128xf32>
    %110 = vector.broadcast %109 : vector<1x1x128xf32> to vector<4x4x128xf32>
    %111 = arith.mulf %110, %108 : vector<4x4x128xf32>
    %112 = arith.addf %105, %111 : vector<4x4x128xf32>
    %113 = vector.extract_strided_slice %6 {offsets = [3, 0, 0], sizes = [1, 1, 128], strides = [1, 1, 1]} : vector<5x5x128xf32> to vector<1x1x128xf32>
    %114 = vector.shape_cast %113 : vector<1x1x128xf32> to vector<128xf32>
    %c3 = arith.constant 3 : index
    %c6_53 = arith.constant 6 : index
    %c0_54 = arith.constant 0 : index
    %115 = vector.load %arg6[%c3, %c6_53, %c0_54] : memref<8x16x128xf32, #tpu.memory_space<vmem>>, vector<4x4x128xf32>
    %116 = vector.shape_cast %114 : vector<128xf32> to vector<1x1x128xf32>
    %117 = vector.broadcast %116 : vector<1x1x128xf32> to vector<4x4x128xf32>
    %118 = arith.mulf %117, %115 : vector<4x4x128xf32>
    %119 = arith.addf %112, %118 : vector<4x4x128xf32>
    %120 = vector.extract_strided_slice %6 {offsets = [3, 1, 0], sizes = [1, 1, 128], strides = [1, 1, 1]} : vector<5x5x128xf32> to vector<1x1x128xf32>
    %121 = vector.shape_cast %120 : vector<1x1x128xf32> to vector<128xf32>
    %c3_55 = arith.constant 3 : index
    %c7_56 = arith.constant 7 : index
    %c0_57 = arith.constant 0 : index
    %122 = vector.load %arg6[%c3_55, %c7_56, %c0_57] : memref<8x16x128xf32, #tpu.memory_space<vmem>>, vector<4x4x128xf32>
    %123 = vector.shape_cast %121 : vector<128xf32> to vector<1x1x128xf32>
    %124 = vector.broadcast %123 : vector<1x1x128xf32> to vector<4x4x128xf32>
    %125 = arith.mulf %124, %122 : vector<4x4x128xf32>
    %126 = arith.addf %119, %125 : vector<4x4x128xf32>
    %127 = vector.extract_strided_slice %6 {offsets = [3, 2, 0], sizes = [1, 1, 128], strides = [1, 1, 1]} : vector<5x5x128xf32> to vector<1x1x128xf32>
    %128 = vector.shape_cast %127 : vector<1x1x128xf32> to vector<128xf32>
    %c3_58 = arith.constant 3 : index
    %c8_59 = arith.constant 8 : index
    %c0_60 = arith.constant 0 : index
    %129 = vector.load %arg6[%c3_58, %c8_59, %c0_60] : memref<8x16x128xf32, #tpu.memory_space<vmem>>, vector<4x4x128xf32>
    %130 = vector.shape_cast %128 : vector<128xf32> to vector<1x1x128xf32>
    %131 = vector.broadcast %130 : vector<1x1x128xf32> to vector<4x4x128xf32>
    %132 = arith.mulf %131, %129 : vector<4x4x128xf32>
    %133 = arith.addf %126, %132 : vector<4x4x128xf32>
    %134 = vector.extract_strided_slice %6 {offsets = [3, 3, 0], sizes = [1, 1, 128], strides = [1, 1, 1]} : vector<5x5x128xf32> to vector<1x1x128xf32>
    %135 = vector.shape_cast %134 : vector<1x1x128xf32> to vector<128xf32>
    %c3_61 = arith.constant 3 : index
    %c9_62 = arith.constant 9 : index
    %c0_63 = arith.constant 0 : index
    %136 = vector.load %arg6[%c3_61, %c9_62, %c0_63] : memref<8x16x128xf32, #tpu.memory_space<vmem>>, vector<4x4x128xf32>
    %137 = vector.shape_cast %135 : vector<128xf32> to vector<1x1x128xf32>
    %138 = vector.broadcast %137 : vector<1x1x128xf32> to vector<4x4x128xf32>
    %139 = arith.mulf %138, %136 : vector<4x4x128xf32>
    %140 = arith.addf %133, %139 : vector<4x4x128xf32>
    %141 = vector.extract_strided_slice %6 {offsets = [3, 4, 0], sizes = [1, 1, 128], strides = [1, 1, 1]} : vector<5x5x128xf32> to vector<1x1x128xf32>
    %142 = vector.shape_cast %141 : vector<1x1x128xf32> to vector<128xf32>
    %c3_64 = arith.constant 3 : index
    %c10_65 = arith.constant 10 : index
    %c0_66 = arith.constant 0 : index
    %143 = vector.load %arg6[%c3_64, %c10_65, %c0_66] : memref<8x16x128xf32, #tpu.memory_space<vmem>>, vector<4x4x128xf32>
    %144 = vector.shape_cast %142 : vector<128xf32> to vector<1x1x128xf32>
    %145 = vector.broadcast %144 : vector<1x1x128xf32> to vector<4x4x128xf32>
    %146 = arith.mulf %145, %143 : vector<4x4x128xf32>
    %147 = arith.addf %140, %146 : vector<4x4x128xf32>
    %148 = vector.extract_strided_slice %6 {offsets = [4, 0, 0], sizes = [1, 1, 128], strides = [1, 1, 1]} : vector<5x5x128xf32> to vector<1x1x128xf32>
    %149 = vector.shape_cast %148 : vector<1x1x128xf32> to vector<128xf32>
    %c4 = arith.constant 4 : index
    %c6_67 = arith.constant 6 : index
    %c0_68 = arith.constant 0 : index
    %150 = vector.load %arg6[%c4, %c6_67, %c0_68] : memref<8x16x128xf32, #tpu.memory_space<vmem>>, vector<4x4x128xf32>
    %151 = vector.shape_cast %149 : vector<128xf32> to vector<1x1x128xf32>
    %152 = vector.broadcast %151 : vector<1x1x128xf32> to vector<4x4x128xf32>
    %153 = arith.mulf %152, %150 : vector<4x4x128xf32>
    %154 = arith.addf %147, %153 : vector<4x4x128xf32>
    %155 = vector.extract_strided_slice %6 {offsets = [4, 1, 0], sizes = [1, 1, 128], strides = [1, 1, 1]} : vector<5x5x128xf32> to vector<1x1x128xf32>
    %156 = vector.shape_cast %155 : vector<1x1x128xf32> to vector<128xf32>
    %c4_69 = arith.constant 4 : index
    %c7_70 = arith.constant 7 : index
    %c0_71 = arith.constant 0 : index
    %157 = vector.load %arg6[%c4_69, %c7_70, %c0_71] : memref<8x16x128xf32, #tpu.memory_space<vmem>>, vector<4x4x128xf32>
    %158 = vector.shape_cast %156 : vector<128xf32> to vector<1x1x128xf32>
    %159 = vector.broadcast %158 : vector<1x1x128xf32> to vector<4x4x128xf32>
    %160 = arith.mulf %159, %157 : vector<4x4x128xf32>
    %161 = arith.addf %154, %160 : vector<4x4x128xf32>
    %162 = vector.extract_strided_slice %6 {offsets = [4, 2, 0], sizes = [1, 1, 128], strides = [1, 1, 1]} : vector<5x5x128xf32> to vector<1x1x128xf32>
    %163 = vector.shape_cast %162 : vector<1x1x128xf32> to vector<128xf32>
    %c4_72 = arith.constant 4 : index
    %c8_73 = arith.constant 8 : index
    %c0_74 = arith.constant 0 : index
    %164 = vector.load %arg6[%c4_72, %c8_73, %c0_74] : memref<8x16x128xf32, #tpu.memory_space<vmem>>, vector<4x4x128xf32>
    %165 = vector.shape_cast %163 : vector<128xf32> to vector<1x1x128xf32>
    %166 = vector.broadcast %165 : vector<1x1x128xf32> to vector<4x4x128xf32>
    %167 = arith.mulf %166, %164 : vector<4x4x128xf32>
    %168 = arith.addf %161, %167 : vector<4x4x128xf32>
    %169 = vector.extract_strided_slice %6 {offsets = [4, 3, 0], sizes = [1, 1, 128], strides = [1, 1, 1]} : vector<5x5x128xf32> to vector<1x1x128xf32>
    %170 = vector.shape_cast %169 : vector<1x1x128xf32> to vector<128xf32>
    %c4_75 = arith.constant 4 : index
    %c9_76 = arith.constant 9 : index
    %c0_77 = arith.constant 0 : index
    %171 = vector.load %arg6[%c4_75, %c9_76, %c0_77] : memref<8x16x128xf32, #tpu.memory_space<vmem>>, vector<4x4x128xf32>
    %172 = vector.shape_cast %170 : vector<128xf32> to vector<1x1x128xf32>
    %173 = vector.broadcast %172 : vector<1x1x128xf32> to vector<4x4x128xf32>
    %174 = arith.mulf %173, %171 : vector<4x4x128xf32>
    %175 = arith.addf %168, %174 : vector<4x4x128xf32>
    %176 = vector.extract_strided_slice %6 {offsets = [4, 4, 0], sizes = [1, 1, 128], strides = [1, 1, 1]} : vector<5x5x128xf32> to vector<1x1x128xf32>
    %177 = vector.shape_cast %176 : vector<1x1x128xf32> to vector<128xf32>
    %c4_78 = arith.constant 4 : index
    %c10_79 = arith.constant 10 : index
    %c0_80 = arith.constant 0 : index
    %178 = vector.load %arg6[%c4_78, %c10_79, %c0_80] : memref<8x16x128xf32, #tpu.memory_space<vmem>>, vector<4x4x128xf32>
    %179 = vector.shape_cast %177 : vector<128xf32> to vector<1x1x128xf32>
    %180 = vector.broadcast %179 : vector<1x1x128xf32> to vector<4x4x128xf32>
    %181 = arith.mulf %180, %178 : vector<4x4x128xf32>
    %182 = arith.addf %175, %181 : vector<4x4x128xf32>
    %183 = vector.shape_cast %8 : vector<128xf32> to vector<1x1x128xf32>
    %184 = vector.broadcast %183 : vector<1x1x128xf32> to vector<4x4x128xf32>
    %185 = arith.addf %182, %184 : vector<4x4x128xf32>
    %cst_81 = arith.constant 5.000000e-01 : f32
    %186 = vector.broadcast %cst_81 : f32 to vector<4x4x128xf32>
    %187 = arith.mulf %186, %185 : vector<4x4x128xf32>
    %cst_82 = arith.constant 4.471500e-02 : f32
    %188 = vector.broadcast %cst_82 : f32 to vector<4x4x128xf32>
    %189 = arith.mulf %188, %185 : vector<4x4x128xf32>
    %190 = arith.mulf %189, %185 : vector<4x4x128xf32>
    %191 = arith.mulf %190, %185 : vector<4x4x128xf32>
    %192 = arith.addf %185, %191 : vector<4x4x128xf32>
    %cst_83 = arith.constant 0.797884583 : f32
    %193 = vector.broadcast %cst_83 : f32 to vector<4x4x128xf32>
    %194 = arith.mulf %193, %192 : vector<4x4x128xf32>
    %195 = math.tanh %194 : vector<4x4x128xf32>
    %cst_84 = arith.constant 1.000000e+00 : f32
    %196 = vector.broadcast %cst_84 : f32 to vector<4x4x128xf32>
    %197 = arith.addf %196, %195 : vector<4x4x128xf32>
    %198 = arith.mulf %187, %197 : vector<4x4x128xf32>
    %cst_85 = arith.constant 5.000000e-01 : f32
    %199 = vector.broadcast %cst_85 : f32 to vector<4x4x128xf32>
    %200 = arith.mulf %199, %198 : vector<4x4x128xf32>
    %cst_86 = arith.constant 4.471500e-02 : f32
    %201 = vector.broadcast %cst_86 : f32 to vector<4x4x128xf32>
    %202 = arith.mulf %201, %198 : vector<4x4x128xf32>
    %203 = arith.mulf %202, %198 : vector<4x4x128xf32>
    %204 = arith.mulf %203, %198 : vector<4x4x128xf32>
    %205 = arith.addf %198, %204 : vector<4x4x128xf32>
    %cst_87 = arith.constant 0.797884583 : f32
    %206 = vector.broadcast %cst_87 : f32 to vector<4x4x128xf32>
    %207 = arith.mulf %206, %205 : vector<4x4x128xf32>
    %208 = math.tanh %207 : vector<4x4x128xf32>
    %cst_88 = arith.constant 1.000000e+00 : f32
    %209 = vector.broadcast %cst_88 : f32 to vector<4x4x128xf32>
    %210 = arith.addf %209, %208 : vector<4x4x128xf32>
    %211 = arith.mulf %200, %210 : vector<4x4x128xf32>
    %212 = arith.truncf %211 : vector<4x4x128xf32> to vector<4x4x128xbf16>
    %c0_89 = arith.constant 0 : index
    %c0_90 = arith.constant 0 : index
    %c0_91 = arith.constant 0 : index
    %c0_92 = arith.constant 0 : index
    %213 = vector.load %arg5[%c0_89, %c0_90, %c0_91, %c0_92] : memref<1x4x4x128xbf16, #tpu.memory_space<vmem>>, vector<1x4x4x128xbf16>
    %214 = vector.shape_cast %213 : vector<1x4x4x128xbf16> to vector<4x4x128xbf16>
    %215 = vector.shape_cast %212 : vector<4x4x128xbf16> to vector<1x4x4x128xbf16>
    tpu.vector_store %arg5[%c0_89, %c0_90, %c0_91, %c0_92], %215 {strides = array<i32>} : memref<1x4x4x128xbf16, #tpu.memory_space<vmem>>, vector<1x4x4x128xbf16>,
    return
  }
  func.func @transform_0(%arg0: i32, %arg1: i32) -> (i32, i32, i32, i32) {
    %c0_i32 = arith.constant 0 : i32
    %c0_i32_0 = arith.constant 0 : i32
    %c0_i32_1 = arith.constant 0 : i32
    return %arg0, %c0_i32, %c0_i32_0, %arg1 : i32, i32, i32, i32
  }
  func.func @transform_1(%arg0: i32, %arg1: i32) -> (i32, i32, i32) {
    %c0_i32 = arith.constant 0 : i32
    %c0_i32_0 = arith.constant 0 : i32
    %c0_i32_1 = arith.constant 0 : i32
    return %c0_i32, %c0_i32_0, %arg1 : i32, i32, i32
  }
  func.func @transform_2(%arg0: i32, %arg1: i32) -> (i32, i32, i32) {
    %c0_i32 = arith.constant 0 : i32
    %c0_i32_0 = arith.constant 0 : i32
    %c0_i32_1 = arith.constant 0 : i32
    return %c0_i32, %c0_i32_0, %arg1 : i32, i32, i32
  }
  func.func @transform_3(%arg0: i32, %arg1: i32) -> (i32, i32, i32, i32) {
    %c0_i32 = arith.constant 0 : i32
    %c0_i32_0 = arith.constant 0 : i32
    %c0_i32_1 = arith.constant 0 : i32
    return %arg0, %c0_i32, %c0_i32_0, %arg1 : i32, i32, i32, i32
  }
}

module attributes {stable_mosaic.version = 11 : i64} {
  func.func @_linear_kernel(%arg0: i32, %arg1: memref<32x128xbf16, #tpu.memory_space<vmem>>, %arg2: memref<128x64xbf16, #tpu.memory_space<vmem>>, %arg3: memref<1x64xf32, #tpu.memory_space<vmem>>, %arg4: memref<32x64xf32, #tpu.memory_space<vmem>>) attributes {dimension_semantics = [#tpu.dimension_semantics<parallel>], iteration_bounds = array<i64: 1>, scalar_prefetch = 0 : i64, scratch_operands = 0 : i64, tpu.core_type = #tpu.core_type<tc>, window_params = [{transform_indices = @transform_0, window_bounds = array<i64: 32, 128>}, {pipeline_mode = #tpu.pipeline_mode<synchronous>, transform_indices = @transform_1, window_bounds = array<i64: 128, 64>}, {pipeline_mode = #tpu.pipeline_mode<synchronous>, transform_indices = @transform_2, window_bounds = array<i64: 1, 64>}, {transform_indices = @transform_3, window_bounds = array<i64: 32, 64>}]} {
    %c0 = arith.constant 0 : index
    %c0_0 = arith.constant 0 : index
    %0 = vector.load %arg1[%c0, %c0_0] : memref<32x128xbf16, #tpu.memory_space<vmem>>, vector<32x128xbf16>
    %c0_1 = arith.constant 0 : index
    %c0_2 = arith.constant 0 : index
    %1 = vector.load %arg2[%c0_1, %c0_2] : memref<128x64xbf16, #tpu.memory_space<vmem>>, vector<128x64xbf16>
    %cst = arith.constant dense<0.000000e+00> : vector<32x64xf32>
    %2 = tpu.matmul %0, %1, %cst {dimension_numbers = #tpu.dot_dimension_numbers<[1], [0], [0], [1], [0, 0, 1, 1], [], []>} : vector<32x128xbf16>, vector<128x64xbf16>, vector<32x64xf32> -> vector<32x64xf32>
    %c0_3 = arith.constant 0 : index
    %c0_4 = arith.constant 0 : index
    %3 = vector.load %arg3[%c0_3, %c0_4] : memref<1x64xf32, #tpu.memory_space<vmem>>, vector<1x64xf32>
    %4 = vector.broadcast %3 : vector<1x64xf32> to vector<32x64xf32>
    %5 = arith.addf %2, %4 : vector<32x64xf32>
    %c0_5 = arith.constant 0 : index
    %c0_6 = arith.constant 0 : index
    %6 = vector.load %arg4[%c0_5, %c0_6] : memref<32x64xf32, #tpu.memory_space<vmem>>, vector<32x64xf32>
    tpu.vector_store %arg4[%c0_5, %c0_6], %5 {strides = array<i32>} : memref<32x64xf32, #tpu.memory_space<vmem>>, vector<32x64xf32>,
    return
  }
  func.func @transform_0(%arg0: i32) -> (i32, i32) {
    %c0_i32 = arith.constant 0 : i32
    %c0_i32_0 = arith.constant 0 : i32
    return %arg0, %c0_i32 : i32, i32
  }
  func.func @transform_1(%arg0: i32) -> (i32, i32) {
    %c0_i32 = arith.constant 0 : i32
    %c0_i32_0 = arith.constant 0 : i32
    %c0_i32_1 = arith.constant 0 : i32
    return %c0_i32, %c0_i32_0 : i32, i32
  }
  func.func @transform_2(%arg0: i32) -> (i32, i32) {
    %c0_i32 = arith.constant 0 : i32
    %c0_i32_0 = arith.constant 0 : i32
    %c0_i32_1 = arith.constant 0 : i32
    return %c0_i32, %c0_i32_0 : i32, i32
  }
  func.func @transform_3(%arg0: i32) -> (i32, i32) {
    %c0_i32 = arith.constant 0 : i32
    %c0_i32_0 = arith.constant 0 : i32
    return %arg0, %c0_i32 : i32, i32
  }
}

module attributes {stable_mosaic.version = 11 : i64} {
  func.func @_dwconv_bn_gelu_kernel(%arg0: i32, %arg1: i32, %arg2: memref<1x16x16x128xbf16, #tpu.memory_space<vmem>>, %arg3: memref<5x5x128xf32, #tpu.memory_space<vmem>>, %arg4: memref<1x1x128xf32, #tpu.memory_space<vmem>>, %arg5: memref<1x16x16x128xbf16, #tpu.memory_space<vmem>>, %arg6: memref<20x32x128xf32, #tpu.memory_space<vmem>>) attributes {dimension_semantics = [#tpu.dimension_semantics<parallel>, #tpu.dimension_semantics<parallel>], iteration_bounds = array<i64: 2, 1>, scalar_prefetch = 0 : i64, scratch_operands = 1 : i64, tpu.core_type = #tpu.core_type<tc>, window_params = [{transform_indices = @transform_0, window_bounds = array<i64: 1, 16, 16, 128>}, {transform_indices = @transform_1, window_bounds = array<i64: 5, 5, 128>}, {transform_indices = @transform_2, window_bounds = array<i64: 1, 1, 128>}, {transform_indices = @transform_3, window_bounds = array<i64: 1, 16, 16, 128>}]} {
    %cst = arith.constant 0.000000e+00 : f32
    %0 = vector.broadcast %cst : f32 to vector<20x32x128xf32>
    %c0 = arith.constant 0 : index
    %c0_0 = arith.constant 0 : index
    %c0_1 = arith.constant 0 : index
    %1 = vector.load %arg6[%c0, %c0_0, %c0_1] : memref<20x32x128xf32, #tpu.memory_space<vmem>>, vector<20x32x128xf32>
    tpu.vector_store %arg6[%c0, %c0_0, %c0_1], %0 {strides = array<i32>} : memref<20x32x128xf32, #tpu.memory_space<vmem>>, vector<20x32x128xf32>,
    %c0_2 = arith.constant 0 : index
    %c0_3 = arith.constant 0 : index
    %c0_4 = arith.constant 0 : index
    %c0_5 = arith.constant 0 : index
    %2 = vector.load %arg2[%c0_2, %c0_3, %c0_4, %c0_5] : memref<1x16x16x128xbf16, #tpu.memory_space<vmem>>, vector<1x16x16x128xbf16>
    %3 = vector.shape_cast %2 : vector<1x16x16x128xbf16> to vector<16x16x128xbf16>
    %4 = arith.extf %3 : vector<16x16x128xbf16> to vector<16x16x128xf32>
    %c2 = arith.constant 2 : index
    %c8 = arith.constant 8 : index
    %c0_6 = arith.constant 0 : index
    %5 = vector.load %arg6[%c2, %c8, %c0_6] : memref<20x32x128xf32, #tpu.memory_space<vmem>>, vector<16x16x128xf32>
    tpu.vector_store %arg6[%c2, %c8, %c0_6], %4 {strides = array<i32>} : memref<20x32x128xf32, #tpu.memory_space<vmem>>, vector<16x16x128xf32>,
    %c0_7 = arith.constant 0 : index
    %c0_8 = arith.constant 0 : index
    %c0_9 = arith.constant 0 : index
    %6 = vector.load %arg3[%c0_7, %c0_8, %c0_9] : memref<5x5x128xf32, #tpu.memory_space<vmem>>, vector<5x5x128xf32>
    %c0_10 = arith.constant 0 : index
    %c0_11 = arith.constant 0 : index
    %c0_12 = arith.constant 0 : index
    %7 = vector.load %arg4[%c0_10, %c0_11, %c0_12] : memref<1x1x128xf32, #tpu.memory_space<vmem>>, vector<1x1x128xf32>
    %8 = vector.shape_cast %7 : vector<1x1x128xf32> to vector<128xf32>
    %9 = vector.extract_strided_slice %6 {offsets = [0, 0, 0], sizes = [1, 1, 128], strides = [1, 1, 1]} : vector<5x5x128xf32> to vector<1x1x128xf32>
    %10 = vector.shape_cast %9 : vector<1x1x128xf32> to vector<128xf32>
    %c0_13 = arith.constant 0 : index
    %c6 = arith.constant 6 : index
    %c0_14 = arith.constant 0 : index
    %11 = vector.load %arg6[%c0_13, %c6, %c0_14] : memref<20x32x128xf32, #tpu.memory_space<vmem>>, vector<8x16x128xf32>
    %12 = vector.shape_cast %10 : vector<128xf32> to vector<1x1x128xf32>
    %13 = vector.broadcast %12 : vector<1x1x128xf32> to vector<8x16x128xf32>
    %14 = arith.mulf %13, %11 : vector<8x16x128xf32>
    %15 = vector.extract_strided_slice %6 {offsets = [0, 1, 0], sizes = [1, 1, 128], strides = [1, 1, 1]} : vector<5x5x128xf32> to vector<1x1x128xf32>
    %16 = vector.shape_cast %15 : vector<1x1x128xf32> to vector<128xf32>
    %c0_15 = arith.constant 0 : index
    %c7 = arith.constant 7 : index
    %c0_16 = arith.constant 0 : index
    %17 = vector.load %arg6[%c0_15, %c7, %c0_16] : memref<20x32x128xf32, #tpu.memory_space<vmem>>, vector<8x16x128xf32>
    %18 = vector.shape_cast %16 : vector<128xf32> to vector<1x1x128xf32>
    %19 = vector.broadcast %18 : vector<1x1x128xf32> to vector<8x16x128xf32>
    %20 = arith.mulf %19, %17 : vector<8x16x128xf32>
    %21 = arith.addf %14, %20 : vector<8x16x128xf32>
    %22 = vector.extract_strided_slice %6 {offsets = [0, 2, 0], sizes = [1, 1, 128], strides = [1, 1, 1]} : vector<5x5x128xf32> to vector<1x1x128xf32>
    %23 = vector.shape_cast %22 : vector<1x1x128xf32> to vector<128xf32>
    %c0_17 = arith.constant 0 : index
    %c8_18 = arith.constant 8 : index
    %c0_19 = arith.constant 0 : index
    %24 = vector.load %arg6[%c0_17, %c8_18, %c0_19] : memref<20x32x128xf32, #tpu.memory_space<vmem>>, vector<8x16x128xf32>
    %25 = vector.shape_cast %23 : vector<128xf32> to vector<1x1x128xf32>
    %26 = vector.broadcast %25 : vector<1x1x128xf32> to vector<8x16x128xf32>
    %27 = arith.mulf %26, %24 : vector<8x16x128xf32>
    %28 = arith.addf %21, %27 : vector<8x16x128xf32>
    %29 = vector.extract_strided_slice %6 {offsets = [0, 3, 0], sizes = [1, 1, 128], strides = [1, 1, 1]} : vector<5x5x128xf32> to vector<1x1x128xf32>
    %30 = vector.shape_cast %29 : vector<1x1x128xf32> to vector<128xf32>
    %c0_20 = arith.constant 0 : index
    %c9 = arith.constant 9 : index
    %c0_21 = arith.constant 0 : index
    %31 = vector.load %arg6[%c0_20, %c9, %c0_21] : memref<20x32x128xf32, #tpu.memory_space<vmem>>, vector<8x16x128xf32>
    %32 = vector.shape_cast %30 : vector<128xf32> to vector<1x1x128xf32>
    %33 = vector.broadcast %32 : vector<1x1x128xf32> to vector<8x16x128xf32>
    %34 = arith.mulf %33, %31 : vector<8x16x128xf32>
    %35 = arith.addf %28, %34 : vector<8x16x128xf32>
    %36 = vector.extract_strided_slice %6 {offsets = [0, 4, 0], sizes = [1, 1, 128], strides = [1, 1, 1]} : vector<5x5x128xf32> to vector<1x1x128xf32>
    %37 = vector.shape_cast %36 : vector<1x1x128xf32> to vector<128xf32>
    %c0_22 = arith.constant 0 : index
    %c10 = arith.constant 10 : index
    %c0_23 = arith.constant 0 : index
    %38 = vector.load %arg6[%c0_22, %c10, %c0_23] : memref<20x32x128xf32, #tpu.memory_space<vmem>>, vector<8x16x128xf32>
    %39 = vector.shape_cast %37 : vector<128xf32> to vector<1x1x128xf32>
    %40 = vector.broadcast %39 : vector<1x1x128xf32> to vector<8x16x128xf32>
    %41 = arith.mulf %40, %38 : vector<8x16x128xf32>
    %42 = arith.addf %35, %41 : vector<8x16x128xf32>
    %43 = vector.extract_strided_slice %6 {offsets = [1, 0, 0], sizes = [1, 1, 128], strides = [1, 1, 1]} : vector<5x5x128xf32> to vector<1x1x128xf32>
    %44 = vector.shape_cast %43 : vector<1x1x128xf32> to vector<128xf32>
    %c1 = arith.constant 1 : index
    %c6_24 = arith.constant 6 : index
    %c0_25 = arith.constant 0 : index
    %45 = vector.load %arg6[%c1, %c6_24, %c0_25] : memref<20x32x128xf32, #tpu.memory_space<vmem>>, vector<8x16x128xf32>
    %46 = vector.shape_cast %44 : vector<128xf32> to vector<1x1x128xf32>
    %47 = vector.broadcast %46 : vector<1x1x128xf32> to vector<8x16x128xf32>
    %48 = arith.mulf %47, %45 : vector<8x16x128xf32>
    %49 = arith.addf %42, %48 : vector<8x16x128xf32>
    %50 = vector.extract_strided_slice %6 {offsets = [1, 1, 0], sizes = [1, 1, 128], strides = [1, 1, 1]} : vector<5x5x128xf32> to vector<1x1x128xf32>
    %51 = vector.shape_cast %50 : vector<1x1x128xf32> to vector<128xf32>
    %c1_26 = arith.constant 1 : index
    %c7_27 = arith.constant 7 : index
    %c0_28 = arith.constant 0 : index
    %52 = vector.load %arg6[%c1_26, %c7_27, %c0_28] : memref<20x32x128xf32, #tpu.memory_space<vmem>>, vector<8x16x128xf32>
    %53 = vector.shape_cast %51 : vector<128xf32> to vector<1x1x128xf32>
    %54 = vector.broadcast %53 : vector<1x1x128xf32> to vector<8x16x128xf32>
    %55 = arith.mulf %54, %52 : vector<8x16x128xf32>
    %56 = arith.addf %49, %55 : vector<8x16x128xf32>
    %57 = vector.extract_strided_slice %6 {offsets = [1, 2, 0], sizes = [1, 1, 128], strides = [1, 1, 1]} : vector<5x5x128xf32> to vector<1x1x128xf32>
    %58 = vector.shape_cast %57 : vector<1x1x128xf32> to vector<128xf32>
    %c1_29 = arith.constant 1 : index
    %c8_30 = arith.constant 8 : index
    %c0_31 = arith.constant 0 : index
    %59 = vector.load %arg6[%c1_29, %c8_30, %c0_31] : memref<20x32x128xf32, #tpu.memory_space<vmem>>, vector<8x16x128xf32>
    %60 = vector.shape_cast %58 : vector<128xf32> to vector<1x1x128xf32>
    %61 = vector.broadcast %60 : vector<1x1x128xf32> to vector<8x16x128xf32>
    %62 = arith.mulf %61, %59 : vector<8x16x128xf32>
    %63 = arith.addf %56, %62 : vector<8x16x128xf32>
    %64 = vector.extract_strided_slice %6 {offsets = [1, 3, 0], sizes = [1, 1, 128], strides = [1, 1, 1]} : vector<5x5x128xf32> to vector<1x1x128xf32>
    %65 = vector.shape_cast %64 : vector<1x1x128xf32> to vector<128xf32>
    %c1_32 = arith.constant 1 : index
    %c9_33 = arith.constant 9 : index
    %c0_34 = arith.constant 0 : index
    %66 = vector.load %arg6[%c1_32, %c9_33, %c0_34] : memref<20x32x128xf32, #tpu.memory_space<vmem>>, vector<8x16x128xf32>
    %67 = vector.shape_cast %65 : vector<128xf32> to vector<1x1x128xf32>
    %68 = vector.broadcast %67 : vector<1x1x128xf32> to vector<8x16x128xf32>
    %69 = arith.mulf %68, %66 : vector<8x16x128xf32>
    %70 = arith.addf %63, %69 : vector<8x16x128xf32>
    %71 = vector.extract_strided_slice %6 {offsets = [1, 4, 0], sizes = [1, 1, 128], strides = [1, 1, 1]} : vector<5x5x128xf32> to vector<1x1x128xf32>
    %72 = vector.shape_cast %71 : vector<1x1x128xf32> to vector<128xf32>
    %c1_35 = arith.constant 1 : index
    %c10_36 = arith.constant 10 : index
    %c0_37 = arith.constant 0 : index
    %73 = vector.load %arg6[%c1_35, %c10_36, %c0_37] : memref<20x32x128xf32, #tpu.memory_space<vmem>>, vector<8x16x128xf32>
    %74 = vector.shape_cast %72 : vector<128xf32> to vector<1x1x128xf32>
    %75 = vector.broadcast %74 : vector<1x1x128xf32> to vector<8x16x128xf32>
    %76 = arith.mulf %75, %73 : vector<8x16x128xf32>
    %77 = arith.addf %70, %76 : vector<8x16x128xf32>
    %78 = vector.extract_strided_slice %6 {offsets = [2, 0, 0], sizes = [1, 1, 128], strides = [1, 1, 1]} : vector<5x5x128xf32> to vector<1x1x128xf32>
    %79 = vector.shape_cast %78 : vector<1x1x128xf32> to vector<128xf32>
    %c2_38 = arith.constant 2 : index
    %c6_39 = arith.constant 6 : index
    %c0_40 = arith.constant 0 : index
    %80 = vector.load %arg6[%c2_38, %c6_39, %c0_40] : memref<20x32x128xf32, #tpu.memory_space<vmem>>, vector<8x16x128xf32>
    %81 = vector.shape_cast %79 : vector<128xf32> to vector<1x1x128xf32>
    %82 = vector.broadcast %81 : vector<1x1x128xf32> to vector<8x16x128xf32>
    %83 = arith.mulf %82, %80 : vector<8x16x128xf32>
    %84 = arith.addf %77, %83 : vector<8x16x128xf32>
    %85 = vector.extract_strided_slice %6 {offsets = [2, 1, 0], sizes = [1, 1, 128], strides = [1, 1, 1]} : vector<5x5x128xf32> to vector<1x1x128xf32>
    %86 = vector.shape_cast %85 : vector<1x1x128xf32> to vector<128xf32>
    %c2_41 = arith.constant 2 : index
    %c7_42 = arith.constant 7 : index
    %c0_43 = arith.constant 0 : index
    %87 = vector.load %arg6[%c2_41, %c7_42, %c0_43] : memref<20x32x128xf32, #tpu.memory_space<vmem>>, vector<8x16x128xf32>
    %88 = vector.shape_cast %86 : vector<128xf32> to vector<1x1x128xf32>
    %89 = vector.broadcast %88 : vector<1x1x128xf32> to vector<8x16x128xf32>
    %90 = arith.mulf %89, %87 : vector<8x16x128xf32>
    %91 = arith.addf %84, %90 : vector<8x16x128xf32>
    %92 = vector.extract_strided_slice %6 {offsets = [2, 2, 0], sizes = [1, 1, 128], strides = [1, 1, 1]} : vector<5x5x128xf32> to vector<1x1x128xf32>
    %93 = vector.shape_cast %92 : vector<1x1x128xf32> to vector<128xf32>
    %c2_44 = arith.constant 2 : index
    %c8_45 = arith.constant 8 : index
    %c0_46 = arith.constant 0 : index
    %94 = vector.load %arg6[%c2_44, %c8_45, %c0_46] : memref<20x32x128xf32, #tpu.memory_space<vmem>>, vector<8x16x128xf32>
    %95 = vector.shape_cast %93 : vector<128xf32> to vector<1x1x128xf32>
    %96 = vector.broadcast %95 : vector<1x1x128xf32> to vector<8x16x128xf32>
    %97 = arith.mulf %96, %94 : vector<8x16x128xf32>
    %98 = arith.addf %91, %97 : vector<8x16x128xf32>
    %99 = vector.extract_strided_slice %6 {offsets = [2, 3, 0], sizes = [1, 1, 128], strides = [1, 1, 1]} : vector<5x5x128xf32> to vector<1x1x128xf32>
    %100 = vector.shape_cast %99 : vector<1x1x128xf32> to vector<128xf32>
    %c2_47 = arith.constant 2 : index
    %c9_48 = arith.constant 9 : index
    %c0_49 = arith.constant 0 : index
    %101 = vector.load %arg6[%c2_47, %c9_48, %c0_49] : memref<20x32x128xf32, #tpu.memory_space<vmem>>, vector<8x16x128xf32>
    %102 = vector.shape_cast %100 : vector<128xf32> to vector<1x1x128xf32>
    %103 = vector.broadcast %102 : vector<1x1x128xf32> to vector<8x16x128xf32>
    %104 = arith.mulf %103, %101 : vector<8x16x128xf32>
    %105 = arith.addf %98, %104 : vector<8x16x128xf32>
    %106 = vector.extract_strided_slice %6 {offsets = [2, 4, 0], sizes = [1, 1, 128], strides = [1, 1, 1]} : vector<5x5x128xf32> to vector<1x1x128xf32>
    %107 = vector.shape_cast %106 : vector<1x1x128xf32> to vector<128xf32>
    %c2_50 = arith.constant 2 : index
    %c10_51 = arith.constant 10 : index
    %c0_52 = arith.constant 0 : index
    %108 = vector.load %arg6[%c2_50, %c10_51, %c0_52] : memref<20x32x128xf32, #tpu.memory_space<vmem>>, vector<8x16x128xf32>
    %109 = vector.shape_cast %107 : vector<128xf32> to vector<1x1x128xf32>
    %110 = vector.broadcast %109 : vector<1x1x128xf32> to vector<8x16x128xf32>
    %111 = arith.mulf %110, %108 : vector<8x16x128xf32>
    %112 = arith.addf %105, %111 : vector<8x16x128xf32>
    %113 = vector.extract_strided_slice %6 {offsets = [3, 0, 0], sizes = [1, 1, 128], strides = [1, 1, 1]} : vector<5x5x128xf32> to vector<1x1x128xf32>
    %114 = vector.shape_cast %113 : vector<1x1x128xf32> to vector<128xf32>
    %c3 = arith.constant 3 : index
    %c6_53 = arith.constant 6 : index
    %c0_54 = arith.constant 0 : index
    %115 = vector.load %arg6[%c3, %c6_53, %c0_54] : memref<20x32x128xf32, #tpu.memory_space<vmem>>, vector<8x16x128xf32>
    %116 = vector.shape_cast %114 : vector<128xf32> to vector<1x1x128xf32>
    %117 = vector.broadcast %116 : vector<1x1x128xf32> to vector<8x16x128xf32>
    %118 = arith.mulf %117, %115 : vector<8x16x128xf32>
    %119 = arith.addf %112, %118 : vector<8x16x128xf32>
    %120 = vector.extract_strided_slice %6 {offsets = [3, 1, 0], sizes = [1, 1, 128], strides = [1, 1, 1]} : vector<5x5x128xf32> to vector<1x1x128xf32>
    %121 = vector.shape_cast %120 : vector<1x1x128xf32> to vector<128xf32>
    %c3_55 = arith.constant 3 : index
    %c7_56 = arith.constant 7 : index
    %c0_57 = arith.constant 0 : index
    %122 = vector.load %arg6[%c3_55, %c7_56, %c0_57] : memref<20x32x128xf32, #tpu.memory_space<vmem>>, vector<8x16x128xf32>
    %123 = vector.shape_cast %121 : vector<128xf32> to vector<1x1x128xf32>
    %124 = vector.broadcast %123 : vector<1x1x128xf32> to vector<8x16x128xf32>
    %125 = arith.mulf %124, %122 : vector<8x16x128xf32>
    %126 = arith.addf %119, %125 : vector<8x16x128xf32>
    %127 = vector.extract_strided_slice %6 {offsets = [3, 2, 0], sizes = [1, 1, 128], strides = [1, 1, 1]} : vector<5x5x128xf32> to vector<1x1x128xf32>
    %128 = vector.shape_cast %127 : vector<1x1x128xf32> to vector<128xf32>
    %c3_58 = arith.constant 3 : index
    %c8_59 = arith.constant 8 : index
    %c0_60 = arith.constant 0 : index
    %129 = vector.load %arg6[%c3_58, %c8_59, %c0_60] : memref<20x32x128xf32, #tpu.memory_space<vmem>>, vector<8x16x128xf32>
    %130 = vector.shape_cast %128 : vector<128xf32> to vector<1x1x128xf32>
    %131 = vector.broadcast %130 : vector<1x1x128xf32> to vector<8x16x128xf32>
    %132 = arith.mulf %131, %129 : vector<8x16x128xf32>
    %133 = arith.addf %126, %132 : vector<8x16x128xf32>
    %134 = vector.extract_strided_slice %6 {offsets = [3, 3, 0], sizes = [1, 1, 128], strides = [1, 1, 1]} : vector<5x5x128xf32> to vector<1x1x128xf32>
    %135 = vector.shape_cast %134 : vector<1x1x128xf32> to vector<128xf32>
    %c3_61 = arith.constant 3 : index
    %c9_62 = arith.constant 9 : index
    %c0_63 = arith.constant 0 : index
    %136 = vector.load %arg6[%c3_61, %c9_62, %c0_63] : memref<20x32x128xf32, #tpu.memory_space<vmem>>, vector<8x16x128xf32>
    %137 = vector.shape_cast %135 : vector<128xf32> to vector<1x1x128xf32>
    %138 = vector.broadcast %137 : vector<1x1x128xf32> to vector<8x16x128xf32>
    %139 = arith.mulf %138, %136 : vector<8x16x128xf32>
    %140 = arith.addf %133, %139 : vector<8x16x128xf32>
    %141 = vector.extract_strided_slice %6 {offsets = [3, 4, 0], sizes = [1, 1, 128], strides = [1, 1, 1]} : vector<5x5x128xf32> to vector<1x1x128xf32>
    %142 = vector.shape_cast %141 : vector<1x1x128xf32> to vector<128xf32>
    %c3_64 = arith.constant 3 : index
    %c10_65 = arith.constant 10 : index
    %c0_66 = arith.constant 0 : index
    %143 = vector.load %arg6[%c3_64, %c10_65, %c0_66] : memref<20x32x128xf32, #tpu.memory_space<vmem>>, vector<8x16x128xf32>
    %144 = vector.shape_cast %142 : vector<128xf32> to vector<1x1x128xf32>
    %145 = vector.broadcast %144 : vector<1x1x128xf32> to vector<8x16x128xf32>
    %146 = arith.mulf %145, %143 : vector<8x16x128xf32>
    %147 = arith.addf %140, %146 : vector<8x16x128xf32>
    %148 = vector.extract_strided_slice %6 {offsets = [4, 0, 0], sizes = [1, 1, 128], strides = [1, 1, 1]} : vector<5x5x128xf32> to vector<1x1x128xf32>
    %149 = vector.shape_cast %148 : vector<1x1x128xf32> to vector<128xf32>
    %c4 = arith.constant 4 : index
    %c6_67 = arith.constant 6 : index
    %c0_68 = arith.constant 0 : index
    %150 = vector.load %arg6[%c4, %c6_67, %c0_68] : memref<20x32x128xf32, #tpu.memory_space<vmem>>, vector<8x16x128xf32>
    %151 = vector.shape_cast %149 : vector<128xf32> to vector<1x1x128xf32>
    %152 = vector.broadcast %151 : vector<1x1x128xf32> to vector<8x16x128xf32>
    %153 = arith.mulf %152, %150 : vector<8x16x128xf32>
    %154 = arith.addf %147, %153 : vector<8x16x128xf32>
    %155 = vector.extract_strided_slice %6 {offsets = [4, 1, 0], sizes = [1, 1, 128], strides = [1, 1, 1]} : vector<5x5x128xf32> to vector<1x1x128xf32>
    %156 = vector.shape_cast %155 : vector<1x1x128xf32> to vector<128xf32>
    %c4_69 = arith.constant 4 : index
    %c7_70 = arith.constant 7 : index
    %c0_71 = arith.constant 0 : index
    %157 = vector.load %arg6[%c4_69, %c7_70, %c0_71] : memref<20x32x128xf32, #tpu.memory_space<vmem>>, vector<8x16x128xf32>
    %158 = vector.shape_cast %156 : vector<128xf32> to vector<1x1x128xf32>
    %159 = vector.broadcast %158 : vector<1x1x128xf32> to vector<8x16x128xf32>
    %160 = arith.mulf %159, %157 : vector<8x16x128xf32>
    %161 = arith.addf %154, %160 : vector<8x16x128xf32>
    %162 = vector.extract_strided_slice %6 {offsets = [4, 2, 0], sizes = [1, 1, 128], strides = [1, 1, 1]} : vector<5x5x128xf32> to vector<1x1x128xf32>
    %163 = vector.shape_cast %162 : vector<1x1x128xf32> to vector<128xf32>
    %c4_72 = arith.constant 4 : index
    %c8_73 = arith.constant 8 : index
    %c0_74 = arith.constant 0 : index
    %164 = vector.load %arg6[%c4_72, %c8_73, %c0_74] : memref<20x32x128xf32, #tpu.memory_space<vmem>>, vector<8x16x128xf32>
    %165 = vector.shape_cast %163 : vector<128xf32> to vector<1x1x128xf32>
    %166 = vector.broadcast %165 : vector<1x1x128xf32> to vector<8x16x128xf32>
    %167 = arith.mulf %166, %164 : vector<8x16x128xf32>
    %168 = arith.addf %161, %167 : vector<8x16x128xf32>
    %169 = vector.extract_strided_slice %6 {offsets = [4, 3, 0], sizes = [1, 1, 128], strides = [1, 1, 1]} : vector<5x5x128xf32> to vector<1x1x128xf32>
    %170 = vector.shape_cast %169 : vector<1x1x128xf32> to vector<128xf32>
    %c4_75 = arith.constant 4 : index
    %c9_76 = arith.constant 9 : index
    %c0_77 = arith.constant 0 : index
    %171 = vector.load %arg6[%c4_75, %c9_76, %c0_77] : memref<20x32x128xf32, #tpu.memory_space<vmem>>, vector<8x16x128xf32>
    %172 = vector.shape_cast %170 : vector<128xf32> to vector<1x1x128xf32>
    %173 = vector.broadcast %172 : vector<1x1x128xf32> to vector<8x16x128xf32>
    %174 = arith.mulf %173, %171 : vector<8x16x128xf32>
    %175 = arith.addf %168, %174 : vector<8x16x128xf32>
    %176 = vector.extract_strided_slice %6 {offsets = [4, 4, 0], sizes = [1, 1, 128], strides = [1, 1, 1]} : vector<5x5x128xf32> to vector<1x1x128xf32>
    %177 = vector.shape_cast %176 : vector<1x1x128xf32> to vector<128xf32>
    %c4_78 = arith.constant 4 : index
    %c10_79 = arith.constant 10 : index
    %c0_80 = arith.constant 0 : index
    %178 = vector.load %arg6[%c4_78, %c10_79, %c0_80] : memref<20x32x128xf32, #tpu.memory_space<vmem>>, vector<8x16x128xf32>
    %179 = vector.shape_cast %177 : vector<128xf32> to vector<1x1x128xf32>
    %180 = vector.broadcast %179 : vector<1x1x128xf32> to vector<8x16x128xf32>
    %181 = arith.mulf %180, %178 : vector<8x16x128xf32>
    %182 = arith.addf %175, %181 : vector<8x16x128xf32>
    %183 = vector.shape_cast %8 : vector<128xf32> to vector<1x1x128xf32>
    %184 = vector.broadcast %183 : vector<1x1x128xf32> to vector<8x16x128xf32>
    %185 = arith.addf %182, %184 : vector<8x16x128xf32>
    %cst_81 = arith.constant 5.000000e-01 : f32
    %186 = vector.broadcast %cst_81 : f32 to vector<8x16x128xf32>
    %187 = arith.mulf %186, %185 : vector<8x16x128xf32>
    %cst_82 = arith.constant 4.471500e-02 : f32
    %188 = vector.broadcast %cst_82 : f32 to vector<8x16x128xf32>
    %189 = arith.mulf %188, %185 : vector<8x16x128xf32>
    %190 = arith.mulf %189, %185 : vector<8x16x128xf32>
    %191 = arith.mulf %190, %185 : vector<8x16x128xf32>
    %192 = arith.addf %185, %191 : vector<8x16x128xf32>
    %cst_83 = arith.constant 0.797884583 : f32
    %193 = vector.broadcast %cst_83 : f32 to vector<8x16x128xf32>
    %194 = arith.mulf %193, %192 : vector<8x16x128xf32>
    %195 = math.tanh %194 : vector<8x16x128xf32>
    %cst_84 = arith.constant 1.000000e+00 : f32
    %196 = vector.broadcast %cst_84 : f32 to vector<8x16x128xf32>
    %197 = arith.addf %196, %195 : vector<8x16x128xf32>
    %198 = arith.mulf %187, %197 : vector<8x16x128xf32>
    %cst_85 = arith.constant 5.000000e-01 : f32
    %199 = vector.broadcast %cst_85 : f32 to vector<8x16x128xf32>
    %200 = arith.mulf %199, %198 : vector<8x16x128xf32>
    %cst_86 = arith.constant 4.471500e-02 : f32
    %201 = vector.broadcast %cst_86 : f32 to vector<8x16x128xf32>
    %202 = arith.mulf %201, %198 : vector<8x16x128xf32>
    %203 = arith.mulf %202, %198 : vector<8x16x128xf32>
    %204 = arith.mulf %203, %198 : vector<8x16x128xf32>
    %205 = arith.addf %198, %204 : vector<8x16x128xf32>
    %cst_87 = arith.constant 0.797884583 : f32
    %206 = vector.broadcast %cst_87 : f32 to vector<8x16x128xf32>
    %207 = arith.mulf %206, %205 : vector<8x16x128xf32>
    %208 = math.tanh %207 : vector<8x16x128xf32>
    %cst_88 = arith.constant 1.000000e+00 : f32
    %209 = vector.broadcast %cst_88 : f32 to vector<8x16x128xf32>
    %210 = arith.addf %209, %208 : vector<8x16x128xf32>
    %211 = arith.mulf %200, %210 : vector<8x16x128xf32>
    %212 = arith.truncf %211 : vector<8x16x128xf32> to vector<8x16x128xbf16>
    %c0_89 = arith.constant 0 : index
    %c0_90 = arith.constant 0 : index
    %c0_91 = arith.constant 0 : index
    %c0_92 = arith.constant 0 : index
    %213 = vector.load %arg5[%c0_89, %c0_90, %c0_91, %c0_92] : memref<1x16x16x128xbf16, #tpu.memory_space<vmem>>, vector<1x8x16x128xbf16>
    %214 = vector.shape_cast %213 : vector<1x8x16x128xbf16> to vector<8x16x128xbf16>
    %215 = vector.shape_cast %212 : vector<8x16x128xbf16> to vector<1x8x16x128xbf16>
    tpu.vector_store %arg5[%c0_89, %c0_90, %c0_91, %c0_92], %215 {strides = array<i32>} : memref<1x16x16x128xbf16, #tpu.memory_space<vmem>>, vector<1x8x16x128xbf16>,
    %216 = vector.extract_strided_slice %6 {offsets = [0, 0, 0], sizes = [1, 1, 128], strides = [1, 1, 1]} : vector<5x5x128xf32> to vector<1x1x128xf32>
    %217 = vector.shape_cast %216 : vector<1x1x128xf32> to vector<128xf32>
    %c8_93 = arith.constant 8 : index
    %c6_94 = arith.constant 6 : index
    %c0_95 = arith.constant 0 : index
    %218 = vector.load %arg6[%c8_93, %c6_94, %c0_95] : memref<20x32x128xf32, #tpu.memory_space<vmem>>, vector<8x16x128xf32>
    %219 = vector.shape_cast %217 : vector<128xf32> to vector<1x1x128xf32>
    %220 = vector.broadcast %219 : vector<1x1x128xf32> to vector<8x16x128xf32>
    %221 = arith.mulf %220, %218 : vector<8x16x128xf32>
    %222 = vector.extract_strided_slice %6 {offsets = [0, 1, 0], sizes = [1, 1, 128], strides = [1, 1, 1]} : vector<5x5x128xf32> to vector<1x1x128xf32>
    %223 = vector.shape_cast %222 : vector<1x1x128xf32> to vector<128xf32>
    %c8_96 = arith.constant 8 : index
    %c7_97 = arith.constant 7 : index
    %c0_98 = arith.constant 0 : index
    %224 = vector.load %arg6[%c8_96, %c7_97, %c0_98] : memref<20x32x128xf32, #tpu.memory_space<vmem>>, vector<8x16x128xf32>
    %225 = vector.shape_cast %223 : vector<128xf32> to vector<1x1x128xf32>
    %226 = vector.broadcast %225 : vector<1x1x128xf32> to vector<8x16x128xf32>
    %227 = arith.mulf %226, %224 : vector<8x16x128xf32>
    %228 = arith.addf %221, %227 : vector<8x16x128xf32>
    %229 = vector.extract_strided_slice %6 {offsets = [0, 2, 0], sizes = [1, 1, 128], strides = [1, 1, 1]} : vector<5x5x128xf32> to vector<1x1x128xf32>
    %230 = vector.shape_cast %229 : vector<1x1x128xf32> to vector<128xf32>
    %c8_99 = arith.constant 8 : index
    %c8_100 = arith.constant 8 : index
    %c0_101 = arith.constant 0 : index
    %231 = vector.load %arg6[%c8_99, %c8_100, %c0_101] : memref<20x32x128xf32, #tpu.memory_space<vmem>>, vector<8x16x128xf32>
    %232 = vector.shape_cast %230 : vector<128xf32> to vector<1x1x128xf32>
    %233 = vector.broadcast %232 : vector<1x1x128xf32> to vector<8x16x128xf32>
    %234 = arith.mulf %233, %231 : vector<8x16x128xf32>
    %235 = arith.addf %228, %234 : vector<8x16x128xf32>
    %236 = vector.extract_strided_slice %6 {offsets = [0, 3, 0], sizes = [1, 1, 128], strides = [1, 1, 1]} : vector<5x5x128xf32> to vector<1x1x128xf32>
    %237 = vector.shape_cast %236 : vector<1x1x128xf32> to vector<128xf32>
    %c8_102 = arith.constant 8 : index
    %c9_103 = arith.constant 9 : index
    %c0_104 = arith.constant 0 : index
    %238 = vector.load %arg6[%c8_102, %c9_103, %c0_104] : memref<20x32x128xf32, #tpu.memory_space<vmem>>, vector<8x16x128xf32>
    %239 = vector.shape_cast %237 : vector<128xf32> to vector<1x1x128xf32>
    %240 = vector.broadcast %239 : vector<1x1x128xf32> to vector<8x16x128xf32>
    %241 = arith.mulf %240, %238 : vector<8x16x128xf32>
    %242 = arith.addf %235, %241 : vector<8x16x128xf32>
    %243 = vector.extract_strided_slice %6 {offsets = [0, 4, 0], sizes = [1, 1, 128], strides = [1, 1, 1]} : vector<5x5x128xf32> to vector<1x1x128xf32>
    %244 = vector.shape_cast %243 : vector<1x1x128xf32> to vector<128xf32>
    %c8_105 = arith.constant 8 : index
    %c10_106 = arith.constant 10 : index
    %c0_107 = arith.constant 0 : index
    %245 = vector.load %arg6[%c8_105, %c10_106, %c0_107] : memref<20x32x128xf32, #tpu.memory_space<vmem>>, vector<8x16x128xf32>
    %246 = vector.shape_cast %244 : vector<128xf32> to vector<1x1x128xf32>
    %247 = vector.broadcast %246 : vector<1x1x128xf32> to vector<8x16x128xf32>
    %248 = arith.mulf %247, %245 : vector<8x16x128xf32>
    %249 = arith.addf %242, %248 : vector<8x16x128xf32>
    %250 = vector.extract_strided_slice %6 {offsets = [1, 0, 0], sizes = [1, 1, 128], strides = [1, 1, 1]} : vector<5x5x128xf32> to vector<1x1x128xf32>
    %251 = vector.shape_cast %250 : vector<1x1x128xf32> to vector<128xf32>
    %c9_108 = arith.constant 9 : index
    %c6_109 = arith.constant 6 : index
    %c0_110 = arith.constant 0 : index
    %252 = vector.load %arg6[%c9_108, %c6_109, %c0_110] : memref<20x32x128xf32, #tpu.memory_space<vmem>>, vector<8x16x128xf32>
    %253 = vector.shape_cast %251 : vector<128xf32> to vector<1x1x128xf32>
    %254 = vector.broadcast %253 : vector<1x1x128xf32> to vector<8x16x128xf32>
    %255 = arith.mulf %254, %252 : vector<8x16x128xf32>
    %256 = arith.addf %249, %255 : vector<8x16x128xf32>
    %257 = vector.extract_strided_slice %6 {offsets = [1, 1, 0], sizes = [1, 1, 128], strides = [1, 1, 1]} : vector<5x5x128xf32> to vector<1x1x128xf32>
    %258 = vector.shape_cast %257 : vector<1x1x128xf32> to vector<128xf32>
    %c9_111 = arith.constant 9 : index
    %c7_112 = arith.constant 7 : index
    %c0_113 = arith.constant 0 : index
    %259 = vector.load %arg6[%c9_111, %c7_112, %c0_113] : memref<20x32x128xf32, #tpu.memory_space<vmem>>, vector<8x16x128xf32>
    %260 = vector.shape_cast %258 : vector<128xf32> to vector<1x1x128xf32>
    %261 = vector.broadcast %260 : vector<1x1x128xf32> to vector<8x16x128xf32>
    %262 = arith.mulf %261, %259 : vector<8x16x128xf32>
    %263 = arith.addf %256, %262 : vector<8x16x128xf32>
    %264 = vector.extract_strided_slice %6 {offsets = [1, 2, 0], sizes = [1, 1, 128], strides = [1, 1, 1]} : vector<5x5x128xf32> to vector<1x1x128xf32>
    %265 = vector.shape_cast %264 : vector<1x1x128xf32> to vector<128xf32>
    %c9_114 = arith.constant 9 : index
    %c8_115 = arith.constant 8 : index
    %c0_116 = arith.constant 0 : index
    %266 = vector.load %arg6[%c9_114, %c8_115, %c0_116] : memref<20x32x128xf32, #tpu.memory_space<vmem>>, vector<8x16x128xf32>
    %267 = vector.shape_cast %265 : vector<128xf32> to vector<1x1x128xf32>
    %268 = vector.broadcast %267 : vector<1x1x128xf32> to vector<8x16x128xf32>
    %269 = arith.mulf %268, %266 : vector<8x16x128xf32>
    %270 = arith.addf %263, %269 : vector<8x16x128xf32>
    %271 = vector.extract_strided_slice %6 {offsets = [1, 3, 0], sizes = [1, 1, 128], strides = [1, 1, 1]} : vector<5x5x128xf32> to vector<1x1x128xf32>
    %272 = vector.shape_cast %271 : vector<1x1x128xf32> to vector<128xf32>
    %c9_117 = arith.constant 9 : index
    %c9_118 = arith.constant 9 : index
    %c0_119 = arith.constant 0 : index
    %273 = vector.load %arg6[%c9_117, %c9_118, %c0_119] : memref<20x32x128xf32, #tpu.memory_space<vmem>>, vector<8x16x128xf32>
    %274 = vector.shape_cast %272 : vector<128xf32> to vector<1x1x128xf32>
    %275 = vector.broadcast %274 : vector<1x1x128xf32> to vector<8x16x128xf32>
    %276 = arith.mulf %275, %273 : vector<8x16x128xf32>
    %277 = arith.addf %270, %276 : vector<8x16x128xf32>
    %278 = vector.extract_strided_slice %6 {offsets = [1, 4, 0], sizes = [1, 1, 128], strides = [1, 1, 1]} : vector<5x5x128xf32> to vector<1x1x128xf32>
    %279 = vector.shape_cast %278 : vector<1x1x128xf32> to vector<128xf32>
    %c9_120 = arith.constant 9 : index
    %c10_121 = arith.constant 10 : index
    %c0_122 = arith.constant 0 : index
    %280 = vector.load %arg6[%c9_120, %c10_121, %c0_122] : memref<20x32x128xf32, #tpu.memory_space<vmem>>, vector<8x16x128xf32>
    %281 = vector.shape_cast %279 : vector<128xf32> to vector<1x1x128xf32>
    %282 = vector.broadcast %281 : vector<1x1x128xf32> to vector<8x16x128xf32>
    %283 = arith.mulf %282, %280 : vector<8x16x128xf32>
    %284 = arith.addf %277, %283 : vector<8x16x128xf32>
    %285 = vector.extract_strided_slice %6 {offsets = [2, 0, 0], sizes = [1, 1, 128], strides = [1, 1, 1]} : vector<5x5x128xf32> to vector<1x1x128xf32>
    %286 = vector.shape_cast %285 : vector<1x1x128xf32> to vector<128xf32>
    %c10_123 = arith.constant 10 : index
    %c6_124 = arith.constant 6 : index
    %c0_125 = arith.constant 0 : index
    %287 = vector.load %arg6[%c10_123, %c6_124, %c0_125] : memref<20x32x128xf32, #tpu.memory_space<vmem>>, vector<8x16x128xf32>
    %288 = vector.shape_cast %286 : vector<128xf32> to vector<1x1x128xf32>
    %289 = vector.broadcast %288 : vector<1x1x128xf32> to vector<8x16x128xf32>
    %290 = arith.mulf %289, %287 : vector<8x16x128xf32>
    %291 = arith.addf %284, %290 : vector<8x16x128xf32>
    %292 = vector.extract_strided_slice %6 {offsets = [2, 1, 0], sizes = [1, 1, 128], strides = [1, 1, 1]} : vector<5x5x128xf32> to vector<1x1x128xf32>
    %293 = vector.shape_cast %292 : vector<1x1x128xf32> to vector<128xf32>
    %c10_126 = arith.constant 10 : index
    %c7_127 = arith.constant 7 : index
    %c0_128 = arith.constant 0 : index
    %294 = vector.load %arg6[%c10_126, %c7_127, %c0_128] : memref<20x32x128xf32, #tpu.memory_space<vmem>>, vector<8x16x128xf32>
    %295 = vector.shape_cast %293 : vector<128xf32> to vector<1x1x128xf32>
    %296 = vector.broadcast %295 : vector<1x1x128xf32> to vector<8x16x128xf32>
    %297 = arith.mulf %296, %294 : vector<8x16x128xf32>
    %298 = arith.addf %291, %297 : vector<8x16x128xf32>
    %299 = vector.extract_strided_slice %6 {offsets = [2, 2, 0], sizes = [1, 1, 128], strides = [1, 1, 1]} : vector<5x5x128xf32> to vector<1x1x128xf32>
    %300 = vector.shape_cast %299 : vector<1x1x128xf32> to vector<128xf32>
    %c10_129 = arith.constant 10 : index
    %c8_130 = arith.constant 8 : index
    %c0_131 = arith.constant 0 : index
    %301 = vector.load %arg6[%c10_129, %c8_130, %c0_131] : memref<20x32x128xf32, #tpu.memory_space<vmem>>, vector<8x16x128xf32>
    %302 = vector.shape_cast %300 : vector<128xf32> to vector<1x1x128xf32>
    %303 = vector.broadcast %302 : vector<1x1x128xf32> to vector<8x16x128xf32>
    %304 = arith.mulf %303, %301 : vector<8x16x128xf32>
    %305 = arith.addf %298, %304 : vector<8x16x128xf32>
    %306 = vector.extract_strided_slice %6 {offsets = [2, 3, 0], sizes = [1, 1, 128], strides = [1, 1, 1]} : vector<5x5x128xf32> to vector<1x1x128xf32>
    %307 = vector.shape_cast %306 : vector<1x1x128xf32> to vector<128xf32>
    %c10_132 = arith.constant 10 : index
    %c9_133 = arith.constant 9 : index
    %c0_134 = arith.constant 0 : index
    %308 = vector.load %arg6[%c10_132, %c9_133, %c0_134] : memref<20x32x128xf32, #tpu.memory_space<vmem>>, vector<8x16x128xf32>
    %309 = vector.shape_cast %307 : vector<128xf32> to vector<1x1x128xf32>
    %310 = vector.broadcast %309 : vector<1x1x128xf32> to vector<8x16x128xf32>
    %311 = arith.mulf %310, %308 : vector<8x16x128xf32>
    %312 = arith.addf %305, %311 : vector<8x16x128xf32>
    %313 = vector.extract_strided_slice %6 {offsets = [2, 4, 0], sizes = [1, 1, 128], strides = [1, 1, 1]} : vector<5x5x128xf32> to vector<1x1x128xf32>
    %314 = vector.shape_cast %313 : vector<1x1x128xf32> to vector<128xf32>
    %c10_135 = arith.constant 10 : index
    %c10_136 = arith.constant 10 : index
    %c0_137 = arith.constant 0 : index
    %315 = vector.load %arg6[%c10_135, %c10_136, %c0_137] : memref<20x32x128xf32, #tpu.memory_space<vmem>>, vector<8x16x128xf32>
    %316 = vector.shape_cast %314 : vector<128xf32> to vector<1x1x128xf32>
    %317 = vector.broadcast %316 : vector<1x1x128xf32> to vector<8x16x128xf32>
    %318 = arith.mulf %317, %315 : vector<8x16x128xf32>
    %319 = arith.addf %312, %318 : vector<8x16x128xf32>
    %320 = vector.extract_strided_slice %6 {offsets = [3, 0, 0], sizes = [1, 1, 128], strides = [1, 1, 1]} : vector<5x5x128xf32> to vector<1x1x128xf32>
    %321 = vector.shape_cast %320 : vector<1x1x128xf32> to vector<128xf32>
    %c11 = arith.constant 11 : index
    %c6_138 = arith.constant 6 : index
    %c0_139 = arith.constant 0 : index
    %322 = vector.load %arg6[%c11, %c6_138, %c0_139] : memref<20x32x128xf32, #tpu.memory_space<vmem>>, vector<8x16x128xf32>
    %323 = vector.shape_cast %321 : vector<128xf32> to vector<1x1x128xf32>
    %324 = vector.broadcast %323 : vector<1x1x128xf32> to vector<8x16x128xf32>
    %325 = arith.mulf %324, %322 : vector<8x16x128xf32>
    %326 = arith.addf %319, %325 : vector<8x16x128xf32>
    %327 = vector.extract_strided_slice %6 {offsets = [3, 1, 0], sizes = [1, 1, 128], strides = [1, 1, 1]} : vector<5x5x128xf32> to vector<1x1x128xf32>
    %328 = vector.shape_cast %327 : vector<1x1x128xf32> to vector<128xf32>
    %c11_140 = arith.constant 11 : index
    %c7_141 = arith.constant 7 : index
    %c0_142 = arith.constant 0 : index
    %329 = vector.load %arg6[%c11_140, %c7_141, %c0_142] : memref<20x32x128xf32, #tpu.memory_space<vmem>>, vector<8x16x128xf32>
    %330 = vector.shape_cast %328 : vector<128xf32> to vector<1x1x128xf32>
    %331 = vector.broadcast %330 : vector<1x1x128xf32> to vector<8x16x128xf32>
    %332 = arith.mulf %331, %329 : vector<8x16x128xf32>
    %333 = arith.addf %326, %332 : vector<8x16x128xf32>
    %334 = vector.extract_strided_slice %6 {offsets = [3, 2, 0], sizes = [1, 1, 128], strides = [1, 1, 1]} : vector<5x5x128xf32> to vector<1x1x128xf32>
    %335 = vector.shape_cast %334 : vector<1x1x128xf32> to vector<128xf32>
    %c11_143 = arith.constant 11 : index
    %c8_144 = arith.constant 8 : index
    %c0_145 = arith.constant 0 : index
    %336 = vector.load %arg6[%c11_143, %c8_144, %c0_145] : memref<20x32x128xf32, #tpu.memory_space<vmem>>, vector<8x16x128xf32>
    %337 = vector.shape_cast %335 : vector<128xf32> to vector<1x1x128xf32>
    %338 = vector.broadcast %337 : vector<1x1x128xf32> to vector<8x16x128xf32>
    %339 = arith.mulf %338, %336 : vector<8x16x128xf32>
    %340 = arith.addf %333, %339 : vector<8x16x128xf32>
    %341 = vector.extract_strided_slice %6 {offsets = [3, 3, 0], sizes = [1, 1, 128], strides = [1, 1, 1]} : vector<5x5x128xf32> to vector<1x1x128xf32>
    %342 = vector.shape_cast %341 : vector<1x1x128xf32> to vector<128xf32>
    %c11_146 = arith.constant 11 : index
    %c9_147 = arith.constant 9 : index
    %c0_148 = arith.constant 0 : index
    %343 = vector.load %arg6[%c11_146, %c9_147, %c0_148] : memref<20x32x128xf32, #tpu.memory_space<vmem>>, vector<8x16x128xf32>
    %344 = vector.shape_cast %342 : vector<128xf32> to vector<1x1x128xf32>
    %345 = vector.broadcast %344 : vector<1x1x128xf32> to vector<8x16x128xf32>
    %346 = arith.mulf %345, %343 : vector<8x16x128xf32>
    %347 = arith.addf %340, %346 : vector<8x16x128xf32>
    %348 = vector.extract_strided_slice %6 {offsets = [3, 4, 0], sizes = [1, 1, 128], strides = [1, 1, 1]} : vector<5x5x128xf32> to vector<1x1x128xf32>
    %349 = vector.shape_cast %348 : vector<1x1x128xf32> to vector<128xf32>
    %c11_149 = arith.constant 11 : index
    %c10_150 = arith.constant 10 : index
    %c0_151 = arith.constant 0 : index
    %350 = vector.load %arg6[%c11_149, %c10_150, %c0_151] : memref<20x32x128xf32, #tpu.memory_space<vmem>>, vector<8x16x128xf32>
    %351 = vector.shape_cast %349 : vector<128xf32> to vector<1x1x128xf32>
    %352 = vector.broadcast %351 : vector<1x1x128xf32> to vector<8x16x128xf32>
    %353 = arith.mulf %352, %350 : vector<8x16x128xf32>
    %354 = arith.addf %347, %353 : vector<8x16x128xf32>
    %355 = vector.extract_strided_slice %6 {offsets = [4, 0, 0], sizes = [1, 1, 128], strides = [1, 1, 1]} : vector<5x5x128xf32> to vector<1x1x128xf32>
    %356 = vector.shape_cast %355 : vector<1x1x128xf32> to vector<128xf32>
    %c12 = arith.constant 12 : index
    %c6_152 = arith.constant 6 : index
    %c0_153 = arith.constant 0 : index
    %357 = vector.load %arg6[%c12, %c6_152, %c0_153] : memref<20x32x128xf32, #tpu.memory_space<vmem>>, vector<8x16x128xf32>
    %358 = vector.shape_cast %356 : vector<128xf32> to vector<1x1x128xf32>
    %359 = vector.broadcast %358 : vector<1x1x128xf32> to vector<8x16x128xf32>
    %360 = arith.mulf %359, %357 : vector<8x16x128xf32>
    %361 = arith.addf %354, %360 : vector<8x16x128xf32>
    %362 = vector.extract_strided_slice %6 {offsets = [4, 1, 0], sizes = [1, 1, 128], strides = [1, 1, 1]} : vector<5x5x128xf32> to vector<1x1x128xf32>
    %363 = vector.shape_cast %362 : vector<1x1x128xf32> to vector<128xf32>
    %c12_154 = arith.constant 12 : index
    %c7_155 = arith.constant 7 : index
    %c0_156 = arith.constant 0 : index
    %364 = vector.load %arg6[%c12_154, %c7_155, %c0_156] : memref<20x32x128xf32, #tpu.memory_space<vmem>>, vector<8x16x128xf32>
    %365 = vector.shape_cast %363 : vector<128xf32> to vector<1x1x128xf32>
    %366 = vector.broadcast %365 : vector<1x1x128xf32> to vector<8x16x128xf32>
    %367 = arith.mulf %366, %364 : vector<8x16x128xf32>
    %368 = arith.addf %361, %367 : vector<8x16x128xf32>
    %369 = vector.extract_strided_slice %6 {offsets = [4, 2, 0], sizes = [1, 1, 128], strides = [1, 1, 1]} : vector<5x5x128xf32> to vector<1x1x128xf32>
    %370 = vector.shape_cast %369 : vector<1x1x128xf32> to vector<128xf32>
    %c12_157 = arith.constant 12 : index
    %c8_158 = arith.constant 8 : index
    %c0_159 = arith.constant 0 : index
    %371 = vector.load %arg6[%c12_157, %c8_158, %c0_159] : memref<20x32x128xf32, #tpu.memory_space<vmem>>, vector<8x16x128xf32>
    %372 = vector.shape_cast %370 : vector<128xf32> to vector<1x1x128xf32>
    %373 = vector.broadcast %372 : vector<1x1x128xf32> to vector<8x16x128xf32>
    %374 = arith.mulf %373, %371 : vector<8x16x128xf32>
    %375 = arith.addf %368, %374 : vector<8x16x128xf32>
    %376 = vector.extract_strided_slice %6 {offsets = [4, 3, 0], sizes = [1, 1, 128], strides = [1, 1, 1]} : vector<5x5x128xf32> to vector<1x1x128xf32>
    %377 = vector.shape_cast %376 : vector<1x1x128xf32> to vector<128xf32>
    %c12_160 = arith.constant 12 : index
    %c9_161 = arith.constant 9 : index
    %c0_162 = arith.constant 0 : index
    %378 = vector.load %arg6[%c12_160, %c9_161, %c0_162] : memref<20x32x128xf32, #tpu.memory_space<vmem>>, vector<8x16x128xf32>
    %379 = vector.shape_cast %377 : vector<128xf32> to vector<1x1x128xf32>
    %380 = vector.broadcast %379 : vector<1x1x128xf32> to vector<8x16x128xf32>
    %381 = arith.mulf %380, %378 : vector<8x16x128xf32>
    %382 = arith.addf %375, %381 : vector<8x16x128xf32>
    %383 = vector.extract_strided_slice %6 {offsets = [4, 4, 0], sizes = [1, 1, 128], strides = [1, 1, 1]} : vector<5x5x128xf32> to vector<1x1x128xf32>
    %384 = vector.shape_cast %383 : vector<1x1x128xf32> to vector<128xf32>
    %c12_163 = arith.constant 12 : index
    %c10_164 = arith.constant 10 : index
    %c0_165 = arith.constant 0 : index
    %385 = vector.load %arg6[%c12_163, %c10_164, %c0_165] : memref<20x32x128xf32, #tpu.memory_space<vmem>>, vector<8x16x128xf32>
    %386 = vector.shape_cast %384 : vector<128xf32> to vector<1x1x128xf32>
    %387 = vector.broadcast %386 : vector<1x1x128xf32> to vector<8x16x128xf32>
    %388 = arith.mulf %387, %385 : vector<8x16x128xf32>
    %389 = arith.addf %382, %388 : vector<8x16x128xf32>
    %390 = vector.shape_cast %8 : vector<128xf32> to vector<1x1x128xf32>
    %391 = vector.broadcast %390 : vector<1x1x128xf32> to vector<8x16x128xf32>
    %392 = arith.addf %389, %391 : vector<8x16x128xf32>
    %cst_166 = arith.constant 5.000000e-01 : f32
    %393 = vector.broadcast %cst_166 : f32 to vector<8x16x128xf32>
    %394 = arith.mulf %393, %392 : vector<8x16x128xf32>
    %cst_167 = arith.constant 4.471500e-02 : f32
    %395 = vector.broadcast %cst_167 : f32 to vector<8x16x128xf32>
    %396 = arith.mulf %395, %392 : vector<8x16x128xf32>
    %397 = arith.mulf %396, %392 : vector<8x16x128xf32>
    %398 = arith.mulf %397, %392 : vector<8x16x128xf32>
    %399 = arith.addf %392, %398 : vector<8x16x128xf32>
    %cst_168 = arith.constant 0.797884583 : f32
    %400 = vector.broadcast %cst_168 : f32 to vector<8x16x128xf32>
    %401 = arith.mulf %400, %399 : vector<8x16x128xf32>
    %402 = math.tanh %401 : vector<8x16x128xf32>
    %cst_169 = arith.constant 1.000000e+00 : f32
    %403 = vector.broadcast %cst_169 : f32 to vector<8x16x128xf32>
    %404 = arith.addf %403, %402 : vector<8x16x128xf32>
    %405 = arith.mulf %394, %404 : vector<8x16x128xf32>
    %cst_170 = arith.constant 5.000000e-01 : f32
    %406 = vector.broadcast %cst_170 : f32 to vector<8x16x128xf32>
    %407 = arith.mulf %406, %405 : vector<8x16x128xf32>
    %cst_171 = arith.constant 4.471500e-02 : f32
    %408 = vector.broadcast %cst_171 : f32 to vector<8x16x128xf32>
    %409 = arith.mulf %408, %405 : vector<8x16x128xf32>
    %410 = arith.mulf %409, %405 : vector<8x16x128xf32>
    %411 = arith.mulf %410, %405 : vector<8x16x128xf32>
    %412 = arith.addf %405, %411 : vector<8x16x128xf32>
    %cst_172 = arith.constant 0.797884583 : f32
    %413 = vector.broadcast %cst_172 : f32 to vector<8x16x128xf32>
    %414 = arith.mulf %413, %412 : vector<8x16x128xf32>
    %415 = math.tanh %414 : vector<8x16x128xf32>
    %cst_173 = arith.constant 1.000000e+00 : f32
    %416 = vector.broadcast %cst_173 : f32 to vector<8x16x128xf32>
    %417 = arith.addf %416, %415 : vector<8x16x128xf32>
    %418 = arith.mulf %407, %417 : vector<8x16x128xf32>
    %419 = arith.truncf %418 : vector<8x16x128xf32> to vector<8x16x128xbf16>
    %c0_174 = arith.constant 0 : index
    %c8_175 = arith.constant 8 : index
    %c0_176 = arith.constant 0 : index
    %c0_177 = arith.constant 0 : index
    %420 = vector.load %arg5[%c0_174, %c8_175, %c0_176, %c0_177] : memref<1x16x16x128xbf16, #tpu.memory_space<vmem>>, vector<1x8x16x128xbf16>
    %421 = vector.shape_cast %420 : vector<1x8x16x128xbf16> to vector<8x16x128xbf16>
    %422 = vector.shape_cast %419 : vector<8x16x128xbf16> to vector<1x8x16x128xbf16>
    tpu.vector_store %arg5[%c0_174, %c8_175, %c0_176, %c0_177], %422 {strides = array<i32>} : memref<1x16x16x128xbf16, #tpu.memory_space<vmem>>, vector<1x8x16x128xbf16>,
    return
  }
  func.func @transform_0(%arg0: i32, %arg1: i32) -> (i32, i32, i32, i32) {
    %c0_i32 = arith.constant 0 : i32
    %c0_i32_0 = arith.constant 0 : i32
    %c0_i32_1 = arith.constant 0 : i32
    return %arg0, %c0_i32, %c0_i32_0, %arg1 : i32, i32, i32, i32
  }
  func.func @transform_1(%arg0: i32, %arg1: i32) -> (i32, i32, i32) {
    %c0_i32 = arith.constant 0 : i32
    %c0_i32_0 = arith.constant 0 : i32
    %c0_i32_1 = arith.constant 0 : i32
    return %c0_i32, %c0_i32_0, %arg1 : i32, i32, i32
  }
  func.func @transform_2(%arg0: i32, %arg1: i32) -> (i32, i32, i32) {
    %c0_i32 = arith.constant 0 : i32
    %c0_i32_0 = arith.constant 0 : i32
    %c0_i32_1 = arith.constant 0 : i32
    return %c0_i32, %c0_i32_0, %arg1 : i32, i32, i32
  }
  func.func @transform_3(%arg0: i32, %arg1: i32) -> (i32, i32, i32, i32) {
    %c0_i32 = arith.constant 0 : i32
    %c0_i32_0 = arith.constant 0 : i32
    %c0_i32_1 = arith.constant 0 : i32
    return %arg0, %c0_i32, %c0_i32_0, %arg1 : i32, i32, i32, i32
  }
}

module attributes {stable_mosaic.version = 11 : i64} {
  func.func @_dwconv_bn_gelu_kernel(%arg0: i32, %arg1: i32, %arg2: memref<1x8x8x128xbf16, #tpu.memory_space<vmem>>, %arg3: memref<5x5x128xf32, #tpu.memory_space<vmem>>, %arg4: memref<1x1x128xf32, #tpu.memory_space<vmem>>, %arg5: memref<1x8x8x128xbf16, #tpu.memory_space<vmem>>, %arg6: memref<12x24x128xf32, #tpu.memory_space<vmem>>) attributes {dimension_semantics = [#tpu.dimension_semantics<parallel>, #tpu.dimension_semantics<parallel>], iteration_bounds = array<i64: 2, 1>, scalar_prefetch = 0 : i64, scratch_operands = 1 : i64, tpu.core_type = #tpu.core_type<tc>, window_params = [{transform_indices = @transform_0, window_bounds = array<i64: 1, 8, 8, 128>}, {transform_indices = @transform_1, window_bounds = array<i64: 5, 5, 128>}, {transform_indices = @transform_2, window_bounds = array<i64: 1, 1, 128>}, {transform_indices = @transform_3, window_bounds = array<i64: 1, 8, 8, 128>}]} {
    %cst = arith.constant 0.000000e+00 : f32
    %0 = vector.broadcast %cst : f32 to vector<12x24x128xf32>
    %c0 = arith.constant 0 : index
    %c0_0 = arith.constant 0 : index
    %c0_1 = arith.constant 0 : index
    %1 = vector.load %arg6[%c0, %c0_0, %c0_1] : memref<12x24x128xf32, #tpu.memory_space<vmem>>, vector<12x24x128xf32>
    tpu.vector_store %arg6[%c0, %c0_0, %c0_1], %0 {strides = array<i32>} : memref<12x24x128xf32, #tpu.memory_space<vmem>>, vector<12x24x128xf32>,
    %c0_2 = arith.constant 0 : index
    %c0_3 = arith.constant 0 : index
    %c0_4 = arith.constant 0 : index
    %c0_5 = arith.constant 0 : index
    %2 = vector.load %arg2[%c0_2, %c0_3, %c0_4, %c0_5] : memref<1x8x8x128xbf16, #tpu.memory_space<vmem>>, vector<1x8x8x128xbf16>
    %3 = vector.shape_cast %2 : vector<1x8x8x128xbf16> to vector<8x8x128xbf16>
    %4 = arith.extf %3 : vector<8x8x128xbf16> to vector<8x8x128xf32>
    %c2 = arith.constant 2 : index
    %c8 = arith.constant 8 : index
    %c0_6 = arith.constant 0 : index
    %5 = vector.load %arg6[%c2, %c8, %c0_6] : memref<12x24x128xf32, #tpu.memory_space<vmem>>, vector<8x8x128xf32>
    tpu.vector_store %arg6[%c2, %c8, %c0_6], %4 {strides = array<i32>} : memref<12x24x128xf32, #tpu.memory_space<vmem>>, vector<8x8x128xf32>,
    %c0_7 = arith.constant 0 : index
    %c0_8 = arith.constant 0 : index
    %c0_9 = arith.constant 0 : index
    %6 = vector.load %arg3[%c0_7, %c0_8, %c0_9] : memref<5x5x128xf32, #tpu.memory_space<vmem>>, vector<5x5x128xf32>
    %c0_10 = arith.constant 0 : index
    %c0_11 = arith.constant 0 : index
    %c0_12 = arith.constant 0 : index
    %7 = vector.load %arg4[%c0_10, %c0_11, %c0_12] : memref<1x1x128xf32, #tpu.memory_space<vmem>>, vector<1x1x128xf32>
    %8 = vector.shape_cast %7 : vector<1x1x128xf32> to vector<128xf32>
    %9 = vector.extract_strided_slice %6 {offsets = [0, 0, 0], sizes = [1, 1, 128], strides = [1, 1, 1]} : vector<5x5x128xf32> to vector<1x1x128xf32>
    %10 = vector.shape_cast %9 : vector<1x1x128xf32> to vector<128xf32>
    %c0_13 = arith.constant 0 : index
    %c6 = arith.constant 6 : index
    %c0_14 = arith.constant 0 : index
    %11 = vector.load %arg6[%c0_13, %c6, %c0_14] : memref<12x24x128xf32, #tpu.memory_space<vmem>>, vector<8x8x128xf32>
    %12 = vector.shape_cast %10 : vector<128xf32> to vector<1x1x128xf32>
    %13 = vector.broadcast %12 : vector<1x1x128xf32> to vector<8x8x128xf32>
    %14 = arith.mulf %13, %11 : vector<8x8x128xf32>
    %15 = vector.extract_strided_slice %6 {offsets = [0, 1, 0], sizes = [1, 1, 128], strides = [1, 1, 1]} : vector<5x5x128xf32> to vector<1x1x128xf32>
    %16 = vector.shape_cast %15 : vector<1x1x128xf32> to vector<128xf32>
    %c0_15 = arith.constant 0 : index
    %c7 = arith.constant 7 : index
    %c0_16 = arith.constant 0 : index
    %17 = vector.load %arg6[%c0_15, %c7, %c0_16] : memref<12x24x128xf32, #tpu.memory_space<vmem>>, vector<8x8x128xf32>
    %18 = vector.shape_cast %16 : vector<128xf32> to vector<1x1x128xf32>
    %19 = vector.broadcast %18 : vector<1x1x128xf32> to vector<8x8x128xf32>
    %20 = arith.mulf %19, %17 : vector<8x8x128xf32>
    %21 = arith.addf %14, %20 : vector<8x8x128xf32>
    %22 = vector.extract_strided_slice %6 {offsets = [0, 2, 0], sizes = [1, 1, 128], strides = [1, 1, 1]} : vector<5x5x128xf32> to vector<1x1x128xf32>
    %23 = vector.shape_cast %22 : vector<1x1x128xf32> to vector<128xf32>
    %c0_17 = arith.constant 0 : index
    %c8_18 = arith.constant 8 : index
    %c0_19 = arith.constant 0 : index
    %24 = vector.load %arg6[%c0_17, %c8_18, %c0_19] : memref<12x24x128xf32, #tpu.memory_space<vmem>>, vector<8x8x128xf32>
    %25 = vector.shape_cast %23 : vector<128xf32> to vector<1x1x128xf32>
    %26 = vector.broadcast %25 : vector<1x1x128xf32> to vector<8x8x128xf32>
    %27 = arith.mulf %26, %24 : vector<8x8x128xf32>
    %28 = arith.addf %21, %27 : vector<8x8x128xf32>
    %29 = vector.extract_strided_slice %6 {offsets = [0, 3, 0], sizes = [1, 1, 128], strides = [1, 1, 1]} : vector<5x5x128xf32> to vector<1x1x128xf32>
    %30 = vector.shape_cast %29 : vector<1x1x128xf32> to vector<128xf32>
    %c0_20 = arith.constant 0 : index
    %c9 = arith.constant 9 : index
    %c0_21 = arith.constant 0 : index
    %31 = vector.load %arg6[%c0_20, %c9, %c0_21] : memref<12x24x128xf32, #tpu.memory_space<vmem>>, vector<8x8x128xf32>
    %32 = vector.shape_cast %30 : vector<128xf32> to vector<1x1x128xf32>
    %33 = vector.broadcast %32 : vector<1x1x128xf32> to vector<8x8x128xf32>
    %34 = arith.mulf %33, %31 : vector<8x8x128xf32>
    %35 = arith.addf %28, %34 : vector<8x8x128xf32>
    %36 = vector.extract_strided_slice %6 {offsets = [0, 4, 0], sizes = [1, 1, 128], strides = [1, 1, 1]} : vector<5x5x128xf32> to vector<1x1x128xf32>
    %37 = vector.shape_cast %36 : vector<1x1x128xf32> to vector<128xf32>
    %c0_22 = arith.constant 0 : index
    %c10 = arith.constant 10 : index
    %c0_23 = arith.constant 0 : index
    %38 = vector.load %arg6[%c0_22, %c10, %c0_23] : memref<12x24x128xf32, #tpu.memory_space<vmem>>, vector<8x8x128xf32>
    %39 = vector.shape_cast %37 : vector<128xf32> to vector<1x1x128xf32>
    %40 = vector.broadcast %39 : vector<1x1x128xf32> to vector<8x8x128xf32>
    %41 = arith.mulf %40, %38 : vector<8x8x128xf32>
    %42 = arith.addf %35, %41 : vector<8x8x128xf32>
    %43 = vector.extract_strided_slice %6 {offsets = [1, 0, 0], sizes = [1, 1, 128], strides = [1, 1, 1]} : vector<5x5x128xf32> to vector<1x1x128xf32>
    %44 = vector.shape_cast %43 : vector<1x1x128xf32> to vector<128xf32>
    %c1 = arith.constant 1 : index
    %c6_24 = arith.constant 6 : index
    %c0_25 = arith.constant 0 : index
    %45 = vector.load %arg6[%c1, %c6_24, %c0_25] : memref<12x24x128xf32, #tpu.memory_space<vmem>>, vector<8x8x128xf32>
    %46 = vector.shape_cast %44 : vector<128xf32> to vector<1x1x128xf32>
    %47 = vector.broadcast %46 : vector<1x1x128xf32> to vector<8x8x128xf32>
    %48 = arith.mulf %47, %45 : vector<8x8x128xf32>
    %49 = arith.addf %42, %48 : vector<8x8x128xf32>
    %50 = vector.extract_strided_slice %6 {offsets = [1, 1, 0], sizes = [1, 1, 128], strides = [1, 1, 1]} : vector<5x5x128xf32> to vector<1x1x128xf32>
    %51 = vector.shape_cast %50 : vector<1x1x128xf32> to vector<128xf32>
    %c1_26 = arith.constant 1 : index
    %c7_27 = arith.constant 7 : index
    %c0_28 = arith.constant 0 : index
    %52 = vector.load %arg6[%c1_26, %c7_27, %c0_28] : memref<12x24x128xf32, #tpu.memory_space<vmem>>, vector<8x8x128xf32>
    %53 = vector.shape_cast %51 : vector<128xf32> to vector<1x1x128xf32>
    %54 = vector.broadcast %53 : vector<1x1x128xf32> to vector<8x8x128xf32>
    %55 = arith.mulf %54, %52 : vector<8x8x128xf32>
    %56 = arith.addf %49, %55 : vector<8x8x128xf32>
    %57 = vector.extract_strided_slice %6 {offsets = [1, 2, 0], sizes = [1, 1, 128], strides = [1, 1, 1]} : vector<5x5x128xf32> to vector<1x1x128xf32>
    %58 = vector.shape_cast %57 : vector<1x1x128xf32> to vector<128xf32>
    %c1_29 = arith.constant 1 : index
    %c8_30 = arith.constant 8 : index
    %c0_31 = arith.constant 0 : index
    %59 = vector.load %arg6[%c1_29, %c8_30, %c0_31] : memref<12x24x128xf32, #tpu.memory_space<vmem>>, vector<8x8x128xf32>
    %60 = vector.shape_cast %58 : vector<128xf32> to vector<1x1x128xf32>
    %61 = vector.broadcast %60 : vector<1x1x128xf32> to vector<8x8x128xf32>
    %62 = arith.mulf %61, %59 : vector<8x8x128xf32>
    %63 = arith.addf %56, %62 : vector<8x8x128xf32>
    %64 = vector.extract_strided_slice %6 {offsets = [1, 3, 0], sizes = [1, 1, 128], strides = [1, 1, 1]} : vector<5x5x128xf32> to vector<1x1x128xf32>
    %65 = vector.shape_cast %64 : vector<1x1x128xf32> to vector<128xf32>
    %c1_32 = arith.constant 1 : index
    %c9_33 = arith.constant 9 : index
    %c0_34 = arith.constant 0 : index
    %66 = vector.load %arg6[%c1_32, %c9_33, %c0_34] : memref<12x24x128xf32, #tpu.memory_space<vmem>>, vector<8x8x128xf32>
    %67 = vector.shape_cast %65 : vector<128xf32> to vector<1x1x128xf32>
    %68 = vector.broadcast %67 : vector<1x1x128xf32> to vector<8x8x128xf32>
    %69 = arith.mulf %68, %66 : vector<8x8x128xf32>
    %70 = arith.addf %63, %69 : vector<8x8x128xf32>
    %71 = vector.extract_strided_slice %6 {offsets = [1, 4, 0], sizes = [1, 1, 128], strides = [1, 1, 1]} : vector<5x5x128xf32> to vector<1x1x128xf32>
    %72 = vector.shape_cast %71 : vector<1x1x128xf32> to vector<128xf32>
    %c1_35 = arith.constant 1 : index
    %c10_36 = arith.constant 10 : index
    %c0_37 = arith.constant 0 : index
    %73 = vector.load %arg6[%c1_35, %c10_36, %c0_37] : memref<12x24x128xf32, #tpu.memory_space<vmem>>, vector<8x8x128xf32>
    %74 = vector.shape_cast %72 : vector<128xf32> to vector<1x1x128xf32>
    %75 = vector.broadcast %74 : vector<1x1x128xf32> to vector<8x8x128xf32>
    %76 = arith.mulf %75, %73 : vector<8x8x128xf32>
    %77 = arith.addf %70, %76 : vector<8x8x128xf32>
    %78 = vector.extract_strided_slice %6 {offsets = [2, 0, 0], sizes = [1, 1, 128], strides = [1, 1, 1]} : vector<5x5x128xf32> to vector<1x1x128xf32>
    %79 = vector.shape_cast %78 : vector<1x1x128xf32> to vector<128xf32>
    %c2_38 = arith.constant 2 : index
    %c6_39 = arith.constant 6 : index
    %c0_40 = arith.constant 0 : index
    %80 = vector.load %arg6[%c2_38, %c6_39, %c0_40] : memref<12x24x128xf32, #tpu.memory_space<vmem>>, vector<8x8x128xf32>
    %81 = vector.shape_cast %79 : vector<128xf32> to vector<1x1x128xf32>
    %82 = vector.broadcast %81 : vector<1x1x128xf32> to vector<8x8x128xf32>
    %83 = arith.mulf %82, %80 : vector<8x8x128xf32>
    %84 = arith.addf %77, %83 : vector<8x8x128xf32>
    %85 = vector.extract_strided_slice %6 {offsets = [2, 1, 0], sizes = [1, 1, 128], strides = [1, 1, 1]} : vector<5x5x128xf32> to vector<1x1x128xf32>
    %86 = vector.shape_cast %85 : vector<1x1x128xf32> to vector<128xf32>
    %c2_41 = arith.constant 2 : index
    %c7_42 = arith.constant 7 : index
    %c0_43 = arith.constant 0 : index
    %87 = vector.load %arg6[%c2_41, %c7_42, %c0_43] : memref<12x24x128xf32, #tpu.memory_space<vmem>>, vector<8x8x128xf32>
    %88 = vector.shape_cast %86 : vector<128xf32> to vector<1x1x128xf32>
    %89 = vector.broadcast %88 : vector<1x1x128xf32> to vector<8x8x128xf32>
    %90 = arith.mulf %89, %87 : vector<8x8x128xf32>
    %91 = arith.addf %84, %90 : vector<8x8x128xf32>
    %92 = vector.extract_strided_slice %6 {offsets = [2, 2, 0], sizes = [1, 1, 128], strides = [1, 1, 1]} : vector<5x5x128xf32> to vector<1x1x128xf32>
    %93 = vector.shape_cast %92 : vector<1x1x128xf32> to vector<128xf32>
    %c2_44 = arith.constant 2 : index
    %c8_45 = arith.constant 8 : index
    %c0_46 = arith.constant 0 : index
    %94 = vector.load %arg6[%c2_44, %c8_45, %c0_46] : memref<12x24x128xf32, #tpu.memory_space<vmem>>, vector<8x8x128xf32>
    %95 = vector.shape_cast %93 : vector<128xf32> to vector<1x1x128xf32>
    %96 = vector.broadcast %95 : vector<1x1x128xf32> to vector<8x8x128xf32>
    %97 = arith.mulf %96, %94 : vector<8x8x128xf32>
    %98 = arith.addf %91, %97 : vector<8x8x128xf32>
    %99 = vector.extract_strided_slice %6 {offsets = [2, 3, 0], sizes = [1, 1, 128], strides = [1, 1, 1]} : vector<5x5x128xf32> to vector<1x1x128xf32>
    %100 = vector.shape_cast %99 : vector<1x1x128xf32> to vector<128xf32>
    %c2_47 = arith.constant 2 : index
    %c9_48 = arith.constant 9 : index
    %c0_49 = arith.constant 0 : index
    %101 = vector.load %arg6[%c2_47, %c9_48, %c0_49] : memref<12x24x128xf32, #tpu.memory_space<vmem>>, vector<8x8x128xf32>
    %102 = vector.shape_cast %100 : vector<128xf32> to vector<1x1x128xf32>
    %103 = vector.broadcast %102 : vector<1x1x128xf32> to vector<8x8x128xf32>
    %104 = arith.mulf %103, %101 : vector<8x8x128xf32>
    %105 = arith.addf %98, %104 : vector<8x8x128xf32>
    %106 = vector.extract_strided_slice %6 {offsets = [2, 4, 0], sizes = [1, 1, 128], strides = [1, 1, 1]} : vector<5x5x128xf32> to vector<1x1x128xf32>
    %107 = vector.shape_cast %106 : vector<1x1x128xf32> to vector<128xf32>
    %c2_50 = arith.constant 2 : index
    %c10_51 = arith.constant 10 : index
    %c0_52 = arith.constant 0 : index
    %108 = vector.load %arg6[%c2_50, %c10_51, %c0_52] : memref<12x24x128xf32, #tpu.memory_space<vmem>>, vector<8x8x128xf32>
    %109 = vector.shape_cast %107 : vector<128xf32> to vector<1x1x128xf32>
    %110 = vector.broadcast %109 : vector<1x1x128xf32> to vector<8x8x128xf32>
    %111 = arith.mulf %110, %108 : vector<8x8x128xf32>
    %112 = arith.addf %105, %111 : vector<8x8x128xf32>
    %113 = vector.extract_strided_slice %6 {offsets = [3, 0, 0], sizes = [1, 1, 128], strides = [1, 1, 1]} : vector<5x5x128xf32> to vector<1x1x128xf32>
    %114 = vector.shape_cast %113 : vector<1x1x128xf32> to vector<128xf32>
    %c3 = arith.constant 3 : index
    %c6_53 = arith.constant 6 : index
    %c0_54 = arith.constant 0 : index
    %115 = vector.load %arg6[%c3, %c6_53, %c0_54] : memref<12x24x128xf32, #tpu.memory_space<vmem>>, vector<8x8x128xf32>
    %116 = vector.shape_cast %114 : vector<128xf32> to vector<1x1x128xf32>
    %117 = vector.broadcast %116 : vector<1x1x128xf32> to vector<8x8x128xf32>
    %118 = arith.mulf %117, %115 : vector<8x8x128xf32>
    %119 = arith.addf %112, %118 : vector<8x8x128xf32>
    %120 = vector.extract_strided_slice %6 {offsets = [3, 1, 0], sizes = [1, 1, 128], strides = [1, 1, 1]} : vector<5x5x128xf32> to vector<1x1x128xf32>
    %121 = vector.shape_cast %120 : vector<1x1x128xf32> to vector<128xf32>
    %c3_55 = arith.constant 3 : index
    %c7_56 = arith.constant 7 : index
    %c0_57 = arith.constant 0 : index
    %122 = vector.load %arg6[%c3_55, %c7_56, %c0_57] : memref<12x24x128xf32, #tpu.memory_space<vmem>>, vector<8x8x128xf32>
    %123 = vector.shape_cast %121 : vector<128xf32> to vector<1x1x128xf32>
    %124 = vector.broadcast %123 : vector<1x1x128xf32> to vector<8x8x128xf32>
    %125 = arith.mulf %124, %122 : vector<8x8x128xf32>
    %126 = arith.addf %119, %125 : vector<8x8x128xf32>
    %127 = vector.extract_strided_slice %6 {offsets = [3, 2, 0], sizes = [1, 1, 128], strides = [1, 1, 1]} : vector<5x5x128xf32> to vector<1x1x128xf32>
    %128 = vector.shape_cast %127 : vector<1x1x128xf32> to vector<128xf32>
    %c3_58 = arith.constant 3 : index
    %c8_59 = arith.constant 8 : index
    %c0_60 = arith.constant 0 : index
    %129 = vector.load %arg6[%c3_58, %c8_59, %c0_60] : memref<12x24x128xf32, #tpu.memory_space<vmem>>, vector<8x8x128xf32>
    %130 = vector.shape_cast %128 : vector<128xf32> to vector<1x1x128xf32>
    %131 = vector.broadcast %130 : vector<1x1x128xf32> to vector<8x8x128xf32>
    %132 = arith.mulf %131, %129 : vector<8x8x128xf32>
    %133 = arith.addf %126, %132 : vector<8x8x128xf32>
    %134 = vector.extract_strided_slice %6 {offsets = [3, 3, 0], sizes = [1, 1, 128], strides = [1, 1, 1]} : vector<5x5x128xf32> to vector<1x1x128xf32>
    %135 = vector.shape_cast %134 : vector<1x1x128xf32> to vector<128xf32>
    %c3_61 = arith.constant 3 : index
    %c9_62 = arith.constant 9 : index
    %c0_63 = arith.constant 0 : index
    %136 = vector.load %arg6[%c3_61, %c9_62, %c0_63] : memref<12x24x128xf32, #tpu.memory_space<vmem>>, vector<8x8x128xf32>
    %137 = vector.shape_cast %135 : vector<128xf32> to vector<1x1x128xf32>
    %138 = vector.broadcast %137 : vector<1x1x128xf32> to vector<8x8x128xf32>
    %139 = arith.mulf %138, %136 : vector<8x8x128xf32>
    %140 = arith.addf %133, %139 : vector<8x8x128xf32>
    %141 = vector.extract_strided_slice %6 {offsets = [3, 4, 0], sizes = [1, 1, 128], strides = [1, 1, 1]} : vector<5x5x128xf32> to vector<1x1x128xf32>
    %142 = vector.shape_cast %141 : vector<1x1x128xf32> to vector<128xf32>
    %c3_64 = arith.constant 3 : index
    %c10_65 = arith.constant 10 : index
    %c0_66 = arith.constant 0 : index
    %143 = vector.load %arg6[%c3_64, %c10_65, %c0_66] : memref<12x24x128xf32, #tpu.memory_space<vmem>>, vector<8x8x128xf32>
    %144 = vector.shape_cast %142 : vector<128xf32> to vector<1x1x128xf32>
    %145 = vector.broadcast %144 : vector<1x1x128xf32> to vector<8x8x128xf32>
    %146 = arith.mulf %145, %143 : vector<8x8x128xf32>
    %147 = arith.addf %140, %146 : vector<8x8x128xf32>
    %148 = vector.extract_strided_slice %6 {offsets = [4, 0, 0], sizes = [1, 1, 128], strides = [1, 1, 1]} : vector<5x5x128xf32> to vector<1x1x128xf32>
    %149 = vector.shape_cast %148 : vector<1x1x128xf32> to vector<128xf32>
    %c4 = arith.constant 4 : index
    %c6_67 = arith.constant 6 : index
    %c0_68 = arith.constant 0 : index
    %150 = vector.load %arg6[%c4, %c6_67, %c0_68] : memref<12x24x128xf32, #tpu.memory_space<vmem>>, vector<8x8x128xf32>
    %151 = vector.shape_cast %149 : vector<128xf32> to vector<1x1x128xf32>
    %152 = vector.broadcast %151 : vector<1x1x128xf32> to vector<8x8x128xf32>
    %153 = arith.mulf %152, %150 : vector<8x8x128xf32>
    %154 = arith.addf %147, %153 : vector<8x8x128xf32>
    %155 = vector.extract_strided_slice %6 {offsets = [4, 1, 0], sizes = [1, 1, 128], strides = [1, 1, 1]} : vector<5x5x128xf32> to vector<1x1x128xf32>
    %156 = vector.shape_cast %155 : vector<1x1x128xf32> to vector<128xf32>
    %c4_69 = arith.constant 4 : index
    %c7_70 = arith.constant 7 : index
    %c0_71 = arith.constant 0 : index
    %157 = vector.load %arg6[%c4_69, %c7_70, %c0_71] : memref<12x24x128xf32, #tpu.memory_space<vmem>>, vector<8x8x128xf32>
    %158 = vector.shape_cast %156 : vector<128xf32> to vector<1x1x128xf32>
    %159 = vector.broadcast %158 : vector<1x1x128xf32> to vector<8x8x128xf32>
    %160 = arith.mulf %159, %157 : vector<8x8x128xf32>
    %161 = arith.addf %154, %160 : vector<8x8x128xf32>
    %162 = vector.extract_strided_slice %6 {offsets = [4, 2, 0], sizes = [1, 1, 128], strides = [1, 1, 1]} : vector<5x5x128xf32> to vector<1x1x128xf32>
    %163 = vector.shape_cast %162 : vector<1x1x128xf32> to vector<128xf32>
    %c4_72 = arith.constant 4 : index
    %c8_73 = arith.constant 8 : index
    %c0_74 = arith.constant 0 : index
    %164 = vector.load %arg6[%c4_72, %c8_73, %c0_74] : memref<12x24x128xf32, #tpu.memory_space<vmem>>, vector<8x8x128xf32>
    %165 = vector.shape_cast %163 : vector<128xf32> to vector<1x1x128xf32>
    %166 = vector.broadcast %165 : vector<1x1x128xf32> to vector<8x8x128xf32>
    %167 = arith.mulf %166, %164 : vector<8x8x128xf32>
    %168 = arith.addf %161, %167 : vector<8x8x128xf32>
    %169 = vector.extract_strided_slice %6 {offsets = [4, 3, 0], sizes = [1, 1, 128], strides = [1, 1, 1]} : vector<5x5x128xf32> to vector<1x1x128xf32>
    %170 = vector.shape_cast %169 : vector<1x1x128xf32> to vector<128xf32>
    %c4_75 = arith.constant 4 : index
    %c9_76 = arith.constant 9 : index
    %c0_77 = arith.constant 0 : index
    %171 = vector.load %arg6[%c4_75, %c9_76, %c0_77] : memref<12x24x128xf32, #tpu.memory_space<vmem>>, vector<8x8x128xf32>
    %172 = vector.shape_cast %170 : vector<128xf32> to vector<1x1x128xf32>
    %173 = vector.broadcast %172 : vector<1x1x128xf32> to vector<8x8x128xf32>
    %174 = arith.mulf %173, %171 : vector<8x8x128xf32>
    %175 = arith.addf %168, %174 : vector<8x8x128xf32>
    %176 = vector.extract_strided_slice %6 {offsets = [4, 4, 0], sizes = [1, 1, 128], strides = [1, 1, 1]} : vector<5x5x128xf32> to vector<1x1x128xf32>
    %177 = vector.shape_cast %176 : vector<1x1x128xf32> to vector<128xf32>
    %c4_78 = arith.constant 4 : index
    %c10_79 = arith.constant 10 : index
    %c0_80 = arith.constant 0 : index
    %178 = vector.load %arg6[%c4_78, %c10_79, %c0_80] : memref<12x24x128xf32, #tpu.memory_space<vmem>>, vector<8x8x128xf32>
    %179 = vector.shape_cast %177 : vector<128xf32> to vector<1x1x128xf32>
    %180 = vector.broadcast %179 : vector<1x1x128xf32> to vector<8x8x128xf32>
    %181 = arith.mulf %180, %178 : vector<8x8x128xf32>
    %182 = arith.addf %175, %181 : vector<8x8x128xf32>
    %183 = vector.shape_cast %8 : vector<128xf32> to vector<1x1x128xf32>
    %184 = vector.broadcast %183 : vector<1x1x128xf32> to vector<8x8x128xf32>
    %185 = arith.addf %182, %184 : vector<8x8x128xf32>
    %cst_81 = arith.constant 5.000000e-01 : f32
    %186 = vector.broadcast %cst_81 : f32 to vector<8x8x128xf32>
    %187 = arith.mulf %186, %185 : vector<8x8x128xf32>
    %cst_82 = arith.constant 4.471500e-02 : f32
    %188 = vector.broadcast %cst_82 : f32 to vector<8x8x128xf32>
    %189 = arith.mulf %188, %185 : vector<8x8x128xf32>
    %190 = arith.mulf %189, %185 : vector<8x8x128xf32>
    %191 = arith.mulf %190, %185 : vector<8x8x128xf32>
    %192 = arith.addf %185, %191 : vector<8x8x128xf32>
    %cst_83 = arith.constant 0.797884583 : f32
    %193 = vector.broadcast %cst_83 : f32 to vector<8x8x128xf32>
    %194 = arith.mulf %193, %192 : vector<8x8x128xf32>
    %195 = math.tanh %194 : vector<8x8x128xf32>
    %cst_84 = arith.constant 1.000000e+00 : f32
    %196 = vector.broadcast %cst_84 : f32 to vector<8x8x128xf32>
    %197 = arith.addf %196, %195 : vector<8x8x128xf32>
    %198 = arith.mulf %187, %197 : vector<8x8x128xf32>
    %cst_85 = arith.constant 5.000000e-01 : f32
    %199 = vector.broadcast %cst_85 : f32 to vector<8x8x128xf32>
    %200 = arith.mulf %199, %198 : vector<8x8x128xf32>
    %cst_86 = arith.constant 4.471500e-02 : f32
    %201 = vector.broadcast %cst_86 : f32 to vector<8x8x128xf32>
    %202 = arith.mulf %201, %198 : vector<8x8x128xf32>
    %203 = arith.mulf %202, %198 : vector<8x8x128xf32>
    %204 = arith.mulf %203, %198 : vector<8x8x128xf32>
    %205 = arith.addf %198, %204 : vector<8x8x128xf32>
    %cst_87 = arith.constant 0.797884583 : f32
    %206 = vector.broadcast %cst_87 : f32 to vector<8x8x128xf32>
    %207 = arith.mulf %206, %205 : vector<8x8x128xf32>
    %208 = math.tanh %207 : vector<8x8x128xf32>
    %cst_88 = arith.constant 1.000000e+00 : f32
    %209 = vector.broadcast %cst_88 : f32 to vector<8x8x128xf32>
    %210 = arith.addf %209, %208 : vector<8x8x128xf32>
    %211 = arith.mulf %200, %210 : vector<8x8x128xf32>
    %212 = arith.truncf %211 : vector<8x8x128xf32> to vector<8x8x128xbf16>
    %c0_89 = arith.constant 0 : index
    %c0_90 = arith.constant 0 : index
    %c0_91 = arith.constant 0 : index
    %c0_92 = arith.constant 0 : index
    %213 = vector.load %arg5[%c0_89, %c0_90, %c0_91, %c0_92] : memref<1x8x8x128xbf16, #tpu.memory_space<vmem>>, vector<1x8x8x128xbf16>
    %214 = vector.shape_cast %213 : vector<1x8x8x128xbf16> to vector<8x8x128xbf16>
    %215 = vector.shape_cast %212 : vector<8x8x128xbf16> to vector<1x8x8x128xbf16>
    tpu.vector_store %arg5[%c0_89, %c0_90, %c0_91, %c0_92], %215 {strides = array<i32>} : memref<1x8x8x128xbf16, #tpu.memory_space<vmem>>, vector<1x8x8x128xbf16>,
    return
  }
  func.func @transform_0(%arg0: i32, %arg1: i32) -> (i32, i32, i32, i32) {
    %c0_i32 = arith.constant 0 : i32
    %c0_i32_0 = arith.constant 0 : i32
    %c0_i32_1 = arith.constant 0 : i32
    return %arg0, %c0_i32, %c0_i32_0, %arg1 : i32, i32, i32, i32
  }
  func.func @transform_1(%arg0: i32, %arg1: i32) -> (i32, i32, i32) {
    %c0_i32 = arith.constant 0 : i32
    %c0_i32_0 = arith.constant 0 : i32
    %c0_i32_1 = arith.constant 0 : i32
    return %c0_i32, %c0_i32_0, %arg1 : i32, i32, i32
  }
  func.func @transform_2(%arg0: i32, %arg1: i32) -> (i32, i32, i32) {
    %c0_i32 = arith.constant 0 : i32
    %c0_i32_0 = arith.constant 0 : i32
    %c0_i32_1 = arith.constant 0 : i32
    return %c0_i32, %c0_i32_0, %arg1 : i32, i32, i32
  }
  func.func @transform_3(%arg0: i32, %arg1: i32) -> (i32, i32, i32, i32) {
    %c0_i32 = arith.constant 0 : i32
    %c0_i32_0 = arith.constant 0 : i32
    %c0_i32_1 = arith.constant 0 : i32
    return %arg0, %c0_i32, %c0_i32_0, %arg1 : i32, i32, i32, i32
  }
}

module attributes {stable_mosaic.version = 11 : i64} {
  func.func @_linear_kernel(%arg0: i32, %arg1: memref<128x128xbf16, #tpu.memory_space<vmem>>, %arg2: memref<128x64xbf16, #tpu.memory_space<vmem>>, %arg3: memref<1x64xf32, #tpu.memory_space<vmem>>, %arg4: memref<128x64xf32, #tpu.memory_space<vmem>>) attributes {dimension_semantics = [#tpu.dimension_semantics<parallel>], iteration_bounds = array<i64: 1>, scalar_prefetch = 0 : i64, scratch_operands = 0 : i64, tpu.core_type = #tpu.core_type<tc>, window_params = [{transform_indices = @transform_0, window_bounds = array<i64: 128, 128>}, {pipeline_mode = #tpu.pipeline_mode<synchronous>, transform_indices = @transform_1, window_bounds = array<i64: 128, 64>}, {pipeline_mode = #tpu.pipeline_mode<synchronous>, transform_indices = @transform_2, window_bounds = array<i64: 1, 64>}, {transform_indices = @transform_3, window_bounds = array<i64: 128, 64>}]} {
    %c0 = arith.constant 0 : index
    %c0_0 = arith.constant 0 : index
    %0 = vector.load %arg1[%c0, %c0_0] : memref<128x128xbf16, #tpu.memory_space<vmem>>, vector<128x128xbf16>
    %c0_1 = arith.constant 0 : index
    %c0_2 = arith.constant 0 : index
    %1 = vector.load %arg2[%c0_1, %c0_2] : memref<128x64xbf16, #tpu.memory_space<vmem>>, vector<128x64xbf16>
    %cst = arith.constant dense<0.000000e+00> : vector<128x64xf32>
    %2 = tpu.matmul %0, %1, %cst {dimension_numbers = #tpu.dot_dimension_numbers<[1], [0], [0], [1], [0, 0, 1, 1], [], []>} : vector<128x128xbf16>, vector<128x64xbf16>, vector<128x64xf32> -> vector<128x64xf32>
    %c0_3 = arith.constant 0 : index
    %c0_4 = arith.constant 0 : index
    %3 = vector.load %arg3[%c0_3, %c0_4] : memref<1x64xf32, #tpu.memory_space<vmem>>, vector<1x64xf32>
    %4 = vector.broadcast %3 : vector<1x64xf32> to vector<128x64xf32>
    %5 = arith.addf %2, %4 : vector<128x64xf32>
    %c0_5 = arith.constant 0 : index
    %c0_6 = arith.constant 0 : index
    %6 = vector.load %arg4[%c0_5, %c0_6] : memref<128x64xf32, #tpu.memory_space<vmem>>, vector<128x64xf32>
    tpu.vector_store %arg4[%c0_5, %c0_6], %5 {strides = array<i32>} : memref<128x64xf32, #tpu.memory_space<vmem>>, vector<128x64xf32>,
    return
  }
  func.func @transform_0(%arg0: i32) -> (i32, i32) {
    %c0_i32 = arith.constant 0 : i32
    %c0_i32_0 = arith.constant 0 : i32
    return %arg0, %c0_i32 : i32, i32
  }
  func.func @transform_1(%arg0: i32) -> (i32, i32) {
    %c0_i32 = arith.constant 0 : i32
    %c0_i32_0 = arith.constant 0 : i32
    %c0_i32_1 = arith.constant 0 : i32
    return %c0_i32, %c0_i32_0 : i32, i32
  }
  func.func @transform_2(%arg0: i32) -> (i32, i32) {
    %c0_i32 = arith.constant 0 : i32
    %c0_i32_0 = arith.constant 0 : i32
    %c0_i32_1 = arith.constant 0 : i32
    return %c0_i32, %c0_i32_0 : i32, i32
  }
  func.func @transform_3(%arg0: i32) -> (i32, i32) {
    %c0_i32 = arith.constant 0 : i32
    %c0_i32_0 = arith.constant 0 : i32
    return %arg0, %c0_i32 : i32, i32
  }
}

module attributes {stable_mosaic.version = 11 : i64} {
  func.func @_linear_kernel(%arg0: i32, %arg1: memref<128x128xbf16, #tpu.memory_space<vmem>>, %arg2: memref<128x64xbf16, #tpu.memory_space<vmem>>, %arg3: memref<1x64xf32, #tpu.memory_space<vmem>>, %arg4: memref<128x64xf32, #tpu.memory_space<vmem>>) attributes {dimension_semantics = [#tpu.dimension_semantics<parallel>], iteration_bounds = array<i64: 4>, scalar_prefetch = 0 : i64, scratch_operands = 0 : i64, tpu.core_type = #tpu.core_type<tc>, window_params = [{transform_indices = @transform_0, window_bounds = array<i64: 128, 128>}, {pipeline_mode = #tpu.pipeline_mode<synchronous>, transform_indices = @transform_1, window_bounds = array<i64: 128, 64>}, {pipeline_mode = #tpu.pipeline_mode<synchronous>, transform_indices = @transform_2, window_bounds = array<i64: 1, 64>}, {transform_indices = @transform_3, window_bounds = array<i64: 128, 64>}]} {
    %c0 = arith.constant 0 : index
    %c0_0 = arith.constant 0 : index
    %0 = vector.load %arg1[%c0, %c0_0] : memref<128x128xbf16, #tpu.memory_space<vmem>>, vector<128x128xbf16>
    %c0_1 = arith.constant 0 : index
    %c0_2 = arith.constant 0 : index
    %1 = vector.load %arg2[%c0_1, %c0_2] : memref<128x64xbf16, #tpu.memory_space<vmem>>, vector<128x64xbf16>
    %cst = arith.constant dense<0.000000e+00> : vector<128x64xf32>
    %2 = tpu.matmul %0, %1, %cst {dimension_numbers = #tpu.dot_dimension_numbers<[1], [0], [0], [1], [0, 0, 1, 1], [], []>} : vector<128x128xbf16>, vector<128x64xbf16>, vector<128x64xf32> -> vector<128x64xf32>
    %c0_3 = arith.constant 0 : index
    %c0_4 = arith.constant 0 : index
    %3 = vector.load %arg3[%c0_3, %c0_4] : memref<1x64xf32, #tpu.memory_space<vmem>>, vector<1x64xf32>
    %4 = vector.broadcast %3 : vector<1x64xf32> to vector<128x64xf32>
    %5 = arith.addf %2, %4 : vector<128x64xf32>
    %c0_5 = arith.constant 0 : index
    %c0_6 = arith.constant 0 : index
    %6 = vector.load %arg4[%c0_5, %c0_6] : memref<128x64xf32, #tpu.memory_space<vmem>>, vector<128x64xf32>
    tpu.vector_store %arg4[%c0_5, %c0_6], %5 {strides = array<i32>} : memref<128x64xf32, #tpu.memory_space<vmem>>, vector<128x64xf32>,
    return
  }
  func.func @transform_0(%arg0: i32) -> (i32, i32) {
    %c0_i32 = arith.constant 0 : i32
    %c0_i32_0 = arith.constant 0 : i32
    return %arg0, %c0_i32 : i32, i32
  }
  func.func @transform_1(%arg0: i32) -> (i32, i32) {
    %c0_i32 = arith.constant 0 : i32
    %c0_i32_0 = arith.constant 0 : i32
    %c0_i32_1 = arith.constant 0 : i32
    return %c0_i32, %c0_i32_0 : i32, i32
  }
  func.func @transform_2(%arg0: i32) -> (i32, i32) {
    %c0_i32 = arith.constant 0 : i32
    %c0_i32_0 = arith.constant 0 : i32
    %c0_i32_1 = arith.constant 0 : i32
    return %c0_i32, %c0_i32_0 : i32, i32
  }
  func.func @transform_3(%arg0: i32) -> (i32, i32) {
    %c0_i32 = arith.constant 0 : i32
    %c0_i32_0 = arith.constant 0 : i32
    return %arg0, %c0_i32 : i32, i32
  }
}

</mosaic_0001>

<llo_original>
// kernel: mrfp_forward.13
$region0: #{mrfp_forward.13}
  #allocation0 [shape = 'u32[]', space=smem, size = 0x4, offset = 0x4, fixed_abs, tag = 'smem constant byte address 0x4 - core index']
  #allocation1 [shape = 'u32[144,128]{1,0:T(1,128)}', space=vmem, size = 0x12000, scoped, tag = 'internal scratch']
  %s0 = inlined_call_operand.vmem [shape: bf16[32,128], index: 0, kind: input, shape index: {}]
  %s1 = inlined_call_operand.vmem [shape: bf16[128,64], index: 1, kind: input, shape index: {}]
  %s2 = inlined_call_operand.vmem [shape: f32[1,64], index: 2, kind: input, shape index: {}]
  %s3 = inlined_call_operand.vmem [shape: f32[32,64], index: 3, kind: output, shape index: {}]
  %s4 = sld [smem:[#allocation0]]
  $region22: #{mrfp_forward.13} parent=0
    _
  %s6 = ssub.s32 1, %s4
  %s7 = scalar_select 0, %s6, %s4
  // Predicated region
  $region2: #{mrfp_forward.13} parent=0 // pred_check
    _
  $region3: #{mrfp_forward.13} parent=0 // pred_check_branch
    %9 = sbr.rel (0) target = $region5
  $region4: #{mrfp_forward.13} parent=0 // pred_region
    _
  $region5: #{mrfp_forward.13} parent=0 // pred_fallthru
    _
  // Predicated region
  $region6: #{mrfp_forward.13} parent=0 // pred_check
    _
  $region7: #{mrfp_forward.13} parent=0 // pred_check_branch
    %11 = sbr.rel (0) target = $region9
  $region8: #{mrfp_forward.13} parent=0 // pred_region
    _
  $region9: #{mrfp_forward.13} parent=0 // pred_fallthru
    _
  // Predicated region
  $region10: #{mrfp_forward.13} parent=0 // pred_check
    _
  $region11: #{mrfp_forward.13} parent=0 // pred_check_branch
    %13 = sbr.rel (0) target = $region13
  $region12: #{mrfp_forward.13} parent=0 // pred_region
    _
  $region13: #{mrfp_forward.13} parent=0 // pred_fallthru
    _
  %v15 = vld [vmem:[%s0] sm:$0xf]
  %v16 = vld [vmem:[%s0 + $0x4] sm:$0xf]
  %v17 = vld [vmem:[%s0 + $0x8] sm:$0xf]
  %v18 = vld [vmem:[%s0 + $0xc] sm:$0xf]
  %v19 = vld [vmem:[%s1] sm:$0xf]
  %v20 = vld [vmem:[%s1 + $0x4] sm:$0xf]
  %v21 = vld [vmem:[%s1 + $0x8] sm:$0xf]
  %v22 = vld [vmem:[%s1 + $0xc] sm:$0xf]
  %v23 = vld [vmem:[%s1 + $0x10] sm:$0xf]
  %v24 = vld [vmem:[%s1 + $0x14] sm:$0xf]
  %v25 = vld [vmem:[%s1 + $0x18] sm:$0xf]
  %v26 = vld [vmem:[%s1 + $0x1c] sm:$0xf]
  %v27 = vld [vmem:[%s1 + $0x20] sm:$0xf]
  %v28 = vld [vmem:[%s1 + $0x24] sm:$0xf]
  %v29 = vld [vmem:[%s1 + $0x28] sm:$0xf]
  %v30 = vld [vmem:[%s1 + $0x2c] sm:$0xf]
  %v31 = vld [vmem:[%s1 + $0x30] sm:$0xf]
  %v32 = vld [vmem:[%s1 + $0x34] sm:$0xf]
  %v33 = vld [vmem:[%s1 + $0x38] sm:$0xf]
  %v34 = vld [vmem:[%s1 + $0x3c] sm:$0xf]
  %v35 = vld [vmem:[%s2] sm:$0x1]
  %v37 = vlaneseq
  %v38 = vshrl.u32 %v37, 7
  %v39 = vsub.s32 0, %v38
  %v40 = vrot.slane %v35, %v39
  %v46 = vunpack.c.l.b16 %v15
  %v47 = vunpack.c.l.b16 %v16
  %v48 = vunpack.c.l.b16 %v17
  %v49 = vunpack.c.l.b16 %v18
  %v50 = vpack.c.b16 %v47, %v46
  %v51 = vpack.c.b16 %v49, %v48
  %v70 = vunpack.c.l.b16 %v19
  %v71 = vunpack.c.l.b16 %v20
  %v72 = vunpack.c.l.b16 %v21
  %v73 = vunpack.c.l.b16 %v22
  %v74 = vunpack.c.l.b16 %v23
  %v75 = vunpack.c.l.b16 %v24
  %v76 = vunpack.c.l.b16 %v25
  %v77 = vunpack.c.l.b16 %v26
  %v78 = vunpack.c.l.b16 %v27
  %v79 = vunpack.c.l.b16 %v28
  %v80 = vunpack.c.l.b16 %v29
  %v81 = vunpack.c.l.b16 %v30
  %v82 = vunpack.c.l.b16 %v31
  %v83 = vunpack.c.l.b16 %v32
  %v84 = vunpack.c.l.b16 %v33
  %v85 = vunpack.c.l.b16 %v34
  %v86 = vpack.c.b16 %v71, %v70
  %v87 = vpack.c.b16 %v73, %v72
  %v88 = vpack.c.b16 %v75, %v74
  %v89 = vpack.c.b16 %v77, %v76
  %v90 = vpack.c.b16 %v79, %v78
  %v91 = vpack.c.b16 %v81, %v80
  %v92 = vpack.c.b16 %v83, %v82
  %v93 = vpack.c.b16 %v85, %v84
  %102 = vmatprep.subr.bf16.mxu0 0
  %103 = vmatpush1.bf16.msra.mxu0 %v93
  %104 = vmatprep.subr.bf16.mxu0 0
  %105 = vmatpush1.bf16.msra.mxu0 %v92
  %106 = vmatprep.subr.bf16.mxu0 0
  %107 = vmatpush1.bf16.msra.mxu0 %v91
  %108 = vmatprep.subr.bf16.mxu0 0
  %109 = vmatpush1.bf16.msra.mxu0 %v90
  %110 = vmatprep.subr.bf16.mxu0 0
  %111 = vmatpush1.bf16.msra.mxu0 %v89
  %112 = vmatprep.subr.bf16.mxu0 0
  %113 = vmatpush1.bf16.msra.mxu0 %v88
  %114 = vmatprep.subr.bf16.mxu0 0
  %115 = vmatpush1.bf16.msra.mxu0 %v87
  %116 = vmatprep.subr.bf16.mxu0 0
  %117 = vmatpush1.bf16.msra.mxu0 %v86
  %118 = vmatprep.subr.bf16.mxu0 0
  %119 = vmatpush2.bf16.msra.mxu0 0
  %120 = vmatprep.subr.bf16.mxu0 0
  %121 = vmatpush2.bf16.msra.mxu0 0
  %122 = vmatprep.subr.bf16.mxu0 0
  %123 = vmatpush2.bf16.msra.mxu0 0
  %124 = vmatprep.subr.bf16.mxu0 0
  %125 = vmatpush2.bf16.msra.mxu0 0
  %126 = vmatprep.subr.bf16.mxu0 0
  %127 = vmatpush2.bf16.msra.mxu0 0
  %128 = vmatprep.subr.bf16.mxu0 0
  %129 = vmatpush2.bf16.msra.mxu0 0
  %130 = vmatprep.subr.bf16.mxu0 0
  %131 = vmatpush2.bf16.msra.mxu0 0
  %132 = vmatprep.subr.bf16.mxu0 0
  %133 = vmatpush2.bf16.msra.mxu0 0
  %134 = vmatprep.mubr.bf16.mxu0 0
  %135 = vmatmul.mubr.bf16.gmra.mxu0 %v50
  %v136 = vpop.f32.mrf.mxu0
  %v137 = vadd.f32 %v40, %v136
  %v138 = vpop.f32.mrf.mxu0
  %v139 = vpop.f32.mrf.mxu0
  %v140 = vadd.f32 %v40, %v139
  %v141 = vpop.f32.mrf.mxu0
  %142 = vmatprep.mubr.bf16.mxu0 0
  %143 = vmatmul.mubr.bf16.gmra.mxu0 %v51
  %v144 = vpop.f32.mrf.mxu0
  %v145 = vadd.f32 %v40, %v144
  %v146 = vpop.f32.mrf.mxu0
  %v147 = vpop.f32.mrf.mxu0
  %v148 = vadd.f32 %v40, %v147
  %v149 = vpop.f32.mrf.mxu0
  %150 = vdwg.mxu0
  %vm151 = vcmask 523264
  %152 = vst.msk [vmem:[%s3] sm:$0xff] %vm151, %v137
  %153 = vst.msk [vmem:[%s3 + $0x8] sm:$0xff] %vm151, %v140
  %154 = vst.msk [vmem:[%s3 + $0x10] sm:$0xff] %vm151, %v145
  %155 = vst.msk [vmem:[%s3 + $0x18] sm:$0xff] %vm151, %v148
  // Predicated region
  $region14: #{mrfp_forward.13} parent=0 // pred_check
    _
  $region15: #{mrfp_forward.13} parent=0 // pred_check_branch
    %157 = sbr.rel (0) target = $region17
  $region16: #{mrfp_forward.13} parent=0 // pred_region
    _
  $region17: #{mrfp_forward.13} parent=0 // pred_fallthru
    _
  // Predicated region
  $region18: #{mrfp_forward.13} parent=0 // pred_check
    _
  $region19: #{mrfp_forward.13} parent=0 // pred_check_branch
    %159 = sbr.rel (0) target = $region21
  $region20: #{mrfp_forward.13} parent=0 // pred_region
    _
  $region21: #{mrfp_forward.13} parent=0 // pred_fallthru
    _

// kernel: mrfp_forward.7
$region0: #{mrfp_forward.7}
  #allocation0 [shape = 'u32[]', space=smem, size = 0x4, offset = 0x4, fixed_abs, tag = 'smem constant byte address 0x4 - core index']
  #allocation1 [shape = 'u32[144,128]{1,0:T(1,128)}', space=vmem, size = 0x12000, scoped, tag = 'internal scratch']
  %s0 = inlined_call_operand.vmem [shape: f32[672,64], index: 0, kind: input, shape index: {}]
  %s1 = inlined_call_operand.vmem [shape: bf16[64,128], index: 1, kind: input, shape index: {}]
  %s2 = inlined_call_operand.vmem [shape: f32[1,128], index: 2, kind: input, shape index: {}]
  %s3 = inlined_call_operand.vmem [shape: bf16[672,128], index: 3, kind: output, shape index: {}]
  %s4 = sld [smem:[#allocation0]]
  $region89: #{mrfp_forward.7} parent=0
    _
  %s6 = ssub.s32 1, %s4
  %s7 = scalar_select 0, %s6, %s4
  $region1: #{mrfp_forward.7} parent=0
    #allocation2 [shape = 'u8[65536]{0}', space=vmem, size = 0x10000, scoped, tag = 'output window, operand 0']
    loop: start=0, step=1, limit=8
    $region2: #{mrfp_forward.7} parent=1 // loop_pre_header
      _
    $region3: #{mrfp_forward.7} parent=1 // loop_header
      %s9 = sphi 0, %s13
      %p10 = scmp.ge.s32.totalorder %s9, 8
      %s19 = sphi 0, %s21
      %s22 = sphi 0, %s19
      %s23 = sphi 0, %s22
      %s39 = sphi 0, %s23
      %s43 = sphi 0, %s43
      %s45 = sphi 0, %s43
      %s46 = sphi 0, %s45
      %s60 = sphi 0, %s46
      %s64 = sphi 0, %s64
      %s66 = sphi 0, %s64
      %s67 = sphi 0, %s66
      %s81 = sphi 0, %s67
      %s87 = sphi 0, %s89
      %s90 = sphi 0, %s87
      %s91 = sphi 0, %s90
      %s107 = sphi 0, %s91
    $region4: #{mrfp_forward.7} parent=1 // loop_header_branch
      %12 = sbr.rel (%p10) target = $region8
    $region5: #{mrfp_forward.7} parent=1 // loop_body
      %s14 = ssub.s32 %s9, 1
      %s15 = ssub.s32 %s9, 2
      %s16 = sadd.s32 %s9, 1
      %s17 = ssub.s32 %s9, %s16
      %p18 = scmp.eq.s32.totalorder %s17, 0
      %s20 = sadd.s32 %s19, 1
      %s21 = scalar_select %p18, %s19, %s20
      %p24 = pneg %p18
      %p25 = scmp.eq.s32.totalorder %s9, 5
      %p26 = por %p24, %p25
      %p27 = scmp.ne.s32.totalorder %s19, %s22
      %p28 = scmp.eq.s32.totalorder %s9, 0
      %p29 = por %p27, %p28
      %p30 = scmp.ne.s32.totalorder %s19, %s22
      %p31 = scmp.eq.s32.totalorder %s14, 5
      %p32 = por %p30, %p31
      %p33 = scmp.ne.s32.totalorder %s22, %s23
      %p34 = scmp.eq.s32.totalorder %s14, 0
      %p35 = por %p33, %p34
      %p36 = scmp.ne.s32.totalorder %s22, %s23
      %p37 = scmp.eq.s32.totalorder %s15, 5
      %p38 = por %p36, %p37
      %p40 = scmp.ne.s32.totalorder %s23, %s39
      %p41 = scmp.eq.s32.totalorder %s15, 0
      %p42 = por %p40, %p41
      %s44 = sadd.s32 %s43, 1
      %p47 = scmp.eq.s32.totalorder %s9, 5
      %p48 = scmp.ne.s32.totalorder %s43, %s45
      %p49 = scmp.eq.s32.totalorder %s9, 0
      %p50 = por %p48, %p49
      %p51 = scmp.ne.s32.totalorder %s43, %s45
      %p52 = scmp.eq.s32.totalorder %s14, 5
      %p53 = por %p51, %p52
      %p54 = scmp.ne.s32.totalorder %s45, %s46
      %p55 = scmp.eq.s32.totalorder %s14, 0
      %p56 = por %p54, %p55
      %p57 = scmp.ne.s32.totalorder %s45, %s46
      %p58 = scmp.eq.s32.totalorder %s15, 5
      %p59 = por %p57, %p58
      %p61 = scmp.ne.s32.totalorder %s46, %s60
      %p62 = scmp.eq.s32.totalorder %s15, 0
      %p63 = por %p61, %p62
      %s65 = sadd.s32 %s64, 1
      %p68 = scmp.eq.s32.totalorder %s9, 5
      %p69 = scmp.ne.s32.totalorder %s64, %s66
      %p70 = scmp.eq.s32.totalorder %s9, 0
      %p71 = por %p69, %p70
      %p72 = scmp.ne.s32.totalorder %s64, %s66
      %p73 = scmp.eq.s32.totalorder %s14, 5
      %p74 = por %p72, %p73
      %p75 = scmp.ne.s32.totalorder %s66, %s67
      %p76 = scmp.eq.s32.totalorder %s14, 0
      %p77 = por %p75, %p76
      %p78 = scmp.ne.s32.totalorder %s66, %s67
      %p79 = scmp.eq.s32.totalorder %s15, 5
      %p80 = por %p78, %p79
      %p82 = scmp.ne.s32.totalorder %s67, %s81
      %p83 = scmp.eq.s32.totalorder %s15, 0
      %p84 = por %p82, %p83
      %s85 = ssub.s32 %s9, %s16
      %p86 = scmp.eq.s32.totalorder %s85, 0
      %s88 = sadd.s32 %s87, 1
      %s89 = scalar_select %p86, %s87, %s88
      %p92 = pneg %p86
      %p93 = scmp.eq.s32.totalorder %s9, 5
      %p94 = por %p92, %p93
      %p95 = scmp.ne.s32.totalorder %s87, %s90
      %p96 = scmp.eq.s32.totalorder %s9, 0
      %p97 = por %p95, %p96
      %p98 = scmp.ne.s32.totalorder %s87, %s90
      %p99 = scmp.eq.s32.totalorder %s14, 5
      %p100 = por %p98, %p99
      %p101 = scmp.ne.s32.totalorder %s90, %s91
      %p102 = scmp.eq.s32.totalorder %s14, 0
      %p103 = por %p101, %p102
      %p104 = scmp.ne.s32.totalorder %s90, %s91
      %p105 = scmp.eq.s32.totalorder %s15, 5
      %p106 = por %p104, %p105
      %p108 = scmp.ne.s32.totalorder %s91, %s107
      %p109 = scmp.eq.s32.totalorder %s15, 0
      %p110 = por %p108, %p109
      %p111 = scmp.le.s32.totalorder 1, %s9
      %p112 = scmp.lt.s32.totalorder %s9, 7
      %p113 = pnand %p111, %p112
      %p114 = pneg %p113
      // Predicated region
      $region9: #{mrfp_forward.7} parent=5 // pred_check
        _
      $region10: #{mrfp_forward.7} parent=5 // pred_check_branch
        %116 = sbr.rel (%p113) target = $region12
      $region11: #{mrfp_forward.7} parent=5 // pred_region
        %s117 = ssub.s32 %s9, 1
        // Predicated region
        $region13: #{mrfp_forward.7} parent=11 // pred_check
          %p118 = pneg %p56
        $region14: #{mrfp_forward.7} parent=11 // pred_check_branch
          %120 = sbr.rel (%p118) target = $region16
        $region15: #{mrfp_forward.7} parent=11 // pred_region
          _
        $region16: #{mrfp_forward.7} parent=11 // pred_fallthru
          _
        // Predicated region
        $region17: #{mrfp_forward.7} parent=11 // pred_check
          %p121 = pneg %p77
        $region18: #{mrfp_forward.7} parent=11 // pred_check_branch
          %123 = sbr.rel (%p121) target = $region20
        $region19: #{mrfp_forward.7} parent=11 // pred_region
          _
        $region20: #{mrfp_forward.7} parent=11 // pred_fallthru
          _
      $region12: #{mrfp_forward.7} parent=5 // pred_fallthru
        _
      %p124 = scmp.lt.s32.totalorder %s9, 6
      // Predicated region
      $region21: #{mrfp_forward.7} parent=5 // pred_check
        %p125 = pneg %p124
      $region22: #{mrfp_forward.7} parent=5 // pred_check_branch
        %127 = sbr.rel (%p125) target = $region24
      $region23: #{mrfp_forward.7} parent=5 // pred_region
        // Predicated region
        $region25: #{mrfp_forward.7} parent=23 // pred_check
          %p128 = pneg %p29
        $region26: #{mrfp_forward.7} parent=23 // pred_check_branch
          %130 = sbr.rel (%p128) target = $region28
        $region27: #{mrfp_forward.7} parent=23 // pred_region
          %s131 = smul.u32 16, %s9
          %s132 = ssub.s32 84, %s131
          %p133 = scmp.lt.s32.totalorder %s132, 16
          %s134 = scalar_select %p133, %s132, 16
          %s135 = smul.u32 128, %s134
          %p136 = scmp.lt.s32.totalorder %s131, 83
          %s137 = scalar_select %p136, %s131, 83
          %s138 = smul.addr %s137, 8
          %s139 = scalar_lea.vmem %s0, %s138
          %s140 = smul.u32 16, %s9
          %s141 = ssub.s32 84, %s140
          %p142 = scmp.lt.s32.totalorder %s141, 16
          %s143 = scalar_select %p142, %s141, 16
          %s144 = smul.u32 128, %s143
        $region28: #{mrfp_forward.7} parent=23 // pred_fallthru
          _
      $region24: #{mrfp_forward.7} parent=5 // pred_fallthru
        _
      %p145 = scmp.le.s32.totalorder 1, %s9
      %p146 = scmp.lt.s32.totalorder %s9, 7
      %p147 = pnand %p145, %p146
      %p148 = pneg %p147
      // Predicated region
      $region29: #{mrfp_forward.7} parent=5 // pred_check
        _
      $region30: #{mrfp_forward.7} parent=5 // pred_check_branch
        %150 = sbr.rel (%p147) target = $region32
      $region31: #{mrfp_forward.7} parent=5 // pred_region
        %s151 = ssub.s32 %s9, 1
        %s152 = smul.u32 16, %s14
        %s153 = ssub.s32 84, %s152
        %p154 = scmp.lt.s32.totalorder %s153, 16
        %s155 = scalar_select %p154, %s153, 16
        %s156 = smul.u32 128, %s155
        %p157 = scmp.lt.s32.totalorder %s152, 83
        %s158 = scalar_select %p157, %s152, 83
        %s159 = smul.addr %s158, 8
        %s160 = scalar_lea.vmem %s0, %s159
        %p161 = pneg %p35
        %p162 = pneg %p32
        %p163 = pneg %p56
        %p164 = pneg %p53
        %p165 = pneg %p77
        %p166 = pneg %p74
        %p167 = pneg %p103
        %p168 = pneg %p100
        %s169 = sand.u32 %s90, 1
        %s170 = sand.u32 %s90, 1
        %s171 = smul.addr %s170, 64
        %s172 = scalar_lea.vmem [#allocation2], %s171
        %s173 = smul.u32 16, %s14
        %s174 = ssub.s32 84, %s173
        %p175 = scmp.lt.s32.totalorder %s174, 16
        %s176 = scalar_select %p175, %s174, 16
        %s177 = smul.u32 128, %s176
        %p178 = scmp.lt.s32.totalorder %s173, 83
        %s179 = scalar_select %p178, %s173, 83
        %s180 = smul.addr %s179, 8
        %s181 = scalar_lea.vmem %s0, %s180
        %s182 = smul.u32 16, %s14
        %s183 = ssub.s32 84, %s182
        %p184 = scmp.lt.s32.totalorder %s183, 16
        %s185 = scalar_select %p184, %s183, 16
        %s186 = smul.u32 128, %s185
        %s187 = smul.u32 16, %s14
        %s188 = ssub.s32 84, %s187
        %p189 = scmp.lt.s32.totalorder %s188, 16
        %s190 = scalar_select %p189, %s188, 16
        %s191 = smul.u32 64, %s190
        %v193 = vld [vmem:[%s181] sm:$0xff]
        %v194 = vld [vmem:[%s181 + $0x8] sm:$0xff]
        %v195 = vld [vmem:[%s181 + $0x10] sm:$0xff]
        %v196 = vld [vmem:[%s181 + $0x18] sm:$0xff]
        %v197 = vld [vmem:[%s181 + $0x20] sm:$0xff]
        %v198 = vld [vmem:[%s181 + $0x28] sm:$0xff]
        %v199 = vld [vmem:[%s181 + $0x30] sm:$0xff]
        %v200 = vld [vmem:[%s181 + $0x38] sm:$0xff]
        %v201 = vld [vmem:[%s181 + $0x40] sm:$0xff]
        %v202 = vld [vmem:[%s181 + $0x48] sm:$0xff]
        %v203 = vld [vmem:[%s181 + $0x50] sm:$0xff]
        %v204 = vld [vmem:[%s181 + $0x58] sm:$0xff]
        %v205 = vld [vmem:[%s181 + $0x60] sm:$0xff]
        %v206 = vld [vmem:[%s181 + $0x68] sm:$0xff]
        %v207 = vld [vmem:[%s181 + $0x70] sm:$0xff]
        %v208 = vld [vmem:[%s181 + $0x78] sm:$0xff]
        %v209 = vpack.c.bf16 %v194, %v193
        %v210 = vpack.c.bf16 %v196, %v195
        %v211 = vpack.c.bf16 %v198, %v197
        %v212 = vpack.c.bf16 %v200, %v199
        %v213 = vpack.c.bf16 %v202, %v201
        %v214 = vpack.c.bf16 %v204, %v203
        %v215 = vpack.c.bf16 %v206, %v205
        %v216 = vpack.c.bf16 %v208, %v207
        %v217 = vld [vmem:[%s1] sm:$0xf]
        %v218 = vld [vmem:[%s1 + $0x4] sm:$0xf]
        %v219 = vld [vmem:[%s1 + $0x8] sm:$0xf]
        %v220 = vld [vmem:[%s1 + $0xc] sm:$0xf]
        %v221 = vld [vmem:[%s1 + $0x10] sm:$0xf]
        %v222 = vld [vmem:[%s1 + $0x14] sm:$0xf]
        %v223 = vld [vmem:[%s1 + $0x18] sm:$0xf]
        %v224 = vld [vmem:[%s1 + $0x1c] sm:$0xf]
        %v225 = vld [vmem:[%s2] sm:$0x1]
        %v227 = vlaneseq
        %v228 = vshrl.u32 %v227, 7
        %v229 = vsub.s32 0, %v228
        %v230 = vrot.slane %v225, %v229
        %v240 = vunpack.c.l.b16 %v217
        %v241 = vunpack.c.l.b16 %v218
        %v242 = vunpack.c.l.b16 %v219
        %v243 = vunpack.c.l.b16 %v220
        %v244 = vunpack.c.l.b16 %v221
        %v245 = vunpack.c.l.b16 %v222
        %v246 = vunpack.c.l.b16 %v223
        %v247 = vunpack.c.l.b16 %v224
        %v248 = vpack.c.b16 %v241, %v240
        %v249 = vpack.c.b16 %v243, %v242
        %v250 = vpack.c.b16 %v245, %v244
        %v251 = vpack.c.b16 %v247, %v246
        %vm256 = vcmask 523264
        %v258 = vsel %vm256, %v209, 0
        %v261 = vsel %vm256, %v210, 0
        %v264 = vsel %vm256, %v211, 0
        %v267 = vsel %vm256, %v212, 0
        %v270 = vsel %vm256, %v213, 0
        %v273 = vsel %vm256, %v214, 0
        %v276 = vsel %vm256, %v215, 0
        %v279 = vsel %vm256, %v216, 0
        %281 = vmatprep.subr.bf16.mxu0 0
        %282 = vmatpush1.bf16.msra.mxu0 0
        %283 = vmatprep.subr.bf16.mxu0 0
        %284 = vmatpush1.bf16.msra.mxu0 0
        %285 = vmatprep.subr.bf16.mxu0 0
        %286 = vmatpush1.bf16.msra.mxu0 0
        %287 = vmatprep.subr.bf16.mxu0 0
        %288 = vmatpush1.bf16.msra.mxu0 0
        %289 = vmatprep.subr.bf16.mxu0 0
        %290 = vmatpush1.bf16.msra.mxu0 %v251
        %291 = vmatprep.subr.bf16.mxu0 0
        %292 = vmatpush1.bf16.msra.mxu0 %v250
        %293 = vmatprep.subr.bf16.mxu0 0
        %294 = vmatpush1.bf16.msra.mxu0 %v249
        %295 = vmatprep.subr.bf16.mxu0 0
        %296 = vmatpush1.bf16.msra.mxu0 %v248
        %297 = vmatprep.subr.bf16.mxu0 0
        %298 = vmatpush2.bf16.msra.mxu0 0
        %299 = vmatprep.subr.bf16.mxu0 0
        %300 = vmatpush2.bf16.msra.mxu0 0
        %301 = vmatprep.subr.bf16.mxu0 0
        %302 = vmatpush2.bf16.msra.mxu0 0
        %303 = vmatprep.subr.bf16.mxu0 0
        %304 = vmatpush2.bf16.msra.mxu0 0
        %305 = vmatprep.subr.bf16.mxu0 0
        %306 = vmatpush2.bf16.msra.mxu0 0
        %307 = vmatprep.subr.bf16.mxu0 0
        %308 = vmatpush2.bf16.msra.mxu0 0
        %309 = vmatprep.subr.bf16.mxu0 0
        %310 = vmatpush2.bf16.msra.mxu0 0
        %311 = vmatprep.subr.bf16.mxu0 0
        %312 = vmatpush2.bf16.msra.mxu0 0
        %313 = vmatprep.mubr.bf16.mxu0 0
        %314 = vmatmul.mubr.bf16.gmra.mxu0 %v258
        %v315 = vpop.f32.mrf.mxu0
        %v316 = vadd.f32 %v230, %v315
        %v317 = vpop.f32.mrf.mxu0
        %v318 = vpop.f32.mrf.mxu0
        %v319 = vadd.f32 %v230, %v318
        %v320 = vpop.f32.mrf.mxu0
        %321 = vmatprep.mubr.bf16.mxu0 0
        %322 = vmatmul.mubr.bf16.gmra.mxu0 %v261
        %v323 = vpop.f32.mrf.mxu0
        %v324 = vadd.f32 %v230, %v323
        %v325 = vpop.f32.mrf.mxu0
        %v326 = vpop.f32.mrf.mxu0
        %v327 = vadd.f32 %v230, %v326
        %v328 = vpop.f32.mrf.mxu0
        %329 = vmatprep.mubr.bf16.mxu0 0
        %330 = vmatmul.mubr.bf16.gmra.mxu0 %v264
        %v331 = vpop.f32.mrf.mxu0
        %v332 = vadd.f32 %v230, %v331
        %v333 = vpop.f32.mrf.mxu0
        %v334 = vpop.f32.mrf.mxu0
        %v335 = vadd.f32 %v230, %v334
        %v336 = vpop.f32.mrf.mxu0
        %337 = vmatprep.mubr.bf16.mxu0 0
        %338 = vmatmul.mubr.bf16.gmra.mxu0 %v267
        %v339 = vpop.f32.mrf.mxu0
        %v340 = vadd.f32 %v230, %v339
        %v341 = vpop.f32.mrf.mxu0
        %v342 = vpop.f32.mrf.mxu0
        %v343 = vadd.f32 %v230, %v342
        %v344 = vpop.f32.mrf.mxu0
        %345 = vmatprep.mubr.bf16.mxu0 0
        %346 = vmatmul.mubr.bf16.gmra.mxu0 %v270
        %v347 = vpop.f32.mrf.mxu0
        %v348 = vadd.f32 %v230, %v347
        %v349 = vpop.f32.mrf.mxu0
        %v350 = vpop.f32.mrf.mxu0
        %v351 = vadd.f32 %v230, %v350
        %v352 = vpop.f32.mrf.mxu0
        %353 = vmatprep.mubr.bf16.mxu0 0
        %354 = vmatmul.mubr.bf16.gmra.mxu0 %v273
        %v355 = vpop.f32.mrf.mxu0
        %v356 = vadd.f32 %v230, %v355
        %v357 = vpop.f32.mrf.mxu0
        %v358 = vpop.f32.mrf.mxu0
        %v359 = vadd.f32 %v230, %v358
        %v360 = vpop.f32.mrf.mxu0
        %361 = vmatprep.mubr.bf16.mxu0 0
        %362 = vmatmul.mubr.bf16.gmra.mxu0 %v276
        %v363 = vpop.f32.mrf.mxu0
        %v364 = vadd.f32 %v230, %v363
        %v365 = vpop.f32.mrf.mxu0
        %v366 = vpop.f32.mrf.mxu0
        %v367 = vadd.f32 %v230, %v366
        %v368 = vpop.f32.mrf.mxu0
        %369 = vmatprep.mubr.bf16.mxu0 0
        %370 = vmatmul.mubr.bf16.gmra.mxu0 %v279
        %v371 = vpop.f32.mrf.mxu0
        %v372 = vadd.f32 %v230, %v371
        %v373 = vpop.f32.mrf.mxu0
        %v374 = vpop.f32.mrf.mxu0
        %v375 = vadd.f32 %v230, %v374
        %v376 = vpop.f32.mrf.mxu0
        %377 = vdwg.mxu0
        %v378 = vpack.c.bf16 %v319, %v316
        %v379 = vpack.c.bf16 %v327, %v324
        %v380 = vpack.c.bf16 %v335, %v332
        %v381 = vpack.c.bf16 %v343, %v340
        %v382 = vpack.c.bf16 %v351, %v348
        %v383 = vpack.c.bf16 %v359, %v356
        %v384 = vpack.c.bf16 %v367, %v364
        %v385 = vpack.c.bf16 %v375, %v372
        %v394 = vunpack.c.l.b16 %v378
        %v395 = vunpack.c.h.b16 %v378
        %v396 = vunpack.c.l.b16 %v379
        %v397 = vunpack.c.h.b16 %v379
        %v398 = vunpack.c.l.b16 %v380
        %v399 = vunpack.c.h.b16 %v380
        %v400 = vunpack.c.l.b16 %v381
        %v401 = vunpack.c.h.b16 %v381
        %v402 = vunpack.c.l.b16 %v382
        %v403 = vunpack.c.h.b16 %v382
        %v404 = vunpack.c.l.b16 %v383
        %v405 = vunpack.c.h.b16 %v383
        %v406 = vunpack.c.l.b16 %v384
        %v407 = vunpack.c.h.b16 %v384
        %v408 = vunpack.c.l.b16 %v385
        %v409 = vunpack.c.h.b16 %v385
        %v410 = vpack.c.b16 %v394, %v394
        %v411 = vpack.c.b16 %v395, %v395
        %v412 = vpack.c.b16 %v396, %v396
        %v413 = vpack.c.b16 %v397, %v397
        %v414 = vpack.c.b16 %v398, %v398
        %v415 = vpack.c.b16 %v399, %v399
        %v416 = vpack.c.b16 %v400, %v400
        %v417 = vpack.c.b16 %v401, %v401
        %v418 = vpack.c.b16 %v402, %v402
        %v419 = vpack.c.b16 %v403, %v403
        %v420 = vpack.c.b16 %v404, %v404
        %v421 = vpack.c.b16 %v405, %v405
        %v422 = vpack.c.b16 %v406, %v406
        %v423 = vpack.c.b16 %v407, %v407
        %v424 = vpack.c.b16 %v408, %v408
        %v425 = vpack.c.b16 %v409, %v409
        %442 = vst [vmem:[%s172] sm:$0xf] %v410
        %443 = vst [vmem:[%s172 + $0x4] sm:$0xf] %v411
        %444 = vst [vmem:[%s172 + $0x8] sm:$0xf] %v412
        %445 = vst [vmem:[%s172 + $0xc] sm:$0xf] %v413
        %446 = vst [vmem:[%s172 + $0x10] sm:$0xf] %v414
        %447 = vst [vmem:[%s172 + $0x14] sm:$0xf] %v415
        %448 = vst [vmem:[%s172 + $0x18] sm:$0xf] %v416
        %449 = vst [vmem:[%s172 + $0x1c] sm:$0xf] %v417
        %450 = vst [vmem:[%s172 + $0x20] sm:$0xf] %v418
        %451 = vst [vmem:[%s172 + $0x24] sm:$0xf] %v419
        %452 = vst [vmem:[%s172 + $0x28] sm:$0xf] %v420
        %453 = vst [vmem:[%s172 + $0x2c] sm:$0xf] %v421
        %454 = vst [vmem:[%s172 + $0x30] sm:$0xf] %v422
        %455 = vst [vmem:[%s172 + $0x34] sm:$0xf] %v423
        %456 = vst [vmem:[%s172 + $0x38] sm:$0xf] %v424
        %457 = vst [vmem:[%s172 + $0x3c] sm:$0xf] %v425
        %s458 = sand.u32 %s90, 1
        %s459 = sand.u32 %s90, 1
        %s460 = smul.addr %s459, 64
        %s461 = scalar_lea.vmem [#allocation2], %s460
        // Predicated region
        $region33: #{mrfp_forward.7} parent=31 // pred_check
          %p462 = pneg %p100
        $region34: #{mrfp_forward.7} parent=31 // pred_check_branch
          %464 = sbr.rel (%p462) target = $region36
        $region35: #{mrfp_forward.7} parent=31 // pred_region
          %s465 = smul.u32 16, %s14
          %s466 = ssub.s32 84, %s465
          %p467 = scmp.lt.s32.totalorder %s466, 16
          %s468 = scalar_select %p467, %s466, 16
          %s469 = smul.u32 64, %s468
          %p470 = scmp.ne.s32.totalorder 0, %s469
          %s471 = smul.addr %s465, 4
          %s472 = scalar_lea.vmem %s3, %s471
          // Predicated region
          $region37: #{mrfp_forward.7} parent=35 // pred_check
            %p473 = pneg %p470
          $region38: #{mrfp_forward.7} parent=35 // pred_check_branch
            %475 = sbr.rel (%p473) target = $region40
          $region39: #{mrfp_forward.7} parent=35 // pred_region
            // Predicated region
            $region41: #{mrfp_forward.7} parent=39 // pred_check
              _
            $region42: #{mrfp_forward.7} parent=39 // pred_check_branch
              %477 = sbr.rel target = $region44
            $region43: #{mrfp_forward.7} parent=39 // pred_region
              // Predicated region
              $region63: #{mrfp_forward.7} parent=43 // pred_check
                _
              $region64: #{mrfp_forward.7} parent=43 // pred_check_branch
                %557 = sbr.rel (0) target = $region66
              $region65: #{mrfp_forward.7} parent=43 // pred_region
                %s559 = ssub.s32 16, 1
                %s560 = sshrl.u32 %s468, 4
                // While loop
                $region67: #{mrfp_forward.7} parent=65 // loop_pre_header
                  _
                $region68: #{mrfp_forward.7} parent=65 // loop_header
                  %s562 = sphi 0, %s564
                  %p563 = scmp.ge.s32.totalorder %s562, %s560
                  %s567 = sphi 0, %s604
                  %s568 = sphi %s461, %s607
                  %s569 = sphi %s472, %s608
                $region69: #{mrfp_forward.7} parent=65 // loop_header_branch
                  %566 = sbr.rel (%p563) target = $region73
                $region70: #{mrfp_forward.7} parent=65 // loop_body
                  %v570 = vld [vmem:[%s568] sm:%s559]
                  %571 = vst [vmem:[%s569] sm:%s559] %v570
                  %v572 = vld [vmem:[%s568 + $0x4] sm:%s559]
                  %573 = vst [vmem:[%s569 + $0x4] sm:%s559] %v572
                  %v574 = vld [vmem:[%s568 + $0x8] sm:%s559]
                  %575 = vst [vmem:[%s569 + $0x8] sm:%s559] %v574
                  %v576 = vld [vmem:[%s568 + $0xc] sm:%s559]
                  %577 = vst [vmem:[%s569 + $0xc] sm:%s559] %v576
                  %v578 = vld [vmem:[%s568 + $0x10] sm:%s559]
                  %579 = vst [vmem:[%s569 + $0x10] sm:%s559] %v578
                  %v580 = vld [vmem:[%s568 + $0x14] sm:%s559]
                  %581 = vst [vmem:[%s569 + $0x14] sm:%s559] %v580
                  %v582 = vld [vmem:[%s568 + $0x18] sm:%s559]
                  %583 = vst [vmem:[%s569 + $0x18] sm:%s559] %v582
                  %v584 = vld [vmem:[%s568 + $0x1c] sm:%s559]
                  %585 = vst [vmem:[%s569 + $0x1c] sm:%s559] %v584
                  %v586 = vld [vmem:[%s568 + $0x20] sm:%s559]
                  %587 = vst [vmem:[%s569 + $0x20] sm:%s559] %v586
                  %v588 = vld [vmem:[%s568 + $0x24] sm:%s559]
                  %589 = vst [vmem:[%s569 + $0x24] sm:%s559] %v588
                  %v590 = vld [vmem:[%s568 + $0x28] sm:%s559]
                  %591 = vst [vmem:[%s569 + $0x28] sm:%s559] %v590
                  %v592 = vld [vmem:[%s568 + $0x2c] sm:%s559]
                  %593 = vst [vmem:[%s569 + $0x2c] sm:%s559] %v592
                  %v594 = vld [vmem:[%s568 + $0x30] sm:%s559]
                  %595 = vst [vmem:[%s569 + $0x30] sm:%s559] %v594
                  %v596 = vld [vmem:[%s568 + $0x34] sm:%s559]
                  %597 = vst [vmem:[%s569 + $0x34] sm:%s559] %v596
                  %v598 = vld [vmem:[%s568 + $0x38] sm:%s559]
                  %599 = vst [vmem:[%s569 + $0x38] sm:%s559] %v598
                  %v600 = vld [vmem:[%s568 + $0x3c] sm:%s559]
                  %601 = vst [vmem:[%s569 + $0x3c] sm:%s559] %v600
                  %s602 = sadd.s32 1, %s567
                  %p603 = scmp.ge.s32.totalorder %s602, %s560
                  %s604 = scalar_select %p603, 0, %s602
                  %s605 = smul.u32 %s604, 64
                  %s606 = smul.u32 %s604, 64
                  %s607 = scalar_lea.vmem %s461, %s605 [#allocation2]
                  %s608 = scalar_lea.vmem %s472, %s606
                $region71: #{mrfp_forward.7} parent=65 // loop_footer
                  %s564 = sadd.s32 %s562, 1
                $region72: #{mrfp_forward.7} parent=65 // loop_footer_branch
                  %561 = sbr.rel target = $region68
                $region73: #{mrfp_forward.7} parent=65 // loop_exit
                  _
                %s609 = sshrl.u32 %s468, 4
                %s610 = sand.u32 %s468, 15
                %s611 = smul.u32 %s609, 16
                %s612 = smul.u32 4, %s611
                %s613 = scalar_lea.vmem %s461, %s612 [#allocation2]
                %s614 = smul.u32 4, %s611
                %s615 = scalar_lea.vmem %s472, %s614
                // While loop
                $region74: #{mrfp_forward.7} parent=65 // loop_pre_header
                  _
                $region75: #{mrfp_forward.7} parent=65 // loop_header
                  %s617 = sphi 0, %s619
                  %p618 = scmp.ge.s32.totalorder %s617, %s610
                  %s622 = sphi 0, %s629
                  %s623 = sphi %s613, %s632
                  %s624 = sphi %s615, %s633
                $region76: #{mrfp_forward.7} parent=65 // loop_header_branch
                  %621 = sbr.rel (%p618) target = $region80
                $region77: #{mrfp_forward.7} parent=65 // loop_body
                  %v625 = vld [vmem:[%s623] sm:%s559]
                  %626 = vst [vmem:[%s624] sm:%s559] %v625
                  %s627 = sadd.s32 1, %s622
                  %p628 = scmp.ge.s32.totalorder %s627, %s610
                  %s629 = scalar_select %p628, 0, %s627
                  %s630 = smul.u32 %s629, 4
                  %s631 = smul.u32 %s629, 4
                  %s632 = scalar_lea.vmem %s613, %s630 [#allocation2]
                  %s633 = scalar_lea.vmem %s615, %s631
                $region78: #{mrfp_forward.7} parent=65 // loop_footer
                  %s619 = sadd.s32 %s617, 1
                $region79: #{mrfp_forward.7} parent=65 // loop_footer_branch
                  %616 = sbr.rel target = $region75
                $region80: #{mrfp_forward.7} parent=65 // loop_exit
                  _
              $region66: #{mrfp_forward.7} parent=43 // pred_fallthru
                _
            $region44: #{mrfp_forward.7} parent=39 // pred_fallthru
              _
            // Predicated region
            $region45: #{mrfp_forward.7} parent=39 // pred_check
              _
            $region46: #{mrfp_forward.7} parent=39 // pred_check_branch
              %479 = sbr.rel (0) target = $region48
            $region47: #{mrfp_forward.7} parent=39 // pred_region
              %s481 = ssub.s32 16, 1
              %s482 = sshrl.u32 %s468, 4
              // While loop
              $region49: #{mrfp_forward.7} parent=47 // loop_pre_header
                _
              $region50: #{mrfp_forward.7} parent=47 // loop_header
                %s484 = sphi 0, %s486
                %p485 = scmp.ge.s32.totalorder %s484, %s482
                %s489 = sphi 0, %s526
                %s490 = sphi %s461, %s529
                %s491 = sphi %s472, %s530
              $region51: #{mrfp_forward.7} parent=47 // loop_header_branch
                %488 = sbr.rel (%p485) target = $region55
              $region52: #{mrfp_forward.7} parent=47 // loop_body
                %v492 = vld [vmem:[%s490] sm:%s481]
                %493 = vst [vmem:[%s491] sm:%s481] %v492
                %v494 = vld [vmem:[%s490 + $0x4] sm:%s481]
                %495 = vst [vmem:[%s491 + $0x4] sm:%s481] %v494
                %v496 = vld [vmem:[%s490 + $0x8] sm:%s481]
                %497 = vst [vmem:[%s491 + $0x8] sm:%s481] %v496
                %v498 = vld [vmem:[%s490 + $0xc] sm:%s481]
                %499 = vst [vmem:[%s491 + $0xc] sm:%s481] %v498
                %v500 = vld [vmem:[%s490 + $0x10] sm:%s481]
                %501 = vst [vmem:[%s491 + $0x10] sm:%s481] %v500
                %v502 = vld [vmem:[%s490 + $0x14] sm:%s481]
                %503 = vst [vmem:[%s491 + $0x14] sm:%s481] %v502
                %v504 = vld [vmem:[%s490 + $0x18] sm:%s481]
                %505 = vst [vmem:[%s491 + $0x18] sm:%s481] %v504
                %v506 = vld [vmem:[%s490 + $0x1c] sm:%s481]
                %507 = vst [vmem:[%s491 + $0x1c] sm:%s481] %v506
                %v508 = vld [vmem:[%s490 + $0x20] sm:%s481]
                %509 = vst [vmem:[%s491 + $0x20] sm:%s481] %v508
                %v510 = vld [vmem:[%s490 + $0x24] sm:%s481]
                %511 = vst [vmem:[%s491 + $0x24] sm:%s481] %v510
                %v512 = vld [vmem:[%s490 + $0x28] sm:%s481]
                %513 = vst [vmem:[%s491 + $0x28] sm:%s481] %v512
                %v514 = vld [vmem:[%s490 + $0x2c] sm:%s481]
                %515 = vst [vmem:[%s491 + $0x2c] sm:%s481] %v514
                %v516 = vld [vmem:[%s490 + $0x30] sm:%s481]
                %517 = vst [vmem:[%s491 + $0x30] sm:%s481] %v516
                %v518 = vld [vmem:[%s490 + $0x34] sm:%s481]
                %519 = vst [vmem:[%s491 + $0x34] sm:%s481] %v518
                %v520 = vld [vmem:[%s490 + $0x38] sm:%s481]
                %521 = vst [vmem:[%s491 + $0x38] sm:%s481] %v520
                %v522 = vld [vmem:[%s490 + $0x3c] sm:%s481]
                %523 = vst [vmem:[%s491 + $0x3c] sm:%s481] %v522
                %s524 = sadd.s32 1, %s489
                %p525 = scmp.ge.s32.totalorder %s524, %s482
                %s526 = scalar_select %p525, 0, %s524
                %s527 = smul.u32 %s526, 64
                %s528 = smul.u32 %s526, 64
                %s529 = scalar_lea.vmem %s461, %s527 [#allocation2]
                %s530 = scalar_lea.vmem %s472, %s528
              $region53: #{mrfp_forward.7} parent=47 // loop_footer
                %s486 = sadd.s32 %s484, 1
              $region54: #{mrfp_forward.7} parent=47 // loop_footer_branch
                %483 = sbr.rel target = $region50
              $region55: #{mrfp_forward.7} parent=47 // loop_exit
                _
              %s531 = sshrl.u32 %s468, 4
              %s532 = sand.u32 %s468, 15
              %s533 = smul.u32 %s531, 16
              %s534 = smul.u32 4, %s533
              %s535 = scalar_lea.vmem %s461, %s534 [#allocation2]
              %s536 = smul.u32 4, %s533
              %s537 = scalar_lea.vmem %s472, %s536
              // While loop
              $region56: #{mrfp_forward.7} parent=47 // loop_pre_header
                _
              $region57: #{mrfp_forward.7} parent=47 // loop_header
                %s539 = sphi 0, %s541
                %p540 = scmp.ge.s32.totalorder %s539, %s532
                %s544 = sphi 0, %s551
                %s545 = sphi %s535, %s554
                %s546 = sphi %s537, %s555
              $region58: #{mrfp_forward.7} parent=47 // loop_header_branch
                %543 = sbr.rel (%p540) target = $region62
              $region59: #{mrfp_forward.7} parent=47 // loop_body
                %v547 = vld [vmem:[%s545] sm:%s481]
                %548 = vst [vmem:[%s546] sm:%s481] %v547
                %s549 = sadd.s32 1, %s544
                %p550 = scmp.ge.s32.totalorder %s549, %s532
                %s551 = scalar_select %p550, 0, %s549
                %s552 = smul.u32 %s551, 4
                %s553 = smul.u32 %s551, 4
                %s554 = scalar_lea.vmem %s535, %s552 [#allocation2]
                %s555 = scalar_lea.vmem %s537, %s553
              $region60: #{mrfp_forward.7} parent=47 // loop_footer
                %s541 = sadd.s32 %s539, 1
              $region61: #{mrfp_forward.7} parent=47 // loop_footer_branch
                %538 = sbr.rel target = $region57
              $region62: #{mrfp_forward.7} parent=47 // loop_exit
                _
            $region48: #{mrfp_forward.7} parent=39 // pred_fallthru
              _
          $region40: #{mrfp_forward.7} parent=35 // pred_fallthru
            _
          %634 = vnop
        $region36: #{mrfp_forward.7} parent=31 // pred_fallthru
          _
      $region32: #{mrfp_forward.7} parent=5 // pred_fallthru
        _
      %p635 = scmp.le.s32.totalorder 2, %s9
      // Predicated region
      $region81: #{mrfp_forward.7} parent=5 // pred_check
        %p636 = pneg %p635
      $region82: #{mrfp_forward.7} parent=5 // pred_check_branch
        %638 = sbr.rel (%p636) target = $region84
      $region83: #{mrfp_forward.7} parent=5 // pred_region
        %s639 = ssub.s32 %s9, 2
        // Predicated region
        $region85: #{mrfp_forward.7} parent=83 // pred_check
          %p640 = pneg %p106
        $region86: #{mrfp_forward.7} parent=83 // pred_check_branch
          %642 = sbr.rel (%p640) target = $region88
        $region87: #{mrfp_forward.7} parent=83 // pred_region
          %s643 = sand.u32 %s91, 1
          %s644 = sand.u32 %s91, 1
          %s645 = smul.addr %s644, 64
          %s646 = scalar_lea.vmem [#allocation2], %s645
        $region88: #{mrfp_forward.7} parent=83 // pred_fallthru
          _
      $region84: #{mrfp_forward.7} parent=5 // pred_fallthru
        _
    $region6: #{mrfp_forward.7} parent=1 // loop_footer
      %s13 = sadd.s32 1, %s9
    $region7: #{mrfp_forward.7} parent=1 // loop_footer_branch
      %8 = sbr.rel target = $region3
    $region8: #{mrfp_forward.7} parent=1 // loop_exit
      _

// kernel: mrfp_forward.12
$region0: #{mrfp_forward.12}
  #allocation0 [shape = 'u32[]', space=smem, size = 0x4, offset = 0x4, fixed_abs, tag = 'smem constant byte address 0x4 - core index']
  #allocation1 [shape = 'u32[144,128]{1,0:T(1,128)}', space=vmem, size = 0x12000, scoped, tag = 'internal scratch']
  #allocation2 [shape = 'f32[8,16,128]{2,1,0:T(8,128)}', space=vmem, size = 0x10000, scoped, tag = 'scratch operand']
  %s0 = inlined_call_operand.vmem [shape: bf16[2,4,4,128], index: 0, kind: input, shape index: {}]
  %s1 = inlined_call_operand.vmem [shape: f32[5,5,128], index: 1, kind: input, shape index: {}]
  %s2 = inlined_call_operand.vmem [shape: f32[1,1,128], index: 2, kind: input, shape index: {}]
  %s3 = inlined_call_operand.vmem [shape: bf16[2,4,4,128], index: 3, kind: output, shape index: {}]
  %s4 = sld [smem:[#allocation0]]
  $region45: #{mrfp_forward.12} parent=0
    _
  %s6 = ssub.s32 1, %s4
  %s7 = scalar_select 0, %s6, %s4
  loop: start=0, step=1, limit=4
  $region2: #{mrfp_forward.12} parent=0 // loop_pre_header
    _
  $region3: #{mrfp_forward.12} parent=0 // loop_header
    %s9 = sphi 0, %s13
    %p10 = scmp.ge.s32.totalorder %s9, 4
    %s16 = sphi 0, %s28
    %s17 = sphi 0, %s24
    %s18 = sphi 0, %s16
    %s19 = sphi 0, %s17
    %s20 = sphi 0, %s18
    %s21 = sphi 0, %s19
    %s33 = sphi 0, %s35
    %s36 = sphi 0, %s33
    %s37 = sphi 0, %s36
    %s53 = sphi 0, %s37
    %s59 = sphi 0, %s61
    %s62 = sphi 0, %s59
    %s63 = sphi 0, %s62
    %s79 = sphi 0, %s63
    %s85 = sphi 0, %s87
    %s88 = sphi 0, %s85
    %s89 = sphi 0, %s88
    %s105 = sphi 0, %s89
    %s113 = sphi 0, %s115
    %s116 = sphi 0, %s113
    %s117 = sphi 0, %s116
    %s133 = sphi 0, %s117
  $region4: #{mrfp_forward.12} parent=0 // loop_header_branch
    %12 = sbr.rel (%p10) target = $region8
  $region5: #{mrfp_forward.12} parent=0 // loop_body
    %s14 = ssub.s32 %s9, 1
    %s15 = ssub.s32 %s9, 2
    %s22 = sadd.s32 1, %s17
    %p23 = scmp.ge.s32.totalorder %s22, 1
    %s24 = scalar_select %p23, 0, %s22
    %s25 = sadd.s32 1, %s16
    %s26 = scalar_select %p23, %s25, %s16
    %p27 = scmp.ge.s32.totalorder %s26, 2
    %s28 = scalar_select %p27, 0, %s26
    %s29 = ssub.s32 %s16, %s28
    %s30 = ssub.s32 %s17, %s24
    %s31 = sor.u32 %s29, %s30
    %p32 = scmp.eq.s32.totalorder %s31, 0
    %s34 = sadd.s32 %s33, 1
    %s35 = scalar_select %p32, %s33, %s34
    %p38 = pneg %p32
    %p39 = scmp.eq.s32.totalorder %s9, 1
    %p40 = por %p38, %p39
    %p41 = scmp.ne.s32.totalorder %s33, %s36
    %p42 = scmp.eq.s32.totalorder %s9, 0
    %p43 = por %p41, %p42
    %p44 = scmp.ne.s32.totalorder %s33, %s36
    %p45 = scmp.eq.s32.totalorder %s14, 1
    %p46 = por %p44, %p45
    %p47 = scmp.ne.s32.totalorder %s36, %s37
    %p48 = scmp.eq.s32.totalorder %s14, 0
    %p49 = por %p47, %p48
    %p50 = scmp.ne.s32.totalorder %s36, %s37
    %p51 = scmp.eq.s32.totalorder %s15, 1
    %p52 = por %p50, %p51
    %p54 = scmp.ne.s32.totalorder %s37, %s53
    %p55 = scmp.eq.s32.totalorder %s15, 0
    %p56 = por %p54, %p55
    %s57 = ssub.s32 %s17, %s24
    %p58 = scmp.eq.s32.totalorder %s57, 0
    %s60 = sadd.s32 %s59, 1
    %s61 = scalar_select %p58, %s59, %s60
    %p64 = pneg %p58
    %p65 = scmp.eq.s32.totalorder %s9, 1
    %p66 = por %p64, %p65
    %p67 = scmp.ne.s32.totalorder %s59, %s62
    %p68 = scmp.eq.s32.totalorder %s9, 0
    %p69 = por %p67, %p68
    %p70 = scmp.ne.s32.totalorder %s59, %s62
    %p71 = scmp.eq.s32.totalorder %s14, 1
    %p72 = por %p70, %p71
    %p73 = scmp.ne.s32.totalorder %s62, %s63
    %p74 = scmp.eq.s32.totalorder %s14, 0
    %p75 = por %p73, %p74
    %p76 = scmp.ne.s32.totalorder %s62, %s63
    %p77 = scmp.eq.s32.totalorder %s15, 1
    %p78 = por %p76, %p77
    %p80 = scmp.ne.s32.totalorder %s63, %s79
    %p81 = scmp.eq.s32.totalorder %s15, 0
    %p82 = por %p80, %p81
    %s83 = ssub.s32 %s17, %s24
    %p84 = scmp.eq.s32.totalorder %s83, 0
    %s86 = sadd.s32 %s85, 1
    %s87 = scalar_select %p84, %s85, %s86
    %p90 = pneg %p84
    %p91 = scmp.eq.s32.totalorder %s9, 1
    %p92 = por %p90, %p91
    %p93 = scmp.ne.s32.totalorder %s85, %s88
    %p94 = scmp.eq.s32.totalorder %s9, 0
    %p95 = por %p93, %p94
    %p96 = scmp.ne.s32.totalorder %s85, %s88
    %p97 = scmp.eq.s32.totalorder %s14, 1
    %p98 = por %p96, %p97
    %p99 = scmp.ne.s32.totalorder %s88, %s89
    %p100 = scmp.eq.s32.totalorder %s14, 0
    %p101 = por %p99, %p100
    %p102 = scmp.ne.s32.totalorder %s88, %s89
    %p103 = scmp.eq.s32.totalorder %s15, 1
    %p104 = por %p102, %p103
    %p106 = scmp.ne.s32.totalorder %s89, %s105
    %p107 = scmp.eq.s32.totalorder %s15, 0
    %p108 = por %p106, %p107
    %s109 = ssub.s32 %s16, %s28
    %s110 = ssub.s32 %s17, %s24
    %s111 = sor.u32 %s109, %s110
    %p112 = scmp.eq.s32.totalorder %s111, 0
    %s114 = sadd.s32 %s113, 1
    %s115 = scalar_select %p112, %s113, %s114
    %p118 = pneg %p112
    %p119 = scmp.eq.s32.totalorder %s9, 1
    %p120 = por %p118, %p119
    %p121 = scmp.ne.s32.totalorder %s113, %s116
    %p122 = scmp.eq.s32.totalorder %s9, 0
    %p123 = por %p121, %p122
    %p124 = scmp.ne.s32.totalorder %s113, %s116
    %p125 = scmp.eq.s32.totalorder %s14, 1
    %p126 = por %p124, %p125
    %p127 = scmp.ne.s32.totalorder %s116, %s117
    %p128 = scmp.eq.s32.totalorder %s14, 0
    %p129 = por %p127, %p128
    %p130 = scmp.ne.s32.totalorder %s116, %s117
    %p131 = scmp.eq.s32.totalorder %s15, 1
    %p132 = por %p130, %p131
    %p134 = scmp.ne.s32.totalorder %s117, %s133
    %p135 = scmp.eq.s32.totalorder %s15, 0
    %p136 = por %p134, %p135
    %p137 = scmp.le.s32.totalorder 1, %s9
    %p138 = scmp.lt.s32.totalorder %s9, 3
    %p139 = pnand %p137, %p138
    %p140 = pneg %p139
    // Predicated region
    $region9: #{mrfp_forward.12} parent=5 // pred_check
      _
    $region10: #{mrfp_forward.12} parent=5 // pred_check_branch
      %142 = sbr.rel (%p139) target = $region12
    $region11: #{mrfp_forward.12} parent=5 // pred_region
      %s143 = ssub.s32 %s9, 1
      // Predicated region
      $region13: #{mrfp_forward.12} parent=11 // pred_check
        %p144 = pneg %p75
      $region14: #{mrfp_forward.12} parent=11 // pred_check_branch
        %146 = sbr.rel (%p144) target = $region16
      $region15: #{mrfp_forward.12} parent=11 // pred_region
        %p147 = scmp.lt.s32.totalorder %s19, 0
        %s148 = scalar_select %p147, %s19, 0
        %s149 = smul.addr %s148, 8
        %s150 = scalar_lea.vmem %s1, %s149
      $region16: #{mrfp_forward.12} parent=11 // pred_fallthru
        _
      // Predicated region
      $region17: #{mrfp_forward.12} parent=11 // pred_check
        %p151 = pneg %p101
      $region18: #{mrfp_forward.12} parent=11 // pred_check_branch
        %153 = sbr.rel (%p151) target = $region20
      $region19: #{mrfp_forward.12} parent=11 // pred_region
        %p154 = scmp.lt.s32.totalorder %s19, 0
        %s155 = scalar_select %p154, %s19, 0
        %s156 = scalar_lea.vmem %s2, %s155
      $region20: #{mrfp_forward.12} parent=11 // pred_fallthru
        _
    $region12: #{mrfp_forward.12} parent=5 // pred_fallthru
      _
    %p157 = scmp.lt.s32.totalorder %s9, 2
    // Predicated region
    $region21: #{mrfp_forward.12} parent=5 // pred_check
      %p158 = pneg %p157
    $region22: #{mrfp_forward.12} parent=5 // pred_check_branch
      %160 = sbr.rel (%p158) target = $region24
    $region23: #{mrfp_forward.12} parent=5 // pred_region
      // Predicated region
      $region25: #{mrfp_forward.12} parent=23 // pred_check
        %p161 = pneg %p43
      $region26: #{mrfp_forward.12} parent=23 // pred_check_branch
        %163 = sbr.rel (%p161) target = $region28
      $region27: #{mrfp_forward.12} parent=23 // pred_region
        %p164 = scmp.lt.s32.totalorder %s16, 1
        %s165 = scalar_select %p164, %s16, 1
        %p166 = scmp.lt.s32.totalorder %s17, 0
        %s167 = scalar_select %p166, %s17, 0
        %s168 = smul.addr %s165, 4
        %s169 = sadd.s32 %s167, %s168
        %s170 = smul.addr %s169, 2
        %s171 = scalar_lea.vmem %s0, %s170
      $region28: #{mrfp_forward.12} parent=23 // pred_fallthru
        _
    $region24: #{mrfp_forward.12} parent=5 // pred_fallthru
      _
    %p172 = scmp.le.s32.totalorder 1, %s9
    %p173 = scmp.lt.s32.totalorder %s9, 3
    %p174 = pnand %p172, %p173
    %p175 = pneg %p174
    // Predicated region
    $region29: #{mrfp_forward.12} parent=5 // pred_check
      _
    $region30: #{mrfp_forward.12} parent=5 // pred_check_branch
      %177 = sbr.rel (%p174) target = $region32
    $region31: #{mrfp_forward.12} parent=5 // pred_region
      %s178 = ssub.s32 %s9, 1
      %p179 = scmp.lt.s32.totalorder %s18, 1
      %s180 = scalar_select %p179, %s18, 1
      %p181 = scmp.lt.s32.totalorder %s19, 0
      %s182 = scalar_select %p181, %s19, 0
      %s183 = smul.addr %s180, 4
      %s184 = sadd.s32 %s182, %s183
      %s185 = smul.addr %s184, 2
      %s186 = scalar_lea.vmem %s0, %s185
      %p187 = pneg %p49
      %p188 = pneg %p46
      %p189 = scmp.lt.s32.totalorder %s19, 0
      %s190 = scalar_select %p189, %s19, 0
      %s191 = smul.addr %s190, 8
      %s192 = scalar_lea.vmem %s1, %s191
      %p193 = pneg %p75
      %p194 = pneg %p72
      %p195 = scmp.lt.s32.totalorder %s19, 0
      %s196 = scalar_select %p195, %s19, 0
      %s197 = scalar_lea.vmem %s2, %s196
      %p198 = pneg %p101
      %p199 = pneg %p98
      %p200 = pneg %p129
      %p201 = pneg %p126
      %p202 = scmp.lt.s32.totalorder %s18, 1
      %s203 = scalar_select %p202, %s18, 1
      %p204 = scmp.lt.s32.totalorder %s19, 0
      %s205 = scalar_select %p204, %s19, 0
      %s206 = smul.addr %s203, 4
      %s207 = sadd.s32 %s205, %s206
      %s208 = smul.addr %s207, 2
      %s209 = scalar_lea.vmem %s3, %s208
      %p210 = scmp.lt.s32.totalorder %s18, 1
      %s211 = scalar_select %p210, %s18, 1
      %p212 = scmp.lt.s32.totalorder %s19, 0
      %s213 = scalar_select %p212, %s19, 0
      %s214 = smul.addr %s211, 4
      %s215 = sadd.s32 %s213, %s214
      %s216 = smul.addr %s215, 2
      %s217 = scalar_lea.vmem %s0, %s216
      %p218 = scmp.lt.s32.totalorder %s19, 0
      %s219 = scalar_select %p218, %s19, 0
      %s220 = smul.addr %s219, 8
      %s221 = scalar_lea.vmem %s1, %s220
      %p222 = scmp.lt.s32.totalorder %s19, 0
      %s223 = scalar_select %p222, %s19, 0
      %s224 = scalar_lea.vmem %s2, %s223
      %p225 = scmp.lt.s32.totalorder %s18, 1
      %s226 = scalar_select %p225, %s18, 1
      %p227 = scmp.lt.s32.totalorder %s19, 0
      %s228 = scalar_select %p227, %s19, 0
      %s229 = smul.addr %s226, 4
      %s230 = sadd.s32 %s228, %s229
      %s231 = smul.addr %s230, 2
      %s232 = scalar_lea.vmem %s3, %s231
      %233 = vst [vmem:[#allocation2] sm:$0xff] 0.0
      %234 = vst [vmem:[#allocation2 + $0x8] sm:$0xff] 0.0
      %235 = vst [vmem:[#allocation2 + $0x10] sm:$0xff] 0.0
      %236 = vst [vmem:[#allocation2 + $0x18] sm:$0xff] 0.0
      %237 = vst [vmem:[#allocation2 + $0x20] sm:$0xff] 0.0
      %238 = vst [vmem:[#allocation2 + $0x28] sm:$0xff] 0.0
      %239 = vst [vmem:[#allocation2 + $0x30] sm:$0xff] 0.0
      %240 = vst [vmem:[#allocation2 + $0x38] sm:$0xff] 0.0
      %241 = vst [vmem:[#allocation2 + $0x40] sm:$0xff] 0.0
      %242 = vst [vmem:[#allocation2 + $0x48] sm:$0xff] 0.0
      %243 = vst [vmem:[#allocation2 + $0x50] sm:$0xff] 0.0
      %244 = vst [vmem:[#allocation2 + $0x58] sm:$0xff] 0.0
      %245 = vst [vmem:[#allocation2 + $0x60] sm:$0xff] 0.0
      %246 = vst [vmem:[#allocation2 + $0x68] sm:$0xff] 0.0
      %247 = vst [vmem:[#allocation2 + $0x70] sm:$0xff] 0.0
      %248 = vst [vmem:[#allocation2 + $0x78] sm:$0xff] 0.0
      %v249 = vld [vmem:[%s217] sm:$0x3]
      %v250 = vld [vmem:[%s217 + $0x2] sm:$0x3]
      %v251 = vld [vmem:[%s217 + $0x4] sm:$0x3]
      %v252 = vld [vmem:[%s217 + $0x6] sm:$0x3]
      %v253 = vunpack.c.l.bf16 %v249
      %v254 = vunpack.c.l.bf16 %v250
      %v255 = vunpack.c.l.bf16 %v251
      %v256 = vunpack.c.l.bf16 %v252
      %s257 = scalar_lea.vmem [#allocation2], 32
      %258 = vst [vmem:[%s257 + $0x8] sm:$0xf] %v253
      %259 = vst [vmem:[%s257 + $0x18] sm:$0xf] %v254
      %260 = vst [vmem:[%s257 + $0x28] sm:$0xf] %v255
      %261 = vst [vmem:[%s257 + $0x38] sm:$0xf] %v256
      %v262 = vld [vmem:[%s221] sm:$0x1f]
      %v263 = vld [vmem:[%s221 + $0x8] sm:$0x1f]
      %v264 = vld [vmem:[%s221 + $0x10] sm:$0x1f]
      %v265 = vld [vmem:[%s221 + $0x18] sm:$0x1f]
      %v266 = vld [vmem:[%s221 + $0x20] sm:$0x1f]
      %v267 = vld [vmem:[%s224] sm:$0x1]
      %v268 = vld [vmem:[#allocation2 + $0x6] sm:$0xf]
      %v269 = vld [vmem:[#allocation2 + $0x16] sm:$0xf]
      %v270 = vld [vmem:[#allocation2 + $0x26] sm:$0xf]
      %v271 = vld [vmem:[#allocation2 + $0x36] sm:$0xf]
      %v272 = vlaneseq
      %v273 = vshrl.u32 %v272, 7
      %v274 = vsub.s32 0, %v273
      %v275 = vrot.slane %v262, %v274
      %v276 = vmul.f32 %v275, %v268
      %v277 = vmul.f32 %v275, %v269
      %v278 = vmul.f32 %v275, %v270
      %v279 = vmul.f32 %v275, %v271
      %v280 = vld [vmem:[#allocation2 + $0x7] sm:$0xf]
      %v281 = vld [vmem:[#allocation2 + $0x17] sm:$0xf]
      %v282 = vld [vmem:[#allocation2 + $0x27] sm:$0xf]
      %v283 = vld [vmem:[#allocation2 + $0x37] sm:$0xf]
      %v284 = vlaneseq
      %v285 = vshrl.u32 %v284, 7
      %v286 = vsub.s32 1, %v285
      %v287 = vrot.slane %v262, %v286
      %v288 = vmul.f32 %v287, %v280
      %v289 = vmul.f32 %v287, %v281
      %v290 = vmul.f32 %v287, %v282
      %v291 = vmul.f32 %v287, %v283
      %v292 = vadd.f32 %v276, %v288
      %v293 = vadd.f32 %v277, %v289
      %v294 = vadd.f32 %v278, %v290
      %v295 = vadd.f32 %v279, %v291
      %v296 = vld [vmem:[#allocation2 + $0x8] sm:$0xf]
      %v297 = vld [vmem:[#allocation2 + $0x18] sm:$0xf]
      %v298 = vld [vmem:[#allocation2 + $0x28] sm:$0xf]
      %v299 = vld [vmem:[#allocation2 + $0x38] sm:$0xf]
      %v300 = vlaneseq
      %v301 = vshrl.u32 %v300, 7
      %v302 = vsub.s32 2, %v301
      %v303 = vrot.slane %v262, %v302
      %v304 = vmul.f32 %v303, %v296
      %v305 = vmul.f32 %v303, %v297
      %v306 = vmul.f32 %v303, %v298
      %v307 = vmul.f32 %v303, %v299
      %v308 = vadd.f32 %v292, %v304
      %v309 = vadd.f32 %v293, %v305
      %v310 = vadd.f32 %v294, %v306
      %v311 = vadd.f32 %v295, %v307
      %v312 = vld [vmem:[#allocation2 + $0x9] sm:$0xf]
      %v313 = vld [vmem:[#allocation2 + $0x19] sm:$0xf]
      %v314 = vld [vmem:[#allocation2 + $0x29] sm:$0xf]
      %v315 = vld [vmem:[#allocation2 + $0x39] sm:$0xf]
      %v316 = vlaneseq
      %v317 = vshrl.u32 %v316, 7
      %v318 = vsub.s32 3, %v317
      %v319 = vrot.slane %v262, %v318
      %v320 = vmul.f32 %v319, %v312
      %v321 = vmul.f32 %v319, %v313
      %v322 = vmul.f32 %v319, %v314
      %v323 = vmul.f32 %v319, %v315
      %v324 = vadd.f32 %v308, %v320
      %v325 = vadd.f32 %v309, %v321
      %v326 = vadd.f32 %v310, %v322
      %v327 = vadd.f32 %v311, %v323
      %v328 = vld [vmem:[#allocation2 + $0xa] sm:$0xf]
      %v329 = vld [vmem:[#allocation2 + $0x1a] sm:$0xf]
      %v330 = vld [vmem:[#allocation2 + $0x2a] sm:$0xf]
      %v331 = vld [vmem:[#allocation2 + $0x3a] sm:$0xf]
      %v332 = vlaneseq
      %v333 = vshrl.u32 %v332, 7
      %v334 = vsub.s32 4, %v333
      %v335 = vrot.slane %v262, %v334
      %v336 = vmul.f32 %v335, %v328
      %v337 = vmul.f32 %v335, %v329
      %v338 = vmul.f32 %v335, %v330
      %v339 = vmul.f32 %v335, %v331
      %v340 = vadd.f32 %v324, %v336
      %v341 = vadd.f32 %v325, %v337
      %v342 = vadd.f32 %v326, %v338
      %v343 = vadd.f32 %v327, %v339
      %s344 = scalar_lea.vmem [#allocation2], 16
      %v345 = vld [vmem:[%s344 + $0x6] sm:$0xf]
      %v346 = vld [vmem:[%s344 + $0x16] sm:$0xf]
      %v347 = vld [vmem:[%s344 + $0x26] sm:$0xf]
      %v348 = vld [vmem:[%s344 + $0x36] sm:$0xf]
      %v349 = vlaneseq
      %v350 = vshrl.u32 %v349, 7
      %v351 = vsub.s32 0, %v350
      %v352 = vrot.slane %v263, %v351
      %v353 = vmul.f32 %v352, %v345
      %v354 = vmul.f32 %v352, %v346
      %v355 = vmul.f32 %v352, %v347
      %v356 = vmul.f32 %v352, %v348
      %v357 = vadd.f32 %v340, %v353
      %v358 = vadd.f32 %v341, %v354
      %v359 = vadd.f32 %v342, %v355
      %v360 = vadd.f32 %v343, %v356
      %v361 = vld [vmem:[%s344 + $0x7] sm:$0xf]
      %v362 = vld [vmem:[%s344 + $0x17] sm:$0xf]
      %v363 = vld [vmem:[%s344 + $0x27] sm:$0xf]
      %v364 = vld [vmem:[%s344 + $0x37] sm:$0xf]
      %v365 = vlaneseq
      %v366 = vshrl.u32 %v365, 7
      %v367 = vsub.s32 1, %v366
      %v368 = vrot.slane %v263, %v367
      %v369 = vmul.f32 %v368, %v361
      %v370 = vmul.f32 %v368, %v362
      %v371 = vmul.f32 %v368, %v363
      %v372 = vmul.f32 %v368, %v364
      %v373 = vadd.f32 %v357, %v369
      %v374 = vadd.f32 %v358, %v370
      %v375 = vadd.f32 %v359, %v371
      %v376 = vadd.f32 %v360, %v372
      %v377 = vld [vmem:[%s344 + $0x8] sm:$0xf]
      %v378 = vld [vmem:[%s344 + $0x18] sm:$0xf]
      %v379 = vld [vmem:[%s344 + $0x28] sm:$0xf]
      %v380 = vld [vmem:[%s344 + $0x38] sm:$0xf]
      %v381 = vlaneseq
      %v382 = vshrl.u32 %v381, 7
      %v383 = vsub.s32 2, %v382
      %v384 = vrot.slane %v263, %v383
      %v385 = vmul.f32 %v384, %v377
      %v386 = vmul.f32 %v384, %v378
      %v387 = vmul.f32 %v384, %v379
      %v388 = vmul.f32 %v384, %v380
      %v389 = vadd.f32 %v373, %v385
      %v390 = vadd.f32 %v374, %v386
      %v391 = vadd.f32 %v375, %v387
      %v392 = vadd.f32 %v376, %v388
      %v393 = vld [vmem:[%s344 + $0x9] sm:$0xf]
      %v394 = vld [vmem:[%s344 + $0x19] sm:$0xf]
      %v395 = vld [vmem:[%s344 + $0x29] sm:$0xf]
      %v396 = vld [vmem:[%s344 + $0x39] sm:$0xf]
      %v397 = vlaneseq
      %v398 = vshrl.u32 %v397, 7
      %v399 = vsub.s32 3, %v398
      %v400 = vrot.slane %v263, %v399
      %v401 = vmul.f32 %v400, %v393
      %v402 = vmul.f32 %v400, %v394
      %v403 = vmul.f32 %v400, %v395
      %v404 = vmul.f32 %v400, %v396
      %v405 = vadd.f32 %v389, %v401
      %v406 = vadd.f32 %v390, %v402
      %v407 = vadd.f32 %v391, %v403
      %v408 = vadd.f32 %v392, %v404
      %v409 = vld [vmem:[%s344 + $0xa] sm:$0xf]
      %v410 = vld [vmem:[%s344 + $0x1a] sm:$0xf]
      %v411 = vld [vmem:[%s344 + $0x2a] sm:$0xf]
      %v412 = vld [vmem:[%s344 + $0x3a] sm:$0xf]
      %v413 = vlaneseq
      %v414 = vshrl.u32 %v413, 7
      %v415 = vsub.s32 4, %v414
      %v416 = vrot.slane %v263, %v415
      %v417 = vmul.f32 %v416, %v409
      %v418 = vmul.f32 %v416, %v410
      %v419 = vmul.f32 %v416, %v411
      %v420 = vmul.f32 %v416, %v412
      %v421 = vadd.f32 %v405, %v417
      %v422 = vadd.f32 %v406, %v418
      %v423 = vadd.f32 %v407, %v419
      %v424 = vadd.f32 %v408, %v420
      %v425 = vld [vmem:[%s257 + $0x6] sm:$0xf]
      %v426 = vld [vmem:[%s257 + $0x16] sm:$0xf]
      %v427 = vld [vmem:[%s257 + $0x26] sm:$0xf]
      %v428 = vld [vmem:[%s257 + $0x36] sm:$0xf]
      %v429 = vlaneseq
      %v430 = vshrl.u32 %v429, 7
      %v431 = vsub.s32 0, %v430
      %v432 = vrot.slane %v264, %v431
      %v433 = vmul.f32 %v432, %v425
      %v434 = vmul.f32 %v432, %v426
      %v435 = vmul.f32 %v432, %v427
      %v436 = vmul.f32 %v432, %v428
      %v437 = vadd.f32 %v421, %v433
      %v438 = vadd.f32 %v422, %v434
      %v439 = vadd.f32 %v423, %v435
      %v440 = vadd.f32 %v424, %v436
      %v441 = vld [vmem:[%s257 + $0x7] sm:$0xf]
      %v442 = vld [vmem:[%s257 + $0x17] sm:$0xf]
      %v443 = vld [vmem:[%s257 + $0x27] sm:$0xf]
      %v444 = vld [vmem:[%s257 + $0x37] sm:$0xf]
      %v445 = vlaneseq
      %v446 = vshrl.u32 %v445, 7
      %v447 = vsub.s32 1, %v446
      %v448 = vrot.slane %v264, %v447
      %v449 = vmul.f32 %v448, %v441
      %v450 = vmul.f32 %v448, %v442
      %v451 = vmul.f32 %v448, %v443
      %v452 = vmul.f32 %v448, %v444
      %v453 = vadd.f32 %v437, %v449
      %v454 = vadd.f32 %v438, %v450
      %v455 = vadd.f32 %v439, %v451
      %v456 = vadd.f32 %v440, %v452
      %v457 = vld [vmem:[%s257 + $0x8] sm:$0xf]
      %v458 = vld [vmem:[%s257 + $0x18] sm:$0xf]
      %v459 = vld [vmem:[%s257 + $0x28] sm:$0xf]
      %v460 = vld [vmem:[%s257 + $0x38] sm:$0xf]
      %v461 = vlaneseq
      %v462 = vshrl.u32 %v461, 7
      %v463 = vsub.s32 2, %v462
      %v464 = vrot.slane %v264, %v463
      %v465 = vmul.f32 %v464, %v457
      %v466 = vmul.f32 %v464, %v458
      %v467 = vmul.f32 %v464, %v459
      %v468 = vmul.f32 %v464, %v460
      %v469 = vadd.f32 %v453, %v465
      %v470 = vadd.f32 %v454, %v466
      %v471 = vadd.f32 %v455, %v467
      %v472 = vadd.f32 %v456, %v468
      %v473 = vld [vmem:[%s257 + $0x9] sm:$0xf]
      %v474 = vld [vmem:[%s257 + $0x19] sm:$0xf]
      %v475 = vld [vmem:[%s257 + $0x29] sm:$0xf]
      %v476 = vld [vmem:[%s257 + $0x39] sm:$0xf]
      %v477 = vlaneseq
      %v478 = vshrl.u32 %v477, 7
      %v479 = vsub.s32 3, %v478
      %v480 = vrot.slane %v264, %v479
      %v481 = vmul.f32 %v480, %v473
      %v482 = vmul.f32 %v480, %v474
      %v483 = vmul.f32 %v480, %v475
      %v484 = vmul.f32 %v480, %v476
      %v485 = vadd.f32 %v469, %v481
      %v486 = vadd.f32 %v470, %v482
      %v487 = vadd.f32 %v471, %v483
      %v488 = vadd.f32 %v472, %v484
      %v489 = vld [vmem:[%s257 + $0xa] sm:$0xf]
      %v490 = vld [vmem:[%s257 + $0x1a] sm:$0xf]
      %v491 = vld [vmem:[%s257 + $0x2a] sm:$0xf]
      %v492 = vld [vmem:[%s257 + $0x3a] sm:$0xf]
      %v493 = vlaneseq
      %v494 = vshrl.u32 %v493, 7
      %v495 = vsub.s32 4, %v494
      %v496 = vrot.slane %v264, %v495
      %v497 = vmul.f32 %v496, %v489
      %v498 = vmul.f32 %v496, %v490
      %v499 = vmul.f32 %v496, %v491
      %v500 = vmul.f32 %v496, %v492
      %v501 = vadd.f32 %v485, %v497
      %v502 = vadd.f32 %v486, %v498
      %v503 = vadd.f32 %v487, %v499
      %v504 = vadd.f32 %v488, %v500
      %s505 = scalar_lea.vmem [#allocation2], 48
      %v506 = vld [vmem:[%s505 + $0x6] sm:$0xf]
      %v507 = vld [vmem:[%s505 + $0x16] sm:$0xf]
      %v508 = vld [vmem:[%s505 + $0x26] sm:$0xf]
      %v509 = vld [vmem:[%s505 + $0x36] sm:$0xf]
      %v510 = vlaneseq
      %v511 = vshrl.u32 %v510, 7
      %v512 = vsub.s32 0, %v511
      %v513 = vrot.slane %v265, %v512
      %v514 = vmul.f32 %v513, %v506
      %v515 = vmul.f32 %v513, %v507
      %v516 = vmul.f32 %v513, %v508
      %v517 = vmul.f32 %v513, %v509
      %v518 = vadd.f32 %v501, %v514
      %v519 = vadd.f32 %v502, %v515
      %v520 = vadd.f32 %v503, %v516
      %v521 = vadd.f32 %v504, %v517
      %v522 = vld [vmem:[%s505 + $0x7] sm:$0xf]
      %v523 = vld [vmem:[%s505 + $0x17] sm:$0xf]
      %v524 = vld [vmem:[%s505 + $0x27] sm:$0xf]
      %v525 = vld [vmem:[%s505 + $0x37] sm:$0xf]
      %v526 = vlaneseq
      %v527 = vshrl.u32 %v526, 7
      %v528 = vsub.s32 1, %v527
      %v529 = vrot.slane %v265, %v528
      %v530 = vmul.f32 %v529, %v522
      %v531 = vmul.f32 %v529, %v523
      %v532 = vmul.f32 %v529, %v524
      %v533 = vmul.f32 %v529, %v525
      %v534 = vadd.f32 %v518, %v530
      %v535 = vadd.f32 %v519, %v531
      %v536 = vadd.f32 %v520, %v532
      %v537 = vadd.f32 %v521, %v533
      %v538 = vld [vmem:[%s505 + $0x8] sm:$0xf]
      %v539 = vld [vmem:[%s505 + $0x18] sm:$0xf]
      %v540 = vld [vmem:[%s505 + $0x28] sm:$0xf]
      %v541 = vld [vmem:[%s505 + $0x38] sm:$0xf]
      %v542 = vlaneseq
      %v543 = vshrl.u32 %v542, 7
      %v544 = vsub.s32 2, %v543
      %v545 = vrot.slane %v265, %v544
      %v546 = vmul.f32 %v545, %v538
      %v547 = vmul.f32 %v545, %v539
      %v548 = vmul.f32 %v545, %v540
      %v549 = vmul.f32 %v545, %v541
      %v550 = vadd.f32 %v534, %v546
      %v551 = vadd.f32 %v535, %v547
      %v552 = vadd.f32 %v536, %v548
      %v553 = vadd.f32 %v537, %v549
      %v554 = vld [vmem:[%s505 + $0x9] sm:$0xf]
      %v555 = vld [vmem:[%s505 + $0x19] sm:$0xf]
      %v556 = vld [vmem:[%s505 + $0x29] sm:$0xf]
      %v557 = vld [vmem:[%s505 + $0x39] sm:$0xf]
      %v558 = vlaneseq
      %v559 = vshrl.u32 %v558, 7
      %v560 = vsub.s32 3, %v559
      %v561 = vrot.slane %v265, %v560
      %v562 = vmul.f32 %v561, %v554
      %v563 = vmul.f32 %v561, %v555
      %v564 = vmul.f32 %v561, %v556
      %v565 = vmul.f32 %v561, %v557
      %v566 = vadd.f32 %v550, %v562
      %v567 = vadd.f32 %v551, %v563
      %v568 = vadd.f32 %v552, %v564
      %v569 = vadd.f32 %v553, %v565
      %v570 = vld [vmem:[%s505 + $0xa] sm:$0xf]
      %v571 = vld [vmem:[%s505 + $0x1a] sm:$0xf]
      %v572 = vld [vmem:[%s505 + $0x2a] sm:$0xf]
      %v573 = vld [vmem:[%s505 + $0x3a] sm:$0xf]
      %v574 = vlaneseq
      %v575 = vshrl.u32 %v574, 7
      %v576 = vsub.s32 4, %v575
      %v577 = vrot.slane %v265, %v576
      %v578 = vmul.f32 %v577, %v570
      %v579 = vmul.f32 %v577, %v571
      %v580 = vmul.f32 %v577, %v572
      %v581 = vmul.f32 %v577, %v573
      %v582 = vadd.f32 %v566, %v578
      %v583 = vadd.f32 %v567, %v579
      %v584 = vadd.f32 %v568, %v580
      %v585 = vadd.f32 %v569, %v581
      %s586 = scalar_lea.vmem [#allocation2], 64
      %v587 = vld [vmem:[%s586 + $0x6] sm:$0xf]
      %v588 = vld [vmem:[%s586 + $0x16] sm:$0xf]
      %v589 = vld [vmem:[%s586 + $0x26] sm:$0xf]
      %v590 = vld [vmem:[%s586 + $0x36] sm:$0xf]
      %v591 = vlaneseq
      %v592 = vshrl.u32 %v591, 7
      %v593 = vsub.s32 0, %v592
      %v594 = vrot.slane %v266, %v593
      %v595 = vmul.f32 %v594, %v587
      %v596 = vmul.f32 %v594, %v588
      %v597 = vmul.f32 %v594, %v589
      %v598 = vmul.f32 %v594, %v590
      %v599 = vadd.f32 %v582, %v595
      %v600 = vadd.f32 %v583, %v596
      %v601 = vadd.f32 %v584, %v597
      %v602 = vadd.f32 %v585, %v598
      %v603 = vld [vmem:[%s586 + $0x7] sm:$0xf]
      %v604 = vld [vmem:[%s586 + $0x17] sm:$0xf]
      %v605 = vld [vmem:[%s586 + $0x27] sm:$0xf]
      %v606 = vld [vmem:[%s586 + $0x37] sm:$0xf]
      %v607 = vlaneseq
      %v608 = vshrl.u32 %v607, 7
      %v609 = vsub.s32 1, %v608
      %v610 = vrot.slane %v266, %v609
      %v611 = vmul.f32 %v610, %v603
      %v612 = vmul.f32 %v610, %v604
      %v613 = vmul.f32 %v610, %v605
      %v614 = vmul.f32 %v610, %v606
      %v615 = vadd.f32 %v599, %v611
      %v616 = vadd.f32 %v600, %v612
      %v617 = vadd.f32 %v601, %v613
      %v618 = vadd.f32 %v602, %v614
      %v619 = vld [vmem:[%s586 + $0x8] sm:$0xf]
      %v620 = vld [vmem:[%s586 + $0x18] sm:$0xf]
      %v621 = vld [vmem:[%s586 + $0x28] sm:$0xf]
      %v622 = vld [vmem:[%s586 + $0x38] sm:$0xf]
      %v623 = vlaneseq
      %v624 = vshrl.u32 %v623, 7
      %v625 = vsub.s32 2, %v624
      %v626 = vrot.slane %v266, %v625
      %v627 = vmul.f32 %v626, %v619
      %v628 = vmul.f32 %v626, %v620
      %v629 = vmul.f32 %v626, %v621
      %v630 = vmul.f32 %v626, %v622
      %v631 = vadd.f32 %v615, %v627
      %v632 = vadd.f32 %v616, %v628
      %v633 = vadd.f32 %v617, %v629
      %v634 = vadd.f32 %v618, %v630
      %v635 = vld [vmem:[%s586 + $0x9] sm:$0xf]
      %v636 = vld [vmem:[%s586 + $0x19] sm:$0xf]
      %v637 = vld [vmem:[%s586 + $0x29] sm:$0xf]
      %v638 = vld [vmem:[%s586 + $0x39] sm:$0xf]
      %v639 = vlaneseq
      %v640 = vshrl.u32 %v639, 7
      %v641 = vsub.s32 3, %v640
      %v642 = vrot.slane %v266, %v641
      %v643 = vmul.f32 %v642, %v635
      %v644 = vmul.f32 %v642, %v636
      %v645 = vmul.f32 %v642, %v637
      %v646 = vmul.f32 %v642, %v638
      %v647 = vadd.f32 %v631, %v643
      %v648 = vadd.f32 %v632, %v644
      %v649 = vadd.f32 %v633, %v645
      %v650 = vadd.f32 %v634, %v646
      %v651 = vld [vmem:[%s586 + $0xa] sm:$0xf]
      %v652 = vld [vmem:[%s586 + $0x1a] sm:$0xf]
      %v653 = vld [vmem:[%s586 + $0x2a] sm:$0xf]
      %v654 = vld [vmem:[%s586 + $0x3a] sm:$0xf]
      %v655 = vlaneseq
      %v656 = vshrl.u32 %v655, 7
      %v657 = vsub.s32 4, %v656
      %v658 = vrot.slane %v266, %v657
      %v659 = vmul.f32 %v658, %v651
      %v660 = vmul.f32 %v658, %v652
      %v661 = vmul.f32 %v658, %v653
      %v662 = vmul.f32 %v658, %v654
      %v663 = vadd.f32 %v647, %v659
      %v664 = vadd.f32 %v648, %v660
      %v665 = vadd.f32 %v649, %v661
      %v666 = vadd.f32 %v650, %v662
      %v668 = vlaneseq
      %v669 = vshrl.u32 %v668, 7
      %v670 = vsub.s32 0, %v669
      %v671 = vrot.slane %v267, %v670
      %v673 = vadd.f32 %v663, %v671
      %v674 = vadd.f32 %v664, %v671
      %v675 = vadd.f32 %v665, %v671
      %v676 = vadd.f32 %v666, %v671
      %v677 = vmul.f32 %v673, 0.5
      %v678 = vmul.f32 %v674, 0.5
      %v679 = vmul.f32 %v675, 0.5
      %v680 = vmul.f32 %v676, 0.5
      %v681 = vmul.f32 %v673, 0.044715
      %v682 = vmul.f32 %v674, 0.044715
      %v683 = vmul.f32 %v675, 0.044715
      %v684 = vmul.f32 %v676, 0.044715
      %v685 = vmul.f32 %v681, %v673
      %v686 = vmul.f32 %v682, %v674
      %v687 = vmul.f32 %v683, %v675
      %v688 = vmul.f32 %v684, %v676
      %v689 = vmul.f32 %v685, %v673
      %v690 = vmul.f32 %v686, %v674
      %v691 = vmul.f32 %v687, %v675
      %v692 = vmul.f32 %v688, %v676
      %v693 = vadd.f32 %v673, %v689
      %v694 = vadd.f32 %v674, %v690
      %v695 = vadd.f32 %v675, %v691
      %v696 = vadd.f32 %v676, %v692
      %v697 = vmul.f32 %v693, 0.7978846
      %v698 = vmul.f32 %v694, 0.7978846
      %v699 = vmul.f32 %v695, 0.7978846
      %v700 = vmul.f32 %v696, 0.7978846
      %v701 = vtanh.pop %v697
      %v702 = vtanh.pop %v698
      %v703 = vtanh.pop %v699
      %v704 = vtanh.pop %v700
      %v705 = vadd.f32 %v701, 1.0
      %v706 = vadd.f32 %v702, 1.0
      %v707 = vadd.f32 %v703, 1.0
      %v708 = vadd.f32 %v704, 1.0
      %v709 = vmul.f32 %v677, %v705
      %v710 = vmul.f32 %v678, %v706
      %v711 = vmul.f32 %v679, %v707
      %v712 = vmul.f32 %v680, %v708
      %v713 = vmul.f32 %v709, 0.5
      %v714 = vmul.f32 %v710, 0.5
      %v715 = vmul.f32 %v711, 0.5
      %v716 = vmul.f32 %v712, 0.5
      %v717 = vmul.f32 %v709, 0.044715
      %v718 = vmul.f32 %v710, 0.044715
      %v719 = vmul.f32 %v711, 0.044715
      %v720 = vmul.f32 %v712, 0.044715
      %v721 = vmul.f32 %v717, %v709
      %v722 = vmul.f32 %v718, %v710
      %v723 = vmul.f32 %v719, %v711
      %v724 = vmul.f32 %v720, %v712
      %v725 = vmul.f32 %v721, %v709
      %v726 = vmul.f32 %v722, %v710
      %v727 = vmul.f32 %v723, %v711
      %v728 = vmul.f32 %v724, %v712
      %v729 = vadd.f32 %v709, %v725
      %v730 = vadd.f32 %v710, %v726
      %v731 = vadd.f32 %v711, %v727
      %v732 = vadd.f32 %v712, %v728
      %v733 = vmul.f32 %v729, 0.7978846
      %v734 = vmul.f32 %v730, 0.7978846
      %v735 = vmul.f32 %v731, 0.7978846
      %v736 = vmul.f32 %v732, 0.7978846
      %v737 = vtanh.pop %v733
      %v738 = vtanh.pop %v734
      %v739 = vtanh.pop %v735
      %v740 = vtanh.pop %v736
      %v741 = vadd.f32 %v737, 1.0
      %v742 = vadd.f32 %v738, 1.0
      %v743 = vadd.f32 %v739, 1.0
      %v744 = vadd.f32 %v740, 1.0
      %v745 = vmul.f32 %v713, %v741
      %v746 = vmul.f32 %v714, %v742
      %v747 = vmul.f32 %v715, %v743
      %v748 = vmul.f32 %v716, %v744
      %v749 = vpack.c.bf16 %v745, %v745
      %v750 = vpack.c.bf16 %v746, %v746
      %v751 = vpack.c.bf16 %v747, %v747
      %v752 = vpack.c.bf16 %v748, %v748
      %753 = vst [vmem:[%s232] sm:$0x3] %v749
      %754 = vst [vmem:[%s232 + $0x2] sm:$0x3] %v750
      %755 = vst [vmem:[%s232 + $0x4] sm:$0x3] %v751
      %756 = vst [vmem:[%s232 + $0x6] sm:$0x3] %v752
      %p757 = scmp.lt.s32.totalorder %s18, 1
      %s758 = scalar_select %p757, %s18, 1
      %p759 = scmp.lt.s32.totalorder %s19, 0
      %s760 = scalar_select %p759, %s19, 0
      %s761 = smul.addr %s758, 4
      %s762 = sadd.s32 %s760, %s761
      %s763 = smul.addr %s762, 2
      %s764 = scalar_lea.vmem %s3, %s763
      // Predicated region
      $region33: #{mrfp_forward.12} parent=31 // pred_check
        %p765 = pneg %p126
      $region34: #{mrfp_forward.12} parent=31 // pred_check_branch
        %767 = sbr.rel (%p765) target = $region36
      $region35: #{mrfp_forward.12} parent=31 // pred_region
        _
      $region36: #{mrfp_forward.12} parent=31 // pred_fallthru
        _
    $region32: #{mrfp_forward.12} parent=5 // pred_fallthru
      _
    %p768 = scmp.le.s32.totalorder 2, %s9
    // Predicated region
    $region37: #{mrfp_forward.12} parent=5 // pred_check
      %p769 = pneg %p768
    $region38: #{mrfp_forward.12} parent=5 // pred_check_branch
      %771 = sbr.rel (%p769) target = $region40
    $region39: #{mrfp_forward.12} parent=5 // pred_region
      %s772 = ssub.s32 %s9, 2
      // Predicated region
      $region41: #{mrfp_forward.12} parent=39 // pred_check
        %p773 = pneg %p132
      $region42: #{mrfp_forward.12} parent=39 // pred_check_branch
        %775 = sbr.rel (%p773) target = $region44
      $region43: #{mrfp_forward.12} parent=39 // pred_region
        %p776 = scmp.lt.s32.totalorder %s20, 1
        %s777 = scalar_select %p776, %s20, 1
        %p778 = scmp.lt.s32.totalorder %s21, 0
        %s779 = scalar_select %p778, %s21, 0
        %s780 = smul.addr %s777, 4
        %s781 = sadd.s32 %s779, %s780
        %s782 = smul.addr %s781, 2
        %s783 = scalar_lea.vmem %s3, %s782
      $region44: #{mrfp_forward.12} parent=39 // pred_fallthru
        _
    $region40: #{mrfp_forward.12} parent=5 // pred_fallthru
      _
  $region6: #{mrfp_forward.12} parent=0 // loop_footer
    %s13 = sadd.s32 1, %s9
  $region7: #{mrfp_forward.12} parent=0 // loop_footer_branch
    %8 = sbr.rel target = $region3
  $region8: #{mrfp_forward.12} parent=0 // loop_exit
    _

// kernel: mrfp_forward.11
$region0: #{mrfp_forward.11}
  #allocation0 [shape = 'u32[]', space=smem, size = 0x4, offset = 0x4, fixed_abs, tag = 'smem constant byte address 0x4 - core index']
  #allocation1 [shape = 'u32[144,128]{1,0:T(1,128)}', space=vmem, size = 0x12000, scoped, tag = 'internal scratch']
  %s0 = inlined_call_operand.vmem [shape: bf16[128,128], index: 0, kind: input, shape index: {}]
  %s1 = inlined_call_operand.vmem [shape: bf16[128,64], index: 1, kind: input, shape index: {}]
  %s2 = inlined_call_operand.vmem [shape: f32[1,64], index: 2, kind: input, shape index: {}]
  %s3 = inlined_call_operand.vmem [shape: f32[128,64], index: 3, kind: output, shape index: {}]
  %s4 = sld [smem:[#allocation0]]
  $region22: #{mrfp_forward.11} parent=0
    _
  %s6 = ssub.s32 1, %s4
  %s7 = scalar_select 0, %s6, %s4
  // Predicated region
  $region2: #{mrfp_forward.11} parent=0 // pred_check
    _
  $region3: #{mrfp_forward.11} parent=0 // pred_check_branch
    %9 = sbr.rel (0) target = $region5
  $region4: #{mrfp_forward.11} parent=0 // pred_region
    _
  $region5: #{mrfp_forward.11} parent=0 // pred_fallthru
    _
  // Predicated region
  $region6: #{mrfp_forward.11} parent=0 // pred_check
    _
  $region7: #{mrfp_forward.11} parent=0 // pred_check_branch
    %11 = sbr.rel (0) target = $region9
  $region8: #{mrfp_forward.11} parent=0 // pred_region
    _
  $region9: #{mrfp_forward.11} parent=0 // pred_fallthru
    _
  // Predicated region
  $region10: #{mrfp_forward.11} parent=0 // pred_check
    _
  $region11: #{mrfp_forward.11} parent=0 // pred_check_branch
    %13 = sbr.rel (0) target = $region13
  $region12: #{mrfp_forward.11} parent=0 // pred_region
    _
  $region13: #{mrfp_forward.11} parent=0 // pred_fallthru
    _
  %v15 = vld [vmem:[%s0] sm:$0xf]
  %v16 = vld [vmem:[%s0 + $0x4] sm:$0xf]
  %v17 = vld [vmem:[%s0 + $0x8] sm:$0xf]
  %v18 = vld [vmem:[%s0 + $0xc] sm:$0xf]
  %v19 = vld [vmem:[%s0 + $0x10] sm:$0xf]
  %v20 = vld [vmem:[%s0 + $0x14] sm:$0xf]
  %v21 = vld [vmem:[%s0 + $0x18] sm:$0xf]
  %v22 = vld [vmem:[%s0 + $0x1c] sm:$0xf]
  %v23 = vld [vmem:[%s0 + $0x20] sm:$0xf]
  %v24 = vld [vmem:[%s0 + $0x24] sm:$0xf]
  %v25 = vld [vmem:[%s0 + $0x28] sm:$0xf]
  %v26 = vld [vmem:[%s0 + $0x2c] sm:$0xf]
  %v27 = vld [vmem:[%s0 + $0x30] sm:$0xf]
  %v28 = vld [vmem:[%s0 + $0x34] sm:$0xf]
  %v29 = vld [vmem:[%s0 + $0x38] sm:$0xf]
  %v30 = vld [vmem:[%s0 + $0x3c] sm:$0xf]
  %v31 = vld [vmem:[%s1] sm:$0xf]
  %v32 = vld [vmem:[%s1 + $0x4] sm:$0xf]
  %v33 = vld [vmem:[%s1 + $0x8] sm:$0xf]
  %v34 = vld [vmem:[%s1 + $0xc] sm:$0xf]
  %v35 = vld [vmem:[%s1 + $0x10] sm:$0xf]
  %v36 = vld [vmem:[%s1 + $0x14] sm:$0xf]
  %v37 = vld [vmem:[%s1 + $0x18] sm:$0xf]
  %v38 = vld [vmem:[%s1 + $0x1c] sm:$0xf]
  %v39 = vld [vmem:[%s1 + $0x20] sm:$0xf]
  %v40 = vld [vmem:[%s1 + $0x24] sm:$0xf]
  %v41 = vld [vmem:[%s1 + $0x28] sm:$0xf]
  %v42 = vld [vmem:[%s1 + $0x2c] sm:$0xf]
  %v43 = vld [vmem:[%s1 + $0x30] sm:$0xf]
  %v44 = vld [vmem:[%s1 + $0x34] sm:$0xf]
  %v45 = vld [vmem:[%s1 + $0x38] sm:$0xf]
  %v46 = vld [vmem:[%s1 + $0x3c] sm:$0xf]
  %v47 = vld [vmem:[%s2] sm:$0x1]
  %v49 = vlaneseq
  %v50 = vshrl.u32 %v49, 7
  %v51 = vsub.s32 0, %v50
  %v52 = vrot.slane %v47, %v51
  %v70 = vunpack.c.l.b16 %v15
  %v71 = vunpack.c.l.b16 %v16
  %v72 = vunpack.c.l.b16 %v17
  %v73 = vunpack.c.l.b16 %v18
  %v74 = vunpack.c.l.b16 %v19
  %v75 = vunpack.c.l.b16 %v20
  %v76 = vunpack.c.l.b16 %v21
  %v77 = vunpack.c.l.b16 %v22
  %v78 = vunpack.c.l.b16 %v23
  %v79 = vunpack.c.l.b16 %v24
  %v80 = vunpack.c.l.b16 %v25
  %v81 = vunpack.c.l.b16 %v26
  %v82 = vunpack.c.l.b16 %v27
  %v83 = vunpack.c.l.b16 %v28
  %v84 = vunpack.c.l.b16 %v29
  %v85 = vunpack.c.l.b16 %v30
  %v86 = vpack.c.b16 %v71, %v70
  %v87 = vpack.c.b16 %v73, %v72
  %v88 = vpack.c.b16 %v75, %v74
  %v89 = vpack.c.b16 %v77, %v76
  %v90 = vpack.c.b16 %v79, %v78
  %v91 = vpack.c.b16 %v81, %v80
  %v92 = vpack.c.b16 %v83, %v82
  %v93 = vpack.c.b16 %v85, %v84
  %v118 = vunpack.c.l.b16 %v31
  %v119 = vunpack.c.l.b16 %v32
  %v120 = vunpack.c.l.b16 %v33
  %v121 = vunpack.c.l.b16 %v34
  %v122 = vunpack.c.l.b16 %v35
  %v123 = vunpack.c.l.b16 %v36
  %v124 = vunpack.c.l.b16 %v37
  %v125 = vunpack.c.l.b16 %v38
  %v126 = vunpack.c.l.b16 %v39
  %v127 = vunpack.c.l.b16 %v40
  %v128 = vunpack.c.l.b16 %v41
  %v129 = vunpack.c.l.b16 %v42
  %v130 = vunpack.c.l.b16 %v43
  %v131 = vunpack.c.l.b16 %v44
  %v132 = vunpack.c.l.b16 %v45
  %v133 = vunpack.c.l.b16 %v46
  %v134 = vpack.c.b16 %v119, %v118
  %v135 = vpack.c.b16 %v121, %v120
  %v136 = vpack.c.b16 %v123, %v122
  %v137 = vpack.c.b16 %v125, %v124
  %v138 = vpack.c.b16 %v127, %v126
  %v139 = vpack.c.b16 %v129, %v128
  %v140 = vpack.c.b16 %v131, %v130
  %v141 = vpack.c.b16 %v133, %v132
  %150 = vmatprep.subr.bf16.mxu0 0
  %151 = vmatpush1.bf16.msra.mxu0 %v141
  %152 = vmatprep.subr.bf16.mxu0 0
  %153 = vmatpush1.bf16.msra.mxu0 %v140
  %154 = vmatprep.subr.bf16.mxu0 0
  %155 = vmatpush1.bf16.msra.mxu0 %v139
  %156 = vmatprep.subr.bf16.mxu0 0
  %157 = vmatpush1.bf16.msra.mxu0 %v138
  %158 = vmatprep.subr.bf16.mxu0 0
  %159 = vmatpush1.bf16.msra.mxu0 %v137
  %160 = vmatprep.subr.bf16.mxu0 0
  %161 = vmatpush1.bf16.msra.mxu0 %v136
  %162 = vmatprep.subr.bf16.mxu0 0
  %163 = vmatpush1.bf16.msra.mxu0 %v135
  %164 = vmatprep.subr.bf16.mxu0 0
  %165 = vmatpush1.bf16.msra.mxu0 %v134
  %166 = vmatprep.subr.bf16.mxu0 0
  %167 = vmatpush2.bf16.msra.mxu0 0
  %168 = vmatprep.subr.bf16.mxu0 0
  %169 = vmatpush2.bf16.msra.mxu0 0
  %170 = vmatprep.subr.bf16.mxu0 0
  %171 = vmatpush2.bf16.msra.mxu0 0
  %172 = vmatprep.subr.bf16.mxu0 0
  %173 = vmatpush2.bf16.msra.mxu0 0
  %174 = vmatprep.subr.bf16.mxu0 0
  %175 = vmatpush2.bf16.msra.mxu0 0
  %176 = vmatprep.subr.bf16.mxu0 0
  %177 = vmatpush2.bf16.msra.mxu0 0
  %178 = vmatprep.subr.bf16.mxu0 0
  %179 = vmatpush2.bf16.msra.mxu0 0
  %180 = vmatprep.subr.bf16.mxu0 0
  %181 = vmatpush2.bf16.msra.mxu0 0
  %182 = vmatprep.mubr.bf16.mxu0 0
  %183 = vmatmul.mubr.bf16.gmra.mxu0 %v86
  %v184 = vpop.f32.mrf.mxu0
  %v185 = vadd.f32 %v52, %v184
  %v186 = vpop.f32.mrf.mxu0
  %v187 = vpop.f32.mrf.mxu0
  %v188 = vadd.f32 %v52, %v187
  %v189 = vpop.f32.mrf.mxu0
  %190 = vmatprep.mubr.bf16.mxu0 0
  %191 = vmatmul.mubr.bf16.gmra.mxu0 %v87
  %v192 = vpop.f32.mrf.mxu0
  %v193 = vadd.f32 %v52, %v192
  %v194 = vpop.f32.mrf.mxu0
  %v195 = vpop.f32.mrf.mxu0
  %v196 = vadd.f32 %v52, %v195
  %v197 = vpop.f32.mrf.mxu0
  %198 = vmatprep.mubr.bf16.mxu0 0
  %199 = vmatmul.mubr.bf16.gmra.mxu0 %v88
  %v200 = vpop.f32.mrf.mxu0
  %v201 = vadd.f32 %v52, %v200
  %v202 = vpop.f32.mrf.mxu0
  %v203 = vpop.f32.mrf.mxu0
  %v204 = vadd.f32 %v52, %v203
  %v205 = vpop.f32.mrf.mxu0
  %206 = vmatprep.mubr.bf16.mxu0 0
  %207 = vmatmul.mubr.bf16.gmra.mxu0 %v89
  %v208 = vpop.f32.mrf.mxu0
  %v209 = vadd.f32 %v52, %v208
  %v210 = vpop.f32.mrf.mxu0
  %v211 = vpop.f32.mrf.mxu0
  %v212 = vadd.f32 %v52, %v211
  %v213 = vpop.f32.mrf.mxu0
  %214 = vmatprep.mubr.bf16.mxu0 0
  %215 = vmatmul.mubr.bf16.gmra.mxu0 %v90
  %v216 = vpop.f32.mrf.mxu0
  %v217 = vadd.f32 %v52, %v216
  %v218 = vpop.f32.mrf.mxu0
  %v219 = vpop.f32.mrf.mxu0
  %v220 = vadd.f32 %v52, %v219
  %v221 = vpop.f32.mrf.mxu0
  %222 = vmatprep.mubr.bf16.mxu0 0
  %223 = vmatmul.mubr.bf16.gmra.mxu0 %v91
  %v224 = vpop.f32.mrf.mxu0
  %v225 = vadd.f32 %v52, %v224
  %v226 = vpop.f32.mrf.mxu0
  %v227 = vpop.f32.mrf.mxu0
  %v228 = vadd.f32 %v52, %v227
  %v229 = vpop.f32.mrf.mxu0
  %230 = vmatprep.mubr.bf16.mxu0 0
  %231 = vmatmul.mubr.bf16.gmra.mxu0 %v92
  %v232 = vpop.f32.mrf.mxu0
  %v233 = vadd.f32 %v52, %v232
  %v234 = vpop.f32.mrf.mxu0
  %v235 = vpop.f32.mrf.mxu0
  %v236 = vadd.f32 %v52, %v235
  %v237 = vpop.f32.mrf.mxu0
  %238 = vmatprep.mubr.bf16.mxu0 0
  %239 = vmatmul.mubr.bf16.gmra.mxu0 %v93
  %v240 = vpop.f32.mrf.mxu0
  %v241 = vadd.f32 %v52, %v240
  %v242 = vpop.f32.mrf.mxu0
  %v243 = vpop.f32.mrf.mxu0
  %v244 = vadd.f32 %v52, %v243
  %v245 = vpop.f32.mrf.mxu0
  %246 = vdwg.mxu0
  %vm247 = vcmask 523264
  %248 = vst.msk [vmem:[%s3] sm:$0xff] %vm247, %v185
  %249 = vst.msk [vmem:[%s3 + $0x8] sm:$0xff] %vm247, %v188
  %250 = vst.msk [vmem:[%s3 + $0x10] sm:$0xff] %vm247, %v193
  %251 = vst.msk [vmem:[%s3 + $0x18] sm:$0xff] %vm247, %v196
  %252 = vst.msk [vmem:[%s3 + $0x20] sm:$0xff] %vm247, %v201
  %253 = vst.msk [vmem:[%s3 + $0x28] sm:$0xff] %vm247, %v204
  %254 = vst.msk [vmem:[%s3 + $0x30] sm:$0xff] %vm247, %v209
  %255 = vst.msk [vmem:[%s3 + $0x38] sm:$0xff] %vm247, %v212
  %256 = vst.msk [vmem:[%s3 + $0x40] sm:$0xff] %vm247, %v217
  %257 = vst.msk [vmem:[%s3 + $0x48] sm:$0xff] %vm247, %v220
  %258 = vst.msk [vmem:[%s3 + $0x50] sm:$0xff] %vm247, %v225
  %259 = vst.msk [vmem:[%s3 + $0x58] sm:$0xff] %vm247, %v228
  %260 = vst.msk [vmem:[%s3 + $0x60] sm:$0xff] %vm247, %v233
  %261 = vst.msk [vmem:[%s3 + $0x68] sm:$0xff] %vm247, %v236
  %262 = vst.msk [vmem:[%s3 + $0x70] sm:$0xff] %vm247, %v241
  %263 = vst.msk [vmem:[%s3 + $0x78] sm:$0xff] %vm247, %v244
  // Predicated region
  $region14: #{mrfp_forward.11} parent=0 // pred_check
    _
  $region15: #{mrfp_forward.11} parent=0 // pred_check_branch
    %265 = sbr.rel (0) target = $region17
  $region16: #{mrfp_forward.11} parent=0 // pred_region
    _
  $region17: #{mrfp_forward.11} parent=0 // pred_fallthru
    _
  // Predicated region
  $region18: #{mrfp_forward.11} parent=0 // pred_check
    _
  $region19: #{mrfp_forward.11} parent=0 // pred_check_branch
    %267 = sbr.rel (0) target = $region21
  $region20: #{mrfp_forward.11} parent=0 // pred_region
    _
  $region21: #{mrfp_forward.11} parent=0 // pred_fallthru
    _

// kernel: mrfp_forward.10
$region0: #{mrfp_forward.10}
  #allocation0 [shape = 'u32[]', space=smem, size = 0x4, offset = 0x4, fixed_abs, tag = 'smem constant byte address 0x4 - core index']
  #allocation1 [shape = 'u32[144,128]{1,0:T(1,128)}', space=vmem, size = 0x12000, scoped, tag = 'internal scratch']
  #allocation2 [shape = 'f32[12,24,128]{2,1,0:T(8,128)}', space=vmem, size = 0x24000, scoped, tag = 'scratch operand']
  %s0 = inlined_call_operand.vmem [shape: bf16[2,8,8,128], index: 0, kind: input, shape index: {}]
  %s1 = inlined_call_operand.vmem [shape: f32[5,5,128], index: 1, kind: input, shape index: {}]
  %s2 = inlined_call_operand.vmem [shape: f32[1,1,128], index: 2, kind: input, shape index: {}]
  %s3 = inlined_call_operand.vmem [shape: bf16[2,8,8,128], index: 3, kind: output, shape index: {}]
  %s4 = sld [smem:[#allocation0]]
  $region45: #{mrfp_forward.10} parent=0
    _
  %s6 = ssub.s32 1, %s4
  %s7 = scalar_select 0, %s6, %s4
  loop: start=0, step=1, limit=4
  $region2: #{mrfp_forward.10} parent=0 // loop_pre_header
    _
  $region3: #{mrfp_forward.10} parent=0 // loop_header
    %s9 = sphi 0, %s13
    %p10 = scmp.ge.s32.totalorder %s9, 4
    %s16 = sphi 0, %s28
    %s17 = sphi 0, %s24
    %s18 = sphi 0, %s16
    %s19 = sphi 0, %s17
    %s20 = sphi 0, %s18
    %s21 = sphi 0, %s19
    %s33 = sphi 0, %s35
    %s36 = sphi 0, %s33
    %s37 = sphi 0, %s36
    %s53 = sphi 0, %s37
    %s59 = sphi 0, %s61
    %s62 = sphi 0, %s59
    %s63 = sphi 0, %s62
    %s79 = sphi 0, %s63
    %s85 = sphi 0, %s87
    %s88 = sphi 0, %s85
    %s89 = sphi 0, %s88
    %s105 = sphi 0, %s89
    %s113 = sphi 0, %s115
    %s116 = sphi 0, %s113
    %s117 = sphi 0, %s116
    %s133 = sphi 0, %s117
  $region4: #{mrfp_forward.10} parent=0 // loop_header_branch
    %12 = sbr.rel (%p10) target = $region8
  $region5: #{mrfp_forward.10} parent=0 // loop_body
    %s14 = ssub.s32 %s9, 1
    %s15 = ssub.s32 %s9, 2
    %s22 = sadd.s32 1, %s17
    %p23 = scmp.ge.s32.totalorder %s22, 1
    %s24 = scalar_select %p23, 0, %s22
    %s25 = sadd.s32 1, %s16
    %s26 = scalar_select %p23, %s25, %s16
    %p27 = scmp.ge.s32.totalorder %s26, 2
    %s28 = scalar_select %p27, 0, %s26
    %s29 = ssub.s32 %s16, %s28
    %s30 = ssub.s32 %s17, %s24
    %s31 = sor.u32 %s29, %s30
    %p32 = scmp.eq.s32.totalorder %s31, 0
    %s34 = sadd.s32 %s33, 1
    %s35 = scalar_select %p32, %s33, %s34
    %p38 = pneg %p32
    %p39 = scmp.eq.s32.totalorder %s9, 1
    %p40 = por %p38, %p39
    %p41 = scmp.ne.s32.totalorder %s33, %s36
    %p42 = scmp.eq.s32.totalorder %s9, 0
    %p43 = por %p41, %p42
    %p44 = scmp.ne.s32.totalorder %s33, %s36
    %p45 = scmp.eq.s32.totalorder %s14, 1
    %p46 = por %p44, %p45
    %p47 = scmp.ne.s32.totalorder %s36, %s37
    %p48 = scmp.eq.s32.totalorder %s14, 0
    %p49 = por %p47, %p48
    %p50 = scmp.ne.s32.totalorder %s36, %s37
    %p51 = scmp.eq.s32.totalorder %s15, 1
    %p52 = por %p50, %p51
    %p54 = scmp.ne.s32.totalorder %s37, %s53
    %p55 = scmp.eq.s32.totalorder %s15, 0
    %p56 = por %p54, %p55
    %s57 = ssub.s32 %s17, %s24
    %p58 = scmp.eq.s32.totalorder %s57, 0
    %s60 = sadd.s32 %s59, 1
    %s61 = scalar_select %p58, %s59, %s60
    %p64 = pneg %p58
    %p65 = scmp.eq.s32.totalorder %s9, 1
    %p66 = por %p64, %p65
    %p67 = scmp.ne.s32.totalorder %s59, %s62
    %p68 = scmp.eq.s32.totalorder %s9, 0
    %p69 = por %p67, %p68
    %p70 = scmp.ne.s32.totalorder %s59, %s62
    %p71 = scmp.eq.s32.totalorder %s14, 1
    %p72 = por %p70, %p71
    %p73 = scmp.ne.s32.totalorder %s62, %s63
    %p74 = scmp.eq.s32.totalorder %s14, 0
    %p75 = por %p73, %p74
    %p76 = scmp.ne.s32.totalorder %s62, %s63
    %p77 = scmp.eq.s32.totalorder %s15, 1
    %p78 = por %p76, %p77
    %p80 = scmp.ne.s32.totalorder %s63, %s79
    %p81 = scmp.eq.s32.totalorder %s15, 0
    %p82 = por %p80, %p81
    %s83 = ssub.s32 %s17, %s24
    %p84 = scmp.eq.s32.totalorder %s83, 0
    %s86 = sadd.s32 %s85, 1
    %s87 = scalar_select %p84, %s85, %s86
    %p90 = pneg %p84
    %p91 = scmp.eq.s32.totalorder %s9, 1
    %p92 = por %p90, %p91
    %p93 = scmp.ne.s32.totalorder %s85, %s88
    %p94 = scmp.eq.s32.totalorder %s9, 0
    %p95 = por %p93, %p94
    %p96 = scmp.ne.s32.totalorder %s85, %s88
    %p97 = scmp.eq.s32.totalorder %s14, 1
    %p98 = por %p96, %p97
    %p99 = scmp.ne.s32.totalorder %s88, %s89
    %p100 = scmp.eq.s32.totalorder %s14, 0
    %p101 = por %p99, %p100
    %p102 = scmp.ne.s32.totalorder %s88, %s89
    %p103 = scmp.eq.s32.totalorder %s15, 1
    %p104 = por %p102, %p103
    %p106 = scmp.ne.s32.totalorder %s89, %s105
    %p107 = scmp.eq.s32.totalorder %s15, 0
    %p108 = por %p106, %p107
    %s109 = ssub.s32 %s16, %s28
    %s110 = ssub.s32 %s17, %s24
    %s111 = sor.u32 %s109, %s110
    %p112 = scmp.eq.s32.totalorder %s111, 0
    %s114 = sadd.s32 %s113, 1
    %s115 = scalar_select %p112, %s113, %s114
    %p118 = pneg %p112
    %p119 = scmp.eq.s32.totalorder %s9, 1
    %p120 = por %p118, %p119
    %p121 = scmp.ne.s32.totalorder %s113, %s116
    %p122 = scmp.eq.s32.totalorder %s9, 0
    %p123 = por %p121, %p122
    %p124 = scmp.ne.s32.totalorder %s113, %s116
    %p125 = scmp.eq.s32.totalorder %s14, 1
    %p126 = por %p124, %p125
    %p127 = scmp.ne.s32.totalorder %s116, %s117
    %p128 = scmp.eq.s32.totalorder %s14, 0
    %p129 = por %p127, %p128
    %p130 = scmp.ne.s32.totalorder %s116, %s117
    %p131 = scmp.eq.s32.totalorder %s15, 1
    %p132 = por %p130, %p131
    %p134 = scmp.ne.s32.totalorder %s117, %s133
    %p135 = scmp.eq.s32.totalorder %s15, 0
    %p136 = por %p134, %p135
    %p137 = scmp.le.s32.totalorder 1, %s9
    %p138 = scmp.lt.s32.totalorder %s9, 3
    %p139 = pnand %p137, %p138
    %p140 = pneg %p139
    // Predicated region
    $region9: #{mrfp_forward.10} parent=5 // pred_check
      _
    $region10: #{mrfp_forward.10} parent=5 // pred_check_branch
      %142 = sbr.rel (%p139) target = $region12
    $region11: #{mrfp_forward.10} parent=5 // pred_region
      %s143 = ssub.s32 %s9, 1
      // Predicated region
      $region13: #{mrfp_forward.10} parent=11 // pred_check
        %p144 = pneg %p75
      $region14: #{mrfp_forward.10} parent=11 // pred_check_branch
        %146 = sbr.rel (%p144) target = $region16
      $region15: #{mrfp_forward.10} parent=11 // pred_region
        %p147 = scmp.lt.s32.totalorder %s19, 0
        %s148 = scalar_select %p147, %s19, 0
        %s149 = smul.addr %s148, 8
        %s150 = scalar_lea.vmem %s1, %s149
      $region16: #{mrfp_forward.10} parent=11 // pred_fallthru
        _
      // Predicated region
      $region17: #{mrfp_forward.10} parent=11 // pred_check
        %p151 = pneg %p101
      $region18: #{mrfp_forward.10} parent=11 // pred_check_branch
        %153 = sbr.rel (%p151) target = $region20
      $region19: #{mrfp_forward.10} parent=11 // pred_region
        %p154 = scmp.lt.s32.totalorder %s19, 0
        %s155 = scalar_select %p154, %s19, 0
        %s156 = scalar_lea.vmem %s2, %s155
      $region20: #{mrfp_forward.10} parent=11 // pred_fallthru
        _
    $region12: #{mrfp_forward.10} parent=5 // pred_fallthru
      _
    %p157 = scmp.lt.s32.totalorder %s9, 2
    // Predicated region
    $region21: #{mrfp_forward.10} parent=5 // pred_check
      %p158 = pneg %p157
    $region22: #{mrfp_forward.10} parent=5 // pred_check_branch
      %160 = sbr.rel (%p158) target = $region24
    $region23: #{mrfp_forward.10} parent=5 // pred_region
      // Predicated region
      $region25: #{mrfp_forward.10} parent=23 // pred_check
        %p161 = pneg %p43
      $region26: #{mrfp_forward.10} parent=23 // pred_check_branch
        %163 = sbr.rel (%p161) target = $region28
      $region27: #{mrfp_forward.10} parent=23 // pred_region
        %p164 = scmp.lt.s32.totalorder %s16, 1
        %s165 = scalar_select %p164, %s16, 1
        %p166 = scmp.lt.s32.totalorder %s17, 0
        %s167 = scalar_select %p166, %s17, 0
        %s168 = smul.addr %s165, 8
        %s169 = sadd.s32 %s167, %s168
        %s170 = smul.addr %s169, 4
        %s171 = scalar_lea.vmem %s0, %s170
      $region28: #{mrfp_forward.10} parent=23 // pred_fallthru
        _
    $region24: #{mrfp_forward.10} parent=5 // pred_fallthru
      _
    %p172 = scmp.le.s32.totalorder 1, %s9
    %p173 = scmp.lt.s32.totalorder %s9, 3
    %p174 = pnand %p172, %p173
    %p175 = pneg %p174
    // Predicated region
    $region29: #{mrfp_forward.10} parent=5 // pred_check
      _
    $region30: #{mrfp_forward.10} parent=5 // pred_check_branch
      %177 = sbr.rel (%p174) target = $region32
    $region31: #{mrfp_forward.10} parent=5 // pred_region
      %s178 = ssub.s32 %s9, 1
      %p179 = scmp.lt.s32.totalorder %s18, 1
      %s180 = scalar_select %p179, %s18, 1
      %p181 = scmp.lt.s32.totalorder %s19, 0
      %s182 = scalar_select %p181, %s19, 0
      %s183 = smul.addr %s180, 8
      %s184 = sadd.s32 %s182, %s183
      %s185 = smul.addr %s184, 4
      %s186 = scalar_lea.vmem %s0, %s185
      %p187 = pneg %p49
      %p188 = pneg %p46
      %p189 = scmp.lt.s32.totalorder %s19, 0
      %s190 = scalar_select %p189, %s19, 0
      %s191 = smul.addr %s190, 8
      %s192 = scalar_lea.vmem %s1, %s191
      %p193 = pneg %p75
      %p194 = pneg %p72
      %p195 = scmp.lt.s32.totalorder %s19, 0
      %s196 = scalar_select %p195, %s19, 0
      %s197 = scalar_lea.vmem %s2, %s196
      %p198 = pneg %p101
      %p199 = pneg %p98
      %p200 = pneg %p129
      %p201 = pneg %p126
      %p202 = scmp.lt.s32.totalorder %s18, 1
      %s203 = scalar_select %p202, %s18, 1
      %p204 = scmp.lt.s32.totalorder %s19, 0
      %s205 = scalar_select %p204, %s19, 0
      %s206 = smul.addr %s203, 8
      %s207 = sadd.s32 %s205, %s206
      %s208 = smul.addr %s207, 4
      %s209 = scalar_lea.vmem %s3, %s208
      %p210 = scmp.lt.s32.totalorder %s18, 1
      %s211 = scalar_select %p210, %s18, 1
      %p212 = scmp.lt.s32.totalorder %s19, 0
      %s213 = scalar_select %p212, %s19, 0
      %s214 = smul.addr %s211, 8
      %s215 = sadd.s32 %s213, %s214
      %s216 = smul.addr %s215, 4
      %s217 = scalar_lea.vmem %s0, %s216
      %p218 = scmp.lt.s32.totalorder %s19, 0
      %s219 = scalar_select %p218, %s19, 0
      %s220 = smul.addr %s219, 8
      %s221 = scalar_lea.vmem %s1, %s220
      %p222 = scmp.lt.s32.totalorder %s19, 0
      %s223 = scalar_select %p222, %s19, 0
      %s224 = scalar_lea.vmem %s2, %s223
      %p225 = scmp.lt.s32.totalorder %s18, 1
      %s226 = scalar_select %p225, %s18, 1
      %p227 = scmp.lt.s32.totalorder %s19, 0
      %s228 = scalar_select %p227, %s19, 0
      %s229 = smul.addr %s226, 8
      %s230 = sadd.s32 %s228, %s229
      %s231 = smul.addr %s230, 4
      %s232 = scalar_lea.vmem %s3, %s231
      %233 = vst [vmem:[#allocation2] sm:$0xff] 0.0
      %234 = vst [vmem:[#allocation2 + $0x8] sm:$0xff] 0.0
      %235 = vst [vmem:[#allocation2 + $0x10] sm:$0xff] 0.0
      %236 = vst [vmem:[#allocation2 + $0x18] sm:$0xff] 0.0
      %237 = vst [vmem:[#allocation2 + $0x20] sm:$0xff] 0.0
      %238 = vst [vmem:[#allocation2 + $0x28] sm:$0xff] 0.0
      %239 = vst [vmem:[#allocation2 + $0x30] sm:$0xff] 0.0
      %240 = vst [vmem:[#allocation2 + $0x38] sm:$0xff] 0.0
      %241 = vst [vmem:[#allocation2 + $0x40] sm:$0xff] 0.0
      %242 = vst [vmem:[#allocation2 + $0x48] sm:$0xff] 0.0
      %243 = vst [vmem:[#allocation2 + $0x50] sm:$0xff] 0.0
      %244 = vst [vmem:[#allocation2 + $0x58] sm:$0xff] 0.0
      %245 = vst [vmem:[#allocation2 + $0x60] sm:$0xff] 0.0
      %246 = vst [vmem:[#allocation2 + $0x68] sm:$0xff] 0.0
      %247 = vst [vmem:[#allocation2 + $0x70] sm:$0xff] 0.0
      %248 = vst [vmem:[#allocation2 + $0x78] sm:$0xff] 0.0
      %249 = vst [vmem:[#allocation2 + $0x80] sm:$0xff] 0.0
      %250 = vst [vmem:[#allocation2 + $0x88] sm:$0xff] 0.0
      %251 = vst [vmem:[#allocation2 + $0x90] sm:$0xff] 0.0
      %252 = vst [vmem:[#allocation2 + $0x98] sm:$0xff] 0.0
      %253 = vst [vmem:[#allocation2 + $0xa0] sm:$0xff] 0.0
      %254 = vst [vmem:[#allocation2 + $0xa8] sm:$0xff] 0.0
      %255 = vst [vmem:[#allocation2 + $0xb0] sm:$0xff] 0.0
      %256 = vst [vmem:[#allocation2 + $0xb8] sm:$0xff] 0.0
      %257 = vst [vmem:[#allocation2 + $0xc0] sm:$0xff] 0.0
      %258 = vst [vmem:[#allocation2 + $0xc8] sm:$0xff] 0.0
      %259 = vst [vmem:[#allocation2 + $0xd0] sm:$0xff] 0.0
      %260 = vst [vmem:[#allocation2 + $0xd8] sm:$0xff] 0.0
      %261 = vst [vmem:[#allocation2 + $0xe0] sm:$0xff] 0.0
      %262 = vst [vmem:[#allocation2 + $0xe8] sm:$0xff] 0.0
      %263 = vst [vmem:[#allocation2 + $0xf0] sm:$0xff] 0.0
      %264 = vst [vmem:[#allocation2 + $0xf8] sm:$0xff] 0.0
      %265 = vst [vmem:[#allocation2 + $0x100] sm:$0xff] 0.0
      %266 = vst [vmem:[#allocation2 + $0x108] sm:$0xff] 0.0
      %267 = vst [vmem:[#allocation2 + $0x110] sm:$0xff] 0.0
      %268 = vst [vmem:[#allocation2 + $0x118] sm:$0xff] 0.0
      %v269 = vld [vmem:[%s217] sm:$0xf]
      %v270 = vld [vmem:[%s217 + $0x4] sm:$0xf]
      %v271 = vld [vmem:[%s217 + $0x8] sm:$0xf]
      %v272 = vld [vmem:[%s217 + $0xc] sm:$0xf]
      %v273 = vld [vmem:[%s217 + $0x10] sm:$0xf]
      %v274 = vld [vmem:[%s217 + $0x14] sm:$0xf]
      %v275 = vld [vmem:[%s217 + $0x18] sm:$0xf]
      %v276 = vld [vmem:[%s217 + $0x1c] sm:$0xf]
      %v277 = vunpack.c.l.bf16 %v269
      %v278 = vunpack.c.l.bf16 %v270
      %v279 = vunpack.c.l.bf16 %v271
      %v280 = vunpack.c.l.bf16 %v272
      %v281 = vunpack.c.l.bf16 %v273
      %v282 = vunpack.c.l.bf16 %v274
      %v283 = vunpack.c.l.bf16 %v275
      %v284 = vunpack.c.l.bf16 %v276
      %s285 = scalar_lea.vmem [#allocation2], 48
      %286 = vst [vmem:[%s285 + $0x8] sm:$0xff] %v277
      %287 = vst [vmem:[%s285 + $0x20] sm:$0xff] %v278
      %288 = vst [vmem:[%s285 + $0x38] sm:$0xff] %v279
      %289 = vst [vmem:[%s285 + $0x50] sm:$0xff] %v280
      %290 = vst [vmem:[%s285 + $0x68] sm:$0xff] %v281
      %291 = vst [vmem:[%s285 + $0x80] sm:$0xff] %v282
      %292 = vst [vmem:[%s285 + $0x98] sm:$0xff] %v283
      %293 = vst [vmem:[%s285 + $0xb0] sm:$0xff] %v284
      %v294 = vld [vmem:[%s221] sm:$0x1f]
      %v295 = vld [vmem:[%s221 + $0x8] sm:$0x1f]
      %v296 = vld [vmem:[%s221 + $0x10] sm:$0x1f]
      %v297 = vld [vmem:[%s221 + $0x18] sm:$0x1f]
      %v298 = vld [vmem:[%s221 + $0x20] sm:$0x1f]
      %v299 = vld [vmem:[%s224] sm:$0x1]
      %v300 = vld [vmem:[#allocation2 + $0x6] sm:$0xff]
      %v301 = vld [vmem:[#allocation2 + $0x1e] sm:$0xff]
      %v302 = vld [vmem:[#allocation2 + $0x36] sm:$0xff]
      %v303 = vld [vmem:[#allocation2 + $0x4e] sm:$0xff]
      %v304 = vld [vmem:[#allocation2 + $0x66] sm:$0xff]
      %v305 = vld [vmem:[#allocation2 + $0x7e] sm:$0xff]
      %v306 = vld [vmem:[#allocation2 + $0x96] sm:$0xff]
      %v307 = vld [vmem:[#allocation2 + $0xae] sm:$0xff]
      %v308 = vlaneseq
      %v309 = vshrl.u32 %v308, 7
      %v310 = vsub.s32 0, %v309
      %v311 = vrot.slane %v294, %v310
      %v312 = vmul.f32 %v311, %v300
      %v313 = vmul.f32 %v311, %v301
      %v314 = vmul.f32 %v311, %v302
      %v315 = vmul.f32 %v311, %v303
      %v316 = vmul.f32 %v311, %v304
      %v317 = vmul.f32 %v311, %v305
      %v318 = vmul.f32 %v311, %v306
      %v319 = vmul.f32 %v311, %v307
      %v320 = vld [vmem:[#allocation2 + $0x7] sm:$0xff]
      %v321 = vld [vmem:[#allocation2 + $0x1f] sm:$0xff]
      %v322 = vld [vmem:[#allocation2 + $0x37] sm:$0xff]
      %v323 = vld [vmem:[#allocation2 + $0x4f] sm:$0xff]
      %v324 = vld [vmem:[#allocation2 + $0x67] sm:$0xff]
      %v325 = vld [vmem:[#allocation2 + $0x7f] sm:$0xff]
      %v326 = vld [vmem:[#allocation2 + $0x97] sm:$0xff]
      %v327 = vld [vmem:[#allocation2 + $0xaf] sm:$0xff]
      %v328 = vlaneseq
      %v329 = vshrl.u32 %v328, 7
      %v330 = vsub.s32 1, %v329
      %v331 = vrot.slane %v294, %v330
      %v332 = vmul.f32 %v331, %v320
      %v333 = vmul.f32 %v331, %v321
      %v334 = vmul.f32 %v331, %v322
      %v335 = vmul.f32 %v331, %v323
      %v336 = vmul.f32 %v331, %v324
      %v337 = vmul.f32 %v331, %v325
      %v338 = vmul.f32 %v331, %v326
      %v339 = vmul.f32 %v331, %v327
      %v340 = vadd.f32 %v312, %v332
      %v341 = vadd.f32 %v313, %v333
      %v342 = vadd.f32 %v314, %v334
      %v343 = vadd.f32 %v315, %v335
      %v344 = vadd.f32 %v316, %v336
      %v345 = vadd.f32 %v317, %v337
      %v346 = vadd.f32 %v318, %v338
      %v347 = vadd.f32 %v319, %v339
      %v348 = vld [vmem:[#allocation2 + $0x8] sm:$0xff]
      %v349 = vld [vmem:[#allocation2 + $0x20] sm:$0xff]
      %v350 = vld [vmem:[#allocation2 + $0x38] sm:$0xff]
      %v351 = vld [vmem:[#allocation2 + $0x50] sm:$0xff]
      %v352 = vld [vmem:[#allocation2 + $0x68] sm:$0xff]
      %v353 = vld [vmem:[#allocation2 + $0x80] sm:$0xff]
      %v354 = vld [vmem:[#allocation2 + $0x98] sm:$0xff]
      %v355 = vld [vmem:[#allocation2 + $0xb0] sm:$0xff]
      %v356 = vlaneseq
      %v357 = vshrl.u32 %v356, 7
      %v358 = vsub.s32 2, %v357
      %v359 = vrot.slane %v294, %v358
      %v360 = vmul.f32 %v359, %v348
      %v361 = vmul.f32 %v359, %v349
      %v362 = vmul.f32 %v359, %v350
      %v363 = vmul.f32 %v359, %v351
      %v364 = vmul.f32 %v359, %v352
      %v365 = vmul.f32 %v359, %v353
      %v366 = vmul.f32 %v359, %v354
      %v367 = vmul.f32 %v359, %v355
      %v368 = vadd.f32 %v340, %v360
      %v369 = vadd.f32 %v341, %v361
      %v370 = vadd.f32 %v342, %v362
      %v371 = vadd.f32 %v343, %v363
      %v372 = vadd.f32 %v344, %v364
      %v373 = vadd.f32 %v345, %v365
      %v374 = vadd.f32 %v346, %v366
      %v375 = vadd.f32 %v347, %v367
      %v376 = vld [vmem:[#allocation2 + $0x9] sm:$0xff]
      %v377 = vld [vmem:[#allocation2 + $0x21] sm:$0xff]
      %v378 = vld [vmem:[#allocation2 + $0x39] sm:$0xff]
      %v379 = vld [vmem:[#allocation2 + $0x51] sm:$0xff]
      %v380 = vld [vmem:[#allocation2 + $0x69] sm:$0xff]
      %v381 = vld [vmem:[#allocation2 + $0x81] sm:$0xff]
      %v382 = vld [vmem:[#allocation2 + $0x99] sm:$0xff]
      %v383 = vld [vmem:[#allocation2 + $0xb1] sm:$0xff]
      %v384 = vlaneseq
      %v385 = vshrl.u32 %v384, 7
      %v386 = vsub.s32 3, %v385
      %v387 = vrot.slane %v294, %v386
      %v388 = vmul.f32 %v387, %v376
      %v389 = vmul.f32 %v387, %v377
      %v390 = vmul.f32 %v387, %v378
      %v391 = vmul.f32 %v387, %v379
      %v392 = vmul.f32 %v387, %v380
      %v393 = vmul.f32 %v387, %v381
      %v394 = vmul.f32 %v387, %v382
      %v395 = vmul.f32 %v387, %v383
      %v396 = vadd.f32 %v368, %v388
      %v397 = vadd.f32 %v369, %v389
      %v398 = vadd.f32 %v370, %v390
      %v399 = vadd.f32 %v371, %v391
      %v400 = vadd.f32 %v372, %v392
      %v401 = vadd.f32 %v373, %v393
      %v402 = vadd.f32 %v374, %v394
      %v403 = vadd.f32 %v375, %v395
      %v404 = vld [vmem:[#allocation2 + $0xa] sm:$0xff]
      %v405 = vld [vmem:[#allocation2 + $0x22] sm:$0xff]
      %v406 = vld [vmem:[#allocation2 + $0x3a] sm:$0xff]
      %v407 = vld [vmem:[#allocation2 + $0x52] sm:$0xff]
      %v408 = vld [vmem:[#allocation2 + $0x6a] sm:$0xff]
      %v409 = vld [vmem:[#allocation2 + $0x82] sm:$0xff]
      %v410 = vld [vmem:[#allocation2 + $0x9a] sm:$0xff]
      %v411 = vld [vmem:[#allocation2 + $0xb2] sm:$0xff]
      %v412 = vlaneseq
      %v413 = vshrl.u32 %v412, 7
      %v414 = vsub.s32 4, %v413
      %v415 = vrot.slane %v294, %v414
      %v416 = vmul.f32 %v415, %v404
      %v417 = vmul.f32 %v415, %v405
      %v418 = vmul.f32 %v415, %v406
      %v419 = vmul.f32 %v415, %v407
      %v420 = vmul.f32 %v415, %v408
      %v421 = vmul.f32 %v415, %v409
      %v422 = vmul.f32 %v415, %v410
      %v423 = vmul.f32 %v415, %v411
      %v424 = vadd.f32 %v396, %v416
      %v425 = vadd.f32 %v397, %v417
      %v426 = vadd.f32 %v398, %v418
      %v427 = vadd.f32 %v399, %v419
      %v428 = vadd.f32 %v400, %v420
      %v429 = vadd.f32 %v401, %v421
      %v430 = vadd.f32 %v402, %v422
      %v431 = vadd.f32 %v403, %v423
      %s432 = scalar_lea.vmem [#allocation2], 24
      %v433 = vld [vmem:[%s432 + $0x6] sm:$0xff]
      %v434 = vld [vmem:[%s432 + $0x1e] sm:$0xff]
      %v435 = vld [vmem:[%s432 + $0x36] sm:$0xff]
      %v436 = vld [vmem:[%s432 + $0x4e] sm:$0xff]
      %v437 = vld [vmem:[%s432 + $0x66] sm:$0xff]
      %v438 = vld [vmem:[%s432 + $0x7e] sm:$0xff]
      %v439 = vld [vmem:[%s432 + $0x96] sm:$0xff]
      %v440 = vld [vmem:[%s432 + $0xae] sm:$0xff]
      %v441 = vlaneseq
      %v442 = vshrl.u32 %v441, 7
      %v443 = vsub.s32 0, %v442
      %v444 = vrot.slane %v295, %v443
      %v445 = vmul.f32 %v444, %v433
      %v446 = vmul.f32 %v444, %v434
      %v447 = vmul.f32 %v444, %v435
      %v448 = vmul.f32 %v444, %v436
      %v449 = vmul.f32 %v444, %v437
      %v450 = vmul.f32 %v444, %v438
      %v451 = vmul.f32 %v444, %v439
      %v452 = vmul.f32 %v444, %v440
      %v453 = vadd.f32 %v424, %v445
      %v454 = vadd.f32 %v425, %v446
      %v455 = vadd.f32 %v426, %v447
      %v456 = vadd.f32 %v427, %v448
      %v457 = vadd.f32 %v428, %v449
      %v458 = vadd.f32 %v429, %v450
      %v459 = vadd.f32 %v430, %v451
      %v460 = vadd.f32 %v431, %v452
      %v461 = vld [vmem:[%s432 + $0x7] sm:$0xff]
      %v462 = vld [vmem:[%s432 + $0x1f] sm:$0xff]
      %v463 = vld [vmem:[%s432 + $0x37] sm:$0xff]
      %v464 = vld [vmem:[%s432 + $0x4f] sm:$0xff]
      %v465 = vld [vmem:[%s432 + $0x67] sm:$0xff]
      %v466 = vld [vmem:[%s432 + $0x7f] sm:$0xff]
      %v467 = vld [vmem:[%s432 + $0x97] sm:$0xff]
      %v468 = vld [vmem:[%s432 + $0xaf] sm:$0xff]
      %v469 = vlaneseq
      %v470 = vshrl.u32 %v469, 7
      %v471 = vsub.s32 1, %v470
      %v472 = vrot.slane %v295, %v471
      %v473 = vmul.f32 %v472, %v461
      %v474 = vmul.f32 %v472, %v462
      %v475 = vmul.f32 %v472, %v463
      %v476 = vmul.f32 %v472, %v464
      %v477 = vmul.f32 %v472, %v465
      %v478 = vmul.f32 %v472, %v466
      %v479 = vmul.f32 %v472, %v467
      %v480 = vmul.f32 %v472, %v468
      %v481 = vadd.f32 %v453, %v473
      %v482 = vadd.f32 %v454, %v474
      %v483 = vadd.f32 %v455, %v475
      %v484 = vadd.f32 %v456, %v476
      %v485 = vadd.f32 %v457, %v477
      %v486 = vadd.f32 %v458, %v478
      %v487 = vadd.f32 %v459, %v479
      %v488 = vadd.f32 %v460, %v480
      %v489 = vld [vmem:[%s432 + $0x8] sm:$0xff]
      %v490 = vld [vmem:[%s432 + $0x20] sm:$0xff]
      %v491 = vld [vmem:[%s432 + $0x38] sm:$0xff]
      %v492 = vld [vmem:[%s432 + $0x50] sm:$0xff]
      %v493 = vld [vmem:[%s432 + $0x68] sm:$0xff]
      %v494 = vld [vmem:[%s432 + $0x80] sm:$0xff]
      %v495 = vld [vmem:[%s432 + $0x98] sm:$0xff]
      %v496 = vld [vmem:[%s432 + $0xb0] sm:$0xff]
      %v497 = vlaneseq
      %v498 = vshrl.u32 %v497, 7
      %v499 = vsub.s32 2, %v498
      %v500 = vrot.slane %v295, %v499
      %v501 = vmul.f32 %v500, %v489
      %v502 = vmul.f32 %v500, %v490
      %v503 = vmul.f32 %v500, %v491
      %v504 = vmul.f32 %v500, %v492
      %v505 = vmul.f32 %v500, %v493
      %v506 = vmul.f32 %v500, %v494
      %v507 = vmul.f32 %v500, %v495
      %v508 = vmul.f32 %v500, %v496
      %v509 = vadd.f32 %v481, %v501
      %v510 = vadd.f32 %v482, %v502
      %v511 = vadd.f32 %v483, %v503
      %v512 = vadd.f32 %v484, %v504
      %v513 = vadd.f32 %v485, %v505
      %v514 = vadd.f32 %v486, %v506
      %v515 = vadd.f32 %v487, %v507
      %v516 = vadd.f32 %v488, %v508
      %v517 = vld [vmem:[%s432 + $0x9] sm:$0xff]
      %v518 = vld [vmem:[%s432 + $0x21] sm:$0xff]
      %v519 = vld [vmem:[%s432 + $0x39] sm:$0xff]
      %v520 = vld [vmem:[%s432 + $0x51] sm:$0xff]
      %v521 = vld [vmem:[%s432 + $0x69] sm:$0xff]
      %v522 = vld [vmem:[%s432 + $0x81] sm:$0xff]
      %v523 = vld [vmem:[%s432 + $0x99] sm:$0xff]
      %v524 = vld [vmem:[%s432 + $0xb1] sm:$0xff]
      %v525 = vlaneseq
      %v526 = vshrl.u32 %v525, 7
      %v527 = vsub.s32 3, %v526
      %v528 = vrot.slane %v295, %v527
      %v529 = vmul.f32 %v528, %v517
      %v530 = vmul.f32 %v528, %v518
      %v531 = vmul.f32 %v528, %v519
      %v532 = vmul.f32 %v528, %v520
      %v533 = vmul.f32 %v528, %v521
      %v534 = vmul.f32 %v528, %v522
      %v535 = vmul.f32 %v528, %v523
      %v536 = vmul.f32 %v528, %v524
      %v537 = vadd.f32 %v509, %v529
      %v538 = vadd.f32 %v510, %v530
      %v539 = vadd.f32 %v511, %v531
      %v540 = vadd.f32 %v512, %v532
      %v541 = vadd.f32 %v513, %v533
      %v542 = vadd.f32 %v514, %v534
      %v543 = vadd.f32 %v515, %v535
      %v544 = vadd.f32 %v516, %v536
      %v545 = vld [vmem:[%s432 + $0xa] sm:$0xff]
      %v546 = vld [vmem:[%s432 + $0x22] sm:$0xff]
      %v547 = vld [vmem:[%s432 + $0x3a] sm:$0xff]
      %v548 = vld [vmem:[%s432 + $0x52] sm:$0xff]
      %v549 = vld [vmem:[%s432 + $0x6a] sm:$0xff]
      %v550 = vld [vmem:[%s432 + $0x82] sm:$0xff]
      %v551 = vld [vmem:[%s432 + $0x9a] sm:$0xff]
      %v552 = vld [vmem:[%s432 + $0xb2] sm:$0xff]
      %v553 = vlaneseq
      %v554 = vshrl.u32 %v553, 7
      %v555 = vsub.s32 4, %v554
      %v556 = vrot.slane %v295, %v555
      %v557 = vmul.f32 %v556, %v545
      %v558 = vmul.f32 %v556, %v546
      %v559 = vmul.f32 %v556, %v547
      %v560 = vmul.f32 %v556, %v548
      %v561 = vmul.f32 %v556, %v549
      %v562 = vmul.f32 %v556, %v550
      %v563 = vmul.f32 %v556, %v551
      %v564 = vmul.f32 %v556, %v552
      %v565 = vadd.f32 %v537, %v557
      %v566 = vadd.f32 %v538, %v558
      %v567 = vadd.f32 %v539, %v559
      %v568 = vadd.f32 %v540, %v560
      %v569 = vadd.f32 %v541, %v561
      %v570 = vadd.f32 %v542, %v562
      %v571 = vadd.f32 %v543, %v563
      %v572 = vadd.f32 %v544, %v564
      %v573 = vld [vmem:[%s285 + $0x6] sm:$0xff]
      %v574 = vld [vmem:[%s285 + $0x1e] sm:$0xff]
      %v575 = vld [vmem:[%s285 + $0x36] sm:$0xff]
      %v576 = vld [vmem:[%s285 + $0x4e] sm:$0xff]
      %v577 = vld [vmem:[%s285 + $0x66] sm:$0xff]
      %v578 = vld [vmem:[%s285 + $0x7e] sm:$0xff]
      %v579 = vld [vmem:[%s285 + $0x96] sm:$0xff]
      %v580 = vld [vmem:[%s285 + $0xae] sm:$0xff]
      %v581 = vlaneseq
      %v582 = vshrl.u32 %v581, 7
      %v583 = vsub.s32 0, %v582
      %v584 = vrot.slane %v296, %v583
      %v585 = vmul.f32 %v584, %v573
      %v586 = vmul.f32 %v584, %v574
      %v587 = vmul.f32 %v584, %v575
      %v588 = vmul.f32 %v584, %v576
      %v589 = vmul.f32 %v584, %v577
      %v590 = vmul.f32 %v584, %v578
      %v591 = vmul.f32 %v584, %v579
      %v592 = vmul.f32 %v584, %v580
      %v593 = vadd.f32 %v565, %v585
      %v594 = vadd.f32 %v566, %v586
      %v595 = vadd.f32 %v567, %v587
      %v596 = vadd.f32 %v568, %v588
      %v597 = vadd.f32 %v569, %v589
      %v598 = vadd.f32 %v570, %v590
      %v599 = vadd.f32 %v571, %v591
      %v600 = vadd.f32 %v572, %v592
      %v601 = vld [vmem:[%s285 + $0x7] sm:$0xff]
      %v602 = vld [vmem:[%s285 + $0x1f] sm:$0xff]
      %v603 = vld [vmem:[%s285 + $0x37] sm:$0xff]
      %v604 = vld [vmem:[%s285 + $0x4f] sm:$0xff]
      %v605 = vld [vmem:[%s285 + $0x67] sm:$0xff]
      %v606 = vld [vmem:[%s285 + $0x7f] sm:$0xff]
      %v607 = vld [vmem:[%s285 + $0x97] sm:$0xff]
      %v608 = vld [vmem:[%s285 + $0xaf] sm:$0xff]
      %v609 = vlaneseq
      %v610 = vshrl.u32 %v609, 7
      %v611 = vsub.s32 1, %v610
      %v612 = vrot.slane %v296, %v611
      %v613 = vmul.f32 %v612, %v601
      %v614 = vmul.f32 %v612, %v602
      %v615 = vmul.f32 %v612, %v603
      %v616 = vmul.f32 %v612, %v604
      %v617 = vmul.f32 %v612, %v605
      %v618 = vmul.f32 %v612, %v606
      %v619 = vmul.f32 %v612, %v607
      %v620 = vmul.f32 %v612, %v608
      %v621 = vadd.f32 %v593, %v613
      %v622 = vadd.f32 %v594, %v614
      %v623 = vadd.f32 %v595, %v615
      %v624 = vadd.f32 %v596, %v616
      %v625 = vadd.f32 %v597, %v617
      %v626 = vadd.f32 %v598, %v618
      %v627 = vadd.f32 %v599, %v619
      %v628 = vadd.f32 %v600, %v620
      %v629 = vld [vmem:[%s285 + $0x8] sm:$0xff]
      %v630 = vld [vmem:[%s285 + $0x20] sm:$0xff]
      %v631 = vld [vmem:[%s285 + $0x38] sm:$0xff]
      %v632 = vld [vmem:[%s285 + $0x50] sm:$0xff]
      %v633 = vld [vmem:[%s285 + $0x68] sm:$0xff]
      %v634 = vld [vmem:[%s285 + $0x80] sm:$0xff]
      %v635 = vld [vmem:[%s285 + $0x98] sm:$0xff]
      %v636 = vld [vmem:[%s285 + $0xb0] sm:$0xff]
      %v637 = vlaneseq
      %v638 = vshrl.u32 %v637, 7
      %v639 = vsub.s32 2, %v638
      %v640 = vrot.slane %v296, %v639
      %v641 = vmul.f32 %v640, %v629
      %v642 = vmul.f32 %v640, %v630
      %v643 = vmul.f32 %v640, %v631
      %v644 = vmul.f32 %v640, %v632
      %v645 = vmul.f32 %v640, %v633
      %v646 = vmul.f32 %v640, %v634
      %v647 = vmul.f32 %v640, %v635
      %v648 = vmul.f32 %v640, %v636
      %v649 = vadd.f32 %v621, %v641
      %v650 = vadd.f32 %v622, %v642
      %v651 = vadd.f32 %v623, %v643
      %v652 = vadd.f32 %v624, %v644
      %v653 = vadd.f32 %v625, %v645
      %v654 = vadd.f32 %v626, %v646
      %v655 = vadd.f32 %v627, %v647
      %v656 = vadd.f32 %v628, %v648
      %v657 = vld [vmem:[%s285 + $0x9] sm:$0xff]
      %v658 = vld [vmem:[%s285 + $0x21] sm:$0xff]
      %v659 = vld [vmem:[%s285 + $0x39] sm:$0xff]
      %v660 = vld [vmem:[%s285 + $0x51] sm:$0xff]
      %v661 = vld [vmem:[%s285 + $0x69] sm:$0xff]
      %v662 = vld [vmem:[%s285 + $0x81] sm:$0xff]
      %v663 = vld [vmem:[%s285 + $0x99] sm:$0xff]
      %v664 = vld [vmem:[%s285 + $0xb1] sm:$0xff]
      %v665 = vlaneseq
      %v666 = vshrl.u32 %v665, 7
      %v667 = vsub.s32 3, %v666
      %v668 = vrot.slane %v296, %v667
      %v669 = vmul.f32 %v668, %v657
      %v670 = vmul.f32 %v668, %v658
      %v671 = vmul.f32 %v668, %v659
      %v672 = vmul.f32 %v668, %v660
      %v673 = vmul.f32 %v668, %v661
      %v674 = vmul.f32 %v668, %v662
      %v675 = vmul.f32 %v668, %v663
      %v676 = vmul.f32 %v668, %v664
      %v677 = vadd.f32 %v649, %v669
      %v678 = vadd.f32 %v650, %v670
      %v679 = vadd.f32 %v651, %v671
      %v680 = vadd.f32 %v652, %v672
      %v681 = vadd.f32 %v653, %v673
      %v682 = vadd.f32 %v654, %v674
      %v683 = vadd.f32 %v655, %v675
      %v684 = vadd.f32 %v656, %v676
      %v685 = vld [vmem:[%s285 + $0xa] sm:$0xff]
      %v686 = vld [vmem:[%s285 + $0x22] sm:$0xff]
      %v687 = vld [vmem:[%s285 + $0x3a] sm:$0xff]
      %v688 = vld [vmem:[%s285 + $0x52] sm:$0xff]
      %v689 = vld [vmem:[%s285 + $0x6a] sm:$0xff]
      %v690 = vld [vmem:[%s285 + $0x82] sm:$0xff]
      %v691 = vld [vmem:[%s285 + $0x9a] sm:$0xff]
      %v692 = vld [vmem:[%s285 + $0xb2] sm:$0xff]
      %v693 = vlaneseq
      %v694 = vshrl.u32 %v693, 7
      %v695 = vsub.s32 4, %v694
      %v696 = vrot.slane %v296, %v695
      %v697 = vmul.f32 %v696, %v685
      %v698 = vmul.f32 %v696, %v686
      %v699 = vmul.f32 %v696, %v687
      %v700 = vmul.f32 %v696, %v688
      %v701 = vmul.f32 %v696, %v689
      %v702 = vmul.f32 %v696, %v690
      %v703 = vmul.f32 %v696, %v691
      %v704 = vmul.f32 %v696, %v692
      %v705 = vadd.f32 %v677, %v697
      %v706 = vadd.f32 %v678, %v698
      %v707 = vadd.f32 %v679, %v699
      %v708 = vadd.f32 %v680, %v700
      %v709 = vadd.f32 %v681, %v701
      %v710 = vadd.f32 %v682, %v702
      %v711 = vadd.f32 %v683, %v703
      %v712 = vadd.f32 %v684, %v704
      %s713 = scalar_lea.vmem [#allocation2], 72
      %v714 = vld [vmem:[%s713 + $0x6] sm:$0xff]
      %v715 = vld [vmem:[%s713 + $0x1e] sm:$0xff]
      %v716 = vld [vmem:[%s713 + $0x36] sm:$0xff]
      %v717 = vld [vmem:[%s713 + $0x4e] sm:$0xff]
      %v718 = vld [vmem:[%s713 + $0x66] sm:$0xff]
      %v719 = vld [vmem:[%s713 + $0x7e] sm:$0xff]
      %v720 = vld [vmem:[%s713 + $0x96] sm:$0xff]
      %v721 = vld [vmem:[%s713 + $0xae] sm:$0xff]
      %v722 = vlaneseq
      %v723 = vshrl.u32 %v722, 7
      %v724 = vsub.s32 0, %v723
      %v725 = vrot.slane %v297, %v724
      %v726 = vmul.f32 %v725, %v714
      %v727 = vmul.f32 %v725, %v715
      %v728 = vmul.f32 %v725, %v716
      %v729 = vmul.f32 %v725, %v717
      %v730 = vmul.f32 %v725, %v718
      %v731 = vmul.f32 %v725, %v719
      %v732 = vmul.f32 %v725, %v720
      %v733 = vmul.f32 %v725, %v721
      %v734 = vadd.f32 %v705, %v726
      %v735 = vadd.f32 %v706, %v727
      %v736 = vadd.f32 %v707, %v728
      %v737 = vadd.f32 %v708, %v729
      %v738 = vadd.f32 %v709, %v730
      %v739 = vadd.f32 %v710, %v731
      %v740 = vadd.f32 %v711, %v732
      %v741 = vadd.f32 %v712, %v733
      %v742 = vld [vmem:[%s713 + $0x7] sm:$0xff]
      %v743 = vld [vmem:[%s713 + $0x1f] sm:$0xff]
      %v744 = vld [vmem:[%s713 + $0x37] sm:$0xff]
      %v745 = vld [vmem:[%s713 + $0x4f] sm:$0xff]
      %v746 = vld [vmem:[%s713 + $0x67] sm:$0xff]
      %v747 = vld [vmem:[%s713 + $0x7f] sm:$0xff]
      %v748 = vld [vmem:[%s713 + $0x97] sm:$0xff]
      %v749 = vld [vmem:[%s713 + $0xaf] sm:$0xff]
      %v750 = vlaneseq
      %v751 = vshrl.u32 %v750, 7
      %v752 = vsub.s32 1, %v751
      %v753 = vrot.slane %v297, %v752
      %v754 = vmul.f32 %v753, %v742
      %v755 = vmul.f32 %v753, %v743
      %v756 = vmul.f32 %v753, %v744
      %v757 = vmul.f32 %v753, %v745
      %v758 = vmul.f32 %v753, %v746
      %v759 = vmul.f32 %v753, %v747
      %v760 = vmul.f32 %v753, %v748
      %v761 = vmul.f32 %v753, %v749
      %v762 = vadd.f32 %v734, %v754
      %v763 = vadd.f32 %v735, %v755
      %v764 = vadd.f32 %v736, %v756
      %v765 = vadd.f32 %v737, %v757
      %v766 = vadd.f32 %v738, %v758
      %v767 = vadd.f32 %v739, %v759
      %v768 = vadd.f32 %v740, %v760
      %v769 = vadd.f32 %v741, %v761
      %v770 = vld [vmem:[%s713 + $0x8] sm:$0xff]
      %v771 = vld [vmem:[%s713 + $0x20] sm:$0xff]
      %v772 = vld [vmem:[%s713 + $0x38] sm:$0xff]
      %v773 = vld [vmem:[%s713 + $0x50] sm:$0xff]
      %v774 = vld [vmem:[%s713 + $0x68] sm:$0xff]
      %v775 = vld [vmem:[%s713 + $0x80] sm:$0xff]
      %v776 = vld [vmem:[%s713 + $0x98] sm:$0xff]
      %v777 = vld [vmem:[%s713 + $0xb0] sm:$0xff]
      %v778 = vlaneseq
      %v779 = vshrl.u32 %v778, 7
      %v780 = vsub.s32 2, %v779
      %v781 = vrot.slane %v297, %v780
      %v782 = vmul.f32 %v781, %v770
      %v783 = vmul.f32 %v781, %v771
      %v784 = vmul.f32 %v781, %v772
      %v785 = vmul.f32 %v781, %v773
      %v786 = vmul.f32 %v781, %v774
      %v787 = vmul.f32 %v781, %v775
      %v788 = vmul.f32 %v781, %v776
      %v789 = vmul.f32 %v781, %v777
      %v790 = vadd.f32 %v762, %v782
      %v791 = vadd.f32 %v763, %v783
      %v792 = vadd.f32 %v764, %v784
      %v793 = vadd.f32 %v765, %v785
      %v794 = vadd.f32 %v766, %v786
      %v795 = vadd.f32 %v767, %v787
      %v796 = vadd.f32 %v768, %v788
      %v797 = vadd.f32 %v769, %v789
      %v798 = vld [vmem:[%s713 + $0x9] sm:$0xff]
      %v799 = vld [vmem:[%s713 + $0x21] sm:$0xff]
      %v800 = vld [vmem:[%s713 + $0x39] sm:$0xff]
      %v801 = vld [vmem:[%s713 + $0x51] sm:$0xff]
      %v802 = vld [vmem:[%s713 + $0x69] sm:$0xff]
      %v803 = vld [vmem:[%s713 + $0x81] sm:$0xff]
      %v804 = vld [vmem:[%s713 + $0x99] sm:$0xff]
      %v805 = vld [vmem:[%s713 + $0xb1] sm:$0xff]
      %v806 = vlaneseq
      %v807 = vshrl.u32 %v806, 7
      %v808 = vsub.s32 3, %v807
      %v809 = vrot.slane %v297, %v808
      %v810 = vmul.f32 %v809, %v798
      %v811 = vmul.f32 %v809, %v799
      %v812 = vmul.f32 %v809, %v800
      %v813 = vmul.f32 %v809, %v801
      %v814 = vmul.f32 %v809, %v802
      %v815 = vmul.f32 %v809, %v803
      %v816 = vmul.f32 %v809, %v804
      %v817 = vmul.f32 %v809, %v805
      %v818 = vadd.f32 %v790, %v810
      %v819 = vadd.f32 %v791, %v811
      %v820 = vadd.f32 %v792, %v812
      %v821 = vadd.f32 %v793, %v813
      %v822 = vadd.f32 %v794, %v814
      %v823 = vadd.f32 %v795, %v815
      %v824 = vadd.f32 %v796, %v816
      %v825 = vadd.f32 %v797, %v817
      %v826 = vld [vmem:[%s713 + $0xa] sm:$0xff]
      %v827 = vld [vmem:[%s713 + $0x22] sm:$0xff]
      %v828 = vld [vmem:[%s713 + $0x3a] sm:$0xff]
      %v829 = vld [vmem:[%s713 + $0x52] sm:$0xff]
      %v830 = vld [vmem:[%s713 + $0x6a] sm:$0xff]
      %v831 = vld [vmem:[%s713 + $0x82] sm:$0xff]
      %v832 = vld [vmem:[%s713 + $0x9a] sm:$0xff]
      %v833 = vld [vmem:[%s713 + $0xb2] sm:$0xff]
      %v834 = vlaneseq
      %v835 = vshrl.u32 %v834, 7
      %v836 = vsub.s32 4, %v835
      %v837 = vrot.slane %v297, %v836
      %v838 = vmul.f32 %v837, %v826
      %v839 = vmul.f32 %v837, %v827
      %v840 = vmul.f32 %v837, %v828
      %v841 = vmul.f32 %v837, %v829
      %v842 = vmul.f32 %v837, %v830
      %v843 = vmul.f32 %v837, %v831
      %v844 = vmul.f32 %v837, %v832
      %v845 = vmul.f32 %v837, %v833
      %v846 = vadd.f32 %v818, %v838
      %v847 = vadd.f32 %v819, %v839
      %v848 = vadd.f32 %v820, %v840
      %v849 = vadd.f32 %v821, %v841
      %v850 = vadd.f32 %v822, %v842
      %v851 = vadd.f32 %v823, %v843
      %v852 = vadd.f32 %v824, %v844
      %v853 = vadd.f32 %v825, %v845
      %s854 = scalar_lea.vmem [#allocation2], 96
      %v855 = vld [vmem:[%s854 + $0x6] sm:$0xff]
      %v856 = vld [vmem:[%s854 + $0x1e] sm:$0xff]
      %v857 = vld [vmem:[%s854 + $0x36] sm:$0xff]
      %v858 = vld [vmem:[%s854 + $0x4e] sm:$0xff]
      %v859 = vld [vmem:[%s854 + $0x66] sm:$0xff]
      %v860 = vld [vmem:[%s854 + $0x7e] sm:$0xff]
      %v861 = vld [vmem:[%s854 + $0x96] sm:$0xff]
      %v862 = vld [vmem:[%s854 + $0xae] sm:$0xff]
      %v863 = vlaneseq
      %v864 = vshrl.u32 %v863, 7
      %v865 = vsub.s32 0, %v864
      %v866 = vrot.slane %v298, %v865
      %v867 = vmul.f32 %v866, %v855
      %v868 = vmul.f32 %v866, %v856
      %v869 = vmul.f32 %v866, %v857
      %v870 = vmul.f32 %v866, %v858
      %v871 = vmul.f32 %v866, %v859
      %v872 = vmul.f32 %v866, %v860
      %v873 = vmul.f32 %v866, %v861
      %v874 = vmul.f32 %v866, %v862
      %v875 = vadd.f32 %v846, %v867
      %v876 = vadd.f32 %v847, %v868
      %v877 = vadd.f32 %v848, %v869
      %v878 = vadd.f32 %v849, %v870
      %v879 = vadd.f32 %v850, %v871
      %v880 = vadd.f32 %v851, %v872
      %v881 = vadd.f32 %v852, %v873
      %v882 = vadd.f32 %v853, %v874
      %v883 = vld [vmem:[%s854 + $0x7] sm:$0xff]
      %v884 = vld [vmem:[%s854 + $0x1f] sm:$0xff]
      %v885 = vld [vmem:[%s854 + $0x37] sm:$0xff]
      %v886 = vld [vmem:[%s854 + $0x4f] sm:$0xff]
      %v887 = vld [vmem:[%s854 + $0x67] sm:$0xff]
      %v888 = vld [vmem:[%s854 + $0x7f] sm:$0xff]
      %v889 = vld [vmem:[%s854 + $0x97] sm:$0xff]
      %v890 = vld [vmem:[%s854 + $0xaf] sm:$0xff]
      %v891 = vlaneseq
      %v892 = vshrl.u32 %v891, 7
      %v893 = vsub.s32 1, %v892
      %v894 = vrot.slane %v298, %v893
      %v895 = vmul.f32 %v894, %v883
      %v896 = vmul.f32 %v894, %v884
      %v897 = vmul.f32 %v894, %v885
      %v898 = vmul.f32 %v894, %v886
      %v899 = vmul.f32 %v894, %v887
      %v900 = vmul.f32 %v894, %v888
      %v901 = vmul.f32 %v894, %v889
      %v902 = vmul.f32 %v894, %v890
      %v903 = vadd.f32 %v875, %v895
      %v904 = vadd.f32 %v876, %v896
      %v905 = vadd.f32 %v877, %v897
      %v906 = vadd.f32 %v878, %v898
      %v907 = vadd.f32 %v879, %v899
      %v908 = vadd.f32 %v880, %v900
      %v909 = vadd.f32 %v881, %v901
      %v910 = vadd.f32 %v882, %v902
      %v911 = vld [vmem:[%s854 + $0x8] sm:$0xff]
      %v912 = vld [vmem:[%s854 + $0x20] sm:$0xff]
      %v913 = vld [vmem:[%s854 + $0x38] sm:$0xff]
      %v914 = vld [vmem:[%s854 + $0x50] sm:$0xff]
      %v915 = vld [vmem:[%s854 + $0x68] sm:$0xff]
      %v916 = vld [vmem:[%s854 + $0x80] sm:$0xff]
      %v917 = vld [vmem:[%s854 + $0x98] sm:$0xff]
      %v918 = vld [vmem:[%s854 + $0xb0] sm:$0xff]
      %v919 = vlaneseq
      %v920 = vshrl.u32 %v919, 7
      %v921 = vsub.s32 2, %v920
      %v922 = vrot.slane %v298, %v921
      %v923 = vmul.f32 %v922, %v911
      %v924 = vmul.f32 %v922, %v912
      %v925 = vmul.f32 %v922, %v913
      %v926 = vmul.f32 %v922, %v914
      %v927 = vmul.f32 %v922, %v915
      %v928 = vmul.f32 %v922, %v916
      %v929 = vmul.f32 %v922, %v917
      %v930 = vmul.f32 %v922, %v918
      %v931 = vadd.f32 %v903, %v923
      %v932 = vadd.f32 %v904, %v924
      %v933 = vadd.f32 %v905, %v925
      %v934 = vadd.f32 %v906, %v926
      %v935 = vadd.f32 %v907, %v927
      %v936 = vadd.f32 %v908, %v928
      %v937 = vadd.f32 %v909, %v929
      %v938 = vadd.f32 %v910, %v930
      %v939 = vld [vmem:[%s854 + $0x9] sm:$0xff]
      %v940 = vld [vmem:[%s854 + $0x21] sm:$0xff]
      %v941 = vld [vmem:[%s854 + $0x39] sm:$0xff]
      %v942 = vld [vmem:[%s854 + $0x51] sm:$0xff]
      %v943 = vld [vmem:[%s854 + $0x69] sm:$0xff]
      %v944 = vld [vmem:[%s854 + $0x81] sm:$0xff]
      %v945 = vld [vmem:[%s854 + $0x99] sm:$0xff]
      %v946 = vld [vmem:[%s854 + $0xb1] sm:$0xff]
      %v947 = vlaneseq
      %v948 = vshrl.u32 %v947, 7
      %v949 = vsub.s32 3, %v948
      %v950 = vrot.slane %v298, %v949
      %v951 = vmul.f32 %v950, %v939
      %v952 = vmul.f32 %v950, %v940
      %v953 = vmul.f32 %v950, %v941
      %v954 = vmul.f32 %v950, %v942
      %v955 = vmul.f32 %v950, %v943
      %v956 = vmul.f32 %v950, %v944
      %v957 = vmul.f32 %v950, %v945
      %v958 = vmul.f32 %v950, %v946
      %v959 = vadd.f32 %v931, %v951
      %v960 = vadd.f32 %v932, %v952
      %v961 = vadd.f32 %v933, %v953
      %v962 = vadd.f32 %v934, %v954
      %v963 = vadd.f32 %v935, %v955
      %v964 = vadd.f32 %v936, %v956
      %v965 = vadd.f32 %v937, %v957
      %v966 = vadd.f32 %v938, %v958
      %v967 = vld [vmem:[%s854 + $0xa] sm:$0xff]
      %v968 = vld [vmem:[%s854 + $0x22] sm:$0xff]
      %v969 = vld [vmem:[%s854 + $0x3a] sm:$0xff]
      %v970 = vld [vmem:[%s854 + $0x52] sm:$0xff]
      %v971 = vld [vmem:[%s854 + $0x6a] sm:$0xff]
      %v972 = vld [vmem:[%s854 + $0x82] sm:$0xff]
      %v973 = vld [vmem:[%s854 + $0x9a] sm:$0xff]
      %v974 = vld [vmem:[%s854 + $0xb2] sm:$0xff]
      %v975 = vlaneseq
      %v976 = vshrl.u32 %v975, 7
      %v977 = vsub.s32 4, %v976
      %v978 = vrot.slane %v298, %v977
      %v979 = vmul.f32 %v978, %v967
      %v980 = vmul.f32 %v978, %v968
      %v981 = vmul.f32 %v978, %v969
      %v982 = vmul.f32 %v978, %v970
      %v983 = vmul.f32 %v978, %v971
      %v984 = vmul.f32 %v978, %v972
      %v985 = vmul.f32 %v978, %v973
      %v986 = vmul.f32 %v978, %v974
      %v987 = vadd.f32 %v959, %v979
      %v988 = vadd.f32 %v960, %v980
      %v989 = vadd.f32 %v961, %v981
      %v990 = vadd.f32 %v962, %v982
      %v991 = vadd.f32 %v963, %v983
      %v992 = vadd.f32 %v964, %v984
      %v993 = vadd.f32 %v965, %v985
      %v994 = vadd.f32 %v966, %v986
      %v996 = vlaneseq
      %v997 = vshrl.u32 %v996, 7
      %v998 = vsub.s32 0, %v997
      %v999 = vrot.slane %v299, %v998
      %v1001 = vadd.f32 %v987, %v999
      %v1002 = vadd.f32 %v988, %v999
      %v1003 = vadd.f32 %v989, %v999
      %v1004 = vadd.f32 %v990, %v999
      %v1005 = vadd.f32 %v991, %v999
      %v1006 = vadd.f32 %v992, %v999
      %v1007 = vadd.f32 %v993, %v999
      %v1008 = vadd.f32 %v994, %v999
      %v1009 = vmul.f32 %v1001, 0.5
      %v1010 = vmul.f32 %v1002, 0.5
      %v1011 = vmul.f32 %v1003, 0.5
      %v1012 = vmul.f32 %v1004, 0.5
      %v1013 = vmul.f32 %v1005, 0.5
      %v1014 = vmul.f32 %v1006, 0.5
      %v1015 = vmul.f32 %v1007, 0.5
      %v1016 = vmul.f32 %v1008, 0.5
      %v1017 = vmul.f32 %v1001, 0.044715
      %v1018 = vmul.f32 %v1002, 0.044715
      %v1019 = vmul.f32 %v1003, 0.044715
      %v1020 = vmul.f32 %v1004, 0.044715
      %v1021 = vmul.f32 %v1005, 0.044715
      %v1022 = vmul.f32 %v1006, 0.044715
      %v1023 = vmul.f32 %v1007, 0.044715
      %v1024 = vmul.f32 %v1008, 0.044715
      %v1025 = vmul.f32 %v1017, %v1001
      %v1026 = vmul.f32 %v1018, %v1002
      %v1027 = vmul.f32 %v1019, %v1003
      %v1028 = vmul.f32 %v1020, %v1004
      %v1029 = vmul.f32 %v1021, %v1005
      %v1030 = vmul.f32 %v1022, %v1006
      %v1031 = vmul.f32 %v1023, %v1007
      %v1032 = vmul.f32 %v1024, %v1008
      %v1033 = vmul.f32 %v1025, %v1001
      %v1034 = vmul.f32 %v1026, %v1002
      %v1035 = vmul.f32 %v1027, %v1003
      %v1036 = vmul.f32 %v1028, %v1004
      %v1037 = vmul.f32 %v1029, %v1005
      %v1038 = vmul.f32 %v1030, %v1006
      %v1039 = vmul.f32 %v1031, %v1007
      %v1040 = vmul.f32 %v1032, %v1008
      %v1041 = vadd.f32 %v1001, %v1033
      %v1042 = vadd.f32 %v1002, %v1034
      %v1043 = vadd.f32 %v1003, %v1035
      %v1044 = vadd.f32 %v1004, %v1036
      %v1045 = vadd.f32 %v1005, %v1037
      %v1046 = vadd.f32 %v1006, %v1038
      %v1047 = vadd.f32 %v1007, %v1039
      %v1048 = vadd.f32 %v1008, %v1040
      %v1049 = vmul.f32 %v1041, 0.7978846
      %v1050 = vmul.f32 %v1042, 0.7978846
      %v1051 = vmul.f32 %v1043, 0.7978846
      %v1052 = vmul.f32 %v1044, 0.7978846
      %v1053 = vmul.f32 %v1045, 0.7978846
      %v1054 = vmul.f32 %v1046, 0.7978846
      %v1055 = vmul.f32 %v1047, 0.7978846
      %v1056 = vmul.f32 %v1048, 0.7978846
      %v1057 = vtanh.pop %v1049
      %v1058 = vtanh.pop %v1050
      %v1059 = vtanh.pop %v1051
      %v1060 = vtanh.pop %v1052
      %v1061 = vtanh.pop %v1053
      %v1062 = vtanh.pop %v1054
      %v1063 = vtanh.pop %v1055
      %v1064 = vtanh.pop %v1056
      %v1065 = vadd.f32 %v1057, 1.0
      %v1066 = vadd.f32 %v1058, 1.0
      %v1067 = vadd.f32 %v1059, 1.0
      %v1068 = vadd.f32 %v1060, 1.0
      %v1069 = vadd.f32 %v1061, 1.0
      %v1070 = vadd.f32 %v1062, 1.0
      %v1071 = vadd.f32 %v1063, 1.0
      %v1072 = vadd.f32 %v1064, 1.0
      %v1073 = vmul.f32 %v1009, %v1065
      %v1074 = vmul.f32 %v1010, %v1066
      %v1075 = vmul.f32 %v1011, %v1067
      %v1076 = vmul.f32 %v1012, %v1068
      %v1077 = vmul.f32 %v1013, %v1069
      %v1078 = vmul.f32 %v1014, %v1070
      %v1079 = vmul.f32 %v1015, %v1071
      %v1080 = vmul.f32 %v1016, %v1072
      %v1081 = vmul.f32 %v1073, 0.5
      %v1082 = vmul.f32 %v1074, 0.5
      %v1083 = vmul.f32 %v1075, 0.5
      %v1084 = vmul.f32 %v1076, 0.5
      %v1085 = vmul.f32 %v1077, 0.5
      %v1086 = vmul.f32 %v1078, 0.5
      %v1087 = vmul.f32 %v1079, 0.5
      %v1088 = vmul.f32 %v1080, 0.5
      %v1089 = vmul.f32 %v1073, 0.044715
      %v1090 = vmul.f32 %v1074, 0.044715
      %v1091 = vmul.f32 %v1075, 0.044715
      %v1092 = vmul.f32 %v1076, 0.044715
      %v1093 = vmul.f32 %v1077, 0.044715
      %v1094 = vmul.f32 %v1078, 0.044715
      %v1095 = vmul.f32 %v1079, 0.044715
      %v1096 = vmul.f32 %v1080, 0.044715
      %v1097 = vmul.f32 %v1089, %v1073
      %v1098 = vmul.f32 %v1090, %v1074
      %v1099 = vmul.f32 %v1091, %v1075
      %v1100 = vmul.f32 %v1092, %v1076
      %v1101 = vmul.f32 %v1093, %v1077
      %v1102 = vmul.f32 %v1094, %v1078
      %v1103 = vmul.f32 %v1095, %v1079
      %v1104 = vmul.f32 %v1096, %v1080
      %v1105 = vmul.f32 %v1097, %v1073
      %v1106 = vmul.f32 %v1098, %v1074
      %v1107 = vmul.f32 %v1099, %v1075
      %v1108 = vmul.f32 %v1100, %v1076
      %v1109 = vmul.f32 %v1101, %v1077
      %v1110 = vmul.f32 %v1102, %v1078
      %v1111 = vmul.f32 %v1103, %v1079
      %v1112 = vmul.f32 %v1104, %v1080
      %v1113 = vadd.f32 %v1073, %v1105
      %v1114 = vadd.f32 %v1074, %v1106
      %v1115 = vadd.f32 %v1075, %v1107
      %v1116 = vadd.f32 %v1076, %v1108
      %v1117 = vadd.f32 %v1077, %v1109
      %v1118 = vadd.f32 %v1078, %v1110
      %v1119 = vadd.f32 %v1079, %v1111
      %v1120 = vadd.f32 %v1080, %v1112
      %v1121 = vmul.f32 %v1113, 0.7978846
      %v1122 = vmul.f32 %v1114, 0.7978846
      %v1123 = vmul.f32 %v1115, 0.7978846
      %v1124 = vmul.f32 %v1116, 0.7978846
      %v1125 = vmul.f32 %v1117, 0.7978846
      %v1126 = vmul.f32 %v1118, 0.7978846
      %v1127 = vmul.f32 %v1119, 0.7978846
      %v1128 = vmul.f32 %v1120, 0.7978846
      %v1129 = vtanh.pop %v1121
      %v1130 = vtanh.pop %v1122
      %v1131 = vtanh.pop %v1123
      %v1132 = vtanh.pop %v1124
      %v1133 = vtanh.pop %v1125
      %v1134 = vtanh.pop %v1126
      %v1135 = vtanh.pop %v1127
      %v1136 = vtanh.pop %v1128
      %v1137 = vadd.f32 %v1129, 1.0
      %v1138 = vadd.f32 %v1130, 1.0
      %v1139 = vadd.f32 %v1131, 1.0
      %v1140 = vadd.f32 %v1132, 1.0
      %v1141 = vadd.f32 %v1133, 1.0
      %v1142 = vadd.f32 %v1134, 1.0
      %v1143 = vadd.f32 %v1135, 1.0
      %v1144 = vadd.f32 %v1136, 1.0
      %v1145 = vmul.f32 %v1081, %v1137
      %v1146 = vmul.f32 %v1082, %v1138
      %v1147 = vmul.f32 %v1083, %v1139
      %v1148 = vmul.f32 %v1084, %v1140
      %v1149 = vmul.f32 %v1085, %v1141
      %v1150 = vmul.f32 %v1086, %v1142
      %v1151 = vmul.f32 %v1087, %v1143
      %v1152 = vmul.f32 %v1088, %v1144
      %v1153 = vpack.c.bf16 %v1145, %v1145
      %v1154 = vpack.c.bf16 %v1146, %v1146
      %v1155 = vpack.c.bf16 %v1147, %v1147
      %v1156 = vpack.c.bf16 %v1148, %v1148
      %v1157 = vpack.c.bf16 %v1149, %v1149
      %v1158 = vpack.c.bf16 %v1150, %v1150
      %v1159 = vpack.c.bf16 %v1151, %v1151
      %v1160 = vpack.c.bf16 %v1152, %v1152
      %1161 = vst [vmem:[%s232] sm:$0xf] %v1153
      %1162 = vst [vmem:[%s232 + $0x4] sm:$0xf] %v1154
      %1163 = vst [vmem:[%s232 + $0x8] sm:$0xf] %v1155
      %1164 = vst [vmem:[%s232 + $0xc] sm:$0xf] %v1156
      %1165 = vst [vmem:[%s232 + $0x10] sm:$0xf] %v1157
      %1166 = vst [vmem:[%s232 + $0x14] sm:$0xf] %v1158
      %1167 = vst [vmem:[%s232 + $0x18] sm:$0xf] %v1159
      %1168 = vst [vmem:[%s232 + $0x1c] sm:$0xf] %v1160
      %p1169 = scmp.lt.s32.totalorder %s18, 1
      %s1170 = scalar_select %p1169, %s18, 1
      %p1171 = scmp.lt.s32.totalorder %s19, 0
      %s1172 = scalar_select %p1171, %s19, 0
      %s1173 = smul.addr %s1170, 8
      %s1174 = sadd.s32 %s1172, %s1173
      %s1175 = smul.addr %s1174, 4
      %s1176 = scalar_lea.vmem %s3, %s1175
      // Predicated region
      $region33: #{mrfp_forward.10} parent=31 // pred_check
        %p1177 = pneg %p126
      $region34: #{mrfp_forward.10} parent=31 // pred_check_branch
        %1179 = sbr.rel (%p1177) target = $region36
      $region35: #{mrfp_forward.10} parent=31 // pred_region
        _
      $region36: #{mrfp_forward.10} parent=31 // pred_fallthru
        _
    $region32: #{mrfp_forward.10} parent=5 // pred_fallthru
      _
    %p1180 = scmp.le.s32.totalorder 2, %s9
    // Predicated region
    $region37: #{mrfp_forward.10} parent=5 // pred_check
      %p1181 = pneg %p1180
    $region38: #{mrfp_forward.10} parent=5 // pred_check_branch
      %1183 = sbr.rel (%p1181) target = $region40
    $region39: #{mrfp_forward.10} parent=5 // pred_region
      %s1184 = ssub.s32 %s9, 2
      // Predicated region
      $region41: #{mrfp_forward.10} parent=39 // pred_check
        %p1185 = pneg %p132
      $region42: #{mrfp_forward.10} parent=39 // pred_check_branch
        %1187 = sbr.rel (%p1185) target = $region44
      $region43: #{mrfp_forward.10} parent=39 // pred_region
        %p1188 = scmp.lt.s32.totalorder %s20, 1
        %s1189 = scalar_select %p1188, %s20, 1
        %p1190 = scmp.lt.s32.totalorder %s21, 0
        %s1191 = scalar_select %p1190, %s21, 0
        %s1192 = smul.addr %s1189, 8
        %s1193 = sadd.s32 %s1191, %s1192
        %s1194 = smul.addr %s1193, 4
        %s1195 = scalar_lea.vmem %s3, %s1194
      $region44: #{mrfp_forward.10} parent=39 // pred_fallthru
        _
    $region40: #{mrfp_forward.10} parent=5 // pred_fallthru
      _
  $region6: #{mrfp_forward.10} parent=0 // loop_footer
    %s13 = sadd.s32 1, %s9
  $region7: #{mrfp_forward.10} parent=0 // loop_footer_branch
    %8 = sbr.rel target = $region3
  $region8: #{mrfp_forward.10} parent=0 // loop_exit
    _

// kernel: mrfp_forward.9
$region0: #{mrfp_forward.9}
  #allocation0 [shape = 'u32[]', space=smem, size = 0x4, offset = 0x4, fixed_abs, tag = 'smem constant byte address 0x4 - core index']
  #allocation1 [shape = 'u32[144,128]{1,0:T(1,128)}', space=vmem, size = 0x12000, scoped, tag = 'internal scratch']
  %s0 = inlined_call_operand.vmem [shape: bf16[512,128], index: 0, kind: input, shape index: {}]
  %s1 = inlined_call_operand.vmem [shape: bf16[128,64], index: 1, kind: input, shape index: {}]
  %s2 = inlined_call_operand.vmem [shape: f32[1,64], index: 2, kind: input, shape index: {}]
  %s3 = inlined_call_operand.vmem [shape: f32[512,64], index: 3, kind: output, shape index: {}]
  %s4 = sld [smem:[#allocation0]]
  $region45: #{mrfp_forward.9} parent=0
    _
  %s6 = ssub.s32 1, %s4
  %s7 = scalar_select 0, %s6, %s4
  loop: start=0, step=1, limit=6
  $region2: #{mrfp_forward.9} parent=0 // loop_pre_header
    _
  $region3: #{mrfp_forward.9} parent=0 // loop_header
    %s9 = sphi 0, %s13
    %p10 = scmp.ge.s32.totalorder %s9, 6
    %s19 = sphi 0, %s21
    %s22 = sphi 0, %s19
    %s23 = sphi 0, %s22
    %s39 = sphi 0, %s23
    %s43 = sphi 0, %s43
    %s45 = sphi 0, %s43
    %s46 = sphi 0, %s45
    %s60 = sphi 0, %s46
    %s64 = sphi 0, %s64
    %s66 = sphi 0, %s64
    %s67 = sphi 0, %s66
    %s81 = sphi 0, %s67
    %s87 = sphi 0, %s89
    %s90 = sphi 0, %s87
    %s91 = sphi 0, %s90
    %s107 = sphi 0, %s91
  $region4: #{mrfp_forward.9} parent=0 // loop_header_branch
    %12 = sbr.rel (%p10) target = $region8
  $region5: #{mrfp_forward.9} parent=0 // loop_body
    %s14 = ssub.s32 %s9, 1
    %s15 = ssub.s32 %s9, 2
    %s16 = sadd.s32 %s9, 1
    %s17 = ssub.s32 %s9, %s16
    %p18 = scmp.eq.s32.totalorder %s17, 0
    %s20 = sadd.s32 %s19, 1
    %s21 = scalar_select %p18, %s19, %s20
    %p24 = pneg %p18
    %p25 = scmp.eq.s32.totalorder %s9, 3
    %p26 = por %p24, %p25
    %p27 = scmp.ne.s32.totalorder %s19, %s22
    %p28 = scmp.eq.s32.totalorder %s9, 0
    %p29 = por %p27, %p28
    %p30 = scmp.ne.s32.totalorder %s19, %s22
    %p31 = scmp.eq.s32.totalorder %s14, 3
    %p32 = por %p30, %p31
    %p33 = scmp.ne.s32.totalorder %s22, %s23
    %p34 = scmp.eq.s32.totalorder %s14, 0
    %p35 = por %p33, %p34
    %p36 = scmp.ne.s32.totalorder %s22, %s23
    %p37 = scmp.eq.s32.totalorder %s15, 3
    %p38 = por %p36, %p37
    %p40 = scmp.ne.s32.totalorder %s23, %s39
    %p41 = scmp.eq.s32.totalorder %s15, 0
    %p42 = por %p40, %p41
    %s44 = sadd.s32 %s43, 1
    %p47 = scmp.eq.s32.totalorder %s9, 3
    %p48 = scmp.ne.s32.totalorder %s43, %s45
    %p49 = scmp.eq.s32.totalorder %s9, 0
    %p50 = por %p48, %p49
    %p51 = scmp.ne.s32.totalorder %s43, %s45
    %p52 = scmp.eq.s32.totalorder %s14, 3
    %p53 = por %p51, %p52
    %p54 = scmp.ne.s32.totalorder %s45, %s46
    %p55 = scmp.eq.s32.totalorder %s14, 0
    %p56 = por %p54, %p55
    %p57 = scmp.ne.s32.totalorder %s45, %s46
    %p58 = scmp.eq.s32.totalorder %s15, 3
    %p59 = por %p57, %p58
    %p61 = scmp.ne.s32.totalorder %s46, %s60
    %p62 = scmp.eq.s32.totalorder %s15, 0
    %p63 = por %p61, %p62
    %s65 = sadd.s32 %s64, 1
    %p68 = scmp.eq.s32.totalorder %s9, 3
    %p69 = scmp.ne.s32.totalorder %s64, %s66
    %p70 = scmp.eq.s32.totalorder %s9, 0
    %p71 = por %p69, %p70
    %p72 = scmp.ne.s32.totalorder %s64, %s66
    %p73 = scmp.eq.s32.totalorder %s14, 3
    %p74 = por %p72, %p73
    %p75 = scmp.ne.s32.totalorder %s66, %s67
    %p76 = scmp.eq.s32.totalorder %s14, 0
    %p77 = por %p75, %p76
    %p78 = scmp.ne.s32.totalorder %s66, %s67
    %p79 = scmp.eq.s32.totalorder %s15, 3
    %p80 = por %p78, %p79
    %p82 = scmp.ne.s32.totalorder %s67, %s81
    %p83 = scmp.eq.s32.totalorder %s15, 0
    %p84 = por %p82, %p83
    %s85 = ssub.s32 %s9, %s16
    %p86 = scmp.eq.s32.totalorder %s85, 0
    %s88 = sadd.s32 %s87, 1
    %s89 = scalar_select %p86, %s87, %s88
    %p92 = pneg %p86
    %p93 = scmp.eq.s32.totalorder %s9, 3
    %p94 = por %p92, %p93
    %p95 = scmp.ne.s32.totalorder %s87, %s90
    %p96 = scmp.eq.s32.totalorder %s9, 0
    %p97 = por %p95, %p96
    %p98 = scmp.ne.s32.totalorder %s87, %s90
    %p99 = scmp.eq.s32.totalorder %s14, 3
    %p100 = por %p98, %p99
    %p101 = scmp.ne.s32.totalorder %s90, %s91
    %p102 = scmp.eq.s32.totalorder %s14, 0
    %p103 = por %p101, %p102
    %p104 = scmp.ne.s32.totalorder %s90, %s91
    %p105 = scmp.eq.s32.totalorder %s15, 3
    %p106 = por %p104, %p105
    %p108 = scmp.ne.s32.totalorder %s91, %s107
    %p109 = scmp.eq.s32.totalorder %s15, 0
    %p110 = por %p108, %p109
    %p111 = scmp.le.s32.totalorder 1, %s9
    %p112 = scmp.lt.s32.totalorder %s9, 5
    %p113 = pnand %p111, %p112
    %p114 = pneg %p113
    // Predicated region
    $region9: #{mrfp_forward.9} parent=5 // pred_check
      _
    $region10: #{mrfp_forward.9} parent=5 // pred_check_branch
      %116 = sbr.rel (%p113) target = $region12
    $region11: #{mrfp_forward.9} parent=5 // pred_region
      %s117 = ssub.s32 %s9, 1
      // Predicated region
      $region13: #{mrfp_forward.9} parent=11 // pred_check
        %p118 = pneg %p56
      $region14: #{mrfp_forward.9} parent=11 // pred_check_branch
        %120 = sbr.rel (%p118) target = $region16
      $region15: #{mrfp_forward.9} parent=11 // pred_region
        _
      $region16: #{mrfp_forward.9} parent=11 // pred_fallthru
        _
      // Predicated region
      $region17: #{mrfp_forward.9} parent=11 // pred_check
        %p121 = pneg %p77
      $region18: #{mrfp_forward.9} parent=11 // pred_check_branch
        %123 = sbr.rel (%p121) target = $region20
      $region19: #{mrfp_forward.9} parent=11 // pred_region
        _
      $region20: #{mrfp_forward.9} parent=11 // pred_fallthru
        _
    $region12: #{mrfp_forward.9} parent=5 // pred_fallthru
      _
    %p124 = scmp.lt.s32.totalorder %s9, 4
    // Predicated region
    $region21: #{mrfp_forward.9} parent=5 // pred_check
      %p125 = pneg %p124
    $region22: #{mrfp_forward.9} parent=5 // pred_check_branch
      %127 = sbr.rel (%p125) target = $region24
    $region23: #{mrfp_forward.9} parent=5 // pred_region
      // Predicated region
      $region25: #{mrfp_forward.9} parent=23 // pred_check
        %p128 = pneg %p29
      $region26: #{mrfp_forward.9} parent=23 // pred_check_branch
        %130 = sbr.rel (%p128) target = $region28
      $region27: #{mrfp_forward.9} parent=23 // pred_region
        %s131 = smul.u32 16, %s9
        %p132 = scmp.lt.s32.totalorder %s131, 63
        %s133 = scalar_select %p132, %s131, 63
        %s134 = smul.addr %s133, 4
        %s135 = scalar_lea.vmem %s0, %s134
        %s136 = smul.u32 16, %s9
      $region28: #{mrfp_forward.9} parent=23 // pred_fallthru
        _
    $region24: #{mrfp_forward.9} parent=5 // pred_fallthru
      _
    %p137 = scmp.le.s32.totalorder 1, %s9
    %p138 = scmp.lt.s32.totalorder %s9, 5
    %p139 = pnand %p137, %p138
    %p140 = pneg %p139
    // Predicated region
    $region29: #{mrfp_forward.9} parent=5 // pred_check
      _
    $region30: #{mrfp_forward.9} parent=5 // pred_check_branch
      %142 = sbr.rel (%p139) target = $region32
    $region31: #{mrfp_forward.9} parent=5 // pred_region
      %s143 = ssub.s32 %s9, 1
      %s144 = smul.u32 16, %s14
      %p145 = scmp.lt.s32.totalorder %s144, 63
      %s146 = scalar_select %p145, %s144, 63
      %s147 = smul.addr %s146, 4
      %s148 = scalar_lea.vmem %s0, %s147
      %p149 = pneg %p35
      %p150 = pneg %p32
      %p151 = pneg %p56
      %p152 = pneg %p53
      %p153 = pneg %p77
      %p154 = pneg %p74
      %p155 = pneg %p103
      %p156 = pneg %p100
      %s157 = smul.u32 16, %s14
      %p158 = scmp.lt.s32.totalorder %s157, 63
      %s159 = scalar_select %p158, %s157, 63
      %s160 = smul.addr %s159, 8
      %s161 = scalar_lea.vmem %s3, %s160
      %s162 = smul.u32 16, %s14
      %p163 = scmp.lt.s32.totalorder %s162, 63
      %s164 = scalar_select %p163, %s162, 63
      %s165 = smul.addr %s164, 4
      %s166 = scalar_lea.vmem %s0, %s165
      %s167 = smul.u32 16, %s14
      %s168 = smul.u32 16, %s14
      %p169 = scmp.lt.s32.totalorder %s168, 63
      %s170 = scalar_select %p169, %s168, 63
      %s171 = smul.addr %s170, 8
      %s172 = scalar_lea.vmem %s3, %s171
      %s173 = smul.u32 16, %s14
      %v175 = vld [vmem:[%s166] sm:$0xf]
      %v176 = vld [vmem:[%s166 + $0x4] sm:$0xf]
      %v177 = vld [vmem:[%s166 + $0x8] sm:$0xf]
      %v178 = vld [vmem:[%s166 + $0xc] sm:$0xf]
      %v179 = vld [vmem:[%s166 + $0x10] sm:$0xf]
      %v180 = vld [vmem:[%s166 + $0x14] sm:$0xf]
      %v181 = vld [vmem:[%s166 + $0x18] sm:$0xf]
      %v182 = vld [vmem:[%s166 + $0x1c] sm:$0xf]
      %v183 = vld [vmem:[%s166 + $0x20] sm:$0xf]
      %v184 = vld [vmem:[%s166 + $0x24] sm:$0xf]
      %v185 = vld [vmem:[%s166 + $0x28] sm:$0xf]
      %v186 = vld [vmem:[%s166 + $0x2c] sm:$0xf]
      %v187 = vld [vmem:[%s166 + $0x30] sm:$0xf]
      %v188 = vld [vmem:[%s166 + $0x34] sm:$0xf]
      %v189 = vld [vmem:[%s166 + $0x38] sm:$0xf]
      %v190 = vld [vmem:[%s166 + $0x3c] sm:$0xf]
      %v191 = vld [vmem:[%s1] sm:$0xf]
      %v192 = vld [vmem:[%s1 + $0x4] sm:$0xf]
      %v193 = vld [vmem:[%s1 + $0x8] sm:$0xf]
      %v194 = vld [vmem:[%s1 + $0xc] sm:$0xf]
      %v195 = vld [vmem:[%s1 + $0x10] sm:$0xf]
      %v196 = vld [vmem:[%s1 + $0x14] sm:$0xf]
      %v197 = vld [vmem:[%s1 + $0x18] sm:$0xf]
      %v198 = vld [vmem:[%s1 + $0x1c] sm:$0xf]
      %v199 = vld [vmem:[%s1 + $0x20] sm:$0xf]
      %v200 = vld [vmem:[%s1 + $0x24] sm:$0xf]
      %v201 = vld [vmem:[%s1 + $0x28] sm:$0xf]
      %v202 = vld [vmem:[%s1 + $0x2c] sm:$0xf]
      %v203 = vld [vmem:[%s1 + $0x30] sm:$0xf]
      %v204 = vld [vmem:[%s1 + $0x34] sm:$0xf]
      %v205 = vld [vmem:[%s1 + $0x38] sm:$0xf]
      %v206 = vld [vmem:[%s1 + $0x3c] sm:$0xf]
      %v207 = vld [vmem:[%s2] sm:$0x1]
      %v209 = vlaneseq
      %v210 = vshrl.u32 %v209, 7
      %v211 = vsub.s32 0, %v210
      %v212 = vrot.slane %v207, %v211
      %v230 = vunpack.c.l.b16 %v175
      %v231 = vunpack.c.l.b16 %v176
      %v232 = vunpack.c.l.b16 %v177
      %v233 = vunpack.c.l.b16 %v178
      %v234 = vunpack.c.l.b16 %v179
      %v235 = vunpack.c.l.b16 %v180
      %v236 = vunpack.c.l.b16 %v181
      %v237 = vunpack.c.l.b16 %v182
      %v238 = vunpack.c.l.b16 %v183
      %v239 = vunpack.c.l.b16 %v184
      %v240 = vunpack.c.l.b16 %v185
      %v241 = vunpack.c.l.b16 %v186
      %v242 = vunpack.c.l.b16 %v187
      %v243 = vunpack.c.l.b16 %v188
      %v244 = vunpack.c.l.b16 %v189
      %v245 = vunpack.c.l.b16 %v190
      %v246 = vpack.c.b16 %v231, %v230
      %v247 = vpack.c.b16 %v233, %v232
      %v248 = vpack.c.b16 %v235, %v234
      %v249 = vpack.c.b16 %v237, %v236
      %v250 = vpack.c.b16 %v239, %v238
      %v251 = vpack.c.b16 %v241, %v240
      %v252 = vpack.c.b16 %v243, %v242
      %v253 = vpack.c.b16 %v245, %v244
      %v278 = vunpack.c.l.b16 %v191
      %v279 = vunpack.c.l.b16 %v192
      %v280 = vunpack.c.l.b16 %v193
      %v281 = vunpack.c.l.b16 %v194
      %v282 = vunpack.c.l.b16 %v195
      %v283 = vunpack.c.l.b16 %v196
      %v284 = vunpack.c.l.b16 %v197
      %v285 = vunpack.c.l.b16 %v198
      %v286 = vunpack.c.l.b16 %v199
      %v287 = vunpack.c.l.b16 %v200
      %v288 = vunpack.c.l.b16 %v201
      %v289 = vunpack.c.l.b16 %v202
      %v290 = vunpack.c.l.b16 %v203
      %v291 = vunpack.c.l.b16 %v204
      %v292 = vunpack.c.l.b16 %v205
      %v293 = vunpack.c.l.b16 %v206
      %v294 = vpack.c.b16 %v279, %v278
      %v295 = vpack.c.b16 %v281, %v280
      %v296 = vpack.c.b16 %v283, %v282
      %v297 = vpack.c.b16 %v285, %v284
      %v298 = vpack.c.b16 %v287, %v286
      %v299 = vpack.c.b16 %v289, %v288
      %v300 = vpack.c.b16 %v291, %v290
      %v301 = vpack.c.b16 %v293, %v292
      %310 = vmatprep.subr.bf16.mxu0 0
      %311 = vmatpush1.bf16.msra.mxu0 %v301
      %312 = vmatprep.subr.bf16.mxu0 0
      %313 = vmatpush1.bf16.msra.mxu0 %v300
      %314 = vmatprep.subr.bf16.mxu0 0
      %315 = vmatpush1.bf16.msra.mxu0 %v299
      %316 = vmatprep.subr.bf16.mxu0 0
      %317 = vmatpush1.bf16.msra.mxu0 %v298
      %318 = vmatprep.subr.bf16.mxu0 0
      %319 = vmatpush1.bf16.msra.mxu0 %v297
      %320 = vmatprep.subr.bf16.mxu0 0
      %321 = vmatpush1.bf16.msra.mxu0 %v296
      %322 = vmatprep.subr.bf16.mxu0 0
      %323 = vmatpush1.bf16.msra.mxu0 %v295
      %324 = vmatprep.subr.bf16.mxu0 0
      %325 = vmatpush1.bf16.msra.mxu0 %v294
      %326 = vmatprep.subr.bf16.mxu0 0
      %327 = vmatpush2.bf16.msra.mxu0 0
      %328 = vmatprep.subr.bf16.mxu0 0
      %329 = vmatpush2.bf16.msra.mxu0 0
      %330 = vmatprep.subr.bf16.mxu0 0
      %331 = vmatpush2.bf16.msra.mxu0 0
      %332 = vmatprep.subr.bf16.mxu0 0
      %333 = vmatpush2.bf16.msra.mxu0 0
      %334 = vmatprep.subr.bf16.mxu0 0
      %335 = vmatpush2.bf16.msra.mxu0 0
      %336 = vmatprep.subr.bf16.mxu0 0
      %337 = vmatpush2.bf16.msra.mxu0 0
      %338 = vmatprep.subr.bf16.mxu0 0
      %339 = vmatpush2.bf16.msra.mxu0 0
      %340 = vmatprep.subr.bf16.mxu0 0
      %341 = vmatpush2.bf16.msra.mxu0 0
      %342 = vmatprep.mubr.bf16.mxu0 0
      %343 = vmatmul.mubr.bf16.gmra.mxu0 %v246
      %v344 = vpop.f32.mrf.mxu0
      %v345 = vadd.f32 %v212, %v344
      %v346 = vpop.f32.mrf.mxu0
      %v347 = vpop.f32.mrf.mxu0
      %v348 = vadd.f32 %v212, %v347
      %v349 = vpop.f32.mrf.mxu0
      %350 = vmatprep.mubr.bf16.mxu0 0
      %351 = vmatmul.mubr.bf16.gmra.mxu0 %v247
      %v352 = vpop.f32.mrf.mxu0
      %v353 = vadd.f32 %v212, %v352
      %v354 = vpop.f32.mrf.mxu0
      %v355 = vpop.f32.mrf.mxu0
      %v356 = vadd.f32 %v212, %v355
      %v357 = vpop.f32.mrf.mxu0
      %358 = vmatprep.mubr.bf16.mxu0 0
      %359 = vmatmul.mubr.bf16.gmra.mxu0 %v248
      %v360 = vpop.f32.mrf.mxu0
      %v361 = vadd.f32 %v212, %v360
      %v362 = vpop.f32.mrf.mxu0
      %v363 = vpop.f32.mrf.mxu0
      %v364 = vadd.f32 %v212, %v363
      %v365 = vpop.f32.mrf.mxu0
      %366 = vmatprep.mubr.bf16.mxu0 0
      %367 = vmatmul.mubr.bf16.gmra.mxu0 %v249
      %v368 = vpop.f32.mrf.mxu0
      %v369 = vadd.f32 %v212, %v368
      %v370 = vpop.f32.mrf.mxu0
      %v371 = vpop.f32.mrf.mxu0
      %v372 = vadd.f32 %v212, %v371
      %v373 = vpop.f32.mrf.mxu0
      %374 = vmatprep.mubr.bf16.mxu0 0
      %375 = vmatmul.mubr.bf16.gmra.mxu0 %v250
      %v376 = vpop.f32.mrf.mxu0
      %v377 = vadd.f32 %v212, %v376
      %v378 = vpop.f32.mrf.mxu0
      %v379 = vpop.f32.mrf.mxu0
      %v380 = vadd.f32 %v212, %v379
      %v381 = vpop.f32.mrf.mxu0
      %382 = vmatprep.mubr.bf16.mxu0 0
      %383 = vmatmul.mubr.bf16.gmra.mxu0 %v251
      %v384 = vpop.f32.mrf.mxu0
      %v385 = vadd.f32 %v212, %v384
      %v386 = vpop.f32.mrf.mxu0
      %v387 = vpop.f32.mrf.mxu0
      %v388 = vadd.f32 %v212, %v387
      %v389 = vpop.f32.mrf.mxu0
      %390 = vmatprep.mubr.bf16.mxu0 0
      %391 = vmatmul.mubr.bf16.gmra.mxu0 %v252
      %v392 = vpop.f32.mrf.mxu0
      %v393 = vadd.f32 %v212, %v392
      %v394 = vpop.f32.mrf.mxu0
      %v395 = vpop.f32.mrf.mxu0
      %v396 = vadd.f32 %v212, %v395
      %v397 = vpop.f32.mrf.mxu0
      %398 = vmatprep.mubr.bf16.mxu0 0
      %399 = vmatmul.mubr.bf16.gmra.mxu0 %v253
      %v400 = vpop.f32.mrf.mxu0
      %v401 = vadd.f32 %v212, %v400
      %v402 = vpop.f32.mrf.mxu0
      %v403 = vpop.f32.mrf.mxu0
      %v404 = vadd.f32 %v212, %v403
      %v405 = vpop.f32.mrf.mxu0
      %406 = vdwg.mxu0
      %vm407 = vcmask 523264
      %408 = vst.msk [vmem:[%s172] sm:$0xff] %vm407, %v345
      %409 = vst.msk [vmem:[%s172 + $0x8] sm:$0xff] %vm407, %v348
      %410 = vst.msk [vmem:[%s172 + $0x10] sm:$0xff] %vm407, %v353
      %411 = vst.msk [vmem:[%s172 + $0x18] sm:$0xff] %vm407, %v356
      %412 = vst.msk [vmem:[%s172 + $0x20] sm:$0xff] %vm407, %v361
      %413 = vst.msk [vmem:[%s172 + $0x28] sm:$0xff] %vm407, %v364
      %414 = vst.msk [vmem:[%s172 + $0x30] sm:$0xff] %vm407, %v369
      %415 = vst.msk [vmem:[%s172 + $0x38] sm:$0xff] %vm407, %v372
      %416 = vst.msk [vmem:[%s172 + $0x40] sm:$0xff] %vm407, %v377
      %417 = vst.msk [vmem:[%s172 + $0x48] sm:$0xff] %vm407, %v380
      %418 = vst.msk [vmem:[%s172 + $0x50] sm:$0xff] %vm407, %v385
      %419 = vst.msk [vmem:[%s172 + $0x58] sm:$0xff] %vm407, %v388
      %420 = vst.msk [vmem:[%s172 + $0x60] sm:$0xff] %vm407, %v393
      %421 = vst.msk [vmem:[%s172 + $0x68] sm:$0xff] %vm407, %v396
      %422 = vst.msk [vmem:[%s172 + $0x70] sm:$0xff] %vm407, %v401
      %423 = vst.msk [vmem:[%s172 + $0x78] sm:$0xff] %vm407, %v404
      %s424 = smul.u32 16, %s14
      %p425 = scmp.lt.s32.totalorder %s424, 63
      %s426 = scalar_select %p425, %s424, 63
      %s427 = smul.addr %s426, 8
      %s428 = scalar_lea.vmem %s3, %s427
      // Predicated region
      $region33: #{mrfp_forward.9} parent=31 // pred_check
        %p429 = pneg %p100
      $region34: #{mrfp_forward.9} parent=31 // pred_check_branch
        %431 = sbr.rel (%p429) target = $region36
      $region35: #{mrfp_forward.9} parent=31 // pred_region
        %s432 = smul.u32 16, %s14
      $region36: #{mrfp_forward.9} parent=31 // pred_fallthru
        _
    $region32: #{mrfp_forward.9} parent=5 // pred_fallthru
      _
    %p433 = scmp.le.s32.totalorder 2, %s9
    // Predicated region
    $region37: #{mrfp_forward.9} parent=5 // pred_check
      %p434 = pneg %p433
    $region38: #{mrfp_forward.9} parent=5 // pred_check_branch
      %436 = sbr.rel (%p434) target = $region40
    $region39: #{mrfp_forward.9} parent=5 // pred_region
      %s437 = ssub.s32 %s9, 2
      // Predicated region
      $region41: #{mrfp_forward.9} parent=39 // pred_check
        %p438 = pneg %p106
      $region42: #{mrfp_forward.9} parent=39 // pred_check_branch
        %440 = sbr.rel (%p438) target = $region44
      $region43: #{mrfp_forward.9} parent=39 // pred_region
        %s441 = smul.u32 16, %s15
        %p442 = scmp.lt.s32.totalorder %s441, 63
        %s443 = scalar_select %p442, %s441, 63
        %s444 = smul.addr %s443, 8
        %s445 = scalar_lea.vmem %s3, %s444
      $region44: #{mrfp_forward.9} parent=39 // pred_fallthru
        _
    $region40: #{mrfp_forward.9} parent=5 // pred_fallthru
      _
  $region6: #{mrfp_forward.9} parent=0 // loop_footer
    %s13 = sadd.s32 1, %s9
  $region7: #{mrfp_forward.9} parent=0 // loop_footer_branch
    %8 = sbr.rel target = $region3
  $region8: #{mrfp_forward.9} parent=0 // loop_exit
    _

// kernel: mrfp_forward.8
$region0: #{mrfp_forward.8}
  #allocation0 [shape = 'u32[]', space=smem, size = 0x4, offset = 0x4, fixed_abs, tag = 'smem constant byte address 0x4 - core index']
  #allocation1 [shape = 'u32[144,128]{1,0:T(1,128)}', space=vmem, size = 0x12000, scoped, tag = 'internal scratch']
  #allocation2 [shape = 'f32[20,32,128]{2,1,0:T(8,128)}', space=vmem, size = 0x50000, scoped, tag = 'scratch operand']
  %s0 = inlined_call_operand.vmem [shape: bf16[2,16,16,128], index: 0, kind: input, shape index: {}]
  %s1 = inlined_call_operand.vmem [shape: f32[5,5,128], index: 1, kind: input, shape index: {}]
  %s2 = inlined_call_operand.vmem [shape: f32[1,1,128], index: 2, kind: input, shape index: {}]
  %s3 = inlined_call_operand.vmem [shape: bf16[2,16,16,128], index: 3, kind: output, shape index: {}]
  %s4 = sld [smem:[#allocation0]]
  $region45: #{mrfp_forward.8} parent=0
    _
  %s6 = ssub.s32 1, %s4
  %s7 = scalar_select 0, %s6, %s4
  loop: start=0, step=1, limit=4
  $region2: #{mrfp_forward.8} parent=0 // loop_pre_header
    _
  $region3: #{mrfp_forward.8} parent=0 // loop_header
    %s9 = sphi 0, %s13
    %p10 = scmp.ge.s32.totalorder %s9, 4
    %s16 = sphi 0, %s28
    %s17 = sphi 0, %s24
    %s18 = sphi 0, %s16
    %s19 = sphi 0, %s17
    %s20 = sphi 0, %s18
    %s21 = sphi 0, %s19
    %s33 = sphi 0, %s35
    %s36 = sphi 0, %s33
    %s37 = sphi 0, %s36
    %s53 = sphi 0, %s37
    %s59 = sphi 0, %s61
    %s62 = sphi 0, %s59
    %s63 = sphi 0, %s62
    %s79 = sphi 0, %s63
    %s85 = sphi 0, %s87
    %s88 = sphi 0, %s85
    %s89 = sphi 0, %s88
    %s105 = sphi 0, %s89
    %s113 = sphi 0, %s115
    %s116 = sphi 0, %s113
    %s117 = sphi 0, %s116
    %s133 = sphi 0, %s117
  $region4: #{mrfp_forward.8} parent=0 // loop_header_branch
    %12 = sbr.rel (%p10) target = $region8
  $region5: #{mrfp_forward.8} parent=0 // loop_body
    %s14 = ssub.s32 %s9, 1
    %s15 = ssub.s32 %s9, 2
    %s22 = sadd.s32 1, %s17
    %p23 = scmp.ge.s32.totalorder %s22, 1
    %s24 = scalar_select %p23, 0, %s22
    %s25 = sadd.s32 1, %s16
    %s26 = scalar_select %p23, %s25, %s16
    %p27 = scmp.ge.s32.totalorder %s26, 2
    %s28 = scalar_select %p27, 0, %s26
    %s29 = ssub.s32 %s16, %s28
    %s30 = ssub.s32 %s17, %s24
    %s31 = sor.u32 %s29, %s30
    %p32 = scmp.eq.s32.totalorder %s31, 0
    %s34 = sadd.s32 %s33, 1
    %s35 = scalar_select %p32, %s33, %s34
    %p38 = pneg %p32
    %p39 = scmp.eq.s32.totalorder %s9, 1
    %p40 = por %p38, %p39
    %p41 = scmp.ne.s32.totalorder %s33, %s36
    %p42 = scmp.eq.s32.totalorder %s9, 0
    %p43 = por %p41, %p42
    %p44 = scmp.ne.s32.totalorder %s33, %s36
    %p45 = scmp.eq.s32.totalorder %s14, 1
    %p46 = por %p44, %p45
    %p47 = scmp.ne.s32.totalorder %s36, %s37
    %p48 = scmp.eq.s32.totalorder %s14, 0
    %p49 = por %p47, %p48
    %p50 = scmp.ne.s32.totalorder %s36, %s37
    %p51 = scmp.eq.s32.totalorder %s15, 1
    %p52 = por %p50, %p51
    %p54 = scmp.ne.s32.totalorder %s37, %s53
    %p55 = scmp.eq.s32.totalorder %s15, 0
    %p56 = por %p54, %p55
    %s57 = ssub.s32 %s17, %s24
    %p58 = scmp.eq.s32.totalorder %s57, 0
    %s60 = sadd.s32 %s59, 1
    %s61 = scalar_select %p58, %s59, %s60
    %p64 = pneg %p58
    %p65 = scmp.eq.s32.totalorder %s9, 1
    %p66 = por %p64, %p65
    %p67 = scmp.ne.s32.totalorder %s59, %s62
    %p68 = scmp.eq.s32.totalorder %s9, 0
    %p69 = por %p67, %p68
    %p70 = scmp.ne.s32.totalorder %s59, %s62
    %p71 = scmp.eq.s32.totalorder %s14, 1
    %p72 = por %p70, %p71
    %p73 = scmp.ne.s32.totalorder %s62, %s63
    %p74 = scmp.eq.s32.totalorder %s14, 0
    %p75 = por %p73, %p74
    %p76 = scmp.ne.s32.totalorder %s62, %s63
    %p77 = scmp.eq.s32.totalorder %s15, 1
    %p78 = por %p76, %p77
    %p80 = scmp.ne.s32.totalorder %s63, %s79
    %p81 = scmp.eq.s32.totalorder %s15, 0
    %p82 = por %p80, %p81
    %s83 = ssub.s32 %s17, %s24
    %p84 = scmp.eq.s32.totalorder %s83, 0
    %s86 = sadd.s32 %s85, 1
    %s87 = scalar_select %p84, %s85, %s86
    %p90 = pneg %p84
    %p91 = scmp.eq.s32.totalorder %s9, 1
    %p92 = por %p90, %p91
    %p93 = scmp.ne.s32.totalorder %s85, %s88
    %p94 = scmp.eq.s32.totalorder %s9, 0
    %p95 = por %p93, %p94
    %p96 = scmp.ne.s32.totalorder %s85, %s88
    %p97 = scmp.eq.s32.totalorder %s14, 1
    %p98 = por %p96, %p97
    %p99 = scmp.ne.s32.totalorder %s88, %s89
    %p100 = scmp.eq.s32.totalorder %s14, 0
    %p101 = por %p99, %p100
    %p102 = scmp.ne.s32.totalorder %s88, %s89
    %p103 = scmp.eq.s32.totalorder %s15, 1
    %p104 = por %p102, %p103
    %p106 = scmp.ne.s32.totalorder %s89, %s105
    %p107 = scmp.eq.s32.totalorder %s15, 0
    %p108 = por %p106, %p107
    %s109 = ssub.s32 %s16, %s28
    %s110 = ssub.s32 %s17, %s24
    %s111 = sor.u32 %s109, %s110
    %p112 = scmp.eq.s32.totalorder %s111, 0
    %s114 = sadd.s32 %s113, 1
    %s115 = scalar_select %p112, %s113, %s114
    %p118 = pneg %p112
    %p119 = scmp.eq.s32.totalorder %s9, 1
    %p120 = por %p118, %p119
    %p121 = scmp.ne.s32.totalorder %s113, %s116
    %p122 = scmp.eq.s32.totalorder %s9, 0
    %p123 = por %p121, %p122
    %p124 = scmp.ne.s32.totalorder %s113, %s116
    %p125 = scmp.eq.s32.totalorder %s14, 1
    %p126 = por %p124, %p125
    %p127 = scmp.ne.s32.totalorder %s116, %s117
    %p128 = scmp.eq.s32.totalorder %s14, 0
    %p129 = por %p127, %p128
    %p130 = scmp.ne.s32.totalorder %s116, %s117
    %p131 = scmp.eq.s32.totalorder %s15, 1
    %p132 = por %p130, %p131
    %p134 = scmp.ne.s32.totalorder %s117, %s133
    %p135 = scmp.eq.s32.totalorder %s15, 0
    %p136 = por %p134, %p135
    %p137 = scmp.le.s32.totalorder 1, %s9
    %p138 = scmp.lt.s32.totalorder %s9, 3
    %p139 = pnand %p137, %p138
    %p140 = pneg %p139
    // Predicated region
    $region9: #{mrfp_forward.8} parent=5 // pred_check
      _
    $region10: #{mrfp_forward.8} parent=5 // pred_check_branch
      %142 = sbr.rel (%p139) target = $region12
    $region11: #{mrfp_forward.8} parent=5 // pred_region
      %s143 = ssub.s32 %s9, 1
      // Predicated region
      $region13: #{mrfp_forward.8} parent=11 // pred_check
        %p144 = pneg %p75
      $region14: #{mrfp_forward.8} parent=11 // pred_check_branch
        %146 = sbr.rel (%p144) target = $region16
      $region15: #{mrfp_forward.8} parent=11 // pred_region
        %p147 = scmp.lt.s32.totalorder %s19, 0
        %s148 = scalar_select %p147, %s19, 0
        %s149 = smul.addr %s148, 8
        %s150 = scalar_lea.vmem %s1, %s149
      $region16: #{mrfp_forward.8} parent=11 // pred_fallthru
        _
      // Predicated region
      $region17: #{mrfp_forward.8} parent=11 // pred_check
        %p151 = pneg %p101
      $region18: #{mrfp_forward.8} parent=11 // pred_check_branch
        %153 = sbr.rel (%p151) target = $region20
      $region19: #{mrfp_forward.8} parent=11 // pred_region
        %p154 = scmp.lt.s32.totalorder %s19, 0
        %s155 = scalar_select %p154, %s19, 0
        %s156 = scalar_lea.vmem %s2, %s155
      $region20: #{mrfp_forward.8} parent=11 // pred_fallthru
        _
    $region12: #{mrfp_forward.8} parent=5 // pred_fallthru
      _
    %p157 = scmp.lt.s32.totalorder %s9, 2
    // Predicated region
    $region21: #{mrfp_forward.8} parent=5 // pred_check
      %p158 = pneg %p157
    $region22: #{mrfp_forward.8} parent=5 // pred_check_branch
      %160 = sbr.rel (%p158) target = $region24
    $region23: #{mrfp_forward.8} parent=5 // pred_region
      // Predicated region
      $region25: #{mrfp_forward.8} parent=23 // pred_check
        %p161 = pneg %p43
      $region26: #{mrfp_forward.8} parent=23 // pred_check_branch
        %163 = sbr.rel (%p161) target = $region28
      $region27: #{mrfp_forward.8} parent=23 // pred_region
        %p164 = scmp.lt.s32.totalorder %s16, 1
        %s165 = scalar_select %p164, %s16, 1
        %p166 = scmp.lt.s32.totalorder %s17, 0
        %s167 = scalar_select %p166, %s17, 0
        %s168 = smul.addr %s165, 32
        %s169 = sadd.s32 %s167, %s168
        %s170 = smul.addr %s169, 4
        %s171 = scalar_lea.vmem %s0, %s170
      $region28: #{mrfp_forward.8} parent=23 // pred_fallthru
        _
    $region24: #{mrfp_forward.8} parent=5 // pred_fallthru
      _
    %p172 = scmp.le.s32.totalorder 1, %s9
    %p173 = scmp.lt.s32.totalorder %s9, 3
    %p174 = pnand %p172, %p173
    %p175 = pneg %p174
    // Predicated region
    $region29: #{mrfp_forward.8} parent=5 // pred_check
      _
    $region30: #{mrfp_forward.8} parent=5 // pred_check_branch
      %177 = sbr.rel (%p174) target = $region32
    $region31: #{mrfp_forward.8} parent=5 // pred_region
      %s178 = ssub.s32 %s9, 1
      %p179 = scmp.lt.s32.totalorder %s18, 1
      %s180 = scalar_select %p179, %s18, 1
      %p181 = scmp.lt.s32.totalorder %s19, 0
      %s182 = scalar_select %p181, %s19, 0
      %s183 = smul.addr %s180, 32
      %s184 = sadd.s32 %s182, %s183
      %s185 = smul.addr %s184, 4
      %s186 = scalar_lea.vmem %s0, %s185
      %p187 = pneg %p49
      %p188 = pneg %p46
      %p189 = scmp.lt.s32.totalorder %s19, 0
      %s190 = scalar_select %p189, %s19, 0
      %s191 = smul.addr %s190, 8
      %s192 = scalar_lea.vmem %s1, %s191
      %p193 = pneg %p75
      %p194 = pneg %p72
      %p195 = scmp.lt.s32.totalorder %s19, 0
      %s196 = scalar_select %p195, %s19, 0
      %s197 = scalar_lea.vmem %s2, %s196
      %p198 = pneg %p101
      %p199 = pneg %p98
      %p200 = pneg %p129
      %p201 = pneg %p126
      %p202 = scmp.lt.s32.totalorder %s18, 1
      %s203 = scalar_select %p202, %s18, 1
      %p204 = scmp.lt.s32.totalorder %s19, 0
      %s205 = scalar_select %p204, %s19, 0
      %s206 = smul.addr %s203, 32
      %s207 = sadd.s32 %s205, %s206
      %s208 = smul.addr %s207, 4
      %s209 = scalar_lea.vmem %s3, %s208
      %p210 = scmp.lt.s32.totalorder %s18, 1
      %s211 = scalar_select %p210, %s18, 1
      %p212 = scmp.lt.s32.totalorder %s19, 0
      %s213 = scalar_select %p212, %s19, 0
      %s214 = smul.addr %s211, 32
      %s215 = sadd.s32 %s213, %s214
      %s216 = smul.addr %s215, 4
      %s217 = scalar_lea.vmem %s0, %s216
      %p218 = scmp.lt.s32.totalorder %s19, 0
      %s219 = scalar_select %p218, %s19, 0
      %s220 = smul.addr %s219, 8
      %s221 = scalar_lea.vmem %s1, %s220
      %p222 = scmp.lt.s32.totalorder %s19, 0
      %s223 = scalar_select %p222, %s19, 0
      %s224 = scalar_lea.vmem %s2, %s223
      %p225 = scmp.lt.s32.totalorder %s18, 1
      %s226 = scalar_select %p225, %s18, 1
      %p227 = scmp.lt.s32.totalorder %s19, 0
      %s228 = scalar_select %p227, %s19, 0
      %s229 = smul.addr %s226, 32
      %s230 = sadd.s32 %s228, %s229
      %s231 = smul.addr %s230, 4
      %s232 = scalar_lea.vmem %s3, %s231
      %233 = vst [vmem:[#allocation2] sm:$0xff] 0.0
      %234 = vst [vmem:[#allocation2 + $0x8] sm:$0xff] 0.0
      %235 = vst [vmem:[#allocation2 + $0x10] sm:$0xff] 0.0
      %236 = vst [vmem:[#allocation2 + $0x18] sm:$0xff] 0.0
      %237 = vst [vmem:[#allocation2 + $0x20] sm:$0xff] 0.0
      %238 = vst [vmem:[#allocation2 + $0x28] sm:$0xff] 0.0
      %239 = vst [vmem:[#allocation2 + $0x30] sm:$0xff] 0.0
      %240 = vst [vmem:[#allocation2 + $0x38] sm:$0xff] 0.0
      %241 = vst [vmem:[#allocation2 + $0x40] sm:$0xff] 0.0
      %242 = vst [vmem:[#allocation2 + $0x48] sm:$0xff] 0.0
      %243 = vst [vmem:[#allocation2 + $0x50] sm:$0xff] 0.0
      %244 = vst [vmem:[#allocation2 + $0x58] sm:$0xff] 0.0
      %245 = vst [vmem:[#allocation2 + $0x60] sm:$0xff] 0.0
      %246 = vst [vmem:[#allocation2 + $0x68] sm:$0xff] 0.0
      %247 = vst [vmem:[#allocation2 + $0x70] sm:$0xff] 0.0
      %248 = vst [vmem:[#allocation2 + $0x78] sm:$0xff] 0.0
      %249 = vst [vmem:[#allocation2 + $0x80] sm:$0xff] 0.0
      %250 = vst [vmem:[#allocation2 + $0x88] sm:$0xff] 0.0
      %251 = vst [vmem:[#allocation2 + $0x90] sm:$0xff] 0.0
      %252 = vst [vmem:[#allocation2 + $0x98] sm:$0xff] 0.0
      %253 = vst [vmem:[#allocation2 + $0xa0] sm:$0xff] 0.0
      %254 = vst [vmem:[#allocation2 + $0xa8] sm:$0xff] 0.0
      %255 = vst [vmem:[#allocation2 + $0xb0] sm:$0xff] 0.0
      %256 = vst [vmem:[#allocation2 + $0xb8] sm:$0xff] 0.0
      %257 = vst [vmem:[#allocation2 + $0xc0] sm:$0xff] 0.0
      %258 = vst [vmem:[#allocation2 + $0xc8] sm:$0xff] 0.0
      %259 = vst [vmem:[#allocation2 + $0xd0] sm:$0xff] 0.0
      %260 = vst [vmem:[#allocation2 + $0xd8] sm:$0xff] 0.0
      %261 = vst [vmem:[#allocation2 + $0xe0] sm:$0xff] 0.0
      %262 = vst [vmem:[#allocation2 + $0xe8] sm:$0xff] 0.0
      %263 = vst [vmem:[#allocation2 + $0xf0] sm:$0xff] 0.0
      %264 = vst [vmem:[#allocation2 + $0xf8] sm:$0xff] 0.0
      %265 = vst [vmem:[#allocation2 + $0x100] sm:$0xff] 0.0
      %266 = vst [vmem:[#allocation2 + $0x108] sm:$0xff] 0.0
      %267 = vst [vmem:[#allocation2 + $0x110] sm:$0xff] 0.0
      %268 = vst [vmem:[#allocation2 + $0x118] sm:$0xff] 0.0
      %269 = vst [vmem:[#allocation2 + $0x120] sm:$0xff] 0.0
      %270 = vst [vmem:[#allocation2 + $0x128] sm:$0xff] 0.0
      %271 = vst [vmem:[#allocation2 + $0x130] sm:$0xff] 0.0
      %272 = vst [vmem:[#allocation2 + $0x138] sm:$0xff] 0.0
      %273 = vst [vmem:[#allocation2 + $0x140] sm:$0xff] 0.0
      %274 = vst [vmem:[#allocation2 + $0x148] sm:$0xff] 0.0
      %275 = vst [vmem:[#allocation2 + $0x150] sm:$0xff] 0.0
      %276 = vst [vmem:[#allocation2 + $0x158] sm:$0xff] 0.0
      %277 = vst [vmem:[#allocation2 + $0x160] sm:$0xff] 0.0
      %278 = vst [vmem:[#allocation2 + $0x168] sm:$0xff] 0.0
      %279 = vst [vmem:[#allocation2 + $0x170] sm:$0xff] 0.0
      %280 = vst [vmem:[#allocation2 + $0x178] sm:$0xff] 0.0
      %281 = vst [vmem:[#allocation2 + $0x180] sm:$0xff] 0.0
      %282 = vst [vmem:[#allocation2 + $0x188] sm:$0xff] 0.0
      %283 = vst [vmem:[#allocation2 + $0x190] sm:$0xff] 0.0
      %284 = vst [vmem:[#allocation2 + $0x198] sm:$0xff] 0.0
      %285 = vst [vmem:[#allocation2 + $0x1a0] sm:$0xff] 0.0
      %286 = vst [vmem:[#allocation2 + $0x1a8] sm:$0xff] 0.0
      %287 = vst [vmem:[#allocation2 + $0x1b0] sm:$0xff] 0.0
      %288 = vst [vmem:[#allocation2 + $0x1b8] sm:$0xff] 0.0
      %289 = vst [vmem:[#allocation2 + $0x1c0] sm:$0xff] 0.0
      %290 = vst [vmem:[#allocation2 + $0x1c8] sm:$0xff] 0.0
      %291 = vst [vmem:[#allocation2 + $0x1d0] sm:$0xff] 0.0
      %292 = vst [vmem:[#allocation2 + $0x1d8] sm:$0xff] 0.0
      %293 = vst [vmem:[#allocation2 + $0x1e0] sm:$0xff] 0.0
      %294 = vst [vmem:[#allocation2 + $0x1e8] sm:$0xff] 0.0
      %295 = vst [vmem:[#allocation2 + $0x1f0] sm:$0xff] 0.0
      %296 = vst [vmem:[#allocation2 + $0x1f8] sm:$0xff] 0.0
      %297 = vst [vmem:[#allocation2 + $0x200] sm:$0xff] 0.0
      %298 = vst [vmem:[#allocation2 + $0x208] sm:$0xff] 0.0
      %299 = vst [vmem:[#allocation2 + $0x210] sm:$0xff] 0.0
      %300 = vst [vmem:[#allocation2 + $0x218] sm:$0xff] 0.0
      %301 = vst [vmem:[#allocation2 + $0x220] sm:$0xff] 0.0
      %302 = vst [vmem:[#allocation2 + $0x228] sm:$0xff] 0.0
      %303 = vst [vmem:[#allocation2 + $0x230] sm:$0xff] 0.0
      %304 = vst [vmem:[#allocation2 + $0x238] sm:$0xff] 0.0
      %305 = vst [vmem:[#allocation2 + $0x240] sm:$0xff] 0.0
      %306 = vst [vmem:[#allocation2 + $0x248] sm:$0xff] 0.0
      %307 = vst [vmem:[#allocation2 + $0x250] sm:$0xff] 0.0
      %308 = vst [vmem:[#allocation2 + $0x258] sm:$0xff] 0.0
      %309 = vst [vmem:[#allocation2 + $0x260] sm:$0xff] 0.0
      %310 = vst [vmem:[#allocation2 + $0x268] sm:$0xff] 0.0
      %311 = vst [vmem:[#allocation2 + $0x270] sm:$0xff] 0.0
      %312 = vst [vmem:[#allocation2 + $0x278] sm:$0xff] 0.0
      %v313 = vld [vmem:[%s217] sm:$0xf]
      %v314 = vld [vmem:[%s217 + $0x4] sm:$0xf]
      %v315 = vld [vmem:[%s217 + $0x8] sm:$0xf]
      %v316 = vld [vmem:[%s217 + $0xc] sm:$0xf]
      %v317 = vld [vmem:[%s217 + $0x10] sm:$0xf]
      %v318 = vld [vmem:[%s217 + $0x14] sm:$0xf]
      %v319 = vld [vmem:[%s217 + $0x18] sm:$0xf]
      %v320 = vld [vmem:[%s217 + $0x1c] sm:$0xf]
      %v321 = vld [vmem:[%s217 + $0x20] sm:$0xf]
      %v322 = vld [vmem:[%s217 + $0x24] sm:$0xf]
      %v323 = vld [vmem:[%s217 + $0x28] sm:$0xf]
      %v324 = vld [vmem:[%s217 + $0x2c] sm:$0xf]
      %v325 = vld [vmem:[%s217 + $0x30] sm:$0xf]
      %v326 = vld [vmem:[%s217 + $0x34] sm:$0xf]
      %v327 = vld [vmem:[%s217 + $0x38] sm:$0xf]
      %v328 = vld [vmem:[%s217 + $0x3c] sm:$0xf]
      %v329 = vld [vmem:[%s217 + $0x40] sm:$0xf]
      %v330 = vld [vmem:[%s217 + $0x44] sm:$0xf]
      %v331 = vld [vmem:[%s217 + $0x48] sm:$0xf]
      %v332 = vld [vmem:[%s217 + $0x4c] sm:$0xf]
      %v333 = vld [vmem:[%s217 + $0x50] sm:$0xf]
      %v334 = vld [vmem:[%s217 + $0x54] sm:$0xf]
      %v335 = vld [vmem:[%s217 + $0x58] sm:$0xf]
      %v336 = vld [vmem:[%s217 + $0x5c] sm:$0xf]
      %v337 = vld [vmem:[%s217 + $0x60] sm:$0xf]
      %v338 = vld [vmem:[%s217 + $0x64] sm:$0xf]
      %v339 = vld [vmem:[%s217 + $0x68] sm:$0xf]
      %v340 = vld [vmem:[%s217 + $0x6c] sm:$0xf]
      %v341 = vld [vmem:[%s217 + $0x70] sm:$0xf]
      %v342 = vld [vmem:[%s217 + $0x74] sm:$0xf]
      %v343 = vld [vmem:[%s217 + $0x78] sm:$0xf]
      %v344 = vld [vmem:[%s217 + $0x7c] sm:$0xf]
      %v345 = vunpack.c.l.bf16 %v313
      %v346 = vunpack.c.l.bf16 %v314
      %v347 = vunpack.c.l.bf16 %v315
      %v348 = vunpack.c.l.bf16 %v316
      %v349 = vunpack.c.l.bf16 %v317
      %v350 = vunpack.c.l.bf16 %v318
      %v351 = vunpack.c.l.bf16 %v319
      %v352 = vunpack.c.l.bf16 %v320
      %v353 = vunpack.c.l.bf16 %v321
      %v354 = vunpack.c.l.bf16 %v322
      %v355 = vunpack.c.l.bf16 %v323
      %v356 = vunpack.c.l.bf16 %v324
      %v357 = vunpack.c.l.bf16 %v325
      %v358 = vunpack.c.l.bf16 %v326
      %v359 = vunpack.c.l.bf16 %v327
      %v360 = vunpack.c.l.bf16 %v328
      %v361 = vunpack.c.l.bf16 %v329
      %v362 = vunpack.c.l.bf16 %v330
      %v363 = vunpack.c.l.bf16 %v331
      %v364 = vunpack.c.l.bf16 %v332
      %v365 = vunpack.c.l.bf16 %v333
      %v366 = vunpack.c.l.bf16 %v334
      %v367 = vunpack.c.l.bf16 %v335
      %v368 = vunpack.c.l.bf16 %v336
      %v369 = vunpack.c.l.bf16 %v337
      %v370 = vunpack.c.l.bf16 %v338
      %v371 = vunpack.c.l.bf16 %v339
      %v372 = vunpack.c.l.bf16 %v340
      %v373 = vunpack.c.l.bf16 %v341
      %v374 = vunpack.c.l.bf16 %v342
      %v375 = vunpack.c.l.bf16 %v343
      %v376 = vunpack.c.l.bf16 %v344
      %s377 = scalar_lea.vmem [#allocation2], 64
      %378 = vst [vmem:[%s377 + $0x8] sm:$0xff] %v345
      %379 = vst [vmem:[%s377 + $0x10] sm:$0xff] %v346
      %380 = vst [vmem:[%s377 + $0x28] sm:$0xff] %v347
      %381 = vst [vmem:[%s377 + $0x30] sm:$0xff] %v348
      %382 = vst [vmem:[%s377 + $0x48] sm:$0xff] %v349
      %383 = vst [vmem:[%s377 + $0x50] sm:$0xff] %v350
      %384 = vst [vmem:[%s377 + $0x68] sm:$0xff] %v351
      %385 = vst [vmem:[%s377 + $0x70] sm:$0xff] %v352
      %386 = vst [vmem:[%s377 + $0x88] sm:$0xff] %v353
      %387 = vst [vmem:[%s377 + $0x90] sm:$0xff] %v354
      %388 = vst [vmem:[%s377 + $0xa8] sm:$0xff] %v355
      %389 = vst [vmem:[%s377 + $0xb0] sm:$0xff] %v356
      %390 = vst [vmem:[%s377 + $0xc8] sm:$0xff] %v357
      %391 = vst [vmem:[%s377 + $0xd0] sm:$0xff] %v358
      %392 = vst [vmem:[%s377 + $0xe8] sm:$0xff] %v359
      %393 = vst [vmem:[%s377 + $0xf0] sm:$0xff] %v360
      %394 = vst [vmem:[%s377 + $0x108] sm:$0xff] %v361
      %395 = vst [vmem:[%s377 + $0x110] sm:$0xff] %v362
      %396 = vst [vmem:[%s377 + $0x128] sm:$0xff] %v363
      %397 = vst [vmem:[%s377 + $0x130] sm:$0xff] %v364
      %398 = vst [vmem:[%s377 + $0x148] sm:$0xff] %v365
      %399 = vst [vmem:[%s377 + $0x150] sm:$0xff] %v366
      %400 = vst [vmem:[%s377 + $0x168] sm:$0xff] %v367
      %401 = vst [vmem:[%s377 + $0x170] sm:$0xff] %v368
      %402 = vst [vmem:[%s377 + $0x188] sm:$0xff] %v369
      %403 = vst [vmem:[%s377 + $0x190] sm:$0xff] %v370
      %404 = vst [vmem:[%s377 + $0x1a8] sm:$0xff] %v371
      %405 = vst [vmem:[%s377 + $0x1b0] sm:$0xff] %v372
      %406 = vst [vmem:[%s377 + $0x1c8] sm:$0xff] %v373
      %407 = vst [vmem:[%s377 + $0x1d0] sm:$0xff] %v374
      %408 = vst [vmem:[%s377 + $0x1e8] sm:$0xff] %v375
      %409 = vst [vmem:[%s377 + $0x1f0] sm:$0xff] %v376
      %v410 = vld [vmem:[%s221] sm:$0x1f]
      %v411 = vld [vmem:[%s221 + $0x8] sm:$0x1f]
      %v412 = vld [vmem:[%s221 + $0x10] sm:$0x1f]
      %v413 = vld [vmem:[%s221 + $0x18] sm:$0x1f]
      %v414 = vld [vmem:[%s221 + $0x20] sm:$0x1f]
      %v415 = vld [vmem:[%s224] sm:$0x1]
      %v416 = vld [vmem:[#allocation2 + $0x6] sm:$0xff]
      %v417 = vld [vmem:[#allocation2 + $0xe] sm:$0xff]
      %v418 = vld [vmem:[#allocation2 + $0x26] sm:$0xff]
      %v419 = vld [vmem:[#allocation2 + $0x2e] sm:$0xff]
      %v420 = vld [vmem:[#allocation2 + $0x46] sm:$0xff]
      %v421 = vld [vmem:[#allocation2 + $0x4e] sm:$0xff]
      %v422 = vld [vmem:[#allocation2 + $0x66] sm:$0xff]
      %v423 = vld [vmem:[#allocation2 + $0x6e] sm:$0xff]
      %v424 = vld [vmem:[#allocation2 + $0x86] sm:$0xff]
      %v425 = vld [vmem:[#allocation2 + $0x8e] sm:$0xff]
      %v426 = vld [vmem:[#allocation2 + $0xa6] sm:$0xff]
      %v427 = vld [vmem:[#allocation2 + $0xae] sm:$0xff]
      %v428 = vld [vmem:[#allocation2 + $0xc6] sm:$0xff]
      %v429 = vld [vmem:[#allocation2 + $0xce] sm:$0xff]
      %v430 = vld [vmem:[#allocation2 + $0xe6] sm:$0xff]
      %v431 = vld [vmem:[#allocation2 + $0xee] sm:$0xff]
      %v432 = vlaneseq
      %v433 = vshrl.u32 %v432, 7
      %v434 = vsub.s32 0, %v433
      %v435 = vrot.slane %v410, %v434
      %v436 = vmul.f32 %v435, %v416
      %v437 = vmul.f32 %v435, %v417
      %v438 = vmul.f32 %v435, %v418
      %v439 = vmul.f32 %v435, %v419
      %v440 = vmul.f32 %v435, %v420
      %v441 = vmul.f32 %v435, %v421
      %v442 = vmul.f32 %v435, %v422
      %v443 = vmul.f32 %v435, %v423
      %v444 = vmul.f32 %v435, %v424
      %v445 = vmul.f32 %v435, %v425
      %v446 = vmul.f32 %v435, %v426
      %v447 = vmul.f32 %v435, %v427
      %v448 = vmul.f32 %v435, %v428
      %v449 = vmul.f32 %v435, %v429
      %v450 = vmul.f32 %v435, %v430
      %v451 = vmul.f32 %v435, %v431
      %v452 = vld [vmem:[#allocation2 + $0x7] sm:$0xff]
      %v453 = vld [vmem:[#allocation2 + $0xf] sm:$0xff]
      %v454 = vld [vmem:[#allocation2 + $0x27] sm:$0xff]
      %v455 = vld [vmem:[#allocation2 + $0x2f] sm:$0xff]
      %v456 = vld [vmem:[#allocation2 + $0x47] sm:$0xff]
      %v457 = vld [vmem:[#allocation2 + $0x4f] sm:$0xff]
      %v458 = vld [vmem:[#allocation2 + $0x67] sm:$0xff]
      %v459 = vld [vmem:[#allocation2 + $0x6f] sm:$0xff]
      %v460 = vld [vmem:[#allocation2 + $0x87] sm:$0xff]
      %v461 = vld [vmem:[#allocation2 + $0x8f] sm:$0xff]
      %v462 = vld [vmem:[#allocation2 + $0xa7] sm:$0xff]
      %v463 = vld [vmem:[#allocation2 + $0xaf] sm:$0xff]
      %v464 = vld [vmem:[#allocation2 + $0xc7] sm:$0xff]
      %v465 = vld [vmem:[#allocation2 + $0xcf] sm:$0xff]
      %v466 = vld [vmem:[#allocation2 + $0xe7] sm:$0xff]
      %v467 = vld [vmem:[#allocation2 + $0xef] sm:$0xff]
      %v468 = vlaneseq
      %v469 = vshrl.u32 %v468, 7
      %v470 = vsub.s32 1, %v469
      %v471 = vrot.slane %v410, %v470
      %v472 = vmul.f32 %v471, %v452
      %v473 = vmul.f32 %v471, %v453
      %v474 = vmul.f32 %v471, %v454
      %v475 = vmul.f32 %v471, %v455
      %v476 = vmul.f32 %v471, %v456
      %v477 = vmul.f32 %v471, %v457
      %v478 = vmul.f32 %v471, %v458
      %v479 = vmul.f32 %v471, %v459
      %v480 = vmul.f32 %v471, %v460
      %v481 = vmul.f32 %v471, %v461
      %v482 = vmul.f32 %v471, %v462
      %v483 = vmul.f32 %v471, %v463
      %v484 = vmul.f32 %v471, %v464
      %v485 = vmul.f32 %v471, %v465
      %v486 = vmul.f32 %v471, %v466
      %v487 = vmul.f32 %v471, %v467
      %v488 = vadd.f32 %v436, %v472
      %v489 = vadd.f32 %v437, %v473
      %v490 = vadd.f32 %v438, %v474
      %v491 = vadd.f32 %v439, %v475
      %v492 = vadd.f32 %v440, %v476
      %v493 = vadd.f32 %v441, %v477
      %v494 = vadd.f32 %v442, %v478
      %v495 = vadd.f32 %v443, %v479
      %v496 = vadd.f32 %v444, %v480
      %v497 = vadd.f32 %v445, %v481
      %v498 = vadd.f32 %v446, %v482
      %v499 = vadd.f32 %v447, %v483
      %v500 = vadd.f32 %v448, %v484
      %v501 = vadd.f32 %v449, %v485
      %v502 = vadd.f32 %v450, %v486
      %v503 = vadd.f32 %v451, %v487
      %v504 = vld [vmem:[#allocation2 + $0x8] sm:$0xff]
      %v505 = vld [vmem:[#allocation2 + $0x10] sm:$0xff]
      %v506 = vld [vmem:[#allocation2 + $0x28] sm:$0xff]
      %v507 = vld [vmem:[#allocation2 + $0x30] sm:$0xff]
      %v508 = vld [vmem:[#allocation2 + $0x48] sm:$0xff]
      %v509 = vld [vmem:[#allocation2 + $0x50] sm:$0xff]
      %v510 = vld [vmem:[#allocation2 + $0x68] sm:$0xff]
      %v511 = vld [vmem:[#allocation2 + $0x70] sm:$0xff]
      %v512 = vld [vmem:[#allocation2 + $0x88] sm:$0xff]
      %v513 = vld [vmem:[#allocation2 + $0x90] sm:$0xff]
      %v514 = vld [vmem:[#allocation2 + $0xa8] sm:$0xff]
      %v515 = vld [vmem:[#allocation2 + $0xb0] sm:$0xff]
      %v516 = vld [vmem:[#allocation2 + $0xc8] sm:$0xff]
      %v517 = vld [vmem:[#allocation2 + $0xd0] sm:$0xff]
      %v518 = vld [vmem:[#allocation2 + $0xe8] sm:$0xff]
      %v519 = vld [vmem:[#allocation2 + $0xf0] sm:$0xff]
      %v520 = vlaneseq
      %v521 = vshrl.u32 %v520, 7
      %v522 = vsub.s32 2, %v521
      %v523 = vrot.slane %v410, %v522
      %v524 = vmul.f32 %v523, %v504
      %v525 = vmul.f32 %v523, %v505
      %v526 = vmul.f32 %v523, %v506
      %v527 = vmul.f32 %v523, %v507
      %v528 = vmul.f32 %v523, %v508
      %v529 = vmul.f32 %v523, %v509
      %v530 = vmul.f32 %v523, %v510
      %v531 = vmul.f32 %v523, %v511
      %v532 = vmul.f32 %v523, %v512
      %v533 = vmul.f32 %v523, %v513
      %v534 = vmul.f32 %v523, %v514
      %v535 = vmul.f32 %v523, %v515
      %v536 = vmul.f32 %v523, %v516
      %v537 = vmul.f32 %v523, %v517
      %v538 = vmul.f32 %v523, %v518
      %v539 = vmul.f32 %v523, %v519
      %v540 = vadd.f32 %v488, %v524
      %v541 = vadd.f32 %v489, %v525
      %v542 = vadd.f32 %v490, %v526
      %v543 = vadd.f32 %v491, %v527
      %v544 = vadd.f32 %v492, %v528
      %v545 = vadd.f32 %v493, %v529
      %v546 = vadd.f32 %v494, %v530
      %v547 = vadd.f32 %v495, %v531
      %v548 = vadd.f32 %v496, %v532
      %v549 = vadd.f32 %v497, %v533
      %v550 = vadd.f32 %v498, %v534
      %v551 = vadd.f32 %v499, %v535
      %v552 = vadd.f32 %v500, %v536
      %v553 = vadd.f32 %v501, %v537
      %v554 = vadd.f32 %v502, %v538
      %v555 = vadd.f32 %v503, %v539
      %v556 = vld [vmem:[#allocation2 + $0x9] sm:$0xff]
      %v557 = vld [vmem:[#allocation2 + $0x11] sm:$0xff]
      %v558 = vld [vmem:[#allocation2 + $0x29] sm:$0xff]
      %v559 = vld [vmem:[#allocation2 + $0x31] sm:$0xff]
      %v560 = vld [vmem:[#allocation2 + $0x49] sm:$0xff]
      %v561 = vld [vmem:[#allocation2 + $0x51] sm:$0xff]
      %v562 = vld [vmem:[#allocation2 + $0x69] sm:$0xff]
      %v563 = vld [vmem:[#allocation2 + $0x71] sm:$0xff]
      %v564 = vld [vmem:[#allocation2 + $0x89] sm:$0xff]
      %v565 = vld [vmem:[#allocation2 + $0x91] sm:$0xff]
      %v566 = vld [vmem:[#allocation2 + $0xa9] sm:$0xff]
      %v567 = vld [vmem:[#allocation2 + $0xb1] sm:$0xff]
      %v568 = vld [vmem:[#allocation2 + $0xc9] sm:$0xff]
      %v569 = vld [vmem:[#allocation2 + $0xd1] sm:$0xff]
      %v570 = vld [vmem:[#allocation2 + $0xe9] sm:$0xff]
      %v571 = vld [vmem:[#allocation2 + $0xf1] sm:$0xff]
      %v572 = vlaneseq
      %v573 = vshrl.u32 %v572, 7
      %v574 = vsub.s32 3, %v573
      %v575 = vrot.slane %v410, %v574
      %v576 = vmul.f32 %v575, %v556
      %v577 = vmul.f32 %v575, %v557
      %v578 = vmul.f32 %v575, %v558
      %v579 = vmul.f32 %v575, %v559
      %v580 = vmul.f32 %v575, %v560
      %v581 = vmul.f32 %v575, %v561
      %v582 = vmul.f32 %v575, %v562
      %v583 = vmul.f32 %v575, %v563
      %v584 = vmul.f32 %v575, %v564
      %v585 = vmul.f32 %v575, %v565
      %v586 = vmul.f32 %v575, %v566
      %v587 = vmul.f32 %v575, %v567
      %v588 = vmul.f32 %v575, %v568
      %v589 = vmul.f32 %v575, %v569
      %v590 = vmul.f32 %v575, %v570
      %v591 = vmul.f32 %v575, %v571
      %v592 = vadd.f32 %v540, %v576
      %v593 = vadd.f32 %v541, %v577
      %v594 = vadd.f32 %v542, %v578
      %v595 = vadd.f32 %v543, %v579
      %v596 = vadd.f32 %v544, %v580
      %v597 = vadd.f32 %v545, %v581
      %v598 = vadd.f32 %v546, %v582
      %v599 = vadd.f32 %v547, %v583
      %v600 = vadd.f32 %v548, %v584
      %v601 = vadd.f32 %v549, %v585
      %v602 = vadd.f32 %v550, %v586
      %v603 = vadd.f32 %v551, %v587
      %v604 = vadd.f32 %v552, %v588
      %v605 = vadd.f32 %v553, %v589
      %v606 = vadd.f32 %v554, %v590
      %v607 = vadd.f32 %v555, %v591
      %v608 = vld [vmem:[#allocation2 + $0xa] sm:$0xff]
      %v609 = vld [vmem:[#allocation2 + $0x12] sm:$0xff]
      %v610 = vld [vmem:[#allocation2 + $0x2a] sm:$0xff]
      %v611 = vld [vmem:[#allocation2 + $0x32] sm:$0xff]
      %v612 = vld [vmem:[#allocation2 + $0x4a] sm:$0xff]
      %v613 = vld [vmem:[#allocation2 + $0x52] sm:$0xff]
      %v614 = vld [vmem:[#allocation2 + $0x6a] sm:$0xff]
      %v615 = vld [vmem:[#allocation2 + $0x72] sm:$0xff]
      %v616 = vld [vmem:[#allocation2 + $0x8a] sm:$0xff]
      %v617 = vld [vmem:[#allocation2 + $0x92] sm:$0xff]
      %v618 = vld [vmem:[#allocation2 + $0xaa] sm:$0xff]
      %v619 = vld [vmem:[#allocation2 + $0xb2] sm:$0xff]
      %v620 = vld [vmem:[#allocation2 + $0xca] sm:$0xff]
      %v621 = vld [vmem:[#allocation2 + $0xd2] sm:$0xff]
      %v622 = vld [vmem:[#allocation2 + $0xea] sm:$0xff]
      %v623 = vld [vmem:[#allocation2 + $0xf2] sm:$0xff]
      %v624 = vlaneseq
      %v625 = vshrl.u32 %v624, 7
      %v626 = vsub.s32 4, %v625
      %v627 = vrot.slane %v410, %v626
      %v628 = vmul.f32 %v627, %v608
      %v629 = vmul.f32 %v627, %v609
      %v630 = vmul.f32 %v627, %v610
      %v631 = vmul.f32 %v627, %v611
      %v632 = vmul.f32 %v627, %v612
      %v633 = vmul.f32 %v627, %v613
      %v634 = vmul.f32 %v627, %v614
      %v635 = vmul.f32 %v627, %v615
      %v636 = vmul.f32 %v627, %v616
      %v637 = vmul.f32 %v627, %v617
      %v638 = vmul.f32 %v627, %v618
      %v639 = vmul.f32 %v627, %v619
      %v640 = vmul.f32 %v627, %v620
      %v641 = vmul.f32 %v627, %v621
      %v642 = vmul.f32 %v627, %v622
      %v643 = vmul.f32 %v627, %v623
      %v644 = vadd.f32 %v592, %v628
      %v645 = vadd.f32 %v593, %v629
      %v646 = vadd.f32 %v594, %v630
      %v647 = vadd.f32 %v595, %v631
      %v648 = vadd.f32 %v596, %v632
      %v649 = vadd.f32 %v597, %v633
      %v650 = vadd.f32 %v598, %v634
      %v651 = vadd.f32 %v599, %v635
      %v652 = vadd.f32 %v600, %v636
      %v653 = vadd.f32 %v601, %v637
      %v654 = vadd.f32 %v602, %v638
      %v655 = vadd.f32 %v603, %v639
      %v656 = vadd.f32 %v604, %v640
      %v657 = vadd.f32 %v605, %v641
      %v658 = vadd.f32 %v606, %v642
      %v659 = vadd.f32 %v607, %v643
      %s660 = scalar_lea.vmem [#allocation2], 32
      %v661 = vld [vmem:[%s660 + $0x6] sm:$0xff]
      %v662 = vld [vmem:[%s660 + $0xe] sm:$0xff]
      %v663 = vld [vmem:[%s660 + $0x26] sm:$0xff]
      %v664 = vld [vmem:[%s660 + $0x2e] sm:$0xff]
      %v665 = vld [vmem:[%s660 + $0x46] sm:$0xff]
      %v666 = vld [vmem:[%s660 + $0x4e] sm:$0xff]
      %v667 = vld [vmem:[%s660 + $0x66] sm:$0xff]
      %v668 = vld [vmem:[%s660 + $0x6e] sm:$0xff]
      %v669 = vld [vmem:[%s660 + $0x86] sm:$0xff]
      %v670 = vld [vmem:[%s660 + $0x8e] sm:$0xff]
      %v671 = vld [vmem:[%s660 + $0xa6] sm:$0xff]
      %v672 = vld [vmem:[%s660 + $0xae] sm:$0xff]
      %v673 = vld [vmem:[%s660 + $0xc6] sm:$0xff]
      %v674 = vld [vmem:[%s660 + $0xce] sm:$0xff]
      %v675 = vld [vmem:[%s660 + $0xe6] sm:$0xff]
      %v676 = vld [vmem:[%s660 + $0xee] sm:$0xff]
      %v677 = vlaneseq
      %v678 = vshrl.u32 %v677, 7
      %v679 = vsub.s32 0, %v678
      %v680 = vrot.slane %v411, %v679
      %v681 = vmul.f32 %v680, %v661
      %v682 = vmul.f32 %v680, %v662
      %v683 = vmul.f32 %v680, %v663
      %v684 = vmul.f32 %v680, %v664
      %v685 = vmul.f32 %v680, %v665
      %v686 = vmul.f32 %v680, %v666
      %v687 = vmul.f32 %v680, %v667
      %v688 = vmul.f32 %v680, %v668
      %v689 = vmul.f32 %v680, %v669
      %v690 = vmul.f32 %v680, %v670
      %v691 = vmul.f32 %v680, %v671
      %v692 = vmul.f32 %v680, %v672
      %v693 = vmul.f32 %v680, %v673
      %v694 = vmul.f32 %v680, %v674
      %v695 = vmul.f32 %v680, %v675
      %v696 = vmul.f32 %v680, %v676
      %v697 = vadd.f32 %v644, %v681
      %v698 = vadd.f32 %v645, %v682
      %v699 = vadd.f32 %v646, %v683
      %v700 = vadd.f32 %v647, %v684
      %v701 = vadd.f32 %v648, %v685
      %v702 = vadd.f32 %v649, %v686
      %v703 = vadd.f32 %v650, %v687
      %v704 = vadd.f32 %v651, %v688
      %v705 = vadd.f32 %v652, %v689
      %v706 = vadd.f32 %v653, %v690
      %v707 = vadd.f32 %v654, %v691
      %v708 = vadd.f32 %v655, %v692
      %v709 = vadd.f32 %v656, %v693
      %v710 = vadd.f32 %v657, %v694
      %v711 = vadd.f32 %v658, %v695
      %v712 = vadd.f32 %v659, %v696
      %v713 = vld [vmem:[%s660 + $0x7] sm:$0xff]
      %v714 = vld [vmem:[%s660 + $0xf] sm:$0xff]
      %v715 = vld [vmem:[%s660 + $0x27] sm:$0xff]
      %v716 = vld [vmem:[%s660 + $0x2f] sm:$0xff]
      %v717 = vld [vmem:[%s660 + $0x47] sm:$0xff]
      %v718 = vld [vmem:[%s660 + $0x4f] sm:$0xff]
      %v719 = vld [vmem:[%s660 + $0x67] sm:$0xff]
      %v720 = vld [vmem:[%s660 + $0x6f] sm:$0xff]
      %v721 = vld [vmem:[%s660 + $0x87] sm:$0xff]
      %v722 = vld [vmem:[%s660 + $0x8f] sm:$0xff]
      %v723 = vld [vmem:[%s660 + $0xa7] sm:$0xff]
      %v724 = vld [vmem:[%s660 + $0xaf] sm:$0xff]
      %v725 = vld [vmem:[%s660 + $0xc7] sm:$0xff]
      %v726 = vld [vmem:[%s660 + $0xcf] sm:$0xff]
      %v727 = vld [vmem:[%s660 + $0xe7] sm:$0xff]
      %v728 = vld [vmem:[%s660 + $0xef] sm:$0xff]
      %v729 = vlaneseq
      %v730 = vshrl.u32 %v729, 7
      %v731 = vsub.s32 1, %v730
      %v732 = vrot.slane %v411, %v731
      %v733 = vmul.f32 %v732, %v713
      %v734 = vmul.f32 %v732, %v714
      %v735 = vmul.f32 %v732, %v715
      %v736 = vmul.f32 %v732, %v716
      %v737 = vmul.f32 %v732, %v717
      %v738 = vmul.f32 %v732, %v718
      %v739 = vmul.f32 %v732, %v719
      %v740 = vmul.f32 %v732, %v720
      %v741 = vmul.f32 %v732, %v721
      %v742 = vmul.f32 %v732, %v722
      %v743 = vmul.f32 %v732, %v723
      %v744 = vmul.f32 %v732, %v724
      %v745 = vmul.f32 %v732, %v725
      %v746 = vmul.f32 %v732, %v726
      %v747 = vmul.f32 %v732, %v727
      %v748 = vmul.f32 %v732, %v728
      %v749 = vadd.f32 %v697, %v733
      %v750 = vadd.f32 %v698, %v734
      %v751 = vadd.f32 %v699, %v735
      %v752 = vadd.f32 %v700, %v736
      %v753 = vadd.f32 %v701, %v737
      %v754 = vadd.f32 %v702, %v738
      %v755 = vadd.f32 %v703, %v739
      %v756 = vadd.f32 %v704, %v740
      %v757 = vadd.f32 %v705, %v741
      %v758 = vadd.f32 %v706, %v742
      %v759 = vadd.f32 %v707, %v743
      %v760 = vadd.f32 %v708, %v744
      %v761 = vadd.f32 %v709, %v745
      %v762 = vadd.f32 %v710, %v746
      %v763 = vadd.f32 %v711, %v747
      %v764 = vadd.f32 %v712, %v748
      %v765 = vld [vmem:[%s660 + $0x8] sm:$0xff]
      %v766 = vld [vmem:[%s660 + $0x10] sm:$0xff]
      %v767 = vld [vmem:[%s660 + $0x28] sm:$0xff]
      %v768 = vld [vmem:[%s660 + $0x30] sm:$0xff]
      %v769 = vld [vmem:[%s660 + $0x48] sm:$0xff]
      %v770 = vld [vmem:[%s660 + $0x50] sm:$0xff]
      %v771 = vld [vmem:[%s660 + $0x68] sm:$0xff]
      %v772 = vld [vmem:[%s660 + $0x70] sm:$0xff]
      %v773 = vld [vmem:[%s660 + $0x88] sm:$0xff]
      %v774 = vld [vmem:[%s660 + $0x90] sm:$0xff]
      %v775 = vld [vmem:[%s660 + $0xa8] sm:$0xff]
      %v776 = vld [vmem:[%s660 + $0xb0] sm:$0xff]
      %v777 = vld [vmem:[%s660 + $0xc8] sm:$0xff]
      %v778 = vld [vmem:[%s660 + $0xd0] sm:$0xff]
      %v779 = vld [vmem:[%s660 + $0xe8] sm:$0xff]
      %v780 = vld [vmem:[%s660 + $0xf0] sm:$0xff]
      %v781 = vlaneseq
      %v782 = vshrl.u32 %v781, 7
      %v783 = vsub.s32 2, %v782
      %v784 = vrot.slane %v411, %v783
      %v785 = vmul.f32 %v784, %v765
      %v786 = vmul.f32 %v784, %v766
      %v787 = vmul.f32 %v784, %v767
      %v788 = vmul.f32 %v784, %v768
      %v789 = vmul.f32 %v784, %v769
      %v790 = vmul.f32 %v784, %v770
      %v791 = vmul.f32 %v784, %v771
      %v792 = vmul.f32 %v784, %v772
      %v793 = vmul.f32 %v784, %v773
      %v794 = vmul.f32 %v784, %v774
      %v795 = vmul.f32 %v784, %v775
      %v796 = vmul.f32 %v784, %v776
      %v797 = vmul.f32 %v784, %v777
      %v798 = vmul.f32 %v784, %v778
      %v799 = vmul.f32 %v784, %v779
      %v800 = vmul.f32 %v784, %v780
      %v801 = vadd.f32 %v749, %v785
      %v802 = vadd.f32 %v750, %v786
      %v803 = vadd.f32 %v751, %v787
      %v804 = vadd.f32 %v752, %v788
      %v805 = vadd.f32 %v753, %v789
      %v806 = vadd.f32 %v754, %v790
      %v807 = vadd.f32 %v755, %v791
      %v808 = vadd.f32 %v756, %v792
      %v809 = vadd.f32 %v757, %v793
      %v810 = vadd.f32 %v758, %v794
      %v811 = vadd.f32 %v759, %v795
      %v812 = vadd.f32 %v760, %v796
      %v813 = vadd.f32 %v761, %v797
      %v814 = vadd.f32 %v762, %v798
      %v815 = vadd.f32 %v763, %v799
      %v816 = vadd.f32 %v764, %v800
      %v817 = vld [vmem:[%s660 + $0x9] sm:$0xff]
      %v818 = vld [vmem:[%s660 + $0x11] sm:$0xff]
      %v819 = vld [vmem:[%s660 + $0x29] sm:$0xff]
      %v820 = vld [vmem:[%s660 + $0x31] sm:$0xff]
      %v821 = vld [vmem:[%s660 + $0x49] sm:$0xff]
      %v822 = vld [vmem:[%s660 + $0x51] sm:$0xff]
      %v823 = vld [vmem:[%s660 + $0x69] sm:$0xff]
      %v824 = vld [vmem:[%s660 + $0x71] sm:$0xff]
      %v825 = vld [vmem:[%s660 + $0x89] sm:$0xff]
      %v826 = vld [vmem:[%s660 + $0x91] sm:$0xff]
      %v827 = vld [vmem:[%s660 + $0xa9] sm:$0xff]
      %v828 = vld [vmem:[%s660 + $0xb1] sm:$0xff]
      %v829 = vld [vmem:[%s660 + $0xc9] sm:$0xff]
      %v830 = vld [vmem:[%s660 + $0xd1] sm:$0xff]
      %v831 = vld [vmem:[%s660 + $0xe9] sm:$0xff]
      %v832 = vld [vmem:[%s660 + $0xf1] sm:$0xff]
      %v833 = vlaneseq
      %v834 = vshrl.u32 %v833, 7
      %v835 = vsub.s32 3, %v834
      %v836 = vrot.slane %v411, %v835
      %v837 = vmul.f32 %v836, %v817
      %v838 = vmul.f32 %v836, %v818
      %v839 = vmul.f32 %v836, %v819
      %v840 = vmul.f32 %v836, %v820
      %v841 = vmul.f32 %v836, %v821
      %v842 = vmul.f32 %v836, %v822
      %v843 = vmul.f32 %v836, %v823
      %v844 = vmul.f32 %v836, %v824
      %v845 = vmul.f32 %v836, %v825
      %v846 = vmul.f32 %v836, %v826
      %v847 = vmul.f32 %v836, %v827
      %v848 = vmul.f32 %v836, %v828
      %v849 = vmul.f32 %v836, %v829
      %v850 = vmul.f32 %v836, %v830
      %v851 = vmul.f32 %v836, %v831
      %v852 = vmul.f32 %v836, %v832
      %v853 = vadd.f32 %v801, %v837
      %v854 = vadd.f32 %v802, %v838
      %v855 = vadd.f32 %v803, %v839
      %v856 = vadd.f32 %v804, %v840
      %v857 = vadd.f32 %v805, %v841
      %v858 = vadd.f32 %v806, %v842
      %v859 = vadd.f32 %v807, %v843
      %v860 = vadd.f32 %v808, %v844
      %v861 = vadd.f32 %v809, %v845
      %v862 = vadd.f32 %v810, %v846
      %v863 = vadd.f32 %v811, %v847
      %v864 = vadd.f32 %v812, %v848
      %v865 = vadd.f32 %v813, %v849
      %v866 = vadd.f32 %v814, %v850
      %v867 = vadd.f32 %v815, %v851
      %v868 = vadd.f32 %v816, %v852
      %v869 = vld [vmem:[%s660 + $0xa] sm:$0xff]
      %v870 = vld [vmem:[%s660 + $0x12] sm:$0xff]
      %v871 = vld [vmem:[%s660 + $0x2a] sm:$0xff]
      %v872 = vld [vmem:[%s660 + $0x32] sm:$0xff]
      %v873 = vld [vmem:[%s660 + $0x4a] sm:$0xff]
      %v874 = vld [vmem:[%s660 + $0x52] sm:$0xff]
      %v875 = vld [vmem:[%s660 + $0x6a] sm:$0xff]
      %v876 = vld [vmem:[%s660 + $0x72] sm:$0xff]
      %v877 = vld [vmem:[%s660 + $0x8a] sm:$0xff]
      %v878 = vld [vmem:[%s660 + $0x92] sm:$0xff]
      %v879 = vld [vmem:[%s660 + $0xaa] sm:$0xff]
      %v880 = vld [vmem:[%s660 + $0xb2] sm:$0xff]
      %v881 = vld [vmem:[%s660 + $0xca] sm:$0xff]
      %v882 = vld [vmem:[%s660 + $0xd2] sm:$0xff]
      %v883 = vld [vmem:[%s660 + $0xea] sm:$0xff]
      %v884 = vld [vmem:[%s660 + $0xf2] sm:$0xff]
      %v885 = vlaneseq
      %v886 = vshrl.u32 %v885, 7
      %v887 = vsub.s32 4, %v886
      %v888 = vrot.slane %v411, %v887
      %v889 = vmul.f32 %v888, %v869
      %v890 = vmul.f32 %v888, %v870
      %v891 = vmul.f32 %v888, %v871
      %v892 = vmul.f32 %v888, %v872
      %v893 = vmul.f32 %v888, %v873
      %v894 = vmul.f32 %v888, %v874
      %v895 = vmul.f32 %v888, %v875
      %v896 = vmul.f32 %v888, %v876
      %v897 = vmul.f32 %v888, %v877
      %v898 = vmul.f32 %v888, %v878
      %v899 = vmul.f32 %v888, %v879
      %v900 = vmul.f32 %v888, %v880
      %v901 = vmul.f32 %v888, %v881
      %v902 = vmul.f32 %v888, %v882
      %v903 = vmul.f32 %v888, %v883
      %v904 = vmul.f32 %v888, %v884
      %v905 = vadd.f32 %v853, %v889
      %v906 = vadd.f32 %v854, %v890
      %v907 = vadd.f32 %v855, %v891
      %v908 = vadd.f32 %v856, %v892
      %v909 = vadd.f32 %v857, %v893
      %v910 = vadd.f32 %v858, %v894
      %v911 = vadd.f32 %v859, %v895
      %v912 = vadd.f32 %v860, %v896
      %v913 = vadd.f32 %v861, %v897
      %v914 = vadd.f32 %v862, %v898
      %v915 = vadd.f32 %v863, %v899
      %v916 = vadd.f32 %v864, %v900
      %v917 = vadd.f32 %v865, %v901
      %v918 = vadd.f32 %v866, %v902
      %v919 = vadd.f32 %v867, %v903
      %v920 = vadd.f32 %v868, %v904
      %v921 = vld [vmem:[%s377 + $0x6] sm:$0xff]
      %v922 = vld [vmem:[%s377 + $0xe] sm:$0xff]
      %v923 = vld [vmem:[%s377 + $0x26] sm:$0xff]
      %v924 = vld [vmem:[%s377 + $0x2e] sm:$0xff]
      %v925 = vld [vmem:[%s377 + $0x46] sm:$0xff]
      %v926 = vld [vmem:[%s377 + $0x4e] sm:$0xff]
      %v927 = vld [vmem:[%s377 + $0x66] sm:$0xff]
      %v928 = vld [vmem:[%s377 + $0x6e] sm:$0xff]
      %v929 = vld [vmem:[%s377 + $0x86] sm:$0xff]
      %v930 = vld [vmem:[%s377 + $0x8e] sm:$0xff]
      %v931 = vld [vmem:[%s377 + $0xa6] sm:$0xff]
      %v932 = vld [vmem:[%s377 + $0xae] sm:$0xff]
      %v933 = vld [vmem:[%s377 + $0xc6] sm:$0xff]
      %v934 = vld [vmem:[%s377 + $0xce] sm:$0xff]
      %v935 = vld [vmem:[%s377 + $0xe6] sm:$0xff]
      %v936 = vld [vmem:[%s377 + $0xee] sm:$0xff]
      %v937 = vlaneseq
      %v938 = vshrl.u32 %v937, 7
      %v939 = vsub.s32 0, %v938
      %v940 = vrot.slane %v412, %v939
      %v941 = vmul.f32 %v940, %v921
      %v942 = vmul.f32 %v940, %v922
      %v943 = vmul.f32 %v940, %v923
      %v944 = vmul.f32 %v940, %v924
      %v945 = vmul.f32 %v940, %v925
      %v946 = vmul.f32 %v940, %v926
      %v947 = vmul.f32 %v940, %v927
      %v948 = vmul.f32 %v940, %v928
      %v949 = vmul.f32 %v940, %v929
      %v950 = vmul.f32 %v940, %v930
      %v951 = vmul.f32 %v940, %v931
      %v952 = vmul.f32 %v940, %v932
      %v953 = vmul.f32 %v940, %v933
      %v954 = vmul.f32 %v940, %v934
      %v955 = vmul.f32 %v940, %v935
      %v956 = vmul.f32 %v940, %v936
      %v957 = vadd.f32 %v905, %v941
      %v958 = vadd.f32 %v906, %v942
      %v959 = vadd.f32 %v907, %v943
      %v960 = vadd.f32 %v908, %v944
      %v961 = vadd.f32 %v909, %v945
      %v962 = vadd.f32 %v910, %v946
      %v963 = vadd.f32 %v911, %v947
      %v964 = vadd.f32 %v912, %v948
      %v965 = vadd.f32 %v913, %v949
      %v966 = vadd.f32 %v914, %v950
      %v967 = vadd.f32 %v915, %v951
      %v968 = vadd.f32 %v916, %v952
      %v969 = vadd.f32 %v917, %v953
      %v970 = vadd.f32 %v918, %v954
      %v971 = vadd.f32 %v919, %v955
      %v972 = vadd.f32 %v920, %v956
      %v973 = vld [vmem:[%s377 + $0x7] sm:$0xff]
      %v974 = vld [vmem:[%s377 + $0xf] sm:$0xff]
      %v975 = vld [vmem:[%s377 + $0x27] sm:$0xff]
      %v976 = vld [vmem:[%s377 + $0x2f] sm:$0xff]
      %v977 = vld [vmem:[%s377 + $0x47] sm:$0xff]
      %v978 = vld [vmem:[%s377 + $0x4f] sm:$0xff]
      %v979 = vld [vmem:[%s377 + $0x67] sm:$0xff]
      %v980 = vld [vmem:[%s377 + $0x6f] sm:$0xff]
      %v981 = vld [vmem:[%s377 + $0x87] sm:$0xff]
      %v982 = vld [vmem:[%s377 + $0x8f] sm:$0xff]
      %v983 = vld [vmem:[%s377 + $0xa7] sm:$0xff]
      %v984 = vld [vmem:[%s377 + $0xaf] sm:$0xff]
      %v985 = vld [vmem:[%s377 + $0xc7] sm:$0xff]
      %v986 = vld [vmem:[%s377 + $0xcf] sm:$0xff]
      %v987 = vld [vmem:[%s377 + $0xe7] sm:$0xff]
      %v988 = vld [vmem:[%s377 + $0xef] sm:$0xff]
      %v989 = vlaneseq
      %v990 = vshrl.u32 %v989, 7
      %v991 = vsub.s32 1, %v990
      %v992 = vrot.slane %v412, %v991
      %v993 = vmul.f32 %v992, %v973
      %v994 = vmul.f32 %v992, %v974
      %v995 = vmul.f32 %v992, %v975
      %v996 = vmul.f32 %v992, %v976
      %v997 = vmul.f32 %v992, %v977
      %v998 = vmul.f32 %v992, %v978
      %v999 = vmul.f32 %v992, %v979
      %v1000 = vmul.f32 %v992, %v980
      %v1001 = vmul.f32 %v992, %v981
      %v1002 = vmul.f32 %v992, %v982
      %v1003 = vmul.f32 %v992, %v983
      %v1004 = vmul.f32 %v992, %v984
      %v1005 = vmul.f32 %v992, %v985
      %v1006 = vmul.f32 %v992, %v986
      %v1007 = vmul.f32 %v992, %v987
      %v1008 = vmul.f32 %v992, %v988
      %v1009 = vadd.f32 %v957, %v993
      %v1010 = vadd.f32 %v958, %v994
      %v1011 = vadd.f32 %v959, %v995
      %v1012 = vadd.f32 %v960, %v996
      %v1013 = vadd.f32 %v961, %v997
      %v1014 = vadd.f32 %v962, %v998
      %v1015 = vadd.f32 %v963, %v999
      %v1016 = vadd.f32 %v964, %v1000
      %v1017 = vadd.f32 %v965, %v1001
      %v1018 = vadd.f32 %v966, %v1002
      %v1019 = vadd.f32 %v967, %v1003
      %v1020 = vadd.f32 %v968, %v1004
      %v1021 = vadd.f32 %v969, %v1005
      %v1022 = vadd.f32 %v970, %v1006
      %v1023 = vadd.f32 %v971, %v1007
      %v1024 = vadd.f32 %v972, %v1008
      %v1025 = vld [vmem:[%s377 + $0x8] sm:$0xff]
      %v1026 = vld [vmem:[%s377 + $0x10] sm:$0xff]
      %v1027 = vld [vmem:[%s377 + $0x28] sm:$0xff]
      %v1028 = vld [vmem:[%s377 + $0x30] sm:$0xff]
      %v1029 = vld [vmem:[%s377 + $0x48] sm:$0xff]
      %v1030 = vld [vmem:[%s377 + $0x50] sm:$0xff]
      %v1031 = vld [vmem:[%s377 + $0x68] sm:$0xff]
      %v1032 = vld [vmem:[%s377 + $0x70] sm:$0xff]
      %v1033 = vld [vmem:[%s377 + $0x88] sm:$0xff]
      %v1034 = vld [vmem:[%s377 + $0x90] sm:$0xff]
      %v1035 = vld [vmem:[%s377 + $0xa8] sm:$0xff]
      %v1036 = vld [vmem:[%s377 + $0xb0] sm:$0xff]
      %v1037 = vld [vmem:[%s377 + $0xc8] sm:$0xff]
      %v1038 = vld [vmem:[%s377 + $0xd0] sm:$0xff]
      %v1039 = vld [vmem:[%s377 + $0xe8] sm:$0xff]
      %v1040 = vld [vmem:[%s377 + $0xf0] sm:$0xff]
      %v1041 = vlaneseq
      %v1042 = vshrl.u32 %v1041, 7
      %v1043 = vsub.s32 2, %v1042
      %v1044 = vrot.slane %v412, %v1043
      %v1045 = vmul.f32 %v1044, %v1025
      %v1046 = vmul.f32 %v1044, %v1026
      %v1047 = vmul.f32 %v1044, %v1027
      %v1048 = vmul.f32 %v1044, %v1028
      %v1049 = vmul.f32 %v1044, %v1029
      %v1050 = vmul.f32 %v1044, %v1030
      %v1051 = vmul.f32 %v1044, %v1031
      %v1052 = vmul.f32 %v1044, %v1032
      %v1053 = vmul.f32 %v1044, %v1033
      %v1054 = vmul.f32 %v1044, %v1034
      %v1055 = vmul.f32 %v1044, %v1035
      %v1056 = vmul.f32 %v1044, %v1036
      %v1057 = vmul.f32 %v1044, %v1037
      %v1058 = vmul.f32 %v1044, %v1038
      %v1059 = vmul.f32 %v1044, %v1039
      %v1060 = vmul.f32 %v1044, %v1040
      %v1061 = vadd.f32 %v1009, %v1045
      %v1062 = vadd.f32 %v1010, %v1046
      %v1063 = vadd.f32 %v1011, %v1047
      %v1064 = vadd.f32 %v1012, %v1048
      %v1065 = vadd.f32 %v1013, %v1049
      %v1066 = vadd.f32 %v1014, %v1050
      %v1067 = vadd.f32 %v1015, %v1051
      %v1068 = vadd.f32 %v1016, %v1052
      %v1069 = vadd.f32 %v1017, %v1053
      %v1070 = vadd.f32 %v1018, %v1054
      %v1071 = vadd.f32 %v1019, %v1055
      %v1072 = vadd.f32 %v1020, %v1056
      %v1073 = vadd.f32 %v1021, %v1057
      %v1074 = vadd.f32 %v1022, %v1058
      %v1075 = vadd.f32 %v1023, %v1059
      %v1076 = vadd.f32 %v1024, %v1060
      %v1077 = vld [vmem:[%s377 + $0x9] sm:$0xff]
      %v1078 = vld [vmem:[%s377 + $0x11] sm:$0xff]
      %v1079 = vld [vmem:[%s377 + $0x29] sm:$0xff]
      %v1080 = vld [vmem:[%s377 + $0x31] sm:$0xff]
      %v1081 = vld [vmem:[%s377 + $0x49] sm:$0xff]
      %v1082 = vld [vmem:[%s377 + $0x51] sm:$0xff]
      %v1083 = vld [vmem:[%s377 + $0x69] sm:$0xff]
      %v1084 = vld [vmem:[%s377 + $0x71] sm:$0xff]
      %v1085 = vld [vmem:[%s377 + $0x89] sm:$0xff]
      %v1086 = vld [vmem:[%s377 + $0x91] sm:$0xff]
      %v1087 = vld [vmem:[%s377 + $0xa9] sm:$0xff]
      %v1088 = vld [vmem:[%s377 + $0xb1] sm:$0xff]
      %v1089 = vld [vmem:[%s377 + $0xc9] sm:$0xff]
      %v1090 = vld [vmem:[%s377 + $0xd1] sm:$0xff]
      %v1091 = vld [vmem:[%s377 + $0xe9] sm:$0xff]
      %v1092 = vld [vmem:[%s377 + $0xf1] sm:$0xff]
      %v1093 = vlaneseq
      %v1094 = vshrl.u32 %v1093, 7
      %v1095 = vsub.s32 3, %v1094
      %v1096 = vrot.slane %v412, %v1095
      %v1097 = vmul.f32 %v1096, %v1077
      %v1098 = vmul.f32 %v1096, %v1078
      %v1099 = vmul.f32 %v1096, %v1079
      %v1100 = vmul.f32 %v1096, %v1080
      %v1101 = vmul.f32 %v1096, %v1081
      %v1102 = vmul.f32 %v1096, %v1082
      %v1103 = vmul.f32 %v1096, %v1083
      %v1104 = vmul.f32 %v1096, %v1084
      %v1105 = vmul.f32 %v1096, %v1085
      %v1106 = vmul.f32 %v1096, %v1086
      %v1107 = vmul.f32 %v1096, %v1087
      %v1108 = vmul.f32 %v1096, %v1088
      %v1109 = vmul.f32 %v1096, %v1089
      %v1110 = vmul.f32 %v1096, %v1090
      %v1111 = vmul.f32 %v1096, %v1091
      %v1112 = vmul.f32 %v1096, %v1092
      %v1113 = vadd.f32 %v1061, %v1097
      %v1114 = vadd.f32 %v1062, %v1098
      %v1115 = vadd.f32 %v1063, %v1099
      %v1116 = vadd.f32 %v1064, %v1100
      %v1117 = vadd.f32 %v1065, %v1101
      %v1118 = vadd.f32 %v1066, %v1102
      %v1119 = vadd.f32 %v1067, %v1103
      %v1120 = vadd.f32 %v1068, %v1104
      %v1121 = vadd.f32 %v1069, %v1105
      %v1122 = vadd.f32 %v1070, %v1106
      %v1123 = vadd.f32 %v1071, %v1107
      %v1124 = vadd.f32 %v1072, %v1108
      %v1125 = vadd.f32 %v1073, %v1109
      %v1126 = vadd.f32 %v1074, %v1110
      %v1127 = vadd.f32 %v1075, %v1111
      %v1128 = vadd.f32 %v1076, %v1112
      %v1129 = vld [vmem:[%s377 + $0xa] sm:$0xff]
      %v1130 = vld [vmem:[%s377 + $0x12] sm:$0xff]
      %v1131 = vld [vmem:[%s377 + $0x2a] sm:$0xff]
      %v1132 = vld [vmem:[%s377 + $0x32] sm:$0xff]
      %v1133 = vld [vmem:[%s377 + $0x4a] sm:$0xff]
      %v1134 = vld [vmem:[%s377 + $0x52] sm:$0xff]
      %v1135 = vld [vmem:[%s377 + $0x6a] sm:$0xff]
      %v1136 = vld [vmem:[%s377 + $0x72] sm:$0xff]
      %v1137 = vld [vmem:[%s377 + $0x8a] sm:$0xff]
      %v1138 = vld [vmem:[%s377 + $0x92] sm:$0xff]
      %v1139 = vld [vmem:[%s377 + $0xaa] sm:$0xff]
      %v1140 = vld [vmem:[%s377 + $0xb2] sm:$0xff]
      %v1141 = vld [vmem:[%s377 + $0xca] sm:$0xff]
      %v1142 = vld [vmem:[%s377 + $0xd2] sm:$0xff]
      %v1143 = vld [vmem:[%s377 + $0xea] sm:$0xff]
      %v1144 = vld [vmem:[%s377 + $0xf2] sm:$0xff]
      %v1145 = vlaneseq
      %v1146 = vshrl.u32 %v1145, 7
      %v1147 = vsub.s32 4, %v1146
      %v1148 = vrot.slane %v412, %v1147
      %v1149 = vmul.f32 %v1148, %v1129
      %v1150 = vmul.f32 %v1148, %v1130
      %v1151 = vmul.f32 %v1148, %v1131
      %v1152 = vmul.f32 %v1148, %v1132
      %v1153 = vmul.f32 %v1148, %v1133
      %v1154 = vmul.f32 %v1148, %v1134
      %v1155 = vmul.f32 %v1148, %v1135
      %v1156 = vmul.f32 %v1148, %v1136
      %v1157 = vmul.f32 %v1148, %v1137
      %v1158 = vmul.f32 %v1148, %v1138
      %v1159 = vmul.f32 %v1148, %v1139
      %v1160 = vmul.f32 %v1148, %v1140
      %v1161 = vmul.f32 %v1148, %v1141
      %v1162 = vmul.f32 %v1148, %v1142
      %v1163 = vmul.f32 %v1148, %v1143
      %v1164 = vmul.f32 %v1148, %v1144
      %v1165 = vadd.f32 %v1113, %v1149
      %v1166 = vadd.f32 %v1114, %v1150
      %v1167 = vadd.f32 %v1115, %v1151
      %v1168 = vadd.f32 %v1116, %v1152
      %v1169 = vadd.f32 %v1117, %v1153
      %v1170 = vadd.f32 %v1118, %v1154
      %v1171 = vadd.f32 %v1119, %v1155
      %v1172 = vadd.f32 %v1120, %v1156
      %v1173 = vadd.f32 %v1121, %v1157
      %v1174 = vadd.f32 %v1122, %v1158
      %v1175 = vadd.f32 %v1123, %v1159
      %v1176 = vadd.f32 %v1124, %v1160
      %v1177 = vadd.f32 %v1125, %v1161
      %v1178 = vadd.f32 %v1126, %v1162
      %v1179 = vadd.f32 %v1127, %v1163
      %v1180 = vadd.f32 %v1128, %v1164
      %s1181 = scalar_lea.vmem [#allocation2], 96
      %v1182 = vld [vmem:[%s1181 + $0x6] sm:$0xff]
      %v1183 = vld [vmem:[%s1181 + $0xe] sm:$0xff]
      %v1184 = vld [vmem:[%s1181 + $0x26] sm:$0xff]
      %v1185 = vld [vmem:[%s1181 + $0x2e] sm:$0xff]
      %v1186 = vld [vmem:[%s1181 + $0x46] sm:$0xff]
      %v1187 = vld [vmem:[%s1181 + $0x4e] sm:$0xff]
      %v1188 = vld [vmem:[%s1181 + $0x66] sm:$0xff]
      %v1189 = vld [vmem:[%s1181 + $0x6e] sm:$0xff]
      %v1190 = vld [vmem:[%s1181 + $0x86] sm:$0xff]
      %v1191 = vld [vmem:[%s1181 + $0x8e] sm:$0xff]
      %v1192 = vld [vmem:[%s1181 + $0xa6] sm:$0xff]
      %v1193 = vld [vmem:[%s1181 + $0xae] sm:$0xff]
      %v1194 = vld [vmem:[%s1181 + $0xc6] sm:$0xff]
      %v1195 = vld [vmem:[%s1181 + $0xce] sm:$0xff]
      %v1196 = vld [vmem:[%s1181 + $0xe6] sm:$0xff]
      %v1197 = vld [vmem:[%s1181 + $0xee] sm:$0xff]
      %v1198 = vlaneseq
      %v1199 = vshrl.u32 %v1198, 7
      %v1200 = vsub.s32 0, %v1199
      %v1201 = vrot.slane %v413, %v1200
      %v1202 = vmul.f32 %v1201, %v1182
      %v1203 = vmul.f32 %v1201, %v1183
      %v1204 = vmul.f32 %v1201, %v1184
      %v1205 = vmul.f32 %v1201, %v1185
      %v1206 = vmul.f32 %v1201, %v1186
      %v1207 = vmul.f32 %v1201, %v1187
      %v1208 = vmul.f32 %v1201, %v1188
      %v1209 = vmul.f32 %v1201, %v1189
      %v1210 = vmul.f32 %v1201, %v1190
      %v1211 = vmul.f32 %v1201, %v1191
      %v1212 = vmul.f32 %v1201, %v1192
      %v1213 = vmul.f32 %v1201, %v1193
      %v1214 = vmul.f32 %v1201, %v1194
      %v1215 = vmul.f32 %v1201, %v1195
      %v1216 = vmul.f32 %v1201, %v1196
      %v1217 = vmul.f32 %v1201, %v1197
      %v1218 = vadd.f32 %v1165, %v1202
      %v1219 = vadd.f32 %v1166, %v1203
      %v1220 = vadd.f32 %v1167, %v1204
      %v1221 = vadd.f32 %v1168, %v1205
      %v1222 = vadd.f32 %v1169, %v1206
      %v1223 = vadd.f32 %v1170, %v1207
      %v1224 = vadd.f32 %v1171, %v1208
      %v1225 = vadd.f32 %v1172, %v1209
      %v1226 = vadd.f32 %v1173, %v1210
      %v1227 = vadd.f32 %v1174, %v1211
      %v1228 = vadd.f32 %v1175, %v1212
      %v1229 = vadd.f32 %v1176, %v1213
      %v1230 = vadd.f32 %v1177, %v1214
      %v1231 = vadd.f32 %v1178, %v1215
      %v1232 = vadd.f32 %v1179, %v1216
      %v1233 = vadd.f32 %v1180, %v1217
      %v1234 = vld [vmem:[%s1181 + $0x7] sm:$0xff]
      %v1235 = vld [vmem:[%s1181 + $0xf] sm:$0xff]
      %v1236 = vld [vmem:[%s1181 + $0x27] sm:$0xff]
      %v1237 = vld [vmem:[%s1181 + $0x2f] sm:$0xff]
      %v1238 = vld [vmem:[%s1181 + $0x47] sm:$0xff]
      %v1239 = vld [vmem:[%s1181 + $0x4f] sm:$0xff]
      %v1240 = vld [vmem:[%s1181 + $0x67] sm:$0xff]
      %v1241 = vld [vmem:[%s1181 + $0x6f] sm:$0xff]
      %v1242 = vld [vmem:[%s1181 + $0x87] sm:$0xff]
      %v1243 = vld [vmem:[%s1181 + $0x8f] sm:$0xff]
      %v1244 = vld [vmem:[%s1181 + $0xa7] sm:$0xff]
      %v1245 = vld [vmem:[%s1181 + $0xaf] sm:$0xff]
      %v1246 = vld [vmem:[%s1181 + $0xc7] sm:$0xff]
      %v1247 = vld [vmem:[%s1181 + $0xcf] sm:$0xff]
      %v1248 = vld [vmem:[%s1181 + $0xe7] sm:$0xff]
      %v1249 = vld [vmem:[%s1181 + $0xef] sm:$0xff]
      %v1250 = vlaneseq
      %v1251 = vshrl.u32 %v1250, 7
      %v1252 = vsub.s32 1, %v1251
      %v1253 = vrot.slane %v413, %v1252
      %v1254 = vmul.f32 %v1253, %v1234
      %v1255 = vmul.f32 %v1253, %v1235
      %v1256 = vmul.f32 %v1253, %v1236
      %v1257 = vmul.f32 %v1253, %v1237
      %v1258 = vmul.f32 %v1253, %v1238
      %v1259 = vmul.f32 %v1253, %v1239
      %v1260 = vmul.f32 %v1253, %v1240
      %v1261 = vmul.f32 %v1253, %v1241
      %v1262 = vmul.f32 %v1253, %v1242
      %v1263 = vmul.f32 %v1253, %v1243
      %v1264 = vmul.f32 %v1253, %v1244
      %v1265 = vmul.f32 %v1253, %v1245
      %v1266 = vmul.f32 %v1253, %v1246
      %v1267 = vmul.f32 %v1253, %v1247
      %v1268 = vmul.f32 %v1253, %v1248
      %v1269 = vmul.f32 %v1253, %v1249
      %v1270 = vadd.f32 %v1218, %v1254
      %v1271 = vadd.f32 %v1219, %v1255
      %v1272 = vadd.f32 %v1220, %v1256
      %v1273 = vadd.f32 %v1221, %v1257
      %v1274 = vadd.f32 %v1222, %v1258
      %v1275 = vadd.f32 %v1223, %v1259
      %v1276 = vadd.f32 %v1224, %v1260
      %v1277 = vadd.f32 %v1225, %v1261
      %v1278 = vadd.f32 %v1226, %v1262
      %v1279 = vadd.f32 %v1227, %v1263
      %v1280 = vadd.f32 %v1228, %v1264
      %v1281 = vadd.f32 %v1229, %v1265
      %v1282 = vadd.f32 %v1230, %v1266
      %v1283 = vadd.f32 %v1231, %v1267
      %v1284 = vadd.f32 %v1232, %v1268
      %v1285 = vadd.f32 %v1233, %v1269
      %v1286 = vld [vmem:[%s1181 + $0x8] sm:$0xff]
      %v1287 = vld [vmem:[%s1181 + $0x10] sm:$0xff]
      %v1288 = vld [vmem:[%s1181 + $0x28] sm:$0xff]
      %v1289 = vld [vmem:[%s1181 + $0x30] sm:$0xff]
      %v1290 = vld [vmem:[%s1181 + $0x48] sm:$0xff]
      %v1291 = vld [vmem:[%s1181 + $0x50] sm:$0xff]
      %v1292 = vld [vmem:[%s1181 + $0x68] sm:$0xff]
      %v1293 = vld [vmem:[%s1181 + $0x70] sm:$0xff]
      %v1294 = vld [vmem:[%s1181 + $0x88] sm:$0xff]
      %v1295 = vld [vmem:[%s1181 + $0x90] sm:$0xff]
      %v1296 = vld [vmem:[%s1181 + $0xa8] sm:$0xff]
      %v1297 = vld [vmem:[%s1181 + $0xb0] sm:$0xff]
      %v1298 = vld [vmem:[%s1181 + $0xc8] sm:$0xff]
      %v1299 = vld [vmem:[%s1181 + $0xd0] sm:$0xff]
      %v1300 = vld [vmem:[%s1181 + $0xe8] sm:$0xff]
      %v1301 = vld [vmem:[%s1181 + $0xf0] sm:$0xff]
      %v1302 = vlaneseq
      %v1303 = vshrl.u32 %v1302, 7
      %v1304 = vsub.s32 2, %v1303
      %v1305 = vrot.slane %v413, %v1304
      %v1306 = vmul.f32 %v1305, %v1286
      %v1307 = vmul.f32 %v1305, %v1287
      %v1308 = vmul.f32 %v1305, %v1288
      %v1309 = vmul.f32 %v1305, %v1289
      %v1310 = vmul.f32 %v1305, %v1290
      %v1311 = vmul.f32 %v1305, %v1291
      %v1312 = vmul.f32 %v1305, %v1292
      %v1313 = vmul.f32 %v1305, %v1293
      %v1314 = vmul.f32 %v1305, %v1294
      %v1315 = vmul.f32 %v1305, %v1295
      %v1316 = vmul.f32 %v1305, %v1296
      %v1317 = vmul.f32 %v1305, %v1297
      %v1318 = vmul.f32 %v1305, %v1298
      %v1319 = vmul.f32 %v1305, %v1299
      %v1320 = vmul.f32 %v1305, %v1300
      %v1321 = vmul.f32 %v1305, %v1301
      %v1322 = vadd.f32 %v1270, %v1306
      %v1323 = vadd.f32 %v1271, %v1307
      %v1324 = vadd.f32 %v1272, %v1308
      %v1325 = vadd.f32 %v1273, %v1309
      %v1326 = vadd.f32 %v1274, %v1310
      %v1327 = vadd.f32 %v1275, %v1311
      %v1328 = vadd.f32 %v1276, %v1312
      %v1329 = vadd.f32 %v1277, %v1313
      %v1330 = vadd.f32 %v1278, %v1314
      %v1331 = vadd.f32 %v1279, %v1315
      %v1332 = vadd.f32 %v1280, %v1316
      %v1333 = vadd.f32 %v1281, %v1317
      %v1334 = vadd.f32 %v1282, %v1318
      %v1335 = vadd.f32 %v1283, %v1319
      %v1336 = vadd.f32 %v1284, %v1320
      %v1337 = vadd.f32 %v1285, %v1321
      %v1338 = vld [vmem:[%s1181 + $0x9] sm:$0xff]
      %v1339 = vld [vmem:[%s1181 + $0x11] sm:$0xff]
      %v1340 = vld [vmem:[%s1181 + $0x29] sm:$0xff]
      %v1341 = vld [vmem:[%s1181 + $0x31] sm:$0xff]
      %v1342 = vld [vmem:[%s1181 + $0x49] sm:$0xff]
      %v1343 = vld [vmem:[%s1181 + $0x51] sm:$0xff]
      %v1344 = vld [vmem:[%s1181 + $0x69] sm:$0xff]
      %v1345 = vld [vmem:[%s1181 + $0x71] sm:$0xff]
      %v1346 = vld [vmem:[%s1181 + $0x89] sm:$0xff]
      %v1347 = vld [vmem:[%s1181 + $0x91] sm:$0xff]
      %v1348 = vld [vmem:[%s1181 + $0xa9] sm:$0xff]
      %v1349 = vld [vmem:[%s1181 + $0xb1] sm:$0xff]
      %v1350 = vld [vmem:[%s1181 + $0xc9] sm:$0xff]
      %v1351 = vld [vmem:[%s1181 + $0xd1] sm:$0xff]
      %v1352 = vld [vmem:[%s1181 + $0xe9] sm:$0xff]
      %v1353 = vld [vmem:[%s1181 + $0xf1] sm:$0xff]
      %v1354 = vlaneseq
      %v1355 = vshrl.u32 %v1354, 7
      %v1356 = vsub.s32 3, %v1355
      %v1357 = vrot.slane %v413, %v1356
      %v1358 = vmul.f32 %v1357, %v1338
      %v1359 = vmul.f32 %v1357, %v1339
      %v1360 = vmul.f32 %v1357, %v1340
      %v1361 = vmul.f32 %v1357, %v1341
      %v1362 = vmul.f32 %v1357, %v1342
      %v1363 = vmul.f32 %v1357, %v1343
      %v1364 = vmul.f32 %v1357, %v1344
      %v1365 = vmul.f32 %v1357, %v1345
      %v1366 = vmul.f32 %v1357, %v1346
      %v1367 = vmul.f32 %v1357, %v1347
      %v1368 = vmul.f32 %v1357, %v1348
      %v1369 = vmul.f32 %v1357, %v1349
      %v1370 = vmul.f32 %v1357, %v1350
      %v1371 = vmul.f32 %v1357, %v1351
      %v1372 = vmul.f32 %v1357, %v1352
      %v1373 = vmul.f32 %v1357, %v1353
      %v1374 = vadd.f32 %v1322, %v1358
      %v1375 = vadd.f32 %v1323, %v1359
      %v1376 = vadd.f32 %v1324, %v1360
      %v1377 = vadd.f32 %v1325, %v1361
      %v1378 = vadd.f32 %v1326, %v1362
      %v1379 = vadd.f32 %v1327, %v1363
      %v1380 = vadd.f32 %v1328, %v1364
      %v1381 = vadd.f32 %v1329, %v1365
      %v1382 = vadd.f32 %v1330, %v1366
      %v1383 = vadd.f32 %v1331, %v1367
      %v1384 = vadd.f32 %v1332, %v1368
      %v1385 = vadd.f32 %v1333, %v1369
      %v1386 = vadd.f32 %v1334, %v1370
      %v1387 = vadd.f32 %v1335, %v1371
      %v1388 = vadd.f32 %v1336, %v1372
      %v1389 = vadd.f32 %v1337, %v1373
      %v1390 = vld [vmem:[%s1181 + $0xa] sm:$0xff]
      %v1391 = vld [vmem:[%s1181 + $0x12] sm:$0xff]
      %v1392 = vld [vmem:[%s1181 + $0x2a] sm:$0xff]
      %v1393 = vld [vmem:[%s1181 + $0x32] sm:$0xff]
      %v1394 = vld [vmem:[%s1181 + $0x4a] sm:$0xff]
      %v1395 = vld [vmem:[%s1181 + $0x52] sm:$0xff]
      %v1396 = vld [vmem:[%s1181 + $0x6a] sm:$0xff]
      %v1397 = vld [vmem:[%s1181 + $0x72] sm:$0xff]
      %v1398 = vld [vmem:[%s1181 + $0x8a] sm:$0xff]
      %v1399 = vld [vmem:[%s1181 + $0x92] sm:$0xff]
      %v1400 = vld [vmem:[%s1181 + $0xaa] sm:$0xff]
      %v1401 = vld [vmem:[%s1181 + $0xb2] sm:$0xff]
      %v1402 = vld [vmem:[%s1181 + $0xca] sm:$0xff]
      %v1403 = vld [vmem:[%s1181 + $0xd2] sm:$0xff]
      %v1404 = vld [vmem:[%s1181 + $0xea] sm:$0xff]
      %v1405 = vld [vmem:[%s1181 + $0xf2] sm:$0xff]
      %v1406 = vlaneseq
      %v1407 = vshrl.u32 %v1406, 7
      %v1408 = vsub.s32 4, %v1407
      %v1409 = vrot.slane %v413, %v1408
      %v1410 = vmul.f32 %v1409, %v1390
      %v1411 = vmul.f32 %v1409, %v1391
      %v1412 = vmul.f32 %v1409, %v1392
      %v1413 = vmul.f32 %v1409, %v1393
      %v1414 = vmul.f32 %v1409, %v1394
      %v1415 = vmul.f32 %v1409, %v1395
      %v1416 = vmul.f32 %v1409, %v1396
      %v1417 = vmul.f32 %v1409, %v1397
      %v1418 = vmul.f32 %v1409, %v1398
      %v1419 = vmul.f32 %v1409, %v1399
      %v1420 = vmul.f32 %v1409, %v1400
      %v1421 = vmul.f32 %v1409, %v1401
      %v1422 = vmul.f32 %v1409, %v1402
      %v1423 = vmul.f32 %v1409, %v1403
      %v1424 = vmul.f32 %v1409, %v1404
      %v1425 = vmul.f32 %v1409, %v1405
      %v1426 = vadd.f32 %v1374, %v1410
      %v1427 = vadd.f32 %v1375, %v1411
      %v1428 = vadd.f32 %v1376, %v1412
      %v1429 = vadd.f32 %v1377, %v1413
      %v1430 = vadd.f32 %v1378, %v1414
      %v1431 = vadd.f32 %v1379, %v1415
      %v1432 = vadd.f32 %v1380, %v1416
      %v1433 = vadd.f32 %v1381, %v1417
      %v1434 = vadd.f32 %v1382, %v1418
      %v1435 = vadd.f32 %v1383, %v1419
      %v1436 = vadd.f32 %v1384, %v1420
      %v1437 = vadd.f32 %v1385, %v1421
      %v1438 = vadd.f32 %v1386, %v1422
      %v1439 = vadd.f32 %v1387, %v1423
      %v1440 = vadd.f32 %v1388, %v1424
      %v1441 = vadd.f32 %v1389, %v1425
      %s1442 = scalar_lea.vmem [#allocation2], 128
      %v1443 = vld [vmem:[%s1442 + $0x6] sm:$0xff]
      %v1444 = vld [vmem:[%s1442 + $0xe] sm:$0xff]
      %v1445 = vld [vmem:[%s1442 + $0x26] sm:$0xff]
      %v1446 = vld [vmem:[%s1442 + $0x2e] sm:$0xff]
      %v1447 = vld [vmem:[%s1442 + $0x46] sm:$0xff]
      %v1448 = vld [vmem:[%s1442 + $0x4e] sm:$0xff]
      %v1449 = vld [vmem:[%s1442 + $0x66] sm:$0xff]
      %v1450 = vld [vmem:[%s1442 + $0x6e] sm:$0xff]
      %v1451 = vld [vmem:[%s1442 + $0x86] sm:$0xff]
      %v1452 = vld [vmem:[%s1442 + $0x8e] sm:$0xff]
      %v1453 = vld [vmem:[%s1442 + $0xa6] sm:$0xff]
      %v1454 = vld [vmem:[%s1442 + $0xae] sm:$0xff]
      %v1455 = vld [vmem:[%s1442 + $0xc6] sm:$0xff]
      %v1456 = vld [vmem:[%s1442 + $0xce] sm:$0xff]
      %v1457 = vld [vmem:[%s1442 + $0xe6] sm:$0xff]
      %v1458 = vld [vmem:[%s1442 + $0xee] sm:$0xff]
      %v1459 = vlaneseq
      %v1460 = vshrl.u32 %v1459, 7
      %v1461 = vsub.s32 0, %v1460
      %v1462 = vrot.slane %v414, %v1461
      %v1463 = vmul.f32 %v1462, %v1443
      %v1464 = vmul.f32 %v1462, %v1444
      %v1465 = vmul.f32 %v1462, %v1445
      %v1466 = vmul.f32 %v1462, %v1446
      %v1467 = vmul.f32 %v1462, %v1447
      %v1468 = vmul.f32 %v1462, %v1448
      %v1469 = vmul.f32 %v1462, %v1449
      %v1470 = vmul.f32 %v1462, %v1450
      %v1471 = vmul.f32 %v1462, %v1451
      %v1472 = vmul.f32 %v1462, %v1452
      %v1473 = vmul.f32 %v1462, %v1453
      %v1474 = vmul.f32 %v1462, %v1454
      %v1475 = vmul.f32 %v1462, %v1455
      %v1476 = vmul.f32 %v1462, %v1456
      %v1477 = vmul.f32 %v1462, %v1457
      %v1478 = vmul.f32 %v1462, %v1458
      %v1479 = vadd.f32 %v1426, %v1463
      %v1480 = vadd.f32 %v1427, %v1464
      %v1481 = vadd.f32 %v1428, %v1465
      %v1482 = vadd.f32 %v1429, %v1466
      %v1483 = vadd.f32 %v1430, %v1467
      %v1484 = vadd.f32 %v1431, %v1468
      %v1485 = vadd.f32 %v1432, %v1469
      %v1486 = vadd.f32 %v1433, %v1470
      %v1487 = vadd.f32 %v1434, %v1471
      %v1488 = vadd.f32 %v1435, %v1472
      %v1489 = vadd.f32 %v1436, %v1473
      %v1490 = vadd.f32 %v1437, %v1474
      %v1491 = vadd.f32 %v1438, %v1475
      %v1492 = vadd.f32 %v1439, %v1476
      %v1493 = vadd.f32 %v1440, %v1477
      %v1494 = vadd.f32 %v1441, %v1478
      %v1495 = vld [vmem:[%s1442 + $0x7] sm:$0xff]
      %v1496 = vld [vmem:[%s1442 + $0xf] sm:$0xff]
      %v1497 = vld [vmem:[%s1442 + $0x27] sm:$0xff]
      %v1498 = vld [vmem:[%s1442 + $0x2f] sm:$0xff]
      %v1499 = vld [vmem:[%s1442 + $0x47] sm:$0xff]
      %v1500 = vld [vmem:[%s1442 + $0x4f] sm:$0xff]
      %v1501 = vld [vmem:[%s1442 + $0x67] sm:$0xff]
      %v1502 = vld [vmem:[%s1442 + $0x6f] sm:$0xff]
      %v1503 = vld [vmem:[%s1442 + $0x87] sm:$0xff]
      %v1504 = vld [vmem:[%s1442 + $0x8f] sm:$0xff]
      %v1505 = vld [vmem:[%s1442 + $0xa7] sm:$0xff]
      %v1506 = vld [vmem:[%s1442 + $0xaf] sm:$0xff]
      %v1507 = vld [vmem:[%s1442 + $0xc7] sm:$0xff]
      %v1508 = vld [vmem:[%s1442 + $0xcf] sm:$0xff]
      %v1509 = vld [vmem:[%s1442 + $0xe7] sm:$0xff]
      %v1510 = vld [vmem:[%s1442 + $0xef] sm:$0xff]
      %v1511 = vlaneseq
      %v1512 = vshrl.u32 %v1511, 7
      %v1513 = vsub.s32 1, %v1512
      %v1514 = vrot.slane %v414, %v1513
      %v1515 = vmul.f32 %v1514, %v1495
      %v1516 = vmul.f32 %v1514, %v1496
      %v1517 = vmul.f32 %v1514, %v1497
      %v1518 = vmul.f32 %v1514, %v1498
      %v1519 = vmul.f32 %v1514, %v1499
      %v1520 = vmul.f32 %v1514, %v1500
      %v1521 = vmul.f32 %v1514, %v1501
      %v1522 = vmul.f32 %v1514, %v1502
      %v1523 = vmul.f32 %v1514, %v1503
      %v1524 = vmul.f32 %v1514, %v1504
      %v1525 = vmul.f32 %v1514, %v1505
      %v1526 = vmul.f32 %v1514, %v1506
      %v1527 = vmul.f32 %v1514, %v1507
      %v1528 = vmul.f32 %v1514, %v1508
      %v1529 = vmul.f32 %v1514, %v1509
      %v1530 = vmul.f32 %v1514, %v1510
      %v1531 = vadd.f32 %v1479, %v1515
      %v1532 = vadd.f32 %v1480, %v1516
      %v1533 = vadd.f32 %v1481, %v1517
      %v1534 = vadd.f32 %v1482, %v1518
      %v1535 = vadd.f32 %v1483, %v1519
      %v1536 = vadd.f32 %v1484, %v1520
      %v1537 = vadd.f32 %v1485, %v1521
      %v1538 = vadd.f32 %v1486, %v1522
      %v1539 = vadd.f32 %v1487, %v1523
      %v1540 = vadd.f32 %v1488, %v1524
      %v1541 = vadd.f32 %v1489, %v1525
      %v1542 = vadd.f32 %v1490, %v1526
      %v1543 = vadd.f32 %v1491, %v1527
      %v1544 = vadd.f32 %v1492, %v1528
      %v1545 = vadd.f32 %v1493, %v1529
      %v1546 = vadd.f32 %v1494, %v1530
      %v1547 = vld [vmem:[%s1442 + $0x8] sm:$0xff]
      %v1548 = vld [vmem:[%s1442 + $0x10] sm:$0xff]
      %v1549 = vld [vmem:[%s1442 + $0x28] sm:$0xff]
      %v1550 = vld [vmem:[%s1442 + $0x30] sm:$0xff]
      %v1551 = vld [vmem:[%s1442 + $0x48] sm:$0xff]
      %v1552 = vld [vmem:[%s1442 + $0x50] sm:$0xff]
      %v1553 = vld [vmem:[%s1442 + $0x68] sm:$0xff]
      %v1554 = vld [vmem:[%s1442 + $0x70] sm:$0xff]
      %v1555 = vld [vmem:[%s1442 + $0x88] sm:$0xff]
      %v1556 = vld [vmem:[%s1442 + $0x90] sm:$0xff]
      %v1557 = vld [vmem:[%s1442 + $0xa8] sm:$0xff]
      %v1558 = vld [vmem:[%s1442 + $0xb0] sm:$0xff]
      %v1559 = vld [vmem:[%s1442 + $0xc8] sm:$0xff]
      %v1560 = vld [vmem:[%s1442 + $0xd0] sm:$0xff]
      %v1561 = vld [vmem:[%s1442 + $0xe8] sm:$0xff]
      %v1562 = vld [vmem:[%s1442 + $0xf0] sm:$0xff]
      %v1563 = vlaneseq
      %v1564 = vshrl.u32 %v1563, 7
      %v1565 = vsub.s32 2, %v1564
      %v1566 = vrot.slane %v414, %v1565
      %v1567 = vmul.f32 %v1566, %v1547
      %v1568 = vmul.f32 %v1566, %v1548
      %v1569 = vmul.f32 %v1566, %v1549
      %v1570 = vmul.f32 %v1566, %v1550
      %v1571 = vmul.f32 %v1566, %v1551
      %v1572 = vmul.f32 %v1566, %v1552
      %v1573 = vmul.f32 %v1566, %v1553
      %v1574 = vmul.f32 %v1566, %v1554
      %v1575 = vmul.f32 %v1566, %v1555
      %v1576 = vmul.f32 %v1566, %v1556
      %v1577 = vmul.f32 %v1566, %v1557
      %v1578 = vmul.f32 %v1566, %v1558
      %v1579 = vmul.f32 %v1566, %v1559
      %v1580 = vmul.f32 %v1566, %v1560
      %v1581 = vmul.f32 %v1566, %v1561
      %v1582 = vmul.f32 %v1566, %v1562
      %v1583 = vadd.f32 %v1531, %v1567
      %v1584 = vadd.f32 %v1532, %v1568
      %v1585 = vadd.f32 %v1533, %v1569
      %v1586 = vadd.f32 %v1534, %v1570
      %v1587 = vadd.f32 %v1535, %v1571
      %v1588 = vadd.f32 %v1536, %v1572
      %v1589 = vadd.f32 %v1537, %v1573
      %v1590 = vadd.f32 %v1538, %v1574
      %v1591 = vadd.f32 %v1539, %v1575
      %v1592 = vadd.f32 %v1540, %v1576
      %v1593 = vadd.f32 %v1541, %v1577
      %v1594 = vadd.f32 %v1542, %v1578
      %v1595 = vadd.f32 %v1543, %v1579
      %v1596 = vadd.f32 %v1544, %v1580
      %v1597 = vadd.f32 %v1545, %v1581
      %v1598 = vadd.f32 %v1546, %v1582
      %v1599 = vld [vmem:[%s1442 + $0x9] sm:$0xff]
      %v1600 = vld [vmem:[%s1442 + $0x11] sm:$0xff]
      %v1601 = vld [vmem:[%s1442 + $0x29] sm:$0xff]
      %v1602 = vld [vmem:[%s1442 + $0x31] sm:$0xff]
      %v1603 = vld [vmem:[%s1442 + $0x49] sm:$0xff]
      %v1604 = vld [vmem:[%s1442 + $0x51] sm:$0xff]
      %v1605 = vld [vmem:[%s1442 + $0x69] sm:$0xff]
      %v1606 = vld [vmem:[%s1442 + $0x71] sm:$0xff]
      %v1607 = vld [vmem:[%s1442 + $0x89] sm:$0xff]
      %v1608 = vld [vmem:[%s1442 + $0x91] sm:$0xff]
      %v1609 = vld [vmem:[%s1442 + $0xa9] sm:$0xff]
      %v1610 = vld [vmem:[%s1442 + $0xb1] sm:$0xff]
      %v1611 = vld [vmem:[%s1442 + $0xc9] sm:$0xff]
      %v1612 = vld [vmem:[%s1442 + $0xd1] sm:$0xff]
      %v1613 = vld [vmem:[%s1442 + $0xe9] sm:$0xff]
      %v1614 = vld [vmem:[%s1442 + $0xf1] sm:$0xff]
      %v1615 = vlaneseq
      %v1616 = vshrl.u32 %v1615, 7
      %v1617 = vsub.s32 3, %v1616
      %v1618 = vrot.slane %v414, %v1617
      %v1619 = vmul.f32 %v1618, %v1599
      %v1620 = vmul.f32 %v1618, %v1600
      %v1621 = vmul.f32 %v1618, %v1601
      %v1622 = vmul.f32 %v1618, %v1602
      %v1623 = vmul.f32 %v1618, %v1603
      %v1624 = vmul.f32 %v1618, %v1604
      %v1625 = vmul.f32 %v1618, %v1605
      %v1626 = vmul.f32 %v1618, %v1606
      %v1627 = vmul.f32 %v1618, %v1607
      %v1628 = vmul.f32 %v1618, %v1608
      %v1629 = vmul.f32 %v1618, %v1609
      %v1630 = vmul.f32 %v1618, %v1610
      %v1631 = vmul.f32 %v1618, %v1611
      %v1632 = vmul.f32 %v1618, %v1612
      %v1633 = vmul.f32 %v1618, %v1613
      %v1634 = vmul.f32 %v1618, %v1614
      %v1635 = vadd.f32 %v1583, %v1619
      %v1636 = vadd.f32 %v1584, %v1620
      %v1637 = vadd.f32 %v1585, %v1621
      %v1638 = vadd.f32 %v1586, %v1622
      %v1639 = vadd.f32 %v1587, %v1623
      %v1640 = vadd.f32 %v1588, %v1624
      %v1641 = vadd.f32 %v1589, %v1625
      %v1642 = vadd.f32 %v1590, %v1626
      %v1643 = vadd.f32 %v1591, %v1627
      %v1644 = vadd.f32 %v1592, %v1628
      %v1645 = vadd.f32 %v1593, %v1629
      %v1646 = vadd.f32 %v1594, %v1630
      %v1647 = vadd.f32 %v1595, %v1631
      %v1648 = vadd.f32 %v1596, %v1632
      %v1649 = vadd.f32 %v1597, %v1633
      %v1650 = vadd.f32 %v1598, %v1634
      %v1651 = vld [vmem:[%s1442 + $0xa] sm:$0xff]
      %v1652 = vld [vmem:[%s1442 + $0x12] sm:$0xff]
      %v1653 = vld [vmem:[%s1442 + $0x2a] sm:$0xff]
      %v1654 = vld [vmem:[%s1442 + $0x32] sm:$0xff]
      %v1655 = vld [vmem:[%s1442 + $0x4a] sm:$0xff]
      %v1656 = vld [vmem:[%s1442 + $0x52] sm:$0xff]
      %v1657 = vld [vmem:[%s1442 + $0x6a] sm:$0xff]
      %v1658 = vld [vmem:[%s1442 + $0x72] sm:$0xff]
      %v1659 = vld [vmem:[%s1442 + $0x8a] sm:$0xff]
      %v1660 = vld [vmem:[%s1442 + $0x92] sm:$0xff]
      %v1661 = vld [vmem:[%s1442 + $0xaa] sm:$0xff]
      %v1662 = vld [vmem:[%s1442 + $0xb2] sm:$0xff]
      %v1663 = vld [vmem:[%s1442 + $0xca] sm:$0xff]
      %v1664 = vld [vmem:[%s1442 + $0xd2] sm:$0xff]
      %v1665 = vld [vmem:[%s1442 + $0xea] sm:$0xff]
      %v1666 = vld [vmem:[%s1442 + $0xf2] sm:$0xff]
      %v1667 = vlaneseq
      %v1668 = vshrl.u32 %v1667, 7
      %v1669 = vsub.s32 4, %v1668
      %v1670 = vrot.slane %v414, %v1669
      %v1671 = vmul.f32 %v1670, %v1651
      %v1672 = vmul.f32 %v1670, %v1652
      %v1673 = vmul.f32 %v1670, %v1653
      %v1674 = vmul.f32 %v1670, %v1654
      %v1675 = vmul.f32 %v1670, %v1655
      %v1676 = vmul.f32 %v1670, %v1656
      %v1677 = vmul.f32 %v1670, %v1657
      %v1678 = vmul.f32 %v1670, %v1658
      %v1679 = vmul.f32 %v1670, %v1659
      %v1680 = vmul.f32 %v1670, %v1660
      %v1681 = vmul.f32 %v1670, %v1661
      %v1682 = vmul.f32 %v1670, %v1662
      %v1683 = vmul.f32 %v1670, %v1663
      %v1684 = vmul.f32 %v1670, %v1664
      %v1685 = vmul.f32 %v1670, %v1665
      %v1686 = vmul.f32 %v1670, %v1666
      %v1687 = vadd.f32 %v1635, %v1671
      %v1688 = vadd.f32 %v1636, %v1672
      %v1689 = vadd.f32 %v1637, %v1673
      %v1690 = vadd.f32 %v1638, %v1674
      %v1691 = vadd.f32 %v1639, %v1675
      %v1692 = vadd.f32 %v1640, %v1676
      %v1693 = vadd.f32 %v1641, %v1677
      %v1694 = vadd.f32 %v1642, %v1678
      %v1695 = vadd.f32 %v1643, %v1679
      %v1696 = vadd.f32 %v1644, %v1680
      %v1697 = vadd.f32 %v1645, %v1681
      %v1698 = vadd.f32 %v1646, %v1682
      %v1699 = vadd.f32 %v1647, %v1683
      %v1700 = vadd.f32 %v1648, %v1684
      %v1701 = vadd.f32 %v1649, %v1685
      %v1702 = vadd.f32 %v1650, %v1686
      %v1704 = vlaneseq
      %v1705 = vshrl.u32 %v1704, 7
      %v1706 = vsub.s32 0, %v1705
      %v1707 = vrot.slane %v415, %v1706
      %v1709 = vadd.f32 %v1687, %v1707
      %v1710 = vadd.f32 %v1688, %v1707
      %v1711 = vadd.f32 %v1689, %v1707
      %v1712 = vadd.f32 %v1690, %v1707
      %v1713 = vadd.f32 %v1691, %v1707
      %v1714 = vadd.f32 %v1692, %v1707
      %v1715 = vadd.f32 %v1693, %v1707
      %v1716 = vadd.f32 %v1694, %v1707
      %v1717 = vadd.f32 %v1695, %v1707
      %v1718 = vadd.f32 %v1696, %v1707
      %v1719 = vadd.f32 %v1697, %v1707
      %v1720 = vadd.f32 %v1698, %v1707
      %v1721 = vadd.f32 %v1699, %v1707
      %v1722 = vadd.f32 %v1700, %v1707
      %v1723 = vadd.f32 %v1701, %v1707
      %v1724 = vadd.f32 %v1702, %v1707
      %v1725 = vmul.f32 %v1709, 0.5
      %v1726 = vmul.f32 %v1710, 0.5
      %v1727 = vmul.f32 %v1711, 0.5
      %v1728 = vmul.f32 %v1712, 0.5
      %v1729 = vmul.f32 %v1713, 0.5
      %v1730 = vmul.f32 %v1714, 0.5
      %v1731 = vmul.f32 %v1715, 0.5
      %v1732 = vmul.f32 %v1716, 0.5
      %v1733 = vmul.f32 %v1717, 0.5
      %v1734 = vmul.f32 %v1718, 0.5
      %v1735 = vmul.f32 %v1719, 0.5
      %v1736 = vmul.f32 %v1720, 0.5
      %v1737 = vmul.f32 %v1721, 0.5
      %v1738 = vmul.f32 %v1722, 0.5
      %v1739 = vmul.f32 %v1723, 0.5
      %v1740 = vmul.f32 %v1724, 0.5
      %v1741 = vmul.f32 %v1709, 0.044715
      %v1742 = vmul.f32 %v1710, 0.044715
      %v1743 = vmul.f32 %v1711, 0.044715
      %v1744 = vmul.f32 %v1712, 0.044715
      %v1745 = vmul.f32 %v1713, 0.044715
      %v1746 = vmul.f32 %v1714, 0.044715
      %v1747 = vmul.f32 %v1715, 0.044715
      %v1748 = vmul.f32 %v1716, 0.044715
      %v1749 = vmul.f32 %v1717, 0.044715
      %v1750 = vmul.f32 %v1718, 0.044715
      %v1751 = vmul.f32 %v1719, 0.044715
      %v1752 = vmul.f32 %v1720, 0.044715
      %v1753 = vmul.f32 %v1721, 0.044715
      %v1754 = vmul.f32 %v1722, 0.044715
      %v1755 = vmul.f32 %v1723, 0.044715
      %v1756 = vmul.f32 %v1724, 0.044715
      %v1757 = vmul.f32 %v1741, %v1709
      %v1758 = vmul.f32 %v1742, %v1710
      %v1759 = vmul.f32 %v1743, %v1711
      %v1760 = vmul.f32 %v1744, %v1712
      %v1761 = vmul.f32 %v1745, %v1713
      %v1762 = vmul.f32 %v1746, %v1714
      %v1763 = vmul.f32 %v1747, %v1715
      %v1764 = vmul.f32 %v1748, %v1716
      %v1765 = vmul.f32 %v1749, %v1717
      %v1766 = vmul.f32 %v1750, %v1718
      %v1767 = vmul.f32 %v1751, %v1719
      %v1768 = vmul.f32 %v1752, %v1720
      %v1769 = vmul.f32 %v1753, %v1721
      %v1770 = vmul.f32 %v1754, %v1722
      %v1771 = vmul.f32 %v1755, %v1723
      %v1772 = vmul.f32 %v1756, %v1724
      %v1773 = vmul.f32 %v1757, %v1709
      %v1774 = vmul.f32 %v1758, %v1710
      %v1775 = vmul.f32 %v1759, %v1711
      %v1776 = vmul.f32 %v1760, %v1712
      %v1777 = vmul.f32 %v1761, %v1713
      %v1778 = vmul.f32 %v1762, %v1714
      %v1779 = vmul.f32 %v1763, %v1715
      %v1780 = vmul.f32 %v1764, %v1716
      %v1781 = vmul.f32 %v1765, %v1717
      %v1782 = vmul.f32 %v1766, %v1718
      %v1783 = vmul.f32 %v1767, %v1719
      %v1784 = vmul.f32 %v1768, %v1720
      %v1785 = vmul.f32 %v1769, %v1721
      %v1786 = vmul.f32 %v1770, %v1722
      %v1787 = vmul.f32 %v1771, %v1723
      %v1788 = vmul.f32 %v1772, %v1724
      %v1789 = vadd.f32 %v1709, %v1773
      %v1790 = vadd.f32 %v1710, %v1774
      %v1791 = vadd.f32 %v1711, %v1775
      %v1792 = vadd.f32 %v1712, %v1776
      %v1793 = vadd.f32 %v1713, %v1777
      %v1794 = vadd.f32 %v1714, %v1778
      %v1795 = vadd.f32 %v1715, %v1779
      %v1796 = vadd.f32 %v1716, %v1780
      %v1797 = vadd.f32 %v1717, %v1781
      %v1798 = vadd.f32 %v1718, %v1782
      %v1799 = vadd.f32 %v1719, %v1783
      %v1800 = vadd.f32 %v1720, %v1784
      %v1801 = vadd.f32 %v1721, %v1785
      %v1802 = vadd.f32 %v1722, %v1786
      %v1803 = vadd.f32 %v1723, %v1787
      %v1804 = vadd.f32 %v1724, %v1788
      %v1805 = vmul.f32 %v1789, 0.7978846
      %v1806 = vmul.f32 %v1790, 0.7978846
      %v1807 = vmul.f32 %v1791, 0.7978846
      %v1808 = vmul.f32 %v1792, 0.7978846
      %v1809 = vmul.f32 %v1793, 0.7978846
      %v1810 = vmul.f32 %v1794, 0.7978846
      %v1811 = vmul.f32 %v1795, 0.7978846
      %v1812 = vmul.f32 %v1796, 0.7978846
      %v1813 = vmul.f32 %v1797, 0.7978846
      %v1814 = vmul.f32 %v1798, 0.7978846
      %v1815 = vmul.f32 %v1799, 0.7978846
      %v1816 = vmul.f32 %v1800, 0.7978846
      %v1817 = vmul.f32 %v1801, 0.7978846
      %v1818 = vmul.f32 %v1802, 0.7978846
      %v1819 = vmul.f32 %v1803, 0.7978846
      %v1820 = vmul.f32 %v1804, 0.7978846
      %v1821 = vtanh.pop %v1805
      %v1822 = vtanh.pop %v1806
      %v1823 = vtanh.pop %v1807
      %v1824 = vtanh.pop %v1808
      %v1825 = vtanh.pop %v1809
      %v1826 = vtanh.pop %v1810
      %v1827 = vtanh.pop %v1811
      %v1828 = vtanh.pop %v1812
      %v1829 = vtanh.pop %v1813
      %v1830 = vtanh.pop %v1814
      %v1831 = vtanh.pop %v1815
      %v1832 = vtanh.pop %v1816
      %v1833 = vtanh.pop %v1817
      %v1834 = vtanh.pop %v1818
      %v1835 = vtanh.pop %v1819
      %v1836 = vtanh.pop %v1820
      %v1837 = vadd.f32 %v1821, 1.0
      %v1838 = vadd.f32 %v1822, 1.0
      %v1839 = vadd.f32 %v1823, 1.0
      %v1840 = vadd.f32 %v1824, 1.0
      %v1841 = vadd.f32 %v1825, 1.0
      %v1842 = vadd.f32 %v1826, 1.0
      %v1843 = vadd.f32 %v1827, 1.0
      %v1844 = vadd.f32 %v1828, 1.0
      %v1845 = vadd.f32 %v1829, 1.0
      %v1846 = vadd.f32 %v1830, 1.0
      %v1847 = vadd.f32 %v1831, 1.0
      %v1848 = vadd.f32 %v1832, 1.0
      %v1849 = vadd.f32 %v1833, 1.0
      %v1850 = vadd.f32 %v1834, 1.0
      %v1851 = vadd.f32 %v1835, 1.0
      %v1852 = vadd.f32 %v1836, 1.0
      %v1853 = vmul.f32 %v1725, %v1837
      %v1854 = vmul.f32 %v1726, %v1838
      %v1855 = vmul.f32 %v1727, %v1839
      %v1856 = vmul.f32 %v1728, %v1840
      %v1857 = vmul.f32 %v1729, %v1841
      %v1858 = vmul.f32 %v1730, %v1842
      %v1859 = vmul.f32 %v1731, %v1843
      %v1860 = vmul.f32 %v1732, %v1844
      %v1861 = vmul.f32 %v1733, %v1845
      %v1862 = vmul.f32 %v1734, %v1846
      %v1863 = vmul.f32 %v1735, %v1847
      %v1864 = vmul.f32 %v1736, %v1848
      %v1865 = vmul.f32 %v1737, %v1849
      %v1866 = vmul.f32 %v1738, %v1850
      %v1867 = vmul.f32 %v1739, %v1851
      %v1868 = vmul.f32 %v1740, %v1852
      %v1869 = vmul.f32 %v1853, 0.5
      %v1870 = vmul.f32 %v1854, 0.5
      %v1871 = vmul.f32 %v1855, 0.5
      %v1872 = vmul.f32 %v1856, 0.5
      %v1873 = vmul.f32 %v1857, 0.5
      %v1874 = vmul.f32 %v1858, 0.5
      %v1875 = vmul.f32 %v1859, 0.5
      %v1876 = vmul.f32 %v1860, 0.5
      %v1877 = vmul.f32 %v1861, 0.5
      %v1878 = vmul.f32 %v1862, 0.5
      %v1879 = vmul.f32 %v1863, 0.5
      %v1880 = vmul.f32 %v1864, 0.5
      %v1881 = vmul.f32 %v1865, 0.5
      %v1882 = vmul.f32 %v1866, 0.5
      %v1883 = vmul.f32 %v1867, 0.5
      %v1884 = vmul.f32 %v1868, 0.5
      %v1885 = vmul.f32 %v1853, 0.044715
      %v1886 = vmul.f32 %v1854, 0.044715
      %v1887 = vmul.f32 %v1855, 0.044715
      %v1888 = vmul.f32 %v1856, 0.044715
      %v1889 = vmul.f32 %v1857, 0.044715
      %v1890 = vmul.f32 %v1858, 0.044715
      %v1891 = vmul.f32 %v1859, 0.044715
      %v1892 = vmul.f32 %v1860, 0.044715
      %v1893 = vmul.f32 %v1861, 0.044715
      %v1894 = vmul.f32 %v1862, 0.044715
      %v1895 = vmul.f32 %v1863, 0.044715
      %v1896 = vmul.f32 %v1864, 0.044715
      %v1897 = vmul.f32 %v1865, 0.044715
      %v1898 = vmul.f32 %v1866, 0.044715
      %v1899 = vmul.f32 %v1867, 0.044715
      %v1900 = vmul.f32 %v1868, 0.044715
      %v1901 = vmul.f32 %v1885, %v1853
      %v1902 = vmul.f32 %v1886, %v1854
      %v1903 = vmul.f32 %v1887, %v1855
      %v1904 = vmul.f32 %v1888, %v1856
      %v1905 = vmul.f32 %v1889, %v1857
      %v1906 = vmul.f32 %v1890, %v1858
      %v1907 = vmul.f32 %v1891, %v1859
      %v1908 = vmul.f32 %v1892, %v1860
      %v1909 = vmul.f32 %v1893, %v1861
      %v1910 = vmul.f32 %v1894, %v1862
      %v1911 = vmul.f32 %v1895, %v1863
      %v1912 = vmul.f32 %v1896, %v1864
      %v1913 = vmul.f32 %v1897, %v1865
      %v1914 = vmul.f32 %v1898, %v1866
      %v1915 = vmul.f32 %v1899, %v1867
      %v1916 = vmul.f32 %v1900, %v1868
      %v1917 = vmul.f32 %v1901, %v1853
      %v1918 = vmul.f32 %v1902, %v1854
      %v1919 = vmul.f32 %v1903, %v1855
      %v1920 = vmul.f32 %v1904, %v1856
      %v1921 = vmul.f32 %v1905, %v1857
      %v1922 = vmul.f32 %v1906, %v1858
      %v1923 = vmul.f32 %v1907, %v1859
      %v1924 = vmul.f32 %v1908, %v1860
      %v1925 = vmul.f32 %v1909, %v1861
      %v1926 = vmul.f32 %v1910, %v1862
      %v1927 = vmul.f32 %v1911, %v1863
      %v1928 = vmul.f32 %v1912, %v1864
      %v1929 = vmul.f32 %v1913, %v1865
      %v1930 = vmul.f32 %v1914, %v1866
      %v1931 = vmul.f32 %v1915, %v1867
      %v1932 = vmul.f32 %v1916, %v1868
      %v1933 = vadd.f32 %v1853, %v1917
      %v1934 = vadd.f32 %v1854, %v1918
      %v1935 = vadd.f32 %v1855, %v1919
      %v1936 = vadd.f32 %v1856, %v1920
      %v1937 = vadd.f32 %v1857, %v1921
      %v1938 = vadd.f32 %v1858, %v1922
      %v1939 = vadd.f32 %v1859, %v1923
      %v1940 = vadd.f32 %v1860, %v1924
      %v1941 = vadd.f32 %v1861, %v1925
      %v1942 = vadd.f32 %v1862, %v1926
      %v1943 = vadd.f32 %v1863, %v1927
      %v1944 = vadd.f32 %v1864, %v1928
      %v1945 = vadd.f32 %v1865, %v1929
      %v1946 = vadd.f32 %v1866, %v1930
      %v1947 = vadd.f32 %v1867, %v1931
      %v1948 = vadd.f32 %v1868, %v1932
      %v1949 = vmul.f32 %v1933, 0.7978846
      %v1950 = vmul.f32 %v1934, 0.7978846
      %v1951 = vmul.f32 %v1935, 0.7978846
      %v1952 = vmul.f32 %v1936, 0.7978846
      %v1953 = vmul.f32 %v1937, 0.7978846
      %v1954 = vmul.f32 %v1938, 0.7978846
      %v1955 = vmul.f32 %v1939, 0.7978846
      %v1956 = vmul.f32 %v1940, 0.7978846
      %v1957 = vmul.f32 %v1941, 0.7978846
      %v1958 = vmul.f32 %v1942, 0.7978846
      %v1959 = vmul.f32 %v1943, 0.7978846
      %v1960 = vmul.f32 %v1944, 0.7978846
      %v1961 = vmul.f32 %v1945, 0.7978846
      %v1962 = vmul.f32 %v1946, 0.7978846
      %v1963 = vmul.f32 %v1947, 0.7978846
      %v1964 = vmul.f32 %v1948, 0.7978846
      %v1965 = vtanh.pop %v1949
      %v1966 = vtanh.pop %v1950
      %v1967 = vtanh.pop %v1951
      %v1968 = vtanh.pop %v1952
      %v1969 = vtanh.pop %v1953
      %v1970 = vtanh.pop %v1954
      %v1971 = vtanh.pop %v1955
      %v1972 = vtanh.pop %v1956
      %v1973 = vtanh.pop %v1957
      %v1974 = vtanh.pop %v1958
      %v1975 = vtanh.pop %v1959
      %v1976 = vtanh.pop %v1960
      %v1977 = vtanh.pop %v1961
      %v1978 = vtanh.pop %v1962
      %v1979 = vtanh.pop %v1963
      %v1980 = vtanh.pop %v1964
      %v1981 = vadd.f32 %v1965, 1.0
      %v1982 = vadd.f32 %v1966, 1.0
      %v1983 = vadd.f32 %v1967, 1.0
      %v1984 = vadd.f32 %v1968, 1.0
      %v1985 = vadd.f32 %v1969, 1.0
      %v1986 = vadd.f32 %v1970, 1.0
      %v1987 = vadd.f32 %v1971, 1.0
      %v1988 = vadd.f32 %v1972, 1.0
      %v1989 = vadd.f32 %v1973, 1.0
      %v1990 = vadd.f32 %v1974, 1.0
      %v1991 = vadd.f32 %v1975, 1.0
      %v1992 = vadd.f32 %v1976, 1.0
      %v1993 = vadd.f32 %v1977, 1.0
      %v1994 = vadd.f32 %v1978, 1.0
      %v1995 = vadd.f32 %v1979, 1.0
      %v1996 = vadd.f32 %v1980, 1.0
      %v1997 = vmul.f32 %v1869, %v1981
      %v1998 = vmul.f32 %v1870, %v1982
      %v1999 = vmul.f32 %v1871, %v1983
      %v2000 = vmul.f32 %v1872, %v1984
      %v2001 = vmul.f32 %v1873, %v1985
      %v2002 = vmul.f32 %v1874, %v1986
      %v2003 = vmul.f32 %v1875, %v1987
      %v2004 = vmul.f32 %v1876, %v1988
      %v2005 = vmul.f32 %v1877, %v1989
      %v2006 = vmul.f32 %v1878, %v1990
      %v2007 = vmul.f32 %v1879, %v1991
      %v2008 = vmul.f32 %v1880, %v1992
      %v2009 = vmul.f32 %v1881, %v1993
      %v2010 = vmul.f32 %v1882, %v1994
      %v2011 = vmul.f32 %v1883, %v1995
      %v2012 = vmul.f32 %v1884, %v1996
      %v2013 = vpack.c.bf16 %v1998, %v1997
      %v2014 = vpack.c.bf16 %v2000, %v1999
      %v2015 = vpack.c.bf16 %v2002, %v2001
      %v2016 = vpack.c.bf16 %v2004, %v2003
      %v2017 = vpack.c.bf16 %v2006, %v2005
      %v2018 = vpack.c.bf16 %v2008, %v2007
      %v2019 = vpack.c.bf16 %v2010, %v2009
      %v2020 = vpack.c.bf16 %v2012, %v2011
      %v2029 = vunpack.c.l.b16 %v2013
      %v2030 = vunpack.c.h.b16 %v2013
      %v2031 = vunpack.c.l.b16 %v2014
      %v2032 = vunpack.c.h.b16 %v2014
      %v2033 = vunpack.c.l.b16 %v2015
      %v2034 = vunpack.c.h.b16 %v2015
      %v2035 = vunpack.c.l.b16 %v2016
      %v2036 = vunpack.c.h.b16 %v2016
      %v2037 = vunpack.c.l.b16 %v2017
      %v2038 = vunpack.c.h.b16 %v2017
      %v2039 = vunpack.c.l.b16 %v2018
      %v2040 = vunpack.c.h.b16 %v2018
      %v2041 = vunpack.c.l.b16 %v2019
      %v2042 = vunpack.c.h.b16 %v2019
      %v2043 = vunpack.c.l.b16 %v2020
      %v2044 = vunpack.c.h.b16 %v2020
      %v2045 = vpack.c.b16 %v2029, %v2029
      %v2046 = vpack.c.b16 %v2030, %v2030
      %v2047 = vpack.c.b16 %v2031, %v2031
      %v2048 = vpack.c.b16 %v2032, %v2032
      %v2049 = vpack.c.b16 %v2033, %v2033
      %v2050 = vpack.c.b16 %v2034, %v2034
      %v2051 = vpack.c.b16 %v2035, %v2035
      %v2052 = vpack.c.b16 %v2036, %v2036
      %v2053 = vpack.c.b16 %v2037, %v2037
      %v2054 = vpack.c.b16 %v2038, %v2038
      %v2055 = vpack.c.b16 %v2039, %v2039
      %v2056 = vpack.c.b16 %v2040, %v2040
      %v2057 = vpack.c.b16 %v2041, %v2041
      %v2058 = vpack.c.b16 %v2042, %v2042
      %v2059 = vpack.c.b16 %v2043, %v2043
      %v2060 = vpack.c.b16 %v2044, %v2044
      %2077 = vst [vmem:[%s232] sm:$0xf] %v2045
      %2078 = vst [vmem:[%s232 + $0x4] sm:$0xf] %v2046
      %2079 = vst [vmem:[%s232 + $0x8] sm:$0xf] %v2047
      %2080 = vst [vmem:[%s232 + $0xc] sm:$0xf] %v2048
      %2081 = vst [vmem:[%s232 + $0x10] sm:$0xf] %v2049
      %2082 = vst [vmem:[%s232 + $0x14] sm:$0xf] %v2050
      %2083 = vst [vmem:[%s232 + $0x18] sm:$0xf] %v2051
      %2084 = vst [vmem:[%s232 + $0x1c] sm:$0xf] %v2052
      %2085 = vst [vmem:[%s232 + $0x20] sm:$0xf] %v2053
      %2086 = vst [vmem:[%s232 + $0x24] sm:$0xf] %v2054
      %2087 = vst [vmem:[%s232 + $0x28] sm:$0xf] %v2055
      %2088 = vst [vmem:[%s232 + $0x2c] sm:$0xf] %v2056
      %2089 = vst [vmem:[%s232 + $0x30] sm:$0xf] %v2057
      %2090 = vst [vmem:[%s232 + $0x34] sm:$0xf] %v2058
      %2091 = vst [vmem:[%s232 + $0x38] sm:$0xf] %v2059
      %2092 = vst [vmem:[%s232 + $0x3c] sm:$0xf] %v2060
      %s2093 = scalar_lea.vmem [#allocation2], 256
      %v2094 = vld [vmem:[%s2093 + $0x6] sm:$0xff]
      %v2095 = vld [vmem:[%s2093 + $0xe] sm:$0xff]
      %v2096 = vld [vmem:[%s2093 + $0x26] sm:$0xff]
      %v2097 = vld [vmem:[%s2093 + $0x2e] sm:$0xff]
      %v2098 = vld [vmem:[%s2093 + $0x46] sm:$0xff]
      %v2099 = vld [vmem:[%s2093 + $0x4e] sm:$0xff]
      %v2100 = vld [vmem:[%s2093 + $0x66] sm:$0xff]
      %v2101 = vld [vmem:[%s2093 + $0x6e] sm:$0xff]
      %v2102 = vld [vmem:[%s2093 + $0x86] sm:$0xff]
      %v2103 = vld [vmem:[%s2093 + $0x8e] sm:$0xff]
      %v2104 = vld [vmem:[%s2093 + $0xa6] sm:$0xff]
      %v2105 = vld [vmem:[%s2093 + $0xae] sm:$0xff]
      %v2106 = vld [vmem:[%s2093 + $0xc6] sm:$0xff]
      %v2107 = vld [vmem:[%s2093 + $0xce] sm:$0xff]
      %v2108 = vld [vmem:[%s2093 + $0xe6] sm:$0xff]
      %v2109 = vld [vmem:[%s2093 + $0xee] sm:$0xff]
      %v2110 = vmul.f32 %v435, %v2094
      %v2111 = vmul.f32 %v435, %v2095
      %v2112 = vmul.f32 %v435, %v2096
      %v2113 = vmul.f32 %v435, %v2097
      %v2114 = vmul.f32 %v435, %v2098
      %v2115 = vmul.f32 %v435, %v2099
      %v2116 = vmul.f32 %v435, %v2100
      %v2117 = vmul.f32 %v435, %v2101
      %v2118 = vmul.f32 %v435, %v2102
      %v2119 = vmul.f32 %v435, %v2103
      %v2120 = vmul.f32 %v435, %v2104
      %v2121 = vmul.f32 %v435, %v2105
      %v2122 = vmul.f32 %v435, %v2106
      %v2123 = vmul.f32 %v435, %v2107
      %v2124 = vmul.f32 %v435, %v2108
      %v2125 = vmul.f32 %v435, %v2109
      %v2126 = vld [vmem:[%s2093 + $0x7] sm:$0xff]
      %v2127 = vld [vmem:[%s2093 + $0xf] sm:$0xff]
      %v2128 = vld [vmem:[%s2093 + $0x27] sm:$0xff]
      %v2129 = vld [vmem:[%s2093 + $0x2f] sm:$0xff]
      %v2130 = vld [vmem:[%s2093 + $0x47] sm:$0xff]
      %v2131 = vld [vmem:[%s2093 + $0x4f] sm:$0xff]
      %v2132 = vld [vmem:[%s2093 + $0x67] sm:$0xff]
      %v2133 = vld [vmem:[%s2093 + $0x6f] sm:$0xff]
      %v2134 = vld [vmem:[%s2093 + $0x87] sm:$0xff]
      %v2135 = vld [vmem:[%s2093 + $0x8f] sm:$0xff]
      %v2136 = vld [vmem:[%s2093 + $0xa7] sm:$0xff]
      %v2137 = vld [vmem:[%s2093 + $0xaf] sm:$0xff]
      %v2138 = vld [vmem:[%s2093 + $0xc7] sm:$0xff]
      %v2139 = vld [vmem:[%s2093 + $0xcf] sm:$0xff]
      %v2140 = vld [vmem:[%s2093 + $0xe7] sm:$0xff]
      %v2141 = vld [vmem:[%s2093 + $0xef] sm:$0xff]
      %v2142 = vmul.f32 %v471, %v2126
      %v2143 = vmul.f32 %v471, %v2127
      %v2144 = vmul.f32 %v471, %v2128
      %v2145 = vmul.f32 %v471, %v2129
      %v2146 = vmul.f32 %v471, %v2130
      %v2147 = vmul.f32 %v471, %v2131
      %v2148 = vmul.f32 %v471, %v2132
      %v2149 = vmul.f32 %v471, %v2133
      %v2150 = vmul.f32 %v471, %v2134
      %v2151 = vmul.f32 %v471, %v2135
      %v2152 = vmul.f32 %v471, %v2136
      %v2153 = vmul.f32 %v471, %v2137
      %v2154 = vmul.f32 %v471, %v2138
      %v2155 = vmul.f32 %v471, %v2139
      %v2156 = vmul.f32 %v471, %v2140
      %v2157 = vmul.f32 %v471, %v2141
      %v2158 = vadd.f32 %v2110, %v2142
      %v2159 = vadd.f32 %v2111, %v2143
      %v2160 = vadd.f32 %v2112, %v2144
      %v2161 = vadd.f32 %v2113, %v2145
      %v2162 = vadd.f32 %v2114, %v2146
      %v2163 = vadd.f32 %v2115, %v2147
      %v2164 = vadd.f32 %v2116, %v2148
      %v2165 = vadd.f32 %v2117, %v2149
      %v2166 = vadd.f32 %v2118, %v2150
      %v2167 = vadd.f32 %v2119, %v2151
      %v2168 = vadd.f32 %v2120, %v2152
      %v2169 = vadd.f32 %v2121, %v2153
      %v2170 = vadd.f32 %v2122, %v2154
      %v2171 = vadd.f32 %v2123, %v2155
      %v2172 = vadd.f32 %v2124, %v2156
      %v2173 = vadd.f32 %v2125, %v2157
      %v2174 = vld [vmem:[%s2093 + $0x8] sm:$0xff]
      %v2175 = vld [vmem:[%s2093 + $0x10] sm:$0xff]
      %v2176 = vld [vmem:[%s2093 + $0x28] sm:$0xff]
      %v2177 = vld [vmem:[%s2093 + $0x30] sm:$0xff]
      %v2178 = vld [vmem:[%s2093 + $0x48] sm:$0xff]
      %v2179 = vld [vmem:[%s2093 + $0x50] sm:$0xff]
      %v2180 = vld [vmem:[%s2093 + $0x68] sm:$0xff]
      %v2181 = vld [vmem:[%s2093 + $0x70] sm:$0xff]
      %v2182 = vld [vmem:[%s2093 + $0x88] sm:$0xff]
      %v2183 = vld [vmem:[%s2093 + $0x90] sm:$0xff]
      %v2184 = vld [vmem:[%s2093 + $0xa8] sm:$0xff]
      %v2185 = vld [vmem:[%s2093 + $0xb0] sm:$0xff]
      %v2186 = vld [vmem:[%s2093 + $0xc8] sm:$0xff]
      %v2187 = vld [vmem:[%s2093 + $0xd0] sm:$0xff]
      %v2188 = vld [vmem:[%s2093 + $0xe8] sm:$0xff]
      %v2189 = vld [vmem:[%s2093 + $0xf0] sm:$0xff]
      %v2190 = vmul.f32 %v523, %v2174
      %v2191 = vmul.f32 %v523, %v2175
      %v2192 = vmul.f32 %v523, %v2176
      %v2193 = vmul.f32 %v523, %v2177
      %v2194 = vmul.f32 %v523, %v2178
      %v2195 = vmul.f32 %v523, %v2179
      %v2196 = vmul.f32 %v523, %v2180
      %v2197 = vmul.f32 %v523, %v2181
      %v2198 = vmul.f32 %v523, %v2182
      %v2199 = vmul.f32 %v523, %v2183
      %v2200 = vmul.f32 %v523, %v2184
      %v2201 = vmul.f32 %v523, %v2185
      %v2202 = vmul.f32 %v523, %v2186
      %v2203 = vmul.f32 %v523, %v2187
      %v2204 = vmul.f32 %v523, %v2188
      %v2205 = vmul.f32 %v523, %v2189
      %v2206 = vadd.f32 %v2158, %v2190
      %v2207 = vadd.f32 %v2159, %v2191
      %v2208 = vadd.f32 %v2160, %v2192
      %v2209 = vadd.f32 %v2161, %v2193
      %v2210 = vadd.f32 %v2162, %v2194
      %v2211 = vadd.f32 %v2163, %v2195
      %v2212 = vadd.f32 %v2164, %v2196
      %v2213 = vadd.f32 %v2165, %v2197
      %v2214 = vadd.f32 %v2166, %v2198
      %v2215 = vadd.f32 %v2167, %v2199
      %v2216 = vadd.f32 %v2168, %v2200
      %v2217 = vadd.f32 %v2169, %v2201
      %v2218 = vadd.f32 %v2170, %v2202
      %v2219 = vadd.f32 %v2171, %v2203
      %v2220 = vadd.f32 %v2172, %v2204
      %v2221 = vadd.f32 %v2173, %v2205
      %v2222 = vld [vmem:[%s2093 + $0x9] sm:$0xff]
      %v2223 = vld [vmem:[%s2093 + $0x11] sm:$0xff]
      %v2224 = vld [vmem:[%s2093 + $0x29] sm:$0xff]
      %v2225 = vld [vmem:[%s2093 + $0x31] sm:$0xff]
      %v2226 = vld [vmem:[%s2093 + $0x49] sm:$0xff]
      %v2227 = vld [vmem:[%s2093 + $0x51] sm:$0xff]
      %v2228 = vld [vmem:[%s2093 + $0x69] sm:$0xff]
      %v2229 = vld [vmem:[%s2093 + $0x71] sm:$0xff]
      %v2230 = vld [vmem:[%s2093 + $0x89] sm:$0xff]
      %v2231 = vld [vmem:[%s2093 + $0x91] sm:$0xff]
      %v2232 = vld [vmem:[%s2093 + $0xa9] sm:$0xff]
      %v2233 = vld [vmem:[%s2093 + $0xb1] sm:$0xff]
      %v2234 = vld [vmem:[%s2093 + $0xc9] sm:$0xff]
      %v2235 = vld [vmem:[%s2093 + $0xd1] sm:$0xff]
      %v2236 = vld [vmem:[%s2093 + $0xe9] sm:$0xff]
      %v2237 = vld [vmem:[%s2093 + $0xf1] sm:$0xff]
      %v2238 = vmul.f32 %v575, %v2222
      %v2239 = vmul.f32 %v575, %v2223
      %v2240 = vmul.f32 %v575, %v2224
      %v2241 = vmul.f32 %v575, %v2225
      %v2242 = vmul.f32 %v575, %v2226
      %v2243 = vmul.f32 %v575, %v2227
      %v2244 = vmul.f32 %v575, %v2228
      %v2245 = vmul.f32 %v575, %v2229
      %v2246 = vmul.f32 %v575, %v2230
      %v2247 = vmul.f32 %v575, %v2231
      %v2248 = vmul.f32 %v575, %v2232
      %v2249 = vmul.f32 %v575, %v2233
      %v2250 = vmul.f32 %v575, %v2234
      %v2251 = vmul.f32 %v575, %v2235
      %v2252 = vmul.f32 %v575, %v2236
      %v2253 = vmul.f32 %v575, %v2237
      %v2254 = vadd.f32 %v2206, %v2238
      %v2255 = vadd.f32 %v2207, %v2239
      %v2256 = vadd.f32 %v2208, %v2240
      %v2257 = vadd.f32 %v2209, %v2241
      %v2258 = vadd.f32 %v2210, %v2242
      %v2259 = vadd.f32 %v2211, %v2243
      %v2260 = vadd.f32 %v2212, %v2244
      %v2261 = vadd.f32 %v2213, %v2245
      %v2262 = vadd.f32 %v2214, %v2246
      %v2263 = vadd.f32 %v2215, %v2247
      %v2264 = vadd.f32 %v2216, %v2248
      %v2265 = vadd.f32 %v2217, %v2249
      %v2266 = vadd.f32 %v2218, %v2250
      %v2267 = vadd.f32 %v2219, %v2251
      %v2268 = vadd.f32 %v2220, %v2252
      %v2269 = vadd.f32 %v2221, %v2253
      %v2270 = vld [vmem:[%s2093 + $0xa] sm:$0xff]
      %v2271 = vld [vmem:[%s2093 + $0x12] sm:$0xff]
      %v2272 = vld [vmem:[%s2093 + $0x2a] sm:$0xff]
      %v2273 = vld [vmem:[%s2093 + $0x32] sm:$0xff]
      %v2274 = vld [vmem:[%s2093 + $0x4a] sm:$0xff]
      %v2275 = vld [vmem:[%s2093 + $0x52] sm:$0xff]
      %v2276 = vld [vmem:[%s2093 + $0x6a] sm:$0xff]
      %v2277 = vld [vmem:[%s2093 + $0x72] sm:$0xff]
      %v2278 = vld [vmem:[%s2093 + $0x8a] sm:$0xff]
      %v2279 = vld [vmem:[%s2093 + $0x92] sm:$0xff]
      %v2280 = vld [vmem:[%s2093 + $0xaa] sm:$0xff]
      %v2281 = vld [vmem:[%s2093 + $0xb2] sm:$0xff]
      %v2282 = vld [vmem:[%s2093 + $0xca] sm:$0xff]
      %v2283 = vld [vmem:[%s2093 + $0xd2] sm:$0xff]
      %v2284 = vld [vmem:[%s2093 + $0xea] sm:$0xff]
      %v2285 = vld [vmem:[%s2093 + $0xf2] sm:$0xff]
      %v2286 = vmul.f32 %v627, %v2270
      %v2287 = vmul.f32 %v627, %v2271
      %v2288 = vmul.f32 %v627, %v2272
      %v2289 = vmul.f32 %v627, %v2273
      %v2290 = vmul.f32 %v627, %v2274
      %v2291 = vmul.f32 %v627, %v2275
      %v2292 = vmul.f32 %v627, %v2276
      %v2293 = vmul.f32 %v627, %v2277
      %v2294 = vmul.f32 %v627, %v2278
      %v2295 = vmul.f32 %v627, %v2279
      %v2296 = vmul.f32 %v627, %v2280
      %v2297 = vmul.f32 %v627, %v2281
      %v2298 = vmul.f32 %v627, %v2282
      %v2299 = vmul.f32 %v627, %v2283
      %v2300 = vmul.f32 %v627, %v2284
      %v2301 = vmul.f32 %v627, %v2285
      %v2302 = vadd.f32 %v2254, %v2286
      %v2303 = vadd.f32 %v2255, %v2287
      %v2304 = vadd.f32 %v2256, %v2288
      %v2305 = vadd.f32 %v2257, %v2289
      %v2306 = vadd.f32 %v2258, %v2290
      %v2307 = vadd.f32 %v2259, %v2291
      %v2308 = vadd.f32 %v2260, %v2292
      %v2309 = vadd.f32 %v2261, %v2293
      %v2310 = vadd.f32 %v2262, %v2294
      %v2311 = vadd.f32 %v2263, %v2295
      %v2312 = vadd.f32 %v2264, %v2296
      %v2313 = vadd.f32 %v2265, %v2297
      %v2314 = vadd.f32 %v2266, %v2298
      %v2315 = vadd.f32 %v2267, %v2299
      %v2316 = vadd.f32 %v2268, %v2300
      %v2317 = vadd.f32 %v2269, %v2301
      %s2318 = scalar_lea.vmem [#allocation2], 288
      %v2319 = vld [vmem:[%s2318 + $0x6] sm:$0xff]
      %v2320 = vld [vmem:[%s2318 + $0xe] sm:$0xff]
      %v2321 = vld [vmem:[%s2318 + $0x26] sm:$0xff]
      %v2322 = vld [vmem:[%s2318 + $0x2e] sm:$0xff]
      %v2323 = vld [vmem:[%s2318 + $0x46] sm:$0xff]
      %v2324 = vld [vmem:[%s2318 + $0x4e] sm:$0xff]
      %v2325 = vld [vmem:[%s2318 + $0x66] sm:$0xff]
      %v2326 = vld [vmem:[%s2318 + $0x6e] sm:$0xff]
      %v2327 = vld [vmem:[%s2318 + $0x86] sm:$0xff]
      %v2328 = vld [vmem:[%s2318 + $0x8e] sm:$0xff]
      %v2329 = vld [vmem:[%s2318 + $0xa6] sm:$0xff]
      %v2330 = vld [vmem:[%s2318 + $0xae] sm:$0xff]
      %v2331 = vld [vmem:[%s2318 + $0xc6] sm:$0xff]
      %v2332 = vld [vmem:[%s2318 + $0xce] sm:$0xff]
      %v2333 = vld [vmem:[%s2318 + $0xe6] sm:$0xff]
      %v2334 = vld [vmem:[%s2318 + $0xee] sm:$0xff]
      %v2335 = vmul.f32 %v680, %v2319
      %v2336 = vmul.f32 %v680, %v2320
      %v2337 = vmul.f32 %v680, %v2321
      %v2338 = vmul.f32 %v680, %v2322
      %v2339 = vmul.f32 %v680, %v2323
      %v2340 = vmul.f32 %v680, %v2324
      %v2341 = vmul.f32 %v680, %v2325
      %v2342 = vmul.f32 %v680, %v2326
      %v2343 = vmul.f32 %v680, %v2327
      %v2344 = vmul.f32 %v680, %v2328
      %v2345 = vmul.f32 %v680, %v2329
      %v2346 = vmul.f32 %v680, %v2330
      %v2347 = vmul.f32 %v680, %v2331
      %v2348 = vmul.f32 %v680, %v2332
      %v2349 = vmul.f32 %v680, %v2333
      %v2350 = vmul.f32 %v680, %v2334
      %v2351 = vadd.f32 %v2302, %v2335
      %v2352 = vadd.f32 %v2303, %v2336
      %v2353 = vadd.f32 %v2304, %v2337
      %v2354 = vadd.f32 %v2305, %v2338
      %v2355 = vadd.f32 %v2306, %v2339
      %v2356 = vadd.f32 %v2307, %v2340
      %v2357 = vadd.f32 %v2308, %v2341
      %v2358 = vadd.f32 %v2309, %v2342
      %v2359 = vadd.f32 %v2310, %v2343
      %v2360 = vadd.f32 %v2311, %v2344
      %v2361 = vadd.f32 %v2312, %v2345
      %v2362 = vadd.f32 %v2313, %v2346
      %v2363 = vadd.f32 %v2314, %v2347
      %v2364 = vadd.f32 %v2315, %v2348
      %v2365 = vadd.f32 %v2316, %v2349
      %v2366 = vadd.f32 %v2317, %v2350
      %v2367 = vld [vmem:[%s2318 + $0x7] sm:$0xff]
      %v2368 = vld [vmem:[%s2318 + $0xf] sm:$0xff]
      %v2369 = vld [vmem:[%s2318 + $0x27] sm:$0xff]
      %v2370 = vld [vmem:[%s2318 + $0x2f] sm:$0xff]
      %v2371 = vld [vmem:[%s2318 + $0x47] sm:$0xff]
      %v2372 = vld [vmem:[%s2318 + $0x4f] sm:$0xff]
      %v2373 = vld [vmem:[%s2318 + $0x67] sm:$0xff]
      %v2374 = vld [vmem:[%s2318 + $0x6f] sm:$0xff]
      %v2375 = vld [vmem:[%s2318 + $0x87] sm:$0xff]
      %v2376 = vld [vmem:[%s2318 + $0x8f] sm:$0xff]
      %v2377 = vld [vmem:[%s2318 + $0xa7] sm:$0xff]
      %v2378 = vld [vmem:[%s2318 + $0xaf] sm:$0xff]
      %v2379 = vld [vmem:[%s2318 + $0xc7] sm:$0xff]
      %v2380 = vld [vmem:[%s2318 + $0xcf] sm:$0xff]
      %v2381 = vld [vmem:[%s2318 + $0xe7] sm:$0xff]
      %v2382 = vld [vmem:[%s2318 + $0xef] sm:$0xff]
      %v2383 = vmul.f32 %v732, %v2367
      %v2384 = vmul.f32 %v732, %v2368
      %v2385 = vmul.f32 %v732, %v2369
      %v2386 = vmul.f32 %v732, %v2370
      %v2387 = vmul.f32 %v732, %v2371
      %v2388 = vmul.f32 %v732, %v2372
      %v2389 = vmul.f32 %v732, %v2373
      %v2390 = vmul.f32 %v732, %v2374
      %v2391 = vmul.f32 %v732, %v2375
      %v2392 = vmul.f32 %v732, %v2376
      %v2393 = vmul.f32 %v732, %v2377
      %v2394 = vmul.f32 %v732, %v2378
      %v2395 = vmul.f32 %v732, %v2379
      %v2396 = vmul.f32 %v732, %v2380
      %v2397 = vmul.f32 %v732, %v2381
      %v2398 = vmul.f32 %v732, %v2382
      %v2399 = vadd.f32 %v2351, %v2383
      %v2400 = vadd.f32 %v2352, %v2384
      %v2401 = vadd.f32 %v2353, %v2385
      %v2402 = vadd.f32 %v2354, %v2386
      %v2403 = vadd.f32 %v2355, %v2387
      %v2404 = vadd.f32 %v2356, %v2388
      %v2405 = vadd.f32 %v2357, %v2389
      %v2406 = vadd.f32 %v2358, %v2390
      %v2407 = vadd.f32 %v2359, %v2391
      %v2408 = vadd.f32 %v2360, %v2392
      %v2409 = vadd.f32 %v2361, %v2393
      %v2410 = vadd.f32 %v2362, %v2394
      %v2411 = vadd.f32 %v2363, %v2395
      %v2412 = vadd.f32 %v2364, %v2396
      %v2413 = vadd.f32 %v2365, %v2397
      %v2414 = vadd.f32 %v2366, %v2398
      %v2415 = vld [vmem:[%s2318 + $0x8] sm:$0xff]
      %v2416 = vld [vmem:[%s2318 + $0x10] sm:$0xff]
      %v2417 = vld [vmem:[%s2318 + $0x28] sm:$0xff]
      %v2418 = vld [vmem:[%s2318 + $0x30] sm:$0xff]
      %v2419 = vld [vmem:[%s2318 + $0x48] sm:$0xff]
      %v2420 = vld [vmem:[%s2318 + $0x50] sm:$0xff]
      %v2421 = vld [vmem:[%s2318 + $0x68] sm:$0xff]
      %v2422 = vld [vmem:[%s2318 + $0x70] sm:$0xff]
      %v2423 = vld [vmem:[%s2318 + $0x88] sm:$0xff]
      %v2424 = vld [vmem:[%s2318 + $0x90] sm:$0xff]
      %v2425 = vld [vmem:[%s2318 + $0xa8] sm:$0xff]
      %v2426 = vld [vmem:[%s2318 + $0xb0] sm:$0xff]
      %v2427 = vld [vmem:[%s2318 + $0xc8] sm:$0xff]
      %v2428 = vld [vmem:[%s2318 + $0xd0] sm:$0xff]
      %v2429 = vld [vmem:[%s2318 + $0xe8] sm:$0xff]
      %v2430 = vld [vmem:[%s2318 + $0xf0] sm:$0xff]
      %v2431 = vmul.f32 %v784, %v2415
      %v2432 = vmul.f32 %v784, %v2416
      %v2433 = vmul.f32 %v784, %v2417
      %v2434 = vmul.f32 %v784, %v2418
      %v2435 = vmul.f32 %v784, %v2419
      %v2436 = vmul.f32 %v784, %v2420
      %v2437 = vmul.f32 %v784, %v2421
      %v2438 = vmul.f32 %v784, %v2422
      %v2439 = vmul.f32 %v784, %v2423
      %v2440 = vmul.f32 %v784, %v2424
      %v2441 = vmul.f32 %v784, %v2425
      %v2442 = vmul.f32 %v784, %v2426
      %v2443 = vmul.f32 %v784, %v2427
      %v2444 = vmul.f32 %v784, %v2428
      %v2445 = vmul.f32 %v784, %v2429
      %v2446 = vmul.f32 %v784, %v2430
      %v2447 = vadd.f32 %v2399, %v2431
      %v2448 = vadd.f32 %v2400, %v2432
      %v2449 = vadd.f32 %v2401, %v2433
      %v2450 = vadd.f32 %v2402, %v2434
      %v2451 = vadd.f32 %v2403, %v2435
      %v2452 = vadd.f32 %v2404, %v2436
      %v2453 = vadd.f32 %v2405, %v2437
      %v2454 = vadd.f32 %v2406, %v2438
      %v2455 = vadd.f32 %v2407, %v2439
      %v2456 = vadd.f32 %v2408, %v2440
      %v2457 = vadd.f32 %v2409, %v2441
      %v2458 = vadd.f32 %v2410, %v2442
      %v2459 = vadd.f32 %v2411, %v2443
      %v2460 = vadd.f32 %v2412, %v2444
      %v2461 = vadd.f32 %v2413, %v2445
      %v2462 = vadd.f32 %v2414, %v2446
      %v2463 = vld [vmem:[%s2318 + $0x9] sm:$0xff]
      %v2464 = vld [vmem:[%s2318 + $0x11] sm:$0xff]
      %v2465 = vld [vmem:[%s2318 + $0x29] sm:$0xff]
      %v2466 = vld [vmem:[%s2318 + $0x31] sm:$0xff]
      %v2467 = vld [vmem:[%s2318 + $0x49] sm:$0xff]
      %v2468 = vld [vmem:[%s2318 + $0x51] sm:$0xff]
      %v2469 = vld [vmem:[%s2318 + $0x69] sm:$0xff]
      %v2470 = vld [vmem:[%s2318 + $0x71] sm:$0xff]
      %v2471 = vld [vmem:[%s2318 + $0x89] sm:$0xff]
      %v2472 = vld [vmem:[%s2318 + $0x91] sm:$0xff]
      %v2473 = vld [vmem:[%s2318 + $0xa9] sm:$0xff]
      %v2474 = vld [vmem:[%s2318 + $0xb1] sm:$0xff]
      %v2475 = vld [vmem:[%s2318 + $0xc9] sm:$0xff]
      %v2476 = vld [vmem:[%s2318 + $0xd1] sm:$0xff]
      %v2477 = vld [vmem:[%s2318 + $0xe9] sm:$0xff]
      %v2478 = vld [vmem:[%s2318 + $0xf1] sm:$0xff]
      %v2479 = vmul.f32 %v836, %v2463
      %v2480 = vmul.f32 %v836, %v2464
      %v2481 = vmul.f32 %v836, %v2465
      %v2482 = vmul.f32 %v836, %v2466
      %v2483 = vmul.f32 %v836, %v2467
      %v2484 = vmul.f32 %v836, %v2468
      %v2485 = vmul.f32 %v836, %v2469
      %v2486 = vmul.f32 %v836, %v2470
      %v2487 = vmul.f32 %v836, %v2471
      %v2488 = vmul.f32 %v836, %v2472
      %v2489 = vmul.f32 %v836, %v2473
      %v2490 = vmul.f32 %v836, %v2474
      %v2491 = vmul.f32 %v836, %v2475
      %v2492 = vmul.f32 %v836, %v2476
      %v2493 = vmul.f32 %v836, %v2477
      %v2494 = vmul.f32 %v836, %v2478
      %v2495 = vadd.f32 %v2447, %v2479
      %v2496 = vadd.f32 %v2448, %v2480
      %v2497 = vadd.f32 %v2449, %v2481
      %v2498 = vadd.f32 %v2450, %v2482
      %v2499 = vadd.f32 %v2451, %v2483
      %v2500 = vadd.f32 %v2452, %v2484
      %v2501 = vadd.f32 %v2453, %v2485
      %v2502 = vadd.f32 %v2454, %v2486
      %v2503 = vadd.f32 %v2455, %v2487
      %v2504 = vadd.f32 %v2456, %v2488
      %v2505 = vadd.f32 %v2457, %v2489
      %v2506 = vadd.f32 %v2458, %v2490
      %v2507 = vadd.f32 %v2459, %v2491
      %v2508 = vadd.f32 %v2460, %v2492
      %v2509 = vadd.f32 %v2461, %v2493
      %v2510 = vadd.f32 %v2462, %v2494
      %v2511 = vld [vmem:[%s2318 + $0xa] sm:$0xff]
      %v2512 = vld [vmem:[%s2318 + $0x12] sm:$0xff]
      %v2513 = vld [vmem:[%s2318 + $0x2a] sm:$0xff]
      %v2514 = vld [vmem:[%s2318 + $0x32] sm:$0xff]
      %v2515 = vld [vmem:[%s2318 + $0x4a] sm:$0xff]
      %v2516 = vld [vmem:[%s2318 + $0x52] sm:$0xff]
      %v2517 = vld [vmem:[%s2318 + $0x6a] sm:$0xff]
      %v2518 = vld [vmem:[%s2318 + $0x72] sm:$0xff]
      %v2519 = vld [vmem:[%s2318 + $0x8a] sm:$0xff]
      %v2520 = vld [vmem:[%s2318 + $0x92] sm:$0xff]
      %v2521 = vld [vmem:[%s2318 + $0xaa] sm:$0xff]
      %v2522 = vld [vmem:[%s2318 + $0xb2] sm:$0xff]
      %v2523 = vld [vmem:[%s2318 + $0xca] sm:$0xff]
      %v2524 = vld [vmem:[%s2318 + $0xd2] sm:$0xff]
      %v2525 = vld [vmem:[%s2318 + $0xea] sm:$0xff]
      %v2526 = vld [vmem:[%s2318 + $0xf2] sm:$0xff]
      %v2527 = vmul.f32 %v888, %v2511
      %v2528 = vmul.f32 %v888, %v2512
      %v2529 = vmul.f32 %v888, %v2513
      %v2530 = vmul.f32 %v888, %v2514
      %v2531 = vmul.f32 %v888, %v2515
      %v2532 = vmul.f32 %v888, %v2516
      %v2533 = vmul.f32 %v888, %v2517
      %v2534 = vmul.f32 %v888, %v2518
      %v2535 = vmul.f32 %v888, %v2519
      %v2536 = vmul.f32 %v888, %v2520
      %v2537 = vmul.f32 %v888, %v2521
      %v2538 = vmul.f32 %v888, %v2522
      %v2539 = vmul.f32 %v888, %v2523
      %v2540 = vmul.f32 %v888, %v2524
      %v2541 = vmul.f32 %v888, %v2525
      %v2542 = vmul.f32 %v888, %v2526
      %v2543 = vadd.f32 %v2495, %v2527
      %v2544 = vadd.f32 %v2496, %v2528
      %v2545 = vadd.f32 %v2497, %v2529
      %v2546 = vadd.f32 %v2498, %v2530
      %v2547 = vadd.f32 %v2499, %v2531
      %v2548 = vadd.f32 %v2500, %v2532
      %v2549 = vadd.f32 %v2501, %v2533
      %v2550 = vadd.f32 %v2502, %v2534
      %v2551 = vadd.f32 %v2503, %v2535
      %v2552 = vadd.f32 %v2504, %v2536
      %v2553 = vadd.f32 %v2505, %v2537
      %v2554 = vadd.f32 %v2506, %v2538
      %v2555 = vadd.f32 %v2507, %v2539
      %v2556 = vadd.f32 %v2508, %v2540
      %v2557 = vadd.f32 %v2509, %v2541
      %v2558 = vadd.f32 %v2510, %v2542
      %s2559 = scalar_lea.vmem [#allocation2], 320
      %v2560 = vld [vmem:[%s2559 + $0x6] sm:$0xff]
      %v2561 = vld [vmem:[%s2559 + $0xe] sm:$0xff]
      %v2562 = vld [vmem:[%s2559 + $0x26] sm:$0xff]
      %v2563 = vld [vmem:[%s2559 + $0x2e] sm:$0xff]
      %v2564 = vld [vmem:[%s2559 + $0x46] sm:$0xff]
      %v2565 = vld [vmem:[%s2559 + $0x4e] sm:$0xff]
      %v2566 = vld [vmem:[%s2559 + $0x66] sm:$0xff]
      %v2567 = vld [vmem:[%s2559 + $0x6e] sm:$0xff]
      %v2568 = vld [vmem:[%s2559 + $0x86] sm:$0xff]
      %v2569 = vld [vmem:[%s2559 + $0x8e] sm:$0xff]
      %v2570 = vld [vmem:[%s2559 + $0xa6] sm:$0xff]
      %v2571 = vld [vmem:[%s2559 + $0xae] sm:$0xff]
      %v2572 = vld [vmem:[%s2559 + $0xc6] sm:$0xff]
      %v2573 = vld [vmem:[%s2559 + $0xce] sm:$0xff]
      %v2574 = vld [vmem:[%s2559 + $0xe6] sm:$0xff]
      %v2575 = vld [vmem:[%s2559 + $0xee] sm:$0xff]
      %v2576 = vmul.f32 %v940, %v2560
      %v2577 = vmul.f32 %v940, %v2561
      %v2578 = vmul.f32 %v940, %v2562
      %v2579 = vmul.f32 %v940, %v2563
      %v2580 = vmul.f32 %v940, %v2564
      %v2581 = vmul.f32 %v940, %v2565
      %v2582 = vmul.f32 %v940, %v2566
      %v2583 = vmul.f32 %v940, %v2567
      %v2584 = vmul.f32 %v940, %v2568
      %v2585 = vmul.f32 %v940, %v2569
      %v2586 = vmul.f32 %v940, %v2570
      %v2587 = vmul.f32 %v940, %v2571
      %v2588 = vmul.f32 %v940, %v2572
      %v2589 = vmul.f32 %v940, %v2573
      %v2590 = vmul.f32 %v940, %v2574
      %v2591 = vmul.f32 %v940, %v2575
      %v2592 = vadd.f32 %v2543, %v2576
      %v2593 = vadd.f32 %v2544, %v2577
      %v2594 = vadd.f32 %v2545, %v2578
      %v2595 = vadd.f32 %v2546, %v2579
      %v2596 = vadd.f32 %v2547, %v2580
      %v2597 = vadd.f32 %v2548, %v2581
      %v2598 = vadd.f32 %v2549, %v2582
      %v2599 = vadd.f32 %v2550, %v2583
      %v2600 = vadd.f32 %v2551, %v2584
      %v2601 = vadd.f32 %v2552, %v2585
      %v2602 = vadd.f32 %v2553, %v2586
      %v2603 = vadd.f32 %v2554, %v2587
      %v2604 = vadd.f32 %v2555, %v2588
      %v2605 = vadd.f32 %v2556, %v2589
      %v2606 = vadd.f32 %v2557, %v2590
      %v2607 = vadd.f32 %v2558, %v2591
      %v2608 = vld [vmem:[%s2559 + $0x7] sm:$0xff]
      %v2609 = vld [vmem:[%s2559 + $0xf] sm:$0xff]
      %v2610 = vld [vmem:[%s2559 + $0x27] sm:$0xff]
      %v2611 = vld [vmem:[%s2559 + $0x2f] sm:$0xff]
      %v2612 = vld [vmem:[%s2559 + $0x47] sm:$0xff]
      %v2613 = vld [vmem:[%s2559 + $0x4f] sm:$0xff]
      %v2614 = vld [vmem:[%s2559 + $0x67] sm:$0xff]
      %v2615 = vld [vmem:[%s2559 + $0x6f] sm:$0xff]
      %v2616 = vld [vmem:[%s2559 + $0x87] sm:$0xff]
      %v2617 = vld [vmem:[%s2559 + $0x8f] sm:$0xff]
      %v2618 = vld [vmem:[%s2559 + $0xa7] sm:$0xff]
      %v2619 = vld [vmem:[%s2559 + $0xaf] sm:$0xff]
      %v2620 = vld [vmem:[%s2559 + $0xc7] sm:$0xff]
      %v2621 = vld [vmem:[%s2559 + $0xcf] sm:$0xff]
      %v2622 = vld [vmem:[%s2559 + $0xe7] sm:$0xff]
      %v2623 = vld [vmem:[%s2559 + $0xef] sm:$0xff]
      %v2624 = vmul.f32 %v992, %v2608
      %v2625 = vmul.f32 %v992, %v2609
      %v2626 = vmul.f32 %v992, %v2610
      %v2627 = vmul.f32 %v992, %v2611
      %v2628 = vmul.f32 %v992, %v2612
      %v2629 = vmul.f32 %v992, %v2613
      %v2630 = vmul.f32 %v992, %v2614
      %v2631 = vmul.f32 %v992, %v2615
      %v2632 = vmul.f32 %v992, %v2616
      %v2633 = vmul.f32 %v992, %v2617
      %v2634 = vmul.f32 %v992, %v2618
      %v2635 = vmul.f32 %v992, %v2619
      %v2636 = vmul.f32 %v992, %v2620
      %v2637 = vmul.f32 %v992, %v2621
      %v2638 = vmul.f32 %v992, %v2622
      %v2639 = vmul.f32 %v992, %v2623
      %v2640 = vadd.f32 %v2592, %v2624
      %v2641 = vadd.f32 %v2593, %v2625
      %v2642 = vadd.f32 %v2594, %v2626
      %v2643 = vadd.f32 %v2595, %v2627
      %v2644 = vadd.f32 %v2596, %v2628
      %v2645 = vadd.f32 %v2597, %v2629
      %v2646 = vadd.f32 %v2598, %v2630
      %v2647 = vadd.f32 %v2599, %v2631
      %v2648 = vadd.f32 %v2600, %v2632
      %v2649 = vadd.f32 %v2601, %v2633
      %v2650 = vadd.f32 %v2602, %v2634
      %v2651 = vadd.f32 %v2603, %v2635
      %v2652 = vadd.f32 %v2604, %v2636
      %v2653 = vadd.f32 %v2605, %v2637
      %v2654 = vadd.f32 %v2606, %v2638
      %v2655 = vadd.f32 %v2607, %v2639
      %v2656 = vld [vmem:[%s2559 + $0x8] sm:$0xff]
      %v2657 = vld [vmem:[%s2559 + $0x10] sm:$0xff]
      %v2658 = vld [vmem:[%s2559 + $0x28] sm:$0xff]
      %v2659 = vld [vmem:[%s2559 + $0x30] sm:$0xff]
      %v2660 = vld [vmem:[%s2559 + $0x48] sm:$0xff]
      %v2661 = vld [vmem:[%s2559 + $0x50] sm:$0xff]
      %v2662 = vld [vmem:[%s2559 + $0x68] sm:$0xff]
      %v2663 = vld [vmem:[%s2559 + $0x70] sm:$0xff]
      %v2664 = vld [vmem:[%s2559 + $0x88] sm:$0xff]
      %v2665 = vld [vmem:[%s2559 + $0x90] sm:$0xff]
      %v2666 = vld [vmem:[%s2559 + $0xa8] sm:$0xff]
      %v2667 = vld [vmem:[%s2559 + $0xb0] sm:$0xff]
      %v2668 = vld [vmem:[%s2559 + $0xc8] sm:$0xff]
      %v2669 = vld [vmem:[%s2559 + $0xd0] sm:$0xff]
      %v2670 = vld [vmem:[%s2559 + $0xe8] sm:$0xff]
      %v2671 = vld [vmem:[%s2559 + $0xf0] sm:$0xff]
      %v2672 = vmul.f32 %v1044, %v2656
      %v2673 = vmul.f32 %v1044, %v2657
      %v2674 = vmul.f32 %v1044, %v2658
      %v2675 = vmul.f32 %v1044, %v2659
      %v2676 = vmul.f32 %v1044, %v2660
      %v2677 = vmul.f32 %v1044, %v2661
      %v2678 = vmul.f32 %v1044, %v2662
      %v2679 = vmul.f32 %v1044, %v2663
      %v2680 = vmul.f32 %v1044, %v2664
      %v2681 = vmul.f32 %v1044, %v2665
      %v2682 = vmul.f32 %v1044, %v2666
      %v2683 = vmul.f32 %v1044, %v2667
      %v2684 = vmul.f32 %v1044, %v2668
      %v2685 = vmul.f32 %v1044, %v2669
      %v2686 = vmul.f32 %v1044, %v2670
      %v2687 = vmul.f32 %v1044, %v2671
      %v2688 = vadd.f32 %v2640, %v2672
      %v2689 = vadd.f32 %v2641, %v2673
      %v2690 = vadd.f32 %v2642, %v2674
      %v2691 = vadd.f32 %v2643, %v2675
      %v2692 = vadd.f32 %v2644, %v2676
      %v2693 = vadd.f32 %v2645, %v2677
      %v2694 = vadd.f32 %v2646, %v2678
      %v2695 = vadd.f32 %v2647, %v2679
      %v2696 = vadd.f32 %v2648, %v2680
      %v2697 = vadd.f32 %v2649, %v2681
      %v2698 = vadd.f32 %v2650, %v2682
      %v2699 = vadd.f32 %v2651, %v2683
      %v2700 = vadd.f32 %v2652, %v2684
      %v2701 = vadd.f32 %v2653, %v2685
      %v2702 = vadd.f32 %v2654, %v2686
      %v2703 = vadd.f32 %v2655, %v2687
      %v2704 = vld [vmem:[%s2559 + $0x9] sm:$0xff]
      %v2705 = vld [vmem:[%s2559 + $0x11] sm:$0xff]
      %v2706 = vld [vmem:[%s2559 + $0x29] sm:$0xff]
      %v2707 = vld [vmem:[%s2559 + $0x31] sm:$0xff]
      %v2708 = vld [vmem:[%s2559 + $0x49] sm:$0xff]
      %v2709 = vld [vmem:[%s2559 + $0x51] sm:$0xff]
      %v2710 = vld [vmem:[%s2559 + $0x69] sm:$0xff]
      %v2711 = vld [vmem:[%s2559 + $0x71] sm:$0xff]
      %v2712 = vld [vmem:[%s2559 + $0x89] sm:$0xff]
      %v2713 = vld [vmem:[%s2559 + $0x91] sm:$0xff]
      %v2714 = vld [vmem:[%s2559 + $0xa9] sm:$0xff]
      %v2715 = vld [vmem:[%s2559 + $0xb1] sm:$0xff]
      %v2716 = vld [vmem:[%s2559 + $0xc9] sm:$0xff]
      %v2717 = vld [vmem:[%s2559 + $0xd1] sm:$0xff]
      %v2718 = vld [vmem:[%s2559 + $0xe9] sm:$0xff]
      %v2719 = vld [vmem:[%s2559 + $0xf1] sm:$0xff]
      %v2720 = vmul.f32 %v1096, %v2704
      %v2721 = vmul.f32 %v1096, %v2705
      %v2722 = vmul.f32 %v1096, %v2706
      %v2723 = vmul.f32 %v1096, %v2707
      %v2724 = vmul.f32 %v1096, %v2708
      %v2725 = vmul.f32 %v1096, %v2709
      %v2726 = vmul.f32 %v1096, %v2710
      %v2727 = vmul.f32 %v1096, %v2711
      %v2728 = vmul.f32 %v1096, %v2712
      %v2729 = vmul.f32 %v1096, %v2713
      %v2730 = vmul.f32 %v1096, %v2714
      %v2731 = vmul.f32 %v1096, %v2715
      %v2732 = vmul.f32 %v1096, %v2716
      %v2733 = vmul.f32 %v1096, %v2717
      %v2734 = vmul.f32 %v1096, %v2718
      %v2735 = vmul.f32 %v1096, %v2719
      %v2736 = vadd.f32 %v2688, %v2720
      %v2737 = vadd.f32 %v2689, %v2721
      %v2738 = vadd.f32 %v2690, %v2722
      %v2739 = vadd.f32 %v2691, %v2723
      %v2740 = vadd.f32 %v2692, %v2724
      %v2741 = vadd.f32 %v2693, %v2725
      %v2742 = vadd.f32 %v2694, %v2726
      %v2743 = vadd.f32 %v2695, %v2727
      %v2744 = vadd.f32 %v2696, %v2728
      %v2745 = vadd.f32 %v2697, %v2729
      %v2746 = vadd.f32 %v2698, %v2730
      %v2747 = vadd.f32 %v2699, %v2731
      %v2748 = vadd.f32 %v2700, %v2732
      %v2749 = vadd.f32 %v2701, %v2733
      %v2750 = vadd.f32 %v2702, %v2734
      %v2751 = vadd.f32 %v2703, %v2735
      %v2752 = vld [vmem:[%s2559 + $0xa] sm:$0xff]
      %v2753 = vld [vmem:[%s2559 + $0x12] sm:$0xff]
      %v2754 = vld [vmem:[%s2559 + $0x2a] sm:$0xff]
      %v2755 = vld [vmem:[%s2559 + $0x32] sm:$0xff]
      %v2756 = vld [vmem:[%s2559 + $0x4a] sm:$0xff]
      %v2757 = vld [vmem:[%s2559 + $0x52] sm:$0xff]
      %v2758 = vld [vmem:[%s2559 + $0x6a] sm:$0xff]
      %v2759 = vld [vmem:[%s2559 + $0x72] sm:$0xff]
      %v2760 = vld [vmem:[%s2559 + $0x8a] sm:$0xff]
      %v2761 = vld [vmem:[%s2559 + $0x92] sm:$0xff]
      %v2762 = vld [vmem:[%s2559 + $0xaa] sm:$0xff]
      %v2763 = vld [vmem:[%s2559 + $0xb2] sm:$0xff]
      %v2764 = vld [vmem:[%s2559 + $0xca] sm:$0xff]
      %v2765 = vld [vmem:[%s2559 + $0xd2] sm:$0xff]
      %v2766 = vld [vmem:[%s2559 + $0xea] sm:$0xff]
      %v2767 = vld [vmem:[%s2559 + $0xf2] sm:$0xff]
      %v2768 = vmul.f32 %v1148, %v2752
      %v2769 = vmul.f32 %v1148, %v2753
      %v2770 = vmul.f32 %v1148, %v2754
      %v2771 = vmul.f32 %v1148, %v2755
      %v2772 = vmul.f32 %v1148, %v2756
      %v2773 = vmul.f32 %v1148, %v2757
      %v2774 = vmul.f32 %v1148, %v2758
      %v2775 = vmul.f32 %v1148, %v2759
      %v2776 = vmul.f32 %v1148, %v2760
      %v2777 = vmul.f32 %v1148, %v2761
      %v2778 = vmul.f32 %v1148, %v2762
      %v2779 = vmul.f32 %v1148, %v2763
      %v2780 = vmul.f32 %v1148, %v2764
      %v2781 = vmul.f32 %v1148, %v2765
      %v2782 = vmul.f32 %v1148, %v2766
      %v2783 = vmul.f32 %v1148, %v2767
      %v2784 = vadd.f32 %v2736, %v2768
      %v2785 = vadd.f32 %v2737, %v2769
      %v2786 = vadd.f32 %v2738, %v2770
      %v2787 = vadd.f32 %v2739, %v2771
      %v2788 = vadd.f32 %v2740, %v2772
      %v2789 = vadd.f32 %v2741, %v2773
      %v2790 = vadd.f32 %v2742, %v2774
      %v2791 = vadd.f32 %v2743, %v2775
      %v2792 = vadd.f32 %v2744, %v2776
      %v2793 = vadd.f32 %v2745, %v2777
      %v2794 = vadd.f32 %v2746, %v2778
      %v2795 = vadd.f32 %v2747, %v2779
      %v2796 = vadd.f32 %v2748, %v2780
      %v2797 = vadd.f32 %v2749, %v2781
      %v2798 = vadd.f32 %v2750, %v2782
      %v2799 = vadd.f32 %v2751, %v2783
      %s2800 = scalar_lea.vmem [#allocation2], 352
      %v2801 = vld [vmem:[%s2800 + $0x6] sm:$0xff]
      %v2802 = vld [vmem:[%s2800 + $0xe] sm:$0xff]
      %v2803 = vld [vmem:[%s2800 + $0x26] sm:$0xff]
      %v2804 = vld [vmem:[%s2800 + $0x2e] sm:$0xff]
      %v2805 = vld [vmem:[%s2800 + $0x46] sm:$0xff]
      %v2806 = vld [vmem:[%s2800 + $0x4e] sm:$0xff]
      %v2807 = vld [vmem:[%s2800 + $0x66] sm:$0xff]
      %v2808 = vld [vmem:[%s2800 + $0x6e] sm:$0xff]
      %v2809 = vld [vmem:[%s2800 + $0x86] sm:$0xff]
      %v2810 = vld [vmem:[%s2800 + $0x8e] sm:$0xff]
      %v2811 = vld [vmem:[%s2800 + $0xa6] sm:$0xff]
      %v2812 = vld [vmem:[%s2800 + $0xae] sm:$0xff]
      %v2813 = vld [vmem:[%s2800 + $0xc6] sm:$0xff]
      %v2814 = vld [vmem:[%s2800 + $0xce] sm:$0xff]
      %v2815 = vld [vmem:[%s2800 + $0xe6] sm:$0xff]
      %v2816 = vld [vmem:[%s2800 + $0xee] sm:$0xff]
      %v2817 = vmul.f32 %v1201, %v2801
      %v2818 = vmul.f32 %v1201, %v2802
      %v2819 = vmul.f32 %v1201, %v2803
      %v2820 = vmul.f32 %v1201, %v2804
      %v2821 = vmul.f32 %v1201, %v2805
      %v2822 = vmul.f32 %v1201, %v2806
      %v2823 = vmul.f32 %v1201, %v2807
      %v2824 = vmul.f32 %v1201, %v2808
      %v2825 = vmul.f32 %v1201, %v2809
      %v2826 = vmul.f32 %v1201, %v2810
      %v2827 = vmul.f32 %v1201, %v2811
      %v2828 = vmul.f32 %v1201, %v2812
      %v2829 = vmul.f32 %v1201, %v2813
      %v2830 = vmul.f32 %v1201, %v2814
      %v2831 = vmul.f32 %v1201, %v2815
      %v2832 = vmul.f32 %v1201, %v2816
      %v2833 = vadd.f32 %v2784, %v2817
      %v2834 = vadd.f32 %v2785, %v2818
      %v2835 = vadd.f32 %v2786, %v2819
      %v2836 = vadd.f32 %v2787, %v2820
      %v2837 = vadd.f32 %v2788, %v2821
      %v2838 = vadd.f32 %v2789, %v2822
      %v2839 = vadd.f32 %v2790, %v2823
      %v2840 = vadd.f32 %v2791, %v2824
      %v2841 = vadd.f32 %v2792, %v2825
      %v2842 = vadd.f32 %v2793, %v2826
      %v2843 = vadd.f32 %v2794, %v2827
      %v2844 = vadd.f32 %v2795, %v2828
      %v2845 = vadd.f32 %v2796, %v2829
      %v2846 = vadd.f32 %v2797, %v2830
      %v2847 = vadd.f32 %v2798, %v2831
      %v2848 = vadd.f32 %v2799, %v2832
      %v2849 = vld [vmem:[%s2800 + $0x7] sm:$0xff]
      %v2850 = vld [vmem:[%s2800 + $0xf] sm:$0xff]
      %v2851 = vld [vmem:[%s2800 + $0x27] sm:$0xff]
      %v2852 = vld [vmem:[%s2800 + $0x2f] sm:$0xff]
      %v2853 = vld [vmem:[%s2800 + $0x47] sm:$0xff]
      %v2854 = vld [vmem:[%s2800 + $0x4f] sm:$0xff]
      %v2855 = vld [vmem:[%s2800 + $0x67] sm:$0xff]
      %v2856 = vld [vmem:[%s2800 + $0x6f] sm:$0xff]
      %v2857 = vld [vmem:[%s2800 + $0x87] sm:$0xff]
      %v2858 = vld [vmem:[%s2800 + $0x8f] sm:$0xff]
      %v2859 = vld [vmem:[%s2800 + $0xa7] sm:$0xff]
      %v2860 = vld [vmem:[%s2800 + $0xaf] sm:$0xff]
      %v2861 = vld [vmem:[%s2800 + $0xc7] sm:$0xff]
      %v2862 = vld [vmem:[%s2800 + $0xcf] sm:$0xff]
      %v2863 = vld [vmem:[%s2800 + $0xe7] sm:$0xff]
      %v2864 = vld [vmem:[%s2800 + $0xef] sm:$0xff]
      %v2865 = vmul.f32 %v1253, %v2849
      %v2866 = vmul.f32 %v1253, %v2850
      %v2867 = vmul.f32 %v1253, %v2851
      %v2868 = vmul.f32 %v1253, %v2852
      %v2869 = vmul.f32 %v1253, %v2853
      %v2870 = vmul.f32 %v1253, %v2854
      %v2871 = vmul.f32 %v1253, %v2855
      %v2872 = vmul.f32 %v1253, %v2856
      %v2873 = vmul.f32 %v1253, %v2857
      %v2874 = vmul.f32 %v1253, %v2858
      %v2875 = vmul.f32 %v1253, %v2859
      %v2876 = vmul.f32 %v1253, %v2860
      %v2877 = vmul.f32 %v1253, %v2861
      %v2878 = vmul.f32 %v1253, %v2862
      %v2879 = vmul.f32 %v1253, %v2863
      %v2880 = vmul.f32 %v1253, %v2864
      %v2881 = vadd.f32 %v2833, %v2865
      %v2882 = vadd.f32 %v2834, %v2866
      %v2883 = vadd.f32 %v2835, %v2867
      %v2884 = vadd.f32 %v2836, %v2868
      %v2885 = vadd.f32 %v2837, %v2869
      %v2886 = vadd.f32 %v2838, %v2870
      %v2887 = vadd.f32 %v2839, %v2871
      %v2888 = vadd.f32 %v2840, %v2872
      %v2889 = vadd.f32 %v2841, %v2873
      %v2890 = vadd.f32 %v2842, %v2874
      %v2891 = vadd.f32 %v2843, %v2875
      %v2892 = vadd.f32 %v2844, %v2876
      %v2893 = vadd.f32 %v2845, %v2877
      %v2894 = vadd.f32 %v2846, %v2878
      %v2895 = vadd.f32 %v2847, %v2879
      %v2896 = vadd.f32 %v2848, %v2880
      %v2897 = vld [vmem:[%s2800 + $0x8] sm:$0xff]
      %v2898 = vld [vmem:[%s2800 + $0x10] sm:$0xff]
      %v2899 = vld [vmem:[%s2800 + $0x28] sm:$0xff]
      %v2900 = vld [vmem:[%s2800 + $0x30] sm:$0xff]
      %v2901 = vld [vmem:[%s2800 + $0x48] sm:$0xff]
      %v2902 = vld [vmem:[%s2800 + $0x50] sm:$0xff]
      %v2903 = vld [vmem:[%s2800 + $0x68] sm:$0xff]
      %v2904 = vld [vmem:[%s2800 + $0x70] sm:$0xff]
      %v2905 = vld [vmem:[%s2800 + $0x88] sm:$0xff]
      %v2906 = vld [vmem:[%s2800 + $0x90] sm:$0xff]
      %v2907 = vld [vmem:[%s2800 + $0xa8] sm:$0xff]
      %v2908 = vld [vmem:[%s2800 + $0xb0] sm:$0xff]
      %v2909 = vld [vmem:[%s2800 + $0xc8] sm:$0xff]
      %v2910 = vld [vmem:[%s2800 + $0xd0] sm:$0xff]
      %v2911 = vld [vmem:[%s2800 + $0xe8] sm:$0xff]
      %v2912 = vld [vmem:[%s2800 + $0xf0] sm:$0xff]
      %v2913 = vmul.f32 %v1305, %v2897
      %v2914 = vmul.f32 %v1305, %v2898
      %v2915 = vmul.f32 %v1305, %v2899
      %v2916 = vmul.f32 %v1305, %v2900
      %v2917 = vmul.f32 %v1305, %v2901
      %v2918 = vmul.f32 %v1305, %v2902
      %v2919 = vmul.f32 %v1305, %v2903
      %v2920 = vmul.f32 %v1305, %v2904
      %v2921 = vmul.f32 %v1305, %v2905
      %v2922 = vmul.f32 %v1305, %v2906
      %v2923 = vmul.f32 %v1305, %v2907
      %v2924 = vmul.f32 %v1305, %v2908
      %v2925 = vmul.f32 %v1305, %v2909
      %v2926 = vmul.f32 %v1305, %v2910
      %v2927 = vmul.f32 %v1305, %v2911
      %v2928 = vmul.f32 %v1305, %v2912
      %v2929 = vadd.f32 %v2881, %v2913
      %v2930 = vadd.f32 %v2882, %v2914
      %v2931 = vadd.f32 %v2883, %v2915
      %v2932 = vadd.f32 %v2884, %v2916
      %v2933 = vadd.f32 %v2885, %v2917
      %v2934 = vadd.f32 %v2886, %v2918
      %v2935 = vadd.f32 %v2887, %v2919
      %v2936 = vadd.f32 %v2888, %v2920
      %v2937 = vadd.f32 %v2889, %v2921
      %v2938 = vadd.f32 %v2890, %v2922
      %v2939 = vadd.f32 %v2891, %v2923
      %v2940 = vadd.f32 %v2892, %v2924
      %v2941 = vadd.f32 %v2893, %v2925
      %v2942 = vadd.f32 %v2894, %v2926
      %v2943 = vadd.f32 %v2895, %v2927
      %v2944 = vadd.f32 %v2896, %v2928
      %v2945 = vld [vmem:[%s2800 + $0x9] sm:$0xff]
      %v2946 = vld [vmem:[%s2800 + $0x11] sm:$0xff]
      %v2947 = vld [vmem:[%s2800 + $0x29] sm:$0xff]
      %v2948 = vld [vmem:[%s2800 + $0x31] sm:$0xff]
      %v2949 = vld [vmem:[%s2800 + $0x49] sm:$0xff]
      %v2950 = vld [vmem:[%s2800 + $0x51] sm:$0xff]
      %v2951 = vld [vmem:[%s2800 + $0x69] sm:$0xff]
      %v2952 = vld [vmem:[%s2800 + $0x71] sm:$0xff]
      %v2953 = vld [vmem:[%s2800 + $0x89] sm:$0xff]
      %v2954 = vld [vmem:[%s2800 + $0x91] sm:$0xff]
      %v2955 = vld [vmem:[%s2800 + $0xa9] sm:$0xff]
      %v2956 = vld [vmem:[%s2800 + $0xb1] sm:$0xff]
      %v2957 = vld [vmem:[%s2800 + $0xc9] sm:$0xff]
      %v2958 = vld [vmem:[%s2800 + $0xd1] sm:$0xff]
      %v2959 = vld [vmem:[%s2800 + $0xe9] sm:$0xff]
      %v2960 = vld [vmem:[%s2800 + $0xf1] sm:$0xff]
      %v2961 = vmul.f32 %v1357, %v2945
      %v2962 = vmul.f32 %v1357, %v2946
      %v2963 = vmul.f32 %v1357, %v2947
      %v2964 = vmul.f32 %v1357, %v2948
      %v2965 = vmul.f32 %v1357, %v2949
      %v2966 = vmul.f32 %v1357, %v2950
      %v2967 = vmul.f32 %v1357, %v2951
      %v2968 = vmul.f32 %v1357, %v2952
      %v2969 = vmul.f32 %v1357, %v2953
      %v2970 = vmul.f32 %v1357, %v2954
      %v2971 = vmul.f32 %v1357, %v2955
      %v2972 = vmul.f32 %v1357, %v2956
      %v2973 = vmul.f32 %v1357, %v2957
      %v2974 = vmul.f32 %v1357, %v2958
      %v2975 = vmul.f32 %v1357, %v2959
      %v2976 = vmul.f32 %v1357, %v2960
      %v2977 = vadd.f32 %v2929, %v2961
      %v2978 = vadd.f32 %v2930, %v2962
      %v2979 = vadd.f32 %v2931, %v2963
      %v2980 = vadd.f32 %v2932, %v2964
      %v2981 = vadd.f32 %v2933, %v2965
      %v2982 = vadd.f32 %v2934, %v2966
      %v2983 = vadd.f32 %v2935, %v2967
      %v2984 = vadd.f32 %v2936, %v2968
      %v2985 = vadd.f32 %v2937, %v2969
      %v2986 = vadd.f32 %v2938, %v2970
      %v2987 = vadd.f32 %v2939, %v2971
      %v2988 = vadd.f32 %v2940, %v2972
      %v2989 = vadd.f32 %v2941, %v2973
      %v2990 = vadd.f32 %v2942, %v2974
      %v2991 = vadd.f32 %v2943, %v2975
      %v2992 = vadd.f32 %v2944, %v2976
      %v2993 = vld [vmem:[%s2800 + $0xa] sm:$0xff]
      %v2994 = vld [vmem:[%s2800 + $0x12] sm:$0xff]
      %v2995 = vld [vmem:[%s2800 + $0x2a] sm:$0xff]
      %v2996 = vld [vmem:[%s2800 + $0x32] sm:$0xff]
      %v2997 = vld [vmem:[%s2800 + $0x4a] sm:$0xff]
      %v2998 = vld [vmem:[%s2800 + $0x52] sm:$0xff]
      %v2999 = vld [vmem:[%s2800 + $0x6a] sm:$0xff]
      %v3000 = vld [vmem:[%s2800 + $0x72] sm:$0xff]
      %v3001 = vld [vmem:[%s2800 + $0x8a] sm:$0xff]
      %v3002 = vld [vmem:[%s2800 + $0x92] sm:$0xff]
      %v3003 = vld [vmem:[%s2800 + $0xaa] sm:$0xff]
      %v3004 = vld [vmem:[%s2800 + $0xb2] sm:$0xff]
      %v3005 = vld [vmem:[%s2800 + $0xca] sm:$0xff]
      %v3006 = vld [vmem:[%s2800 + $0xd2] sm:$0xff]
      %v3007 = vld [vmem:[%s2800 + $0xea] sm:$0xff]
      %v3008 = vld [vmem:[%s2800 + $0xf2] sm:$0xff]
      %v3009 = vmul.f32 %v1409, %v2993
      %v3010 = vmul.f32 %v1409, %v2994
      %v3011 = vmul.f32 %v1409, %v2995
      %v3012 = vmul.f32 %v1409, %v2996
      %v3013 = vmul.f32 %v1409, %v2997
      %v3014 = vmul.f32 %v1409, %v2998
      %v3015 = vmul.f32 %v1409, %v2999
      %v3016 = vmul.f32 %v1409, %v3000
      %v3017 = vmul.f32 %v1409, %v3001
      %v3018 = vmul.f32 %v1409, %v3002
      %v3019 = vmul.f32 %v1409, %v3003
      %v3020 = vmul.f32 %v1409, %v3004
      %v3021 = vmul.f32 %v1409, %v3005
      %v3022 = vmul.f32 %v1409, %v3006
      %v3023 = vmul.f32 %v1409, %v3007
      %v3024 = vmul.f32 %v1409, %v3008
      %v3025 = vadd.f32 %v2977, %v3009
      %v3026 = vadd.f32 %v2978, %v3010
      %v3027 = vadd.f32 %v2979, %v3011
      %v3028 = vadd.f32 %v2980, %v3012
      %v3029 = vadd.f32 %v2981, %v3013
      %v3030 = vadd.f32 %v2982, %v3014
      %v3031 = vadd.f32 %v2983, %v3015
      %v3032 = vadd.f32 %v2984, %v3016
      %v3033 = vadd.f32 %v2985, %v3017
      %v3034 = vadd.f32 %v2986, %v3018
      %v3035 = vadd.f32 %v2987, %v3019
      %v3036 = vadd.f32 %v2988, %v3020
      %v3037 = vadd.f32 %v2989, %v3021
      %v3038 = vadd.f32 %v2990, %v3022
      %v3039 = vadd.f32 %v2991, %v3023
      %v3040 = vadd.f32 %v2992, %v3024
      %s3041 = scalar_lea.vmem [#allocation2], 384
      %v3042 = vld [vmem:[%s3041 + $0x6] sm:$0xff]
      %v3043 = vld [vmem:[%s3041 + $0xe] sm:$0xff]
      %v3044 = vld [vmem:[%s3041 + $0x26] sm:$0xff]
      %v3045 = vld [vmem:[%s3041 + $0x2e] sm:$0xff]
      %v3046 = vld [vmem:[%s3041 + $0x46] sm:$0xff]
      %v3047 = vld [vmem:[%s3041 + $0x4e] sm:$0xff]
      %v3048 = vld [vmem:[%s3041 + $0x66] sm:$0xff]
      %v3049 = vld [vmem:[%s3041 + $0x6e] sm:$0xff]
      %v3050 = vld [vmem:[%s3041 + $0x86] sm:$0xff]
      %v3051 = vld [vmem:[%s3041 + $0x8e] sm:$0xff]
      %v3052 = vld [vmem:[%s3041 + $0xa6] sm:$0xff]
      %v3053 = vld [vmem:[%s3041 + $0xae] sm:$0xff]
      %v3054 = vld [vmem:[%s3041 + $0xc6] sm:$0xff]
      %v3055 = vld [vmem:[%s3041 + $0xce] sm:$0xff]
      %v3056 = vld [vmem:[%s3041 + $0xe6] sm:$0xff]
      %v3057 = vld [vmem:[%s3041 + $0xee] sm:$0xff]
      %v3058 = vmul.f32 %v1462, %v3042
      %v3059 = vmul.f32 %v1462, %v3043
      %v3060 = vmul.f32 %v1462, %v3044
      %v3061 = vmul.f32 %v1462, %v3045
      %v3062 = vmul.f32 %v1462, %v3046
      %v3063 = vmul.f32 %v1462, %v3047
      %v3064 = vmul.f32 %v1462, %v3048
      %v3065 = vmul.f32 %v1462, %v3049
      %v3066 = vmul.f32 %v1462, %v3050
      %v3067 = vmul.f32 %v1462, %v3051
      %v3068 = vmul.f32 %v1462, %v3052
      %v3069 = vmul.f32 %v1462, %v3053
      %v3070 = vmul.f32 %v1462, %v3054
      %v3071 = vmul.f32 %v1462, %v3055
      %v3072 = vmul.f32 %v1462, %v3056
      %v3073 = vmul.f32 %v1462, %v3057
      %v3074 = vadd.f32 %v3025, %v3058
      %v3075 = vadd.f32 %v3026, %v3059
      %v3076 = vadd.f32 %v3027, %v3060
      %v3077 = vadd.f32 %v3028, %v3061
      %v3078 = vadd.f32 %v3029, %v3062
      %v3079 = vadd.f32 %v3030, %v3063
      %v3080 = vadd.f32 %v3031, %v3064
      %v3081 = vadd.f32 %v3032, %v3065
      %v3082 = vadd.f32 %v3033, %v3066
      %v3083 = vadd.f32 %v3034, %v3067
      %v3084 = vadd.f32 %v3035, %v3068
      %v3085 = vadd.f32 %v3036, %v3069
      %v3086 = vadd.f32 %v3037, %v3070
      %v3087 = vadd.f32 %v3038, %v3071
      %v3088 = vadd.f32 %v3039, %v3072
      %v3089 = vadd.f32 %v3040, %v3073
      %v3090 = vld [vmem:[%s3041 + $0x7] sm:$0xff]
      %v3091 = vld [vmem:[%s3041 + $0xf] sm:$0xff]
      %v3092 = vld [vmem:[%s3041 + $0x27] sm:$0xff]
      %v3093 = vld [vmem:[%s3041 + $0x2f] sm:$0xff]
      %v3094 = vld [vmem:[%s3041 + $0x47] sm:$0xff]
      %v3095 = vld [vmem:[%s3041 + $0x4f] sm:$0xff]
      %v3096 = vld [vmem:[%s3041 + $0x67] sm:$0xff]
      %v3097 = vld [vmem:[%s3041 + $0x6f] sm:$0xff]
      %v3098 = vld [vmem:[%s3041 + $0x87] sm:$0xff]
      %v3099 = vld [vmem:[%s3041 + $0x8f] sm:$0xff]
      %v3100 = vld [vmem:[%s3041 + $0xa7] sm:$0xff]
      %v3101 = vld [vmem:[%s3041 + $0xaf] sm:$0xff]
      %v3102 = vld [vmem:[%s3041 + $0xc7] sm:$0xff]
      %v3103 = vld [vmem:[%s3041 + $0xcf] sm:$0xff]
      %v3104 = vld [vmem:[%s3041 + $0xe7] sm:$0xff]
      %v3105 = vld [vmem:[%s3041 + $0xef] sm:$0xff]
      %v3106 = vmul.f32 %v1514, %v3090
      %v3107 = vmul.f32 %v1514, %v3091
      %v3108 = vmul.f32 %v1514, %v3092
      %v3109 = vmul.f32 %v1514, %v3093
      %v3110 = vmul.f32 %v1514, %v3094
      %v3111 = vmul.f32 %v1514, %v3095
      %v3112 = vmul.f32 %v1514, %v3096
      %v3113 = vmul.f32 %v1514, %v3097
      %v3114 = vmul.f32 %v1514, %v3098
      %v3115 = vmul.f32 %v1514, %v3099
      %v3116 = vmul.f32 %v1514, %v3100
      %v3117 = vmul.f32 %v1514, %v3101
      %v3118 = vmul.f32 %v1514, %v3102
      %v3119 = vmul.f32 %v1514, %v3103
      %v3120 = vmul.f32 %v1514, %v3104
      %v3121 = vmul.f32 %v1514, %v3105
      %v3122 = vadd.f32 %v3074, %v3106
      %v3123 = vadd.f32 %v3075, %v3107
      %v3124 = vadd.f32 %v3076, %v3108
      %v3125 = vadd.f32 %v3077, %v3109
      %v3126 = vadd.f32 %v3078, %v3110
      %v3127 = vadd.f32 %v3079, %v3111
      %v3128 = vadd.f32 %v3080, %v3112
      %v3129 = vadd.f32 %v3081, %v3113
      %v3130 = vadd.f32 %v3082, %v3114
      %v3131 = vadd.f32 %v3083, %v3115
      %v3132 = vadd.f32 %v3084, %v3116
      %v3133 = vadd.f32 %v3085, %v3117
      %v3134 = vadd.f32 %v3086, %v3118
      %v3135 = vadd.f32 %v3087, %v3119
      %v3136 = vadd.f32 %v3088, %v3120
      %v3137 = vadd.f32 %v3089, %v3121
      %v3138 = vld [vmem:[%s3041 + $0x8] sm:$0xff]
      %v3139 = vld [vmem:[%s3041 + $0x10] sm:$0xff]
      %v3140 = vld [vmem:[%s3041 + $0x28] sm:$0xff]
      %v3141 = vld [vmem:[%s3041 + $0x30] sm:$0xff]
      %v3142 = vld [vmem:[%s3041 + $0x48] sm:$0xff]
      %v3143 = vld [vmem:[%s3041 + $0x50] sm:$0xff]
      %v3144 = vld [vmem:[%s3041 + $0x68] sm:$0xff]
      %v3145 = vld [vmem:[%s3041 + $0x70] sm:$0xff]
      %v3146 = vld [vmem:[%s3041 + $0x88] sm:$0xff]
      %v3147 = vld [vmem:[%s3041 + $0x90] sm:$0xff]
      %v3148 = vld [vmem:[%s3041 + $0xa8] sm:$0xff]
      %v3149 = vld [vmem:[%s3041 + $0xb0] sm:$0xff]
      %v3150 = vld [vmem:[%s3041 + $0xc8] sm:$0xff]
      %v3151 = vld [vmem:[%s3041 + $0xd0] sm:$0xff]
      %v3152 = vld [vmem:[%s3041 + $0xe8] sm:$0xff]
      %v3153 = vld [vmem:[%s3041 + $0xf0] sm:$0xff]
      %v3154 = vmul.f32 %v1566, %v3138
      %v3155 = vmul.f32 %v1566, %v3139
      %v3156 = vmul.f32 %v1566, %v3140
      %v3157 = vmul.f32 %v1566, %v3141
      %v3158 = vmul.f32 %v1566, %v3142
      %v3159 = vmul.f32 %v1566, %v3143
      %v3160 = vmul.f32 %v1566, %v3144
      %v3161 = vmul.f32 %v1566, %v3145
      %v3162 = vmul.f32 %v1566, %v3146
      %v3163 = vmul.f32 %v1566, %v3147
      %v3164 = vmul.f32 %v1566, %v3148
      %v3165 = vmul.f32 %v1566, %v3149
      %v3166 = vmul.f32 %v1566, %v3150
      %v3167 = vmul.f32 %v1566, %v3151
      %v3168 = vmul.f32 %v1566, %v3152
      %v3169 = vmul.f32 %v1566, %v3153
      %v3170 = vadd.f32 %v3122, %v3154
      %v3171 = vadd.f32 %v3123, %v3155
      %v3172 = vadd.f32 %v3124, %v3156
      %v3173 = vadd.f32 %v3125, %v3157
      %v3174 = vadd.f32 %v3126, %v3158
      %v3175 = vadd.f32 %v3127, %v3159
      %v3176 = vadd.f32 %v3128, %v3160
      %v3177 = vadd.f32 %v3129, %v3161
      %v3178 = vadd.f32 %v3130, %v3162
      %v3179 = vadd.f32 %v3131, %v3163
      %v3180 = vadd.f32 %v3132, %v3164
      %v3181 = vadd.f32 %v3133, %v3165
      %v3182 = vadd.f32 %v3134, %v3166
      %v3183 = vadd.f32 %v3135, %v3167
      %v3184 = vadd.f32 %v3136, %v3168
      %v3185 = vadd.f32 %v3137, %v3169
      %v3186 = vld [vmem:[%s3041 + $0x9] sm:$0xff]
      %v3187 = vld [vmem:[%s3041 + $0x11] sm:$0xff]
      %v3188 = vld [vmem:[%s3041 + $0x29] sm:$0xff]
      %v3189 = vld [vmem:[%s3041 + $0x31] sm:$0xff]
      %v3190 = vld [vmem:[%s3041 + $0x49] sm:$0xff]
      %v3191 = vld [vmem:[%s3041 + $0x51] sm:$0xff]
      %v3192 = vld [vmem:[%s3041 + $0x69] sm:$0xff]
      %v3193 = vld [vmem:[%s3041 + $0x71] sm:$0xff]
      %v3194 = vld [vmem:[%s3041 + $0x89] sm:$0xff]
      %v3195 = vld [vmem:[%s3041 + $0x91] sm:$0xff]
      %v3196 = vld [vmem:[%s3041 + $0xa9] sm:$0xff]
      %v3197 = vld [vmem:[%s3041 + $0xb1] sm:$0xff]
      %v3198 = vld [vmem:[%s3041 + $0xc9] sm:$0xff]
      %v3199 = vld [vmem:[%s3041 + $0xd1] sm:$0xff]
      %v3200 = vld [vmem:[%s3041 + $0xe9] sm:$0xff]
      %v3201 = vld [vmem:[%s3041 + $0xf1] sm:$0xff]
      %v3202 = vmul.f32 %v1618, %v3186
      %v3203 = vmul.f32 %v1618, %v3187
      %v3204 = vmul.f32 %v1618, %v3188
      %v3205 = vmul.f32 %v1618, %v3189
      %v3206 = vmul.f32 %v1618, %v3190
      %v3207 = vmul.f32 %v1618, %v3191
      %v3208 = vmul.f32 %v1618, %v3192
      %v3209 = vmul.f32 %v1618, %v3193
      %v3210 = vmul.f32 %v1618, %v3194
      %v3211 = vmul.f32 %v1618, %v3195
      %v3212 = vmul.f32 %v1618, %v3196
      %v3213 = vmul.f32 %v1618, %v3197
      %v3214 = vmul.f32 %v1618, %v3198
      %v3215 = vmul.f32 %v1618, %v3199
      %v3216 = vmul.f32 %v1618, %v3200
      %v3217 = vmul.f32 %v1618, %v3201
      %v3218 = vadd.f32 %v3170, %v3202
      %v3219 = vadd.f32 %v3171, %v3203
      %v3220 = vadd.f32 %v3172, %v3204
      %v3221 = vadd.f32 %v3173, %v3205
      %v3222 = vadd.f32 %v3174, %v3206
      %v3223 = vadd.f32 %v3175, %v3207
      %v3224 = vadd.f32 %v3176, %v3208
      %v3225 = vadd.f32 %v3177, %v3209
      %v3226 = vadd.f32 %v3178, %v3210
      %v3227 = vadd.f32 %v3179, %v3211
      %v3228 = vadd.f32 %v3180, %v3212
      %v3229 = vadd.f32 %v3181, %v3213
      %v3230 = vadd.f32 %v3182, %v3214
      %v3231 = vadd.f32 %v3183, %v3215
      %v3232 = vadd.f32 %v3184, %v3216
      %v3233 = vadd.f32 %v3185, %v3217
      %v3234 = vld [vmem:[%s3041 + $0xa] sm:$0xff]
      %v3235 = vld [vmem:[%s3041 + $0x12] sm:$0xff]
      %v3236 = vld [vmem:[%s3041 + $0x2a] sm:$0xff]
      %v3237 = vld [vmem:[%s3041 + $0x32] sm:$0xff]
      %v3238 = vld [vmem:[%s3041 + $0x4a] sm:$0xff]
      %v3239 = vld [vmem:[%s3041 + $0x52] sm:$0xff]
      %v3240 = vld [vmem:[%s3041 + $0x6a] sm:$0xff]
      %v3241 = vld [vmem:[%s3041 + $0x72] sm:$0xff]
      %v3242 = vld [vmem:[%s3041 + $0x8a] sm:$0xff]
      %v3243 = vld [vmem:[%s3041 + $0x92] sm:$0xff]
      %v3244 = vld [vmem:[%s3041 + $0xaa] sm:$0xff]
      %v3245 = vld [vmem:[%s3041 + $0xb2] sm:$0xff]
      %v3246 = vld [vmem:[%s3041 + $0xca] sm:$0xff]
      %v3247 = vld [vmem:[%s3041 + $0xd2] sm:$0xff]
      %v3248 = vld [vmem:[%s3041 + $0xea] sm:$0xff]
      %v3249 = vld [vmem:[%s3041 + $0xf2] sm:$0xff]
      %v3250 = vmul.f32 %v1670, %v3234
      %v3251 = vmul.f32 %v1670, %v3235
      %v3252 = vmul.f32 %v1670, %v3236
      %v3253 = vmul.f32 %v1670, %v3237
      %v3254 = vmul.f32 %v1670, %v3238
      %v3255 = vmul.f32 %v1670, %v3239
      %v3256 = vmul.f32 %v1670, %v3240
      %v3257 = vmul.f32 %v1670, %v3241
      %v3258 = vmul.f32 %v1670, %v3242
      %v3259 = vmul.f32 %v1670, %v3243
      %v3260 = vmul.f32 %v1670, %v3244
      %v3261 = vmul.f32 %v1670, %v3245
      %v3262 = vmul.f32 %v1670, %v3246
      %v3263 = vmul.f32 %v1670, %v3247
      %v3264 = vmul.f32 %v1670, %v3248
      %v3265 = vmul.f32 %v1670, %v3249
      %v3266 = vadd.f32 %v3218, %v3250
      %v3267 = vadd.f32 %v3219, %v3251
      %v3268 = vadd.f32 %v3220, %v3252
      %v3269 = vadd.f32 %v3221, %v3253
      %v3270 = vadd.f32 %v3222, %v3254
      %v3271 = vadd.f32 %v3223, %v3255
      %v3272 = vadd.f32 %v3224, %v3256
      %v3273 = vadd.f32 %v3225, %v3257
      %v3274 = vadd.f32 %v3226, %v3258
      %v3275 = vadd.f32 %v3227, %v3259
      %v3276 = vadd.f32 %v3228, %v3260
      %v3277 = vadd.f32 %v3229, %v3261
      %v3278 = vadd.f32 %v3230, %v3262
      %v3279 = vadd.f32 %v3231, %v3263
      %v3280 = vadd.f32 %v3232, %v3264
      %v3281 = vadd.f32 %v3233, %v3265
      %v3282 = vadd.f32 %v3266, %v1707
      %v3283 = vadd.f32 %v3267, %v1707
      %v3284 = vadd.f32 %v3268, %v1707
      %v3285 = vadd.f32 %v3269, %v1707
      %v3286 = vadd.f32 %v3270, %v1707
      %v3287 = vadd.f32 %v3271, %v1707
      %v3288 = vadd.f32 %v3272, %v1707
      %v3289 = vadd.f32 %v3273, %v1707
      %v3290 = vadd.f32 %v3274, %v1707
      %v3291 = vadd.f32 %v3275, %v1707
      %v3292 = vadd.f32 %v3276, %v1707
      %v3293 = vadd.f32 %v3277, %v1707
      %v3294 = vadd.f32 %v3278, %v1707
      %v3295 = vadd.f32 %v3279, %v1707
      %v3296 = vadd.f32 %v3280, %v1707
      %v3297 = vadd.f32 %v3281, %v1707
      %v3298 = vmul.f32 %v3282, 0.5
      %v3299 = vmul.f32 %v3283, 0.5
      %v3300 = vmul.f32 %v3284, 0.5
      %v3301 = vmul.f32 %v3285, 0.5
      %v3302 = vmul.f32 %v3286, 0.5
      %v3303 = vmul.f32 %v3287, 0.5
      %v3304 = vmul.f32 %v3288, 0.5
      %v3305 = vmul.f32 %v3289, 0.5
      %v3306 = vmul.f32 %v3290, 0.5
      %v3307 = vmul.f32 %v3291, 0.5
      %v3308 = vmul.f32 %v3292, 0.5
      %v3309 = vmul.f32 %v3293, 0.5
      %v3310 = vmul.f32 %v3294, 0.5
      %v3311 = vmul.f32 %v3295, 0.5
      %v3312 = vmul.f32 %v3296, 0.5
      %v3313 = vmul.f32 %v3297, 0.5
      %v3314 = vmul.f32 %v3282, 0.044715
      %v3315 = vmul.f32 %v3283, 0.044715
      %v3316 = vmul.f32 %v3284, 0.044715
      %v3317 = vmul.f32 %v3285, 0.044715
      %v3318 = vmul.f32 %v3286, 0.044715
      %v3319 = vmul.f32 %v3287, 0.044715
      %v3320 = vmul.f32 %v3288, 0.044715
      %v3321 = vmul.f32 %v3289, 0.044715
      %v3322 = vmul.f32 %v3290, 0.044715
      %v3323 = vmul.f32 %v3291, 0.044715
      %v3324 = vmul.f32 %v3292, 0.044715
      %v3325 = vmul.f32 %v3293, 0.044715
      %v3326 = vmul.f32 %v3294, 0.044715
      %v3327 = vmul.f32 %v3295, 0.044715
      %v3328 = vmul.f32 %v3296, 0.044715
      %v3329 = vmul.f32 %v3297, 0.044715
      %v3330 = vmul.f32 %v3314, %v3282
      %v3331 = vmul.f32 %v3315, %v3283
      %v3332 = vmul.f32 %v3316, %v3284
      %v3333 = vmul.f32 %v3317, %v3285
      %v3334 = vmul.f32 %v3318, %v3286
      %v3335 = vmul.f32 %v3319, %v3287
      %v3336 = vmul.f32 %v3320, %v3288
      %v3337 = vmul.f32 %v3321, %v3289
      %v3338 = vmul.f32 %v3322, %v3290
      %v3339 = vmul.f32 %v3323, %v3291
      %v3340 = vmul.f32 %v3324, %v3292
      %v3341 = vmul.f32 %v3325, %v3293
      %v3342 = vmul.f32 %v3326, %v3294
      %v3343 = vmul.f32 %v3327, %v3295
      %v3344 = vmul.f32 %v3328, %v3296
      %v3345 = vmul.f32 %v3329, %v3297
      %v3346 = vmul.f32 %v3330, %v3282
      %v3347 = vmul.f32 %v3331, %v3283
      %v3348 = vmul.f32 %v3332, %v3284
      %v3349 = vmul.f32 %v3333, %v3285
      %v3350 = vmul.f32 %v3334, %v3286
      %v3351 = vmul.f32 %v3335, %v3287
      %v3352 = vmul.f32 %v3336, %v3288
      %v3353 = vmul.f32 %v3337, %v3289
      %v3354 = vmul.f32 %v3338, %v3290
      %v3355 = vmul.f32 %v3339, %v3291
      %v3356 = vmul.f32 %v3340, %v3292
      %v3357 = vmul.f32 %v3341, %v3293
      %v3358 = vmul.f32 %v3342, %v3294
      %v3359 = vmul.f32 %v3343, %v3295
      %v3360 = vmul.f32 %v3344, %v3296
      %v3361 = vmul.f32 %v3345, %v3297
      %v3362 = vadd.f32 %v3282, %v3346
      %v3363 = vadd.f32 %v3283, %v3347
      %v3364 = vadd.f32 %v3284, %v3348
      %v3365 = vadd.f32 %v3285, %v3349
      %v3366 = vadd.f32 %v3286, %v3350
      %v3367 = vadd.f32 %v3287, %v3351
      %v3368 = vadd.f32 %v3288, %v3352
      %v3369 = vadd.f32 %v3289, %v3353
      %v3370 = vadd.f32 %v3290, %v3354
      %v3371 = vadd.f32 %v3291, %v3355
      %v3372 = vadd.f32 %v3292, %v3356
      %v3373 = vadd.f32 %v3293, %v3357
      %v3374 = vadd.f32 %v3294, %v3358
      %v3375 = vadd.f32 %v3295, %v3359
      %v3376 = vadd.f32 %v3296, %v3360
      %v3377 = vadd.f32 %v3297, %v3361
      %v3378 = vmul.f32 %v3362, 0.7978846
      %v3379 = vmul.f32 %v3363, 0.7978846
      %v3380 = vmul.f32 %v3364, 0.7978846
      %v3381 = vmul.f32 %v3365, 0.7978846
      %v3382 = vmul.f32 %v3366, 0.7978846
      %v3383 = vmul.f32 %v3367, 0.7978846
      %v3384 = vmul.f32 %v3368, 0.7978846
      %v3385 = vmul.f32 %v3369, 0.7978846
      %v3386 = vmul.f32 %v3370, 0.7978846
      %v3387 = vmul.f32 %v3371, 0.7978846
      %v3388 = vmul.f32 %v3372, 0.7978846
      %v3389 = vmul.f32 %v3373, 0.7978846
      %v3390 = vmul.f32 %v3374, 0.7978846
      %v3391 = vmul.f32 %v3375, 0.7978846
      %v3392 = vmul.f32 %v3376, 0.7978846
      %v3393 = vmul.f32 %v3377, 0.7978846
      %v3394 = vtanh.pop %v3378
      %v3395 = vtanh.pop %v3379
      %v3396 = vtanh.pop %v3380
      %v3397 = vtanh.pop %v3381
      %v3398 = vtanh.pop %v3382
      %v3399 = vtanh.pop %v3383
      %v3400 = vtanh.pop %v3384
      %v3401 = vtanh.pop %v3385
      %v3402 = vtanh.pop %v3386
      %v3403 = vtanh.pop %v3387
      %v3404 = vtanh.pop %v3388
      %v3405 = vtanh.pop %v3389
      %v3406 = vtanh.pop %v3390
      %v3407 = vtanh.pop %v3391
      %v3408 = vtanh.pop %v3392
      %v3409 = vtanh.pop %v3393
      %v3410 = vadd.f32 %v3394, 1.0
      %v3411 = vadd.f32 %v3395, 1.0
      %v3412 = vadd.f32 %v3396, 1.0
      %v3413 = vadd.f32 %v3397, 1.0
      %v3414 = vadd.f32 %v3398, 1.0
      %v3415 = vadd.f32 %v3399, 1.0
      %v3416 = vadd.f32 %v3400, 1.0
      %v3417 = vadd.f32 %v3401, 1.0
      %v3418 = vadd.f32 %v3402, 1.0
      %v3419 = vadd.f32 %v3403, 1.0
      %v3420 = vadd.f32 %v3404, 1.0
      %v3421 = vadd.f32 %v3405, 1.0
      %v3422 = vadd.f32 %v3406, 1.0
      %v3423 = vadd.f32 %v3407, 1.0
      %v3424 = vadd.f32 %v3408, 1.0
      %v3425 = vadd.f32 %v3409, 1.0
      %v3426 = vmul.f32 %v3298, %v3410
      %v3427 = vmul.f32 %v3299, %v3411
      %v3428 = vmul.f32 %v3300, %v3412
      %v3429 = vmul.f32 %v3301, %v3413
      %v3430 = vmul.f32 %v3302, %v3414
      %v3431 = vmul.f32 %v3303, %v3415
      %v3432 = vmul.f32 %v3304, %v3416
      %v3433 = vmul.f32 %v3305, %v3417
      %v3434 = vmul.f32 %v3306, %v3418
      %v3435 = vmul.f32 %v3307, %v3419
      %v3436 = vmul.f32 %v3308, %v3420
      %v3437 = vmul.f32 %v3309, %v3421
      %v3438 = vmul.f32 %v3310, %v3422
      %v3439 = vmul.f32 %v3311, %v3423
      %v3440 = vmul.f32 %v3312, %v3424
      %v3441 = vmul.f32 %v3313, %v3425
      %v3442 = vmul.f32 %v3426, 0.5
      %v3443 = vmul.f32 %v3427, 0.5
      %v3444 = vmul.f32 %v3428, 0.5
      %v3445 = vmul.f32 %v3429, 0.5
      %v3446 = vmul.f32 %v3430, 0.5
      %v3447 = vmul.f32 %v3431, 0.5
      %v3448 = vmul.f32 %v3432, 0.5
      %v3449 = vmul.f32 %v3433, 0.5
      %v3450 = vmul.f32 %v3434, 0.5
      %v3451 = vmul.f32 %v3435, 0.5
      %v3452 = vmul.f32 %v3436, 0.5
      %v3453 = vmul.f32 %v3437, 0.5
      %v3454 = vmul.f32 %v3438, 0.5
      %v3455 = vmul.f32 %v3439, 0.5
      %v3456 = vmul.f32 %v3440, 0.5
      %v3457 = vmul.f32 %v3441, 0.5
      %v3458 = vmul.f32 %v3426, 0.044715
      %v3459 = vmul.f32 %v3427, 0.044715
      %v3460 = vmul.f32 %v3428, 0.044715
      %v3461 = vmul.f32 %v3429, 0.044715
      %v3462 = vmul.f32 %v3430, 0.044715
      %v3463 = vmul.f32 %v3431, 0.044715
      %v3464 = vmul.f32 %v3432, 0.044715
      %v3465 = vmul.f32 %v3433, 0.044715
      %v3466 = vmul.f32 %v3434, 0.044715
      %v3467 = vmul.f32 %v3435, 0.044715
      %v3468 = vmul.f32 %v3436, 0.044715
      %v3469 = vmul.f32 %v3437, 0.044715
      %v3470 = vmul.f32 %v3438, 0.044715
      %v3471 = vmul.f32 %v3439, 0.044715
      %v3472 = vmul.f32 %v3440, 0.044715
      %v3473 = vmul.f32 %v3441, 0.044715
      %v3474 = vmul.f32 %v3458, %v3426
      %v3475 = vmul.f32 %v3459, %v3427
      %v3476 = vmul.f32 %v3460, %v3428
      %v3477 = vmul.f32 %v3461, %v3429
      %v3478 = vmul.f32 %v3462, %v3430
      %v3479 = vmul.f32 %v3463, %v3431
      %v3480 = vmul.f32 %v3464, %v3432
      %v3481 = vmul.f32 %v3465, %v3433
      %v3482 = vmul.f32 %v3466, %v3434
      %v3483 = vmul.f32 %v3467, %v3435
      %v3484 = vmul.f32 %v3468, %v3436
      %v3485 = vmul.f32 %v3469, %v3437
      %v3486 = vmul.f32 %v3470, %v3438
      %v3487 = vmul.f32 %v3471, %v3439
      %v3488 = vmul.f32 %v3472, %v3440
      %v3489 = vmul.f32 %v3473, %v3441
      %v3490 = vmul.f32 %v3474, %v3426
      %v3491 = vmul.f32 %v3475, %v3427
      %v3492 = vmul.f32 %v3476, %v3428
      %v3493 = vmul.f32 %v3477, %v3429
      %v3494 = vmul.f32 %v3478, %v3430
      %v3495 = vmul.f32 %v3479, %v3431
      %v3496 = vmul.f32 %v3480, %v3432
      %v3497 = vmul.f32 %v3481, %v3433
      %v3498 = vmul.f32 %v3482, %v3434
      %v3499 = vmul.f32 %v3483, %v3435
      %v3500 = vmul.f32 %v3484, %v3436
      %v3501 = vmul.f32 %v3485, %v3437
      %v3502 = vmul.f32 %v3486, %v3438
      %v3503 = vmul.f32 %v3487, %v3439
      %v3504 = vmul.f32 %v3488, %v3440
      %v3505 = vmul.f32 %v3489, %v3441
      %v3506 = vadd.f32 %v3426, %v3490
      %v3507 = vadd.f32 %v3427, %v3491
      %v3508 = vadd.f32 %v3428, %v3492
      %v3509 = vadd.f32 %v3429, %v3493
      %v3510 = vadd.f32 %v3430, %v3494
      %v3511 = vadd.f32 %v3431, %v3495
      %v3512 = vadd.f32 %v3432, %v3496
      %v3513 = vadd.f32 %v3433, %v3497
      %v3514 = vadd.f32 %v3434, %v3498
      %v3515 = vadd.f32 %v3435, %v3499
      %v3516 = vadd.f32 %v3436, %v3500
      %v3517 = vadd.f32 %v3437, %v3501
      %v3518 = vadd.f32 %v3438, %v3502
      %v3519 = vadd.f32 %v3439, %v3503
      %v3520 = vadd.f32 %v3440, %v3504
      %v3521 = vadd.f32 %v3441, %v3505
      %v3522 = vmul.f32 %v3506, 0.7978846
      %v3523 = vmul.f32 %v3507, 0.7978846
      %v3524 = vmul.f32 %v3508, 0.7978846
      %v3525 = vmul.f32 %v3509, 0.7978846
      %v3526 = vmul.f32 %v3510, 0.7978846
      %v3527 = vmul.f32 %v3511, 0.7978846
      %v3528 = vmul.f32 %v3512, 0.7978846
      %v3529 = vmul.f32 %v3513, 0.7978846
      %v3530 = vmul.f32 %v3514, 0.7978846
      %v3531 = vmul.f32 %v3515, 0.7978846
      %v3532 = vmul.f32 %v3516, 0.7978846
      %v3533 = vmul.f32 %v3517, 0.7978846
      %v3534 = vmul.f32 %v3518, 0.7978846
      %v3535 = vmul.f32 %v3519, 0.7978846
      %v3536 = vmul.f32 %v3520, 0.7978846
      %v3537 = vmul.f32 %v3521, 0.7978846
      %v3538 = vtanh.pop %v3522
      %v3539 = vtanh.pop %v3523
      %v3540 = vtanh.pop %v3524
      %v3541 = vtanh.pop %v3525
      %v3542 = vtanh.pop %v3526
      %v3543 = vtanh.pop %v3527
      %v3544 = vtanh.pop %v3528
      %v3545 = vtanh.pop %v3529
      %v3546 = vtanh.pop %v3530
      %v3547 = vtanh.pop %v3531
      %v3548 = vtanh.pop %v3532
      %v3549 = vtanh.pop %v3533
      %v3550 = vtanh.pop %v3534
      %v3551 = vtanh.pop %v3535
      %v3552 = vtanh.pop %v3536
      %v3553 = vtanh.pop %v3537
      %v3554 = vadd.f32 %v3538, 1.0
      %v3555 = vadd.f32 %v3539, 1.0
      %v3556 = vadd.f32 %v3540, 1.0
      %v3557 = vadd.f32 %v3541, 1.0
      %v3558 = vadd.f32 %v3542, 1.0
      %v3559 = vadd.f32 %v3543, 1.0
      %v3560 = vadd.f32 %v3544, 1.0
      %v3561 = vadd.f32 %v3545, 1.0
      %v3562 = vadd.f32 %v3546, 1.0
      %v3563 = vadd.f32 %v3547, 1.0
      %v3564 = vadd.f32 %v3548, 1.0
      %v3565 = vadd.f32 %v3549, 1.0
      %v3566 = vadd.f32 %v3550, 1.0
      %v3567 = vadd.f32 %v3551, 1.0
      %v3568 = vadd.f32 %v3552, 1.0
      %v3569 = vadd.f32 %v3553, 1.0
      %v3570 = vmul.f32 %v3442, %v3554
      %v3571 = vmul.f32 %v3443, %v3555
      %v3572 = vmul.f32 %v3444, %v3556
      %v3573 = vmul.f32 %v3445, %v3557
      %v3574 = vmul.f32 %v3446, %v3558
      %v3575 = vmul.f32 %v3447, %v3559
      %v3576 = vmul.f32 %v3448, %v3560
      %v3577 = vmul.f32 %v3449, %v3561
      %v3578 = vmul.f32 %v3450, %v3562
      %v3579 = vmul.f32 %v3451, %v3563
      %v3580 = vmul.f32 %v3452, %v3564
      %v3581 = vmul.f32 %v3453, %v3565
      %v3582 = vmul.f32 %v3454, %v3566
      %v3583 = vmul.f32 %v3455, %v3567
      %v3584 = vmul.f32 %v3456, %v3568
      %v3585 = vmul.f32 %v3457, %v3569
      %v3586 = vpack.c.bf16 %v3571, %v3570
      %v3587 = vpack.c.bf16 %v3573, %v3572
      %v3588 = vpack.c.bf16 %v3575, %v3574
      %v3589 = vpack.c.bf16 %v3577, %v3576
      %v3590 = vpack.c.bf16 %v3579, %v3578
      %v3591 = vpack.c.bf16 %v3581, %v3580
      %v3592 = vpack.c.bf16 %v3583, %v3582
      %v3593 = vpack.c.bf16 %v3585, %v3584
      %v3602 = vunpack.c.l.b16 %v3586
      %v3603 = vunpack.c.h.b16 %v3586
      %v3604 = vunpack.c.l.b16 %v3587
      %v3605 = vunpack.c.h.b16 %v3587
      %v3606 = vunpack.c.l.b16 %v3588
      %v3607 = vunpack.c.h.b16 %v3588
      %v3608 = vunpack.c.l.b16 %v3589
      %v3609 = vunpack.c.h.b16 %v3589
      %v3610 = vunpack.c.l.b16 %v3590
      %v3611 = vunpack.c.h.b16 %v3590
      %v3612 = vunpack.c.l.b16 %v3591
      %v3613 = vunpack.c.h.b16 %v3591
      %v3614 = vunpack.c.l.b16 %v3592
      %v3615 = vunpack.c.h.b16 %v3592
      %v3616 = vunpack.c.l.b16 %v3593
      %v3617 = vunpack.c.h.b16 %v3593
      %v3618 = vpack.c.b16 %v3602, %v3602
      %v3619 = vpack.c.b16 %v3603, %v3603
      %v3620 = vpack.c.b16 %v3604, %v3604
      %v3621 = vpack.c.b16 %v3605, %v3605
      %v3622 = vpack.c.b16 %v3606, %v3606
      %v3623 = vpack.c.b16 %v3607, %v3607
      %v3624 = vpack.c.b16 %v3608, %v3608
      %v3625 = vpack.c.b16 %v3609, %v3609
      %v3626 = vpack.c.b16 %v3610, %v3610
      %v3627 = vpack.c.b16 %v3611, %v3611
      %v3628 = vpack.c.b16 %v3612, %v3612
      %v3629 = vpack.c.b16 %v3613, %v3613
      %v3630 = vpack.c.b16 %v3614, %v3614
      %v3631 = vpack.c.b16 %v3615, %v3615
      %v3632 = vpack.c.b16 %v3616, %v3616
      %v3633 = vpack.c.b16 %v3617, %v3617
      %s3650 = scalar_lea.vmem %s232, 64
      %3651 = vst [vmem:[%s3650] sm:$0xf] %v3618
      %3652 = vst [vmem:[%s3650 + $0x4] sm:$0xf] %v3619
      %3653 = vst [vmem:[%s3650 + $0x8] sm:$0xf] %v3620
      %3654 = vst [vmem:[%s3650 + $0xc] sm:$0xf] %v3621
      %3655 = vst [vmem:[%s3650 + $0x10] sm:$0xf] %v3622
      %3656 = vst [vmem:[%s3650 + $0x14] sm:$0xf] %v3623
      %3657 = vst [vmem:[%s3650 + $0x18] sm:$0xf] %v3624
      %3658 = vst [vmem:[%s3650 + $0x1c] sm:$0xf] %v3625
      %3659 = vst [vmem:[%s3650 + $0x20] sm:$0xf] %v3626
      %3660 = vst [vmem:[%s3650 + $0x24] sm:$0xf] %v3627
      %3661 = vst [vmem:[%s3650 + $0x28] sm:$0xf] %v3628
      %3662 = vst [vmem:[%s3650 + $0x2c] sm:$0xf] %v3629
      %3663 = vst [vmem:[%s3650 + $0x30] sm:$0xf] %v3630
      %3664 = vst [vmem:[%s3650 + $0x34] sm:$0xf] %v3631
      %3665 = vst [vmem:[%s3650 + $0x38] sm:$0xf] %v3632
      %3666 = vst [vmem:[%s3650 + $0x3c] sm:$0xf] %v3633
      %p3667 = scmp.lt.s32.totalorder %s18, 1
      %s3668 = scalar_select %p3667, %s18, 1
      %p3669 = scmp.lt.s32.totalorder %s19, 0
      %s3670 = scalar_select %p3669, %s19, 0
      %s3671 = smul.addr %s3668, 32
      %s3672 = sadd.s32 %s3670, %s3671
      %s3673 = smul.addr %s3672, 4
      %s3674 = scalar_lea.vmem %s3, %s3673
      // Predicated region
      $region33: #{mrfp_forward.8} parent=31 // pred_check
        %p3675 = pneg %p126
      $region34: #{mrfp_forward.8} parent=31 // pred_check_branch
        %3677 = sbr.rel (%p3675) target = $region36
      $region35: #{mrfp_forward.8} parent=31 // pred_region
        _
      $region36: #{mrfp_forward.8} parent=31 // pred_fallthru
        _
    $region32: #{mrfp_forward.8} parent=5 // pred_fallthru
      _
    %p3678 = scmp.le.s32.totalorder 2, %s9
    // Predicated region
    $region37: #{mrfp_forward.8} parent=5 // pred_check
      %p3679 = pneg %p3678
    $region38: #{mrfp_forward.8} parent=5 // pred_check_branch
      %3681 = sbr.rel (%p3679) target = $region40
    $region39: #{mrfp_forward.8} parent=5 // pred_region
      %s3682 = ssub.s32 %s9, 2
      // Predicated region
      $region41: #{mrfp_forward.8} parent=39 // pred_check
        %p3683 = pneg %p132
      $region42: #{mrfp_forward.8} parent=39 // pred_check_branch
        %3685 = sbr.rel (%p3683) target = $region44
      $region43: #{mrfp_forward.8} parent=39 // pred_region
        %p3686 = scmp.lt.s32.totalorder %s20, 1
        %s3687 = scalar_select %p3686, %s20, 1
        %p3688 = scmp.lt.s32.totalorder %s21, 0
        %s3689 = scalar_select %p3688, %s21, 0
        %s3690 = smul.addr %s3687, 32
        %s3691 = sadd.s32 %s3689, %s3690
        %s3692 = smul.addr %s3691, 4
        %s3693 = scalar_lea.vmem %s3, %s3692
      $region44: #{mrfp_forward.8} parent=39 // pred_fallthru
        _
    $region40: #{mrfp_forward.8} parent=5 // pred_fallthru
      _
  $region6: #{mrfp_forward.8} parent=0 // loop_footer
    %s13 = sadd.s32 1, %s9
  $region7: #{mrfp_forward.8} parent=0 // loop_footer_branch
    %8 = sbr.rel target = $region3
  $region8: #{mrfp_forward.8} parent=0 // loop_exit
    _

</llo_original>
